<compile_context>
chip_gen: v7x
topology: tpu7x:2x2x1
jax: 0.10.0
libtpu: 0.0.40
codegen_flags: <defaults>
</compile_context>

<pallas_src>
import functools

import numpy as np
import jax
import jax.numpy as jnp
from jax.experimental import pallas as pl
from jax.experimental.pallas import tpu as pltpu


# ----------------------------------------------------------------------------
# structural constants (built once in prepare_params)
# ----------------------------------------------------------------------------
def _lane_shift_matrix(batch, dy, dx):
    """(49*B, 49*B) 0/1 matrix: (X @ M)[:, (qy,qx,s)] = X[:, (qy+dy, qx+dx, s)].

    Out-of-range reads become zero.  All 7x7 planes in the kernel use lane
    ordering lane = (qy*7 + qx)*batch + sample.
    """
    size = 49 * batch
    m = np.zeros((size, size), np.float32)
    for qy in range(7):
        for qx in range(7):
            sy, sx = qy + dy, qx + dx
            if 0 <= sy < 7 and 0 <= sx < 7:
                for s in range(batch):
                    m[(sy * 7 + sx) * batch + s, (qy * 7 + qx) * batch + s] = 1.0
    return jnp.asarray(m, jnp.bfloat16)


# ----------------------------------------------------------------------------
# the fused kernel: encoder + decoder, everything resident in VMEM
# ----------------------------------------------------------------------------
def _autoencoder_kernel(a1t_ref, w1_ref, b1_ref, w2s_ref, b2_ref, w3_ref, b3_ref,
                        wd1_ref, bd1_ref, wd2s_ref, bd2_ref, wd3s_ref, bd3_ref,
                        axm_ref, aym_ref, axym_ref, axp_ref, ayp_ref, axyp_ref,
                        o_ref,
                        col_ref, h3_ref, h4_ref, hx_ref, hy_ref, hxy_ref, *, n):
    f32, bf16 = jnp.float32, jnp.bfloat16
    m7 = 49 * n                       # lanes of one 7x7 plane

    def mm(a, b):                     # MXU dot, bf16 operands, f32 accumulate
        return jnp.dot(a, b, preferred_element_type=f32)

    # ---- e1: Conv2d(3->16, 3x3, s2, p1) + ReLU: one GEMM per output phase ----
    w1, b1 = w1_ref[...], b1_ref[...]
    p00 = jnp.maximum(mm(w1, a1t_ref[0]) + b1, 0.0).astype(bf16)   # h1 @ (2qy+0, 2qx+0)
    p01 = jnp.maximum(mm(w1, a1t_ref[1]) + b1, 0.0).astype(bf16)   # h1 @ (2qy+0, 2qx+1)
    p10 = jnp.maximum(mm(w1, a1t_ref[2]) + b1, 0.0).astype(bf16)   # h1 @ (2qy+1, 2qx+0)
    p11 = jnp.maximum(mm(w1, a1t_ref[3]) + b1, 0.0).astype(bf16)   # h1 @ (2qy+1, 2qx+1)

    # ---- e2: Conv2d(16->32, 3x3, s2, p1) + ReLU, input-phase decomposed ----
    axm, aym, axym = axm_ref[...], aym_ref[...], axym_ref[...]
    p01m = mm(p01, axm).astype(bf16)    # read at (qy,   qx-1)
    p10m = mm(p10, aym).astype(bf16)    # read at (qy-1, qx  )
    p11x = mm(p11, axm).astype(bf16)
    p11y = mm(p11, aym).astype(bf16)
    p11xy = mm(p11, axym).astype(bf16)

    def w2(i, j):
        return w2s_ref[i * 3 + j]       # (32, 16)

    h2 = (mm(w2(1, 1), p00) + mm(w2(1, 2), p01) + mm(w2(1, 0), p01m)
          + mm(w2(2, 1), p10) + mm(w2(0, 1), p10m)
          + mm(w2(2, 2), p11) + mm(w2(2, 0), p11x) + mm(w2(0, 2), p11y)
          + mm(w2(0, 0), p11xy))
    h2 = jnp.maximum(h2 + b2_ref[...], 0.0).astype(bf16)   # (32, 49n), lanes (r, s)

    # ---- e3: Conv2d(32->64, 7x7) on a 7x7 input == plain GEMM, K = 32*49 ----
    for r in range(49):                 # lanes (r, s) -> rows (r, ci): tiny static copies
        col_ref[r * 32:(r + 1) * 32, :] = h2[:, r * n:(r + 1) * n]
    z = (mm(w3_ref[...], col_ref[...]) + b3_ref[...]).astype(bf16)   # (64, n), no act

    # ---- d1: ConvTranspose2d(64->32, 7x7) on a 1x1 input == plain GEMM, K = 64 ----
    h3s = jnp.maximum(mm(wd1_ref[...], z) + bd1_ref[...], 0.0).astype(bf16)  # (1568, n)
    for r in range(49):                 # rows (r, co) -> lanes (r, s)
        h3_ref[:, r * n:(r + 1) * n] = h3s[r * 32:(r + 1) * 32, :]
    h3 = h3_ref[...]                    # (32, 49n)

    # ---- d2: ConvTranspose2d(32->16, 3x3, s2, p1, op1) + ReLU, output-phase decomposed ----
    axp, ayp, axyp = axp_ref[...], ayp_ref[...], axyp_ref[...]
    h3x = mm(h3, axp).astype(bf16)      # value at (qy,   qx+1)
    h3y = mm(h3, ayp).astype(bf16)      # value at (qy+1, qx  )
    h3xy = mm(h3, axyp).astype(bf16)

    def wd2(ky, kx):
        return wd2s_ref[ky * 3 + kx]    # (16, 32)

    bd2 = bd2_ref[...]
    q00 = jnp.maximum(mm(wd2(1, 1), h3) + bd2, 0.0).astype(bf16)
    q01 = jnp.maximum(mm(wd2(1, 0), h3x) + mm(wd2(1, 2), h3) + bd2, 0.0).astype(bf16)
    q10 = jnp.maximum(mm(wd2(0, 1), h3y) + mm(wd2(2, 1), h3) + bd2, 0.0).astype(bf16)
    q11 = jnp.maximum(mm(wd2(0, 0), h3xy) + mm(wd2(0, 2), h3y)
                      + mm(wd2(2, 0), h3x) + mm(wd2(2, 2), h3) + bd2, 0.0).astype(bf16)

    # h4 (14x14) stored as 4 phase blocks of 7x7; assemble its three one-pixel
    # shifted views needed by d3 (block swap + small shift matmuls, all exact).
    q00x = mm(q00, axp).astype(bf16)
    q10x = mm(q10, axp).astype(bf16)
    q00y = mm(q00, ayp).astype(bf16)
    q01y = mm(q01, ayp).astype(bf16)
    q00xy = mm(q00, axyp).astype(bf16)

    for ref, blocks in (
        (h4_ref, (q00, q01, q10, q11)),        # h4[2qy+ry, 2qx+rx]
        (hx_ref, (q01, q00x, q11, q10x)),      # h4[..,     .. + 1]
        (hy_ref, (q10, q11, q00y, q01y)),      # h4[.. + 1, ..    ]
        (hxy_ref, (q11, q10x, q01y, q00xy)),   # h4[.. + 1, .. + 1]
    ):
        for b, blk in enumerate(blocks):
            ref[:, b * m7:(b + 1) * m7] = blk

    # ---- d3: ConvTranspose2d(16->3, 3x3, s2, p1, op1) + Sigmoid, phase decomposed ----
    def wd3(ky, kx):
        return wd3s_ref[ky * 3 + kx]    # (3, 16)

    def sigmoid(v):
        v = pl.reciprocal(1.0 + jnp.exp(-v), approx=True)   # EUP exp + approx rcp
        return jnp.clip(v, 0.0, 1.0)                        # mask approx-rcp error

    h4v, hxv, hyv, hxyv = h4_ref[...], hx_ref[...], hy_ref[...], hxy_ref[...]
    bd3 = bd3_ref[...]
    o00 = sigmoid(mm(wd3(1, 1), h4v) + bd3)
    o01 = sigmoid(mm(wd3(1, 0), hxv) + mm(wd3(1, 2), h4v) + bd3)
    o10 = sigmoid(mm(wd3(0, 1), hyv) + mm(wd3(2, 1), h4v) + bd3)
    o11 = sigmoid(mm(wd3(0, 0), hxyv) + mm(wd3(0, 2), hyv)
                  + mm(wd3(2, 0), hxv) + mm(wd3(2, 2), h4v) + bd3)

    o_ref[0] = o00.astype(o_ref.dtype)   # output phase (a, b) = (0, 0)
    o_ref[1] = o01.astype(o_ref.dtype)   # (0, 1)
    o_ref[2] = o10.astype(o_ref.dtype)   # (1, 0)
    o_ref[3] = o11.astype(o_ref.dtype)   # (1, 1)


# ----------------------------------------------------------------------------
# boundary layout glue (tiny tensors, runs in XLA inside the same jit)
# ----------------------------------------------------------------------------
def _build_e1_cols(x):
    """(N,3,28,28) -> (4, 27, 49N) bf16 im2col for e1, one block per output phase.

    Rows are (ci, ky, kx) to match the (16, 27) e1 weight matrix; columns of each
    block are ordered (qy, qx, sample).
    """
    n = x.shape[0]
    xp = jnp.pad(x, ((0, 0), (0, 0), (1, 1), (1, 1)))
    cols = []
    for i in range(3):
        for j in range(3):
            p = xp[:, :, i:i + 28:2, j:j + 28:2]          # (n, 3, 14, 14)
            p = p.reshape(n, 3, 7, 2, 7, 2)               # (n, ci, qy, py, qx, px)
            p = jnp.transpose(p, (3, 5, 1, 2, 4, 0))      # (py, px, ci, qy, qx, n)
            cols.append(p.reshape(4, 3, 49 * n))
    return jnp.stack(cols, axis=2).reshape(4, 27, 49 * n).astype(jnp.bfloat16)


def autoencoder_forward(q, x):
    n, c, h, w = x.shape
    assert (c, h, w) == (3, 28, 28), "fused kernel is specialized to 3x28x28 inputs"
    a1t = _build_e1_cols(x)

    out = pl.pallas_call(
        functools.partial(_autoencoder_kernel, n=n),
        out_shape=jax.ShapeDtypeStruct((4, 3, 196 * n), jnp.float32),
        scratch_shapes=[
            pltpu.VMEM((49 * 32, n), jnp.bfloat16),    # e3 gather buffer, rows (r, ci)
            pltpu.VMEM((32, 49 * n), jnp.bfloat16),    # h3 (decoder 7x7 map)
            pltpu.VMEM((16, 196 * n), jnp.bfloat16),   # h4 and its 3 shifted views
            pltpu.VMEM((16, 196 * n), jnp.bfloat16),
            pltpu.VMEM((16, 196 * n), jnp.bfloat16),
            pltpu.VMEM((16, 196 * n), jnp.bfloat16),
        ],
        compiler_params=pltpu.CompilerParams(vmem_limit_bytes=32 * 1024 * 1024),
    )(a1t, q["w1"], q["b1"], q["w2s"], q["b2"], q["w3"], q["b3"],
      q["wd1"], q["bd1"], q["wd2s"], q["bd2"], q["wd3s"], q["bd3"],
      q["axm"], q["aym"], q["axym"], q["axp"], q["ayp"], q["axyp"])

    # De-interleave phases: out[a*2+b, co, (ry*2+rx)*49n + (qy*7+qx)*n + s] is the
    # pixel (4qy + 2ry + a, 4qx + 2rx + b) of sample s.
    y = out.reshape(2, 2, 3, 2, 2, 7, 7, n)                  # (a, b, co, ry, rx, qy, qx, s)
    y = jnp.transpose(y, (7, 2, 5, 3, 0, 6, 4, 1))           # (s, co, qy, ry, a, qx, rx, b)
    return y.reshape(n, 3, 28, 28)


# ----------------------------------------------------------------------------
# parameters (PyTorch layouts) + one-time matmul-ready prep
# ----------------------------------------------------------------------------
def init_params(key):
    def w_init(k, shape, fan_in):
        bound = 1.0 / jnp.sqrt(fan_in)
        return jax.random.uniform(k, shape, jnp.float32, -bound, bound)

    ks = jax.random.split(key, 12)
    p = {}
    # encoder (Conv2d weight layout: (Cout, Cin, kh, kw))
    p["e1_w"] = w_init(ks[0], (16, 3, 3, 3), 3 * 9);    p["e1_b"] = w_init(ks[1], (16,), 3 * 9)
    p["e2_w"] = w_init(ks[2], (32, 16, 3, 3), 16 * 9);  p["e2_b"] = w_init(ks[3], (32,), 16 * 9)
    p["e3_w"] = w_init(ks[4], (64, 32, 7, 7), 32 * 49); p["e3_b"] = w_init(ks[5], (64,), 32 * 49)
    # decoder (ConvTranspose2d weight layout: (Cin, Cout, kh, kw))
    p["d1_w"] = w_init(ks[6], (64, 32, 7, 7), 32 * 49); p["d1_b"] = w_init(ks[7], (32,), 32 * 49)
    p["d2_w"] = w_init(ks[8], (32, 16, 3, 3), 16 * 9);  p["d2_b"] = w_init(ks[9], (16,), 16 * 9)
    p["d3_w"] = w_init(ks[10], (16, 3, 3, 3), 3 * 9);   p["d3_b"] = w_init(ks[11], (3,), 3 * 9)
    return p


def prepare_params(p, batch):
    """One-time prep: bf16 matmul-ready weights, f32 biases, lane-shift matrices."""
    bf16, f32 = jnp.bfloat16, jnp.float32

    def conv_taps(wt):    # Conv2d (Cout, Cin, 3, 3) -> (9, Cout, Cin), k = ky*3+kx
        return jnp.transpose(wt, (2, 3, 0, 1)).reshape(9, wt.shape[0], wt.shape[1]).astype(bf16)

    def convT_taps(wt):   # ConvTranspose2d (Cin, Cout, 3, 3) -> (9, Cout, Cin)
        return jnp.transpose(wt, (2, 3, 1, 0)).reshape(9, wt.shape[1], wt.shape[0]).astype(bf16)

    return {
        "w1": p["e1_w"].reshape(16, 27).astype(bf16),
        "b1": p["e1_b"].reshape(16, 1).astype(f32),
        "w2s": conv_taps(p["e2_w"]),
        "b2": p["e2_b"].reshape(32, 1).astype(f32),
        # e3 as a GEMM with columns ordered (r, ci) to match the in-kernel gather
        "w3": jnp.transpose(p["e3_w"], (0, 2, 3, 1)).reshape(64, 49 * 32).astype(bf16),
        "b3": p["e3_b"].reshape(64, 1).astype(f32),
        # d1 as a GEMM with rows ordered (r, co); PyTorch ConvT weight is (Cin, Cout, kh, kw)
        "wd1": jnp.transpose(p["d1_w"], (2, 3, 1, 0)).reshape(49 * 32, 64).astype(bf16),
        "bd1": jnp.tile(p["d1_b"], 49).reshape(49 * 32, 1).astype(f32),
        "wd2s": convT_taps(p["d2_w"]),
        "bd2": p["d2_b"].reshape(16, 1).astype(f32),
        "wd3s": convT_taps(p["d3_w"]),
        "bd3": p["d3_b"].reshape(3, 1).astype(f32),
        # exact 0/1 lane permutations for +-1 shifts of the 7x7 planes
        "axm": _lane_shift_matrix(batch, 0, -1),
        "aym": _lane_shift_matrix(batch, -1, 0),
        "axym": _lane_shift_matrix(batch, -1, -1),
        "axp": _lane_shift_matrix(batch, 0, 1),
        "ayp": _lane_shift_matrix(batch, 1, 0),
        "axyp": _lane_shift_matrix(batch, 1, 1),
    }


# ----------------------------------------------------------------------------
# pure-XLA f32 reference (correctness check only)
# ----------------------------------------------------------------------------
def reference_forward(p, x):
    def conv(x, w, b, s, pad):
        y = jax.lax.conv_general_dilated(
            x, w, window_strides=(s, s), padding=[(pad, pad), (pad, pad)],
            dimension_numbers=("NCHW", "OIHW", "NCHW"))
        return y + b.reshape(1, -1, 1, 1)

    def convT(x, w, b, s, pad, opad):
        kh, kw = w.shape[2], w.shape[3]
        w2 = jnp.flip(w, axis=(2, 3)).transpose(1, 0, 2, 3)
        y = jax.lax.conv_general_dilated(
            x, w2, window_strides=(1, 1),
            padding=[(kh - 1 - pad, kh - 1 - pad + opad),
                     (kw - 1 - pad, kw - 1 - pad + opad)],
            lhs_dilation=(s, s), dimension_numbers=("NCHW", "OIHW", "NCHW"))
        return y + b.reshape(1, -1, 1, 1)

    h = jax.nn.relu(conv(x, p["e1_w"], p["e1_b"], 2, 1))
    h = jax.nn.relu(conv(h, p["e2_w"], p["e2_b"], 2, 1))
    h = conv(h, p["e3_w"], p["e3_b"], 1, 0)
    h = jax.nn.relu(convT(h, p["d1_w"], p["d1_b"], 1, 0, 0))
    h = jax.nn.relu(convT(h, p["d2_w"], p["d2_b"], 2, 1, 1))
    h = jax.nn.sigmoid(convT(h, p["d3_w"], p["d3_b"], 2, 1, 1))
    return h


if __name__ == "__main__":
    key = jax.random.PRNGKey(0)
    k_param, k_x = jax.random.split(key)
    params = init_params(k_param)
    prepped = prepare_params(params, batch=2)
    # 28x28 is the smallest spatial size compatible with the 7x7 bottleneck conv
    x = jax.random.normal(k_x, (2, 3, 28, 28), dtype=jnp.float32)

    fwd = jax.jit(autoencoder_forward)
    y = fwd(prepped, x)
    jax.block_until_ready(y)

    assert y.shape == (2, 3, 28, 28), y.shape
    assert bool(jnp.all(jnp.isfinite(y)))
    assert bool(jnp.all((y >= 0.0) & (y <= 1.0)))   # sigmoid output range

    # correctness vs pure-XLA f32 reference (bf16 MXU operands -> loose tolerance)
    y_ref = jax.jit(reference_forward)(params, x)
    max_err = float(jnp.max(jnp.abs(y.astype(jnp.float32) - y_ref)))
    assert max_err < 5e-2, max_err

    print("KERNEL_OK")
</pallas_src>

<mosaic_0001>
module attributes {stable_mosaic.version = 11 : i64} {
  func.func @_autoencoder_kernel(%arg0: memref<4x27x98xbf16, #tpu.memory_space<vmem>>, %arg1: memref<16x27xbf16, #tpu.memory_space<vmem>>, %arg2: memref<16x1xf32, #tpu.memory_space<vmem>>, %arg3: memref<9x32x16xbf16, #tpu.memory_space<vmem>>, %arg4: memref<32x1xf32, #tpu.memory_space<vmem>>, %arg5: memref<64x1568xbf16, #tpu.memory_space<vmem>>, %arg6: memref<64x1xf32, #tpu.memory_space<vmem>>, %arg7: memref<1568x64xbf16, #tpu.memory_space<vmem>>, %arg8: memref<1568x1xf32, #tpu.memory_space<vmem>>, %arg9: memref<9x16x32xbf16, #tpu.memory_space<vmem>>, %arg10: memref<16x1xf32, #tpu.memory_space<vmem>>, %arg11: memref<9x3x16xbf16, #tpu.memory_space<vmem>>, %arg12: memref<3x1xf32, #tpu.memory_space<vmem>>, %arg13: memref<98x98xbf16, #tpu.memory_space<vmem>>, %arg14: memref<98x98xbf16, #tpu.memory_space<vmem>>, %arg15: memref<98x98xbf16, #tpu.memory_space<vmem>>, %arg16: memref<98x98xbf16, #tpu.memory_space<vmem>>, %arg17: memref<98x98xbf16, #tpu.memory_space<vmem>>, %arg18: memref<98x98xbf16, #tpu.memory_space<vmem>>, %arg19: memref<4x3x392xf32, #tpu.memory_space<vmem>>, %arg20: memref<1568x2xbf16, #tpu.memory_space<vmem>>, %arg21: memref<32x98xbf16, #tpu.memory_space<vmem>>, %arg22: memref<16x392xbf16, #tpu.memory_space<vmem>>, %arg23: memref<16x392xbf16, #tpu.memory_space<vmem>>, %arg24: memref<16x392xbf16, #tpu.memory_space<vmem>>, %arg25: memref<16x392xbf16, #tpu.memory_space<vmem>>) attributes {dimension_semantics = [], scalar_prefetch = 0 : i64, scratch_operands = 6 : i64, tpu.core_type = #tpu.core_type<tc>} {
    %c0 = arith.constant 0 : index
    %c0_0 = arith.constant 0 : index
    %0 = vector.load %arg1[%c0, %c0_0] : memref<16x27xbf16, #tpu.memory_space<vmem>>, vector<16x27xbf16>
    %c0_1 = arith.constant 0 : index
    %c0_2 = arith.constant 0 : index
    %1 = vector.load %arg2[%c0_1, %c0_2] : memref<16x1xf32, #tpu.memory_space<vmem>>, vector<16x1xf32>
    %c0_3 = arith.constant 0 : index
    %c0_4 = arith.constant 0 : index
    %c0_5 = arith.constant 0 : index
    %2 = vector.load %arg0[%c0_3, %c0_4, %c0_5] : memref<4x27x98xbf16, #tpu.memory_space<vmem>>, vector<1x27x98xbf16>
    %3 = vector.shape_cast %2 : vector<1x27x98xbf16> to vector<27x98xbf16>
    %cst = arith.constant dense<0.000000e+00> : vector<16x98xf32>
    %4 = tpu.matmul %0, %3, %cst {dimension_numbers = #tpu.dot_dimension_numbers<[1], [0], [0], [1], [0, 0, 1, 1], [], []>} : vector<16x27xbf16>, vector<27x98xbf16>, vector<16x98xf32> -> vector<16x98xf32>
    %5 = vector.broadcast %1 : vector<16x1xf32> to vector<16x98xf32>
    %6 = arith.addf %4, %5 : vector<16x98xf32>
    %cst_6 = arith.constant 0.000000e+00 : f32
    %7 = vector.broadcast %cst_6 : f32 to vector<16x98xf32>
    %8 = arith.maximumf %6, %7 : vector<16x98xf32>
    %9 = arith.truncf %8 : vector<16x98xf32> to vector<16x98xbf16>
    %c1 = arith.constant 1 : index
    %c0_7 = arith.constant 0 : index
    %c0_8 = arith.constant 0 : index
    %10 = vector.load %arg0[%c1, %c0_7, %c0_8] : memref<4x27x98xbf16, #tpu.memory_space<vmem>>, vector<1x27x98xbf16>
    %11 = vector.shape_cast %10 : vector<1x27x98xbf16> to vector<27x98xbf16>
    %cst_9 = arith.constant dense<0.000000e+00> : vector<16x98xf32>
    %12 = tpu.matmul %0, %11, %cst_9 {dimension_numbers = #tpu.dot_dimension_numbers<[1], [0], [0], [1], [0, 0, 1, 1], [], []>} : vector<16x27xbf16>, vector<27x98xbf16>, vector<16x98xf32> -> vector<16x98xf32>
    %13 = vector.broadcast %1 : vector<16x1xf32> to vector<16x98xf32>
    %14 = arith.addf %12, %13 : vector<16x98xf32>
    %cst_10 = arith.constant 0.000000e+00 : f32
    %15 = vector.broadcast %cst_10 : f32 to vector<16x98xf32>
    %16 = arith.maximumf %14, %15 : vector<16x98xf32>
    %17 = arith.truncf %16 : vector<16x98xf32> to vector<16x98xbf16>
    %c2 = arith.constant 2 : index
    %c0_11 = arith.constant 0 : index
    %c0_12 = arith.constant 0 : index
    %18 = vector.load %arg0[%c2, %c0_11, %c0_12] : memref<4x27x98xbf16, #tpu.memory_space<vmem>>, vector<1x27x98xbf16>
    %19 = vector.shape_cast %18 : vector<1x27x98xbf16> to vector<27x98xbf16>
    %cst_13 = arith.constant dense<0.000000e+00> : vector<16x98xf32>
    %20 = tpu.matmul %0, %19, %cst_13 {dimension_numbers = #tpu.dot_dimension_numbers<[1], [0], [0], [1], [0, 0, 1, 1], [], []>} : vector<16x27xbf16>, vector<27x98xbf16>, vector<16x98xf32> -> vector<16x98xf32>
    %21 = vector.broadcast %1 : vector<16x1xf32> to vector<16x98xf32>
    %22 = arith.addf %20, %21 : vector<16x98xf32>
    %cst_14 = arith.constant 0.000000e+00 : f32
    %23 = vector.broadcast %cst_14 : f32 to vector<16x98xf32>
    %24 = arith.maximumf %22, %23 : vector<16x98xf32>
    %25 = arith.truncf %24 : vector<16x98xf32> to vector<16x98xbf16>
    %c3 = arith.constant 3 : index
    %c0_15 = arith.constant 0 : index
    %c0_16 = arith.constant 0 : index
    %26 = vector.load %arg0[%c3, %c0_15, %c0_16] : memref<4x27x98xbf16, #tpu.memory_space<vmem>>, vector<1x27x98xbf16>
    %27 = vector.shape_cast %26 : vector<1x27x98xbf16> to vector<27x98xbf16>
    %cst_17 = arith.constant dense<0.000000e+00> : vector<16x98xf32>
    %28 = tpu.matmul %0, %27, %cst_17 {dimension_numbers = #tpu.dot_dimension_numbers<[1], [0], [0], [1], [0, 0, 1, 1], [], []>} : vector<16x27xbf16>, vector<27x98xbf16>, vector<16x98xf32> -> vector<16x98xf32>
    %29 = vector.broadcast %1 : vector<16x1xf32> to vector<16x98xf32>
    %30 = arith.addf %28, %29 : vector<16x98xf32>
    %cst_18 = arith.constant 0.000000e+00 : f32
    %31 = vector.broadcast %cst_18 : f32 to vector<16x98xf32>
    %32 = arith.maximumf %30, %31 : vector<16x98xf32>
    %33 = arith.truncf %32 : vector<16x98xf32> to vector<16x98xbf16>
    %c0_19 = arith.constant 0 : index
    %c0_20 = arith.constant 0 : index
    %34 = vector.load %arg13[%c0_19, %c0_20] : memref<98x98xbf16, #tpu.memory_space<vmem>>, vector<98x98xbf16>
    %c0_21 = arith.constant 0 : index
    %c0_22 = arith.constant 0 : index
    %35 = vector.load %arg14[%c0_21, %c0_22] : memref<98x98xbf16, #tpu.memory_space<vmem>>, vector<98x98xbf16>
    %c0_23 = arith.constant 0 : index
    %c0_24 = arith.constant 0 : index
    %36 = vector.load %arg15[%c0_23, %c0_24] : memref<98x98xbf16, #tpu.memory_space<vmem>>, vector<98x98xbf16>
    %cst_25 = arith.constant dense<0.000000e+00> : vector<16x98xf32>
    %37 = tpu.matmul %17, %34, %cst_25 {dimension_numbers = #tpu.dot_dimension_numbers<[1], [0], [0], [1], [0, 0, 1, 1], [], []>} : vector<16x98xbf16>, vector<98x98xbf16>, vector<16x98xf32> -> vector<16x98xf32>
    %38 = arith.truncf %37 : vector<16x98xf32> to vector<16x98xbf16>
    %cst_26 = arith.constant dense<0.000000e+00> : vector<16x98xf32>
    %39 = tpu.matmul %25, %35, %cst_26 {dimension_numbers = #tpu.dot_dimension_numbers<[1], [0], [0], [1], [0, 0, 1, 1], [], []>} : vector<16x98xbf16>, vector<98x98xbf16>, vector<16x98xf32> -> vector<16x98xf32>
    %40 = arith.truncf %39 : vector<16x98xf32> to vector<16x98xbf16>
    %cst_27 = arith.constant dense<0.000000e+00> : vector<16x98xf32>
    %41 = tpu.matmul %33, %34, %cst_27 {dimension_numbers = #tpu.dot_dimension_numbers<[1], [0], [0], [1], [0, 0, 1, 1], [], []>} : vector<16x98xbf16>, vector<98x98xbf16>, vector<16x98xf32> -> vector<16x98xf32>
    %42 = arith.truncf %41 : vector<16x98xf32> to vector<16x98xbf16>
    %cst_28 = arith.constant dense<0.000000e+00> : vector<16x98xf32>
    %43 = tpu.matmul %33, %35, %cst_28 {dimension_numbers = #tpu.dot_dimension_numbers<[1], [0], [0], [1], [0, 0, 1, 1], [], []>} : vector<16x98xbf16>, vector<98x98xbf16>, vector<16x98xf32> -> vector<16x98xf32>
    %44 = arith.truncf %43 : vector<16x98xf32> to vector<16x98xbf16>
    %cst_29 = arith.constant dense<0.000000e+00> : vector<16x98xf32>
    %45 = tpu.matmul %33, %36, %cst_29 {dimension_numbers = #tpu.dot_dimension_numbers<[1], [0], [0], [1], [0, 0, 1, 1], [], []>} : vector<16x98xbf16>, vector<98x98xbf16>, vector<16x98xf32> -> vector<16x98xf32>
    %46 = arith.truncf %45 : vector<16x98xf32> to vector<16x98xbf16>
    %c4 = arith.constant 4 : index
    %c0_30 = arith.constant 0 : index
    %c0_31 = arith.constant 0 : index
    %47 = vector.load %arg3[%c4, %c0_30, %c0_31] : memref<9x32x16xbf16, #tpu.memory_space<vmem>>, vector<1x32x16xbf16>
    %48 = vector.shape_cast %47 : vector<1x32x16xbf16> to vector<32x16xbf16>
    %cst_32 = arith.constant dense<0.000000e+00> : vector<32x98xf32>
    %49 = tpu.matmul %48, %9, %cst_32 {dimension_numbers = #tpu.dot_dimension_numbers<[1], [0], [0], [1], [0, 0, 1, 1], [], []>} : vector<32x16xbf16>, vector<16x98xbf16>, vector<32x98xf32> -> vector<32x98xf32>
    %c5 = arith.constant 5 : index
    %c0_33 = arith.constant 0 : index
    %c0_34 = arith.constant 0 : index
    %50 = vector.load %arg3[%c5, %c0_33, %c0_34] : memref<9x32x16xbf16, #tpu.memory_space<vmem>>, vector<1x32x16xbf16>
    %51 = vector.shape_cast %50 : vector<1x32x16xbf16> to vector<32x16xbf16>
    %cst_35 = arith.constant dense<0.000000e+00> : vector<32x98xf32>
    %52 = tpu.matmul %51, %17, %cst_35 {dimension_numbers = #tpu.dot_dimension_numbers<[1], [0], [0], [1], [0, 0, 1, 1], [], []>} : vector<32x16xbf16>, vector<16x98xbf16>, vector<32x98xf32> -> vector<32x98xf32>
    %53 = arith.addf %49, %52 : vector<32x98xf32>
    %c3_36 = arith.constant 3 : index
    %c0_37 = arith.constant 0 : index
    %c0_38 = arith.constant 0 : index
    %54 = vector.load %arg3[%c3_36, %c0_37, %c0_38] : memref<9x32x16xbf16, #tpu.memory_space<vmem>>, vector<1x32x16xbf16>
    %55 = vector.shape_cast %54 : vector<1x32x16xbf16> to vector<32x16xbf16>
    %cst_39 = arith.constant dense<0.000000e+00> : vector<32x98xf32>
    %56 = tpu.matmul %55, %38, %cst_39 {dimension_numbers = #tpu.dot_dimension_numbers<[1], [0], [0], [1], [0, 0, 1, 1], [], []>} : vector<32x16xbf16>, vector<16x98xbf16>, vector<32x98xf32> -> vector<32x98xf32>
    %57 = arith.addf %53, %56 : vector<32x98xf32>
    %c7 = arith.constant 7 : index
    %c0_40 = arith.constant 0 : index
    %c0_41 = arith.constant 0 : index
    %58 = vector.load %arg3[%c7, %c0_40, %c0_41] : memref<9x32x16xbf16, #tpu.memory_space<vmem>>, vector<1x32x16xbf16>
    %59 = vector.shape_cast %58 : vector<1x32x16xbf16> to vector<32x16xbf16>
    %cst_42 = arith.constant dense<0.000000e+00> : vector<32x98xf32>
    %60 = tpu.matmul %59, %25, %cst_42 {dimension_numbers = #tpu.dot_dimension_numbers<[1], [0], [0], [1], [0, 0, 1, 1], [], []>} : vector<32x16xbf16>, vector<16x98xbf16>, vector<32x98xf32> -> vector<32x98xf32>
    %61 = arith.addf %57, %60 : vector<32x98xf32>
    %c1_43 = arith.constant 1 : index
    %c0_44 = arith.constant 0 : index
    %c0_45 = arith.constant 0 : index
    %62 = vector.load %arg3[%c1_43, %c0_44, %c0_45] : memref<9x32x16xbf16, #tpu.memory_space<vmem>>, vector<1x32x16xbf16>
    %63 = vector.shape_cast %62 : vector<1x32x16xbf16> to vector<32x16xbf16>
    %cst_46 = arith.constant dense<0.000000e+00> : vector<32x98xf32>
    %64 = tpu.matmul %63, %40, %cst_46 {dimension_numbers = #tpu.dot_dimension_numbers<[1], [0], [0], [1], [0, 0, 1, 1], [], []>} : vector<32x16xbf16>, vector<16x98xbf16>, vector<32x98xf32> -> vector<32x98xf32>
    %65 = arith.addf %61, %64 : vector<32x98xf32>
    %c8 = arith.constant 8 : index
    %c0_47 = arith.constant 0 : index
    %c0_48 = arith.constant 0 : index
    %66 = vector.load %arg3[%c8, %c0_47, %c0_48] : memref<9x32x16xbf16, #tpu.memory_space<vmem>>, vector<1x32x16xbf16>
    %67 = vector.shape_cast %66 : vector<1x32x16xbf16> to vector<32x16xbf16>
    %cst_49 = arith.constant dense<0.000000e+00> : vector<32x98xf32>
    %68 = tpu.matmul %67, %33, %cst_49 {dimension_numbers = #tpu.dot_dimension_numbers<[1], [0], [0], [1], [0, 0, 1, 1], [], []>} : vector<32x16xbf16>, vector<16x98xbf16>, vector<32x98xf32> -> vector<32x98xf32>
    %69 = arith.addf %65, %68 : vector<32x98xf32>
    %c6 = arith.constant 6 : index
    %c0_50 = arith.constant 0 : index
    %c0_51 = arith.constant 0 : index
    %70 = vector.load %arg3[%c6, %c0_50, %c0_51] : memref<9x32x16xbf16, #tpu.memory_space<vmem>>, vector<1x32x16xbf16>
    %71 = vector.shape_cast %70 : vector<1x32x16xbf16> to vector<32x16xbf16>
    %cst_52 = arith.constant dense<0.000000e+00> : vector<32x98xf32>
    %72 = tpu.matmul %71, %42, %cst_52 {dimension_numbers = #tpu.dot_dimension_numbers<[1], [0], [0], [1], [0, 0, 1, 1], [], []>} : vector<32x16xbf16>, vector<16x98xbf16>, vector<32x98xf32> -> vector<32x98xf32>
    %73 = arith.addf %69, %72 : vector<32x98xf32>
    %c2_53 = arith.constant 2 : index
    %c0_54 = arith.constant 0 : index
    %c0_55 = arith.constant 0 : index
    %74 = vector.load %arg3[%c2_53, %c0_54, %c0_55] : memref<9x32x16xbf16, #tpu.memory_space<vmem>>, vector<1x32x16xbf16>
    %75 = vector.shape_cast %74 : vector<1x32x16xbf16> to vector<32x16xbf16>
    %cst_56 = arith.constant dense<0.000000e+00> : vector<32x98xf32>
    %76 = tpu.matmul %75, %44, %cst_56 {dimension_numbers = #tpu.dot_dimension_numbers<[1], [0], [0], [1], [0, 0, 1, 1], [], []>} : vector<32x16xbf16>, vector<16x98xbf16>, vector<32x98xf32> -> vector<32x98xf32>
    %77 = arith.addf %73, %76 : vector<32x98xf32>
    %c0_57 = arith.constant 0 : index
    %c0_58 = arith.constant 0 : index
    %c0_59 = arith.constant 0 : index
    %78 = vector.load %arg3[%c0_57, %c0_58, %c0_59] : memref<9x32x16xbf16, #tpu.memory_space<vmem>>, vector<1x32x16xbf16>
    %79 = vector.shape_cast %78 : vector<1x32x16xbf16> to vector<32x16xbf16>
    %cst_60 = arith.constant dense<0.000000e+00> : vector<32x98xf32>
    %80 = tpu.matmul %79, %46, %cst_60 {dimension_numbers = #tpu.dot_dimension_numbers<[1], [0], [0], [1], [0, 0, 1, 1], [], []>} : vector<32x16xbf16>, vector<16x98xbf16>, vector<32x98xf32> -> vector<32x98xf32>
    %81 = arith.addf %77, %80 : vector<32x98xf32>
    %c0_61 = arith.constant 0 : index
    %c0_62 = arith.constant 0 : index
    %82 = vector.load %arg4[%c0_61, %c0_62] : memref<32x1xf32, #tpu.memory_space<vmem>>, vector<32x1xf32>
    %83 = vector.broadcast %82 : vector<32x1xf32> to vector<32x98xf32>
    %84 = arith.addf %81, %83 : vector<32x98xf32>
    %cst_63 = arith.constant 0.000000e+00 : f32
    %85 = vector.broadcast %cst_63 : f32 to vector<32x98xf32>
    %86 = arith.maximumf %84, %85 : vector<32x98xf32>
    %87 = arith.truncf %86 : vector<32x98xf32> to vector<32x98xbf16>
    %88 = vector.extract_strided_slice %87 {offsets = [0, 0], sizes = [32, 2], strides = [1, 1]} : vector<32x98xbf16> to vector<32x2xbf16>
    %c0_64 = arith.constant 0 : index
    %c0_65 = arith.constant 0 : index
    %89 = vector.load %arg20[%c0_64, %c0_65] : memref<1568x2xbf16, #tpu.memory_space<vmem>>, vector<32x2xbf16>
    tpu.vector_store %arg20[%c0_64, %c0_65], %88 {strides = array<i32>} : memref<1568x2xbf16, #tpu.memory_space<vmem>>, vector<32x2xbf16>,
    %90 = vector.extract_strided_slice %87 {offsets = [0, 2], sizes = [32, 2], strides = [1, 1]} : vector<32x98xbf16> to vector<32x2xbf16>
    %c32 = arith.constant 32 : index
    %c0_66 = arith.constant 0 : index
    %91 = vector.load %arg20[%c32, %c0_66] : memref<1568x2xbf16, #tpu.memory_space<vmem>>, vector<32x2xbf16>
    tpu.vector_store %arg20[%c32, %c0_66], %90 {strides = array<i32>} : memref<1568x2xbf16, #tpu.memory_space<vmem>>, vector<32x2xbf16>,
    %92 = vector.extract_strided_slice %87 {offsets = [0, 4], sizes = [32, 2], strides = [1, 1]} : vector<32x98xbf16> to vector<32x2xbf16>
    %c64 = arith.constant 64 : index
    %c0_67 = arith.constant 0 : index
    %93 = vector.load %arg20[%c64, %c0_67] : memref<1568x2xbf16, #tpu.memory_space<vmem>>, vector<32x2xbf16>
    tpu.vector_store %arg20[%c64, %c0_67], %92 {strides = array<i32>} : memref<1568x2xbf16, #tpu.memory_space<vmem>>, vector<32x2xbf16>,
    %94 = vector.extract_strided_slice %87 {offsets = [0, 6], sizes = [32, 2], strides = [1, 1]} : vector<32x98xbf16> to vector<32x2xbf16>
    %c96 = arith.constant 96 : index
    %c0_68 = arith.constant 0 : index
    %95 = vector.load %arg20[%c96, %c0_68] : memref<1568x2xbf16, #tpu.memory_space<vmem>>, vector<32x2xbf16>
    tpu.vector_store %arg20[%c96, %c0_68], %94 {strides = array<i32>} : memref<1568x2xbf16, #tpu.memory_space<vmem>>, vector<32x2xbf16>,
    %96 = vector.extract_strided_slice %87 {offsets = [0, 8], sizes = [32, 2], strides = [1, 1]} : vector<32x98xbf16> to vector<32x2xbf16>
    %c128 = arith.constant 128 : index
    %c0_69 = arith.constant 0 : index
    %97 = vector.load %arg20[%c128, %c0_69] : memref<1568x2xbf16, #tpu.memory_space<vmem>>, vector<32x2xbf16>
    tpu.vector_store %arg20[%c128, %c0_69], %96 {strides = array<i32>} : memref<1568x2xbf16, #tpu.memory_space<vmem>>, vector<32x2xbf16>,
    %98 = vector.extract_strided_slice %87 {offsets = [0, 10], sizes = [32, 2], strides = [1, 1]} : vector<32x98xbf16> to vector<32x2xbf16>
    %c160 = arith.constant 160 : index
    %c0_70 = arith.constant 0 : index
    %99 = vector.load %arg20[%c160, %c0_70] : memref<1568x2xbf16, #tpu.memory_space<vmem>>, vector<32x2xbf16>
    tpu.vector_store %arg20[%c160, %c0_70], %98 {strides = array<i32>} : memref<1568x2xbf16, #tpu.memory_space<vmem>>, vector<32x2xbf16>,
    %100 = vector.extract_strided_slice %87 {offsets = [0, 12], sizes = [32, 2], strides = [1, 1]} : vector<32x98xbf16> to vector<32x2xbf16>
    %c192 = arith.constant 192 : index
    %c0_71 = arith.constant 0 : index
    %101 = vector.load %arg20[%c192, %c0_71] : memref<1568x2xbf16, #tpu.memory_space<vmem>>, vector<32x2xbf16>
    tpu.vector_store %arg20[%c192, %c0_71], %100 {strides = array<i32>} : memref<1568x2xbf16, #tpu.memory_space<vmem>>, vector<32x2xbf16>,
    %102 = vector.extract_strided_slice %87 {offsets = [0, 14], sizes = [32, 2], strides = [1, 1]} : vector<32x98xbf16> to vector<32x2xbf16>
    %c224 = arith.constant 224 : index
    %c0_72 = arith.constant 0 : index
    %103 = vector.load %arg20[%c224, %c0_72] : memref<1568x2xbf16, #tpu.memory_space<vmem>>, vector<32x2xbf16>
    tpu.vector_store %arg20[%c224, %c0_72], %102 {strides = array<i32>} : memref<1568x2xbf16, #tpu.memory_space<vmem>>, vector<32x2xbf16>,
    %104 = vector.extract_strided_slice %87 {offsets = [0, 16], sizes = [32, 2], strides = [1, 1]} : vector<32x98xbf16> to vector<32x2xbf16>
    %c256 = arith.constant 256 : index
    %c0_73 = arith.constant 0 : index
    %105 = vector.load %arg20[%c256, %c0_73] : memref<1568x2xbf16, #tpu.memory_space<vmem>>, vector<32x2xbf16>
    tpu.vector_store %arg20[%c256, %c0_73], %104 {strides = array<i32>} : memref<1568x2xbf16, #tpu.memory_space<vmem>>, vector<32x2xbf16>,
    %106 = vector.extract_strided_slice %87 {offsets = [0, 18], sizes = [32, 2], strides = [1, 1]} : vector<32x98xbf16> to vector<32x2xbf16>
    %c288 = arith.constant 288 : index
    %c0_74 = arith.constant 0 : index
    %107 = vector.load %arg20[%c288, %c0_74] : memref<1568x2xbf16, #tpu.memory_space<vmem>>, vector<32x2xbf16>
    tpu.vector_store %arg20[%c288, %c0_74], %106 {strides = array<i32>} : memref<1568x2xbf16, #tpu.memory_space<vmem>>, vector<32x2xbf16>,
    %108 = vector.extract_strided_slice %87 {offsets = [0, 20], sizes = [32, 2], strides = [1, 1]} : vector<32x98xbf16> to vector<32x2xbf16>
    %c320 = arith.constant 320 : index
    %c0_75 = arith.constant 0 : index
    %109 = vector.load %arg20[%c320, %c0_75] : memref<1568x2xbf16, #tpu.memory_space<vmem>>, vector<32x2xbf16>
    tpu.vector_store %arg20[%c320, %c0_75], %108 {strides = array<i32>} : memref<1568x2xbf16, #tpu.memory_space<vmem>>, vector<32x2xbf16>,
    %110 = vector.extract_strided_slice %87 {offsets = [0, 22], sizes = [32, 2], strides = [1, 1]} : vector<32x98xbf16> to vector<32x2xbf16>
    %c352 = arith.constant 352 : index
    %c0_76 = arith.constant 0 : index
    %111 = vector.load %arg20[%c352, %c0_76] : memref<1568x2xbf16, #tpu.memory_space<vmem>>, vector<32x2xbf16>
    tpu.vector_store %arg20[%c352, %c0_76], %110 {strides = array<i32>} : memref<1568x2xbf16, #tpu.memory_space<vmem>>, vector<32x2xbf16>,
    %112 = vector.extract_strided_slice %87 {offsets = [0, 24], sizes = [32, 2], strides = [1, 1]} : vector<32x98xbf16> to vector<32x2xbf16>
    %c384 = arith.constant 384 : index
    %c0_77 = arith.constant 0 : index
    %113 = vector.load %arg20[%c384, %c0_77] : memref<1568x2xbf16, #tpu.memory_space<vmem>>, vector<32x2xbf16>
    tpu.vector_store %arg20[%c384, %c0_77], %112 {strides = array<i32>} : memref<1568x2xbf16, #tpu.memory_space<vmem>>, vector<32x2xbf16>,
    %114 = vector.extract_strided_slice %87 {offsets = [0, 26], sizes = [32, 2], strides = [1, 1]} : vector<32x98xbf16> to vector<32x2xbf16>
    %c416 = arith.constant 416 : index
    %c0_78 = arith.constant 0 : index
    %115 = vector.load %arg20[%c416, %c0_78] : memref<1568x2xbf16, #tpu.memory_space<vmem>>, vector<32x2xbf16>
    tpu.vector_store %arg20[%c416, %c0_78], %114 {strides = array<i32>} : memref<1568x2xbf16, #tpu.memory_space<vmem>>, vector<32x2xbf16>,
    %116 = vector.extract_strided_slice %87 {offsets = [0, 28], sizes = [32, 2], strides = [1, 1]} : vector<32x98xbf16> to vector<32x2xbf16>
    %c448 = arith.constant 448 : index
    %c0_79 = arith.constant 0 : index
    %117 = vector.load %arg20[%c448, %c0_79] : memref<1568x2xbf16, #tpu.memory_space<vmem>>, vector<32x2xbf16>
    tpu.vector_store %arg20[%c448, %c0_79], %116 {strides = array<i32>} : memref<1568x2xbf16, #tpu.memory_space<vmem>>, vector<32x2xbf16>,
    %118 = vector.extract_strided_slice %87 {offsets = [0, 30], sizes = [32, 2], strides = [1, 1]} : vector<32x98xbf16> to vector<32x2xbf16>
    %c480 = arith.constant 480 : index
    %c0_80 = arith.constant 0 : index
    %119 = vector.load %arg20[%c480, %c0_80] : memref<1568x2xbf16, #tpu.memory_space<vmem>>, vector<32x2xbf16>
    tpu.vector_store %arg20[%c480, %c0_80], %118 {strides = array<i32>} : memref<1568x2xbf16, #tpu.memory_space<vmem>>, vector<32x2xbf16>,
    %120 = vector.extract_strided_slice %87 {offsets = [0, 32], sizes = [32, 2], strides = [1, 1]} : vector<32x98xbf16> to vector<32x2xbf16>
    %c512 = arith.constant 512 : index
    %c0_81 = arith.constant 0 : index
    %121 = vector.load %arg20[%c512, %c0_81] : memref<1568x2xbf16, #tpu.memory_space<vmem>>, vector<32x2xbf16>
    tpu.vector_store %arg20[%c512, %c0_81], %120 {strides = array<i32>} : memref<1568x2xbf16, #tpu.memory_space<vmem>>, vector<32x2xbf16>,
    %122 = vector.extract_strided_slice %87 {offsets = [0, 34], sizes = [32, 2], strides = [1, 1]} : vector<32x98xbf16> to vector<32x2xbf16>
    %c544 = arith.constant 544 : index
    %c0_82 = arith.constant 0 : index
    %123 = vector.load %arg20[%c544, %c0_82] : memref<1568x2xbf16, #tpu.memory_space<vmem>>, vector<32x2xbf16>
    tpu.vector_store %arg20[%c544, %c0_82], %122 {strides = array<i32>} : memref<1568x2xbf16, #tpu.memory_space<vmem>>, vector<32x2xbf16>,
    %124 = vector.extract_strided_slice %87 {offsets = [0, 36], sizes = [32, 2], strides = [1, 1]} : vector<32x98xbf16> to vector<32x2xbf16>
    %c576 = arith.constant 576 : index
    %c0_83 = arith.constant 0 : index
    %125 = vector.load %arg20[%c576, %c0_83] : memref<1568x2xbf16, #tpu.memory_space<vmem>>, vector<32x2xbf16>
    tpu.vector_store %arg20[%c576, %c0_83], %124 {strides = array<i32>} : memref<1568x2xbf16, #tpu.memory_space<vmem>>, vector<32x2xbf16>,
    %126 = vector.extract_strided_slice %87 {offsets = [0, 38], sizes = [32, 2], strides = [1, 1]} : vector<32x98xbf16> to vector<32x2xbf16>
    %c608 = arith.constant 608 : index
    %c0_84 = arith.constant 0 : index
    %127 = vector.load %arg20[%c608, %c0_84] : memref<1568x2xbf16, #tpu.memory_space<vmem>>, vector<32x2xbf16>
    tpu.vector_store %arg20[%c608, %c0_84], %126 {strides = array<i32>} : memref<1568x2xbf16, #tpu.memory_space<vmem>>, vector<32x2xbf16>,
    %128 = vector.extract_strided_slice %87 {offsets = [0, 40], sizes = [32, 2], strides = [1, 1]} : vector<32x98xbf16> to vector<32x2xbf16>
    %c640 = arith.constant 640 : index
    %c0_85 = arith.constant 0 : index
    %129 = vector.load %arg20[%c640, %c0_85] : memref<1568x2xbf16, #tpu.memory_space<vmem>>, vector<32x2xbf16>
    tpu.vector_store %arg20[%c640, %c0_85], %128 {strides = array<i32>} : memref<1568x2xbf16, #tpu.memory_space<vmem>>, vector<32x2xbf16>,
    %130 = vector.extract_strided_slice %87 {offsets = [0, 42], sizes = [32, 2], strides = [1, 1]} : vector<32x98xbf16> to vector<32x2xbf16>
    %c672 = arith.constant 672 : index
    %c0_86 = arith.constant 0 : index
    %131 = vector.load %arg20[%c672, %c0_86] : memref<1568x2xbf16, #tpu.memory_space<vmem>>, vector<32x2xbf16>
    tpu.vector_store %arg20[%c672, %c0_86], %130 {strides = array<i32>} : memref<1568x2xbf16, #tpu.memory_space<vmem>>, vector<32x2xbf16>,
    %132 = vector.extract_strided_slice %87 {offsets = [0, 44], sizes = [32, 2], strides = [1, 1]} : vector<32x98xbf16> to vector<32x2xbf16>
    %c704 = arith.constant 704 : index
    %c0_87 = arith.constant 0 : index
    %133 = vector.load %arg20[%c704, %c0_87] : memref<1568x2xbf16, #tpu.memory_space<vmem>>, vector<32x2xbf16>
    tpu.vector_store %arg20[%c704, %c0_87], %132 {strides = array<i32>} : memref<1568x2xbf16, #tpu.memory_space<vmem>>, vector<32x2xbf16>,
    %134 = vector.extract_strided_slice %87 {offsets = [0, 46], sizes = [32, 2], strides = [1, 1]} : vector<32x98xbf16> to vector<32x2xbf16>
    %c736 = arith.constant 736 : index
    %c0_88 = arith.constant 0 : index
    %135 = vector.load %arg20[%c736, %c0_88] : memref<1568x2xbf16, #tpu.memory_space<vmem>>, vector<32x2xbf16>
    tpu.vector_store %arg20[%c736, %c0_88], %134 {strides = array<i32>} : memref<1568x2xbf16, #tpu.memory_space<vmem>>, vector<32x2xbf16>,
    %136 = vector.extract_strided_slice %87 {offsets = [0, 48], sizes = [32, 2], strides = [1, 1]} : vector<32x98xbf16> to vector<32x2xbf16>
    %c768 = arith.constant 768 : index
    %c0_89 = arith.constant 0 : index
    %137 = vector.load %arg20[%c768, %c0_89] : memref<1568x2xbf16, #tpu.memory_space<vmem>>, vector<32x2xbf16>
    tpu.vector_store %arg20[%c768, %c0_89], %136 {strides = array<i32>} : memref<1568x2xbf16, #tpu.memory_space<vmem>>, vector<32x2xbf16>,
    %138 = vector.extract_strided_slice %87 {offsets = [0, 50], sizes = [32, 2], strides = [1, 1]} : vector<32x98xbf16> to vector<32x2xbf16>
    %c800 = arith.constant 800 : index
    %c0_90 = arith.constant 0 : index
    %139 = vector.load %arg20[%c800, %c0_90] : memref<1568x2xbf16, #tpu.memory_space<vmem>>, vector<32x2xbf16>
    tpu.vector_store %arg20[%c800, %c0_90], %138 {strides = array<i32>} : memref<1568x2xbf16, #tpu.memory_space<vmem>>, vector<32x2xbf16>,
    %140 = vector.extract_strided_slice %87 {offsets = [0, 52], sizes = [32, 2], strides = [1, 1]} : vector<32x98xbf16> to vector<32x2xbf16>
    %c832 = arith.constant 832 : index
    %c0_91 = arith.constant 0 : index
    %141 = vector.load %arg20[%c832, %c0_91] : memref<1568x2xbf16, #tpu.memory_space<vmem>>, vector<32x2xbf16>
    tpu.vector_store %arg20[%c832, %c0_91], %140 {strides = array<i32>} : memref<1568x2xbf16, #tpu.memory_space<vmem>>, vector<32x2xbf16>,
    %142 = vector.extract_strided_slice %87 {offsets = [0, 54], sizes = [32, 2], strides = [1, 1]} : vector<32x98xbf16> to vector<32x2xbf16>
    %c864 = arith.constant 864 : index
    %c0_92 = arith.constant 0 : index
    %143 = vector.load %arg20[%c864, %c0_92] : memref<1568x2xbf16, #tpu.memory_space<vmem>>, vector<32x2xbf16>
    tpu.vector_store %arg20[%c864, %c0_92], %142 {strides = array<i32>} : memref<1568x2xbf16, #tpu.memory_space<vmem>>, vector<32x2xbf16>,
    %144 = vector.extract_strided_slice %87 {offsets = [0, 56], sizes = [32, 2], strides = [1, 1]} : vector<32x98xbf16> to vector<32x2xbf16>
    %c896 = arith.constant 896 : index
    %c0_93 = arith.constant 0 : index
    %145 = vector.load %arg20[%c896, %c0_93] : memref<1568x2xbf16, #tpu.memory_space<vmem>>, vector<32x2xbf16>
    tpu.vector_store %arg20[%c896, %c0_93], %144 {strides = array<i32>} : memref<1568x2xbf16, #tpu.memory_space<vmem>>, vector<32x2xbf16>,
    %146 = vector.extract_strided_slice %87 {offsets = [0, 58], sizes = [32, 2], strides = [1, 1]} : vector<32x98xbf16> to vector<32x2xbf16>
    %c928 = arith.constant 928 : index
    %c0_94 = arith.constant 0 : index
    %147 = vector.load %arg20[%c928, %c0_94] : memref<1568x2xbf16, #tpu.memory_space<vmem>>, vector<32x2xbf16>
    tpu.vector_store %arg20[%c928, %c0_94], %146 {strides = array<i32>} : memref<1568x2xbf16, #tpu.memory_space<vmem>>, vector<32x2xbf16>,
    %148 = vector.extract_strided_slice %87 {offsets = [0, 60], sizes = [32, 2], strides = [1, 1]} : vector<32x98xbf16> to vector<32x2xbf16>
    %c960 = arith.constant 960 : index
    %c0_95 = arith.constant 0 : index
    %149 = vector.load %arg20[%c960, %c0_95] : memref<1568x2xbf16, #tpu.memory_space<vmem>>, vector<32x2xbf16>
    tpu.vector_store %arg20[%c960, %c0_95], %148 {strides = array<i32>} : memref<1568x2xbf16, #tpu.memory_space<vmem>>, vector<32x2xbf16>,
    %150 = vector.extract_strided_slice %87 {offsets = [0, 62], sizes = [32, 2], strides = [1, 1]} : vector<32x98xbf16> to vector<32x2xbf16>
    %c992 = arith.constant 992 : index
    %c0_96 = arith.constant 0 : index
    %151 = vector.load %arg20[%c992, %c0_96] : memref<1568x2xbf16, #tpu.memory_space<vmem>>, vector<32x2xbf16>
    tpu.vector_store %arg20[%c992, %c0_96], %150 {strides = array<i32>} : memref<1568x2xbf16, #tpu.memory_space<vmem>>, vector<32x2xbf16>,
    %152 = vector.extract_strided_slice %87 {offsets = [0, 64], sizes = [32, 2], strides = [1, 1]} : vector<32x98xbf16> to vector<32x2xbf16>
    %c1024 = arith.constant 1024 : index
    %c0_97 = arith.constant 0 : index
    %153 = vector.load %arg20[%c1024, %c0_97] : memref<1568x2xbf16, #tpu.memory_space<vmem>>, vector<32x2xbf16>
    tpu.vector_store %arg20[%c1024, %c0_97], %152 {strides = array<i32>} : memref<1568x2xbf16, #tpu.memory_space<vmem>>, vector<32x2xbf16>,
    %154 = vector.extract_strided_slice %87 {offsets = [0, 66], sizes = [32, 2], strides = [1, 1]} : vector<32x98xbf16> to vector<32x2xbf16>
    %c1056 = arith.constant 1056 : index
    %c0_98 = arith.constant 0 : index
    %155 = vector.load %arg20[%c1056, %c0_98] : memref<1568x2xbf16, #tpu.memory_space<vmem>>, vector<32x2xbf16>
    tpu.vector_store %arg20[%c1056, %c0_98], %154 {strides = array<i32>} : memref<1568x2xbf16, #tpu.memory_space<vmem>>, vector<32x2xbf16>,
    %156 = vector.extract_strided_slice %87 {offsets = [0, 68], sizes = [32, 2], strides = [1, 1]} : vector<32x98xbf16> to vector<32x2xbf16>
    %c1088 = arith.constant 1088 : index
    %c0_99 = arith.constant 0 : index
    %157 = vector.load %arg20[%c1088, %c0_99] : memref<1568x2xbf16, #tpu.memory_space<vmem>>, vector<32x2xbf16>
    tpu.vector_store %arg20[%c1088, %c0_99], %156 {strides = array<i32>} : memref<1568x2xbf16, #tpu.memory_space<vmem>>, vector<32x2xbf16>,
    %158 = vector.extract_strided_slice %87 {offsets = [0, 70], sizes = [32, 2], strides = [1, 1]} : vector<32x98xbf16> to vector<32x2xbf16>
    %c1120 = arith.constant 1120 : index
    %c0_100 = arith.constant 0 : index
    %159 = vector.load %arg20[%c1120, %c0_100] : memref<1568x2xbf16, #tpu.memory_space<vmem>>, vector<32x2xbf16>
    tpu.vector_store %arg20[%c1120, %c0_100], %158 {strides = array<i32>} : memref<1568x2xbf16, #tpu.memory_space<vmem>>, vector<32x2xbf16>,
    %160 = vector.extract_strided_slice %87 {offsets = [0, 72], sizes = [32, 2], strides = [1, 1]} : vector<32x98xbf16> to vector<32x2xbf16>
    %c1152 = arith.constant 1152 : index
    %c0_101 = arith.constant 0 : index
    %161 = vector.load %arg20[%c1152, %c0_101] : memref<1568x2xbf16, #tpu.memory_space<vmem>>, vector<32x2xbf16>
    tpu.vector_store %arg20[%c1152, %c0_101], %160 {strides = array<i32>} : memref<1568x2xbf16, #tpu.memory_space<vmem>>, vector<32x2xbf16>,
    %162 = vector.extract_strided_slice %87 {offsets = [0, 74], sizes = [32, 2], strides = [1, 1]} : vector<32x98xbf16> to vector<32x2xbf16>
    %c1184 = arith.constant 1184 : index
    %c0_102 = arith.constant 0 : index
    %163 = vector.load %arg20[%c1184, %c0_102] : memref<1568x2xbf16, #tpu.memory_space<vmem>>, vector<32x2xbf16>
    tpu.vector_store %arg20[%c1184, %c0_102], %162 {strides = array<i32>} : memref<1568x2xbf16, #tpu.memory_space<vmem>>, vector<32x2xbf16>,
    %164 = vector.extract_strided_slice %87 {offsets = [0, 76], sizes = [32, 2], strides = [1, 1]} : vector<32x98xbf16> to vector<32x2xbf16>
    %c1216 = arith.constant 1216 : index
    %c0_103 = arith.constant 0 : index
    %165 = vector.load %arg20[%c1216, %c0_103] : memref<1568x2xbf16, #tpu.memory_space<vmem>>, vector<32x2xbf16>
    tpu.vector_store %arg20[%c1216, %c0_103], %164 {strides = array<i32>} : memref<1568x2xbf16, #tpu.memory_space<vmem>>, vector<32x2xbf16>,
    %166 = vector.extract_strided_slice %87 {offsets = [0, 78], sizes = [32, 2], strides = [1, 1]} : vector<32x98xbf16> to vector<32x2xbf16>
    %c1248 = arith.constant 1248 : index
    %c0_104 = arith.constant 0 : index
    %167 = vector.load %arg20[%c1248, %c0_104] : memref<1568x2xbf16, #tpu.memory_space<vmem>>, vector<32x2xbf16>
    tpu.vector_store %arg20[%c1248, %c0_104], %166 {strides = array<i32>} : memref<1568x2xbf16, #tpu.memory_space<vmem>>, vector<32x2xbf16>,
    %168 = vector.extract_strided_slice %87 {offsets = [0, 80], sizes = [32, 2], strides = [1, 1]} : vector<32x98xbf16> to vector<32x2xbf16>
    %c1280 = arith.constant 1280 : index
    %c0_105 = arith.constant 0 : index
    %169 = vector.load %arg20[%c1280, %c0_105] : memref<1568x2xbf16, #tpu.memory_space<vmem>>, vector<32x2xbf16>
    tpu.vector_store %arg20[%c1280, %c0_105], %168 {strides = array<i32>} : memref<1568x2xbf16, #tpu.memory_space<vmem>>, vector<32x2xbf16>,
    %170 = vector.extract_strided_slice %87 {offsets = [0, 82], sizes = [32, 2], strides = [1, 1]} : vector<32x98xbf16> to vector<32x2xbf16>
    %c1312 = arith.constant 1312 : index
    %c0_106 = arith.constant 0 : index
    %171 = vector.load %arg20[%c1312, %c0_106] : memref<1568x2xbf16, #tpu.memory_space<vmem>>, vector<32x2xbf16>
    tpu.vector_store %arg20[%c1312, %c0_106], %170 {strides = array<i32>} : memref<1568x2xbf16, #tpu.memory_space<vmem>>, vector<32x2xbf16>,
    %172 = vector.extract_strided_slice %87 {offsets = [0, 84], sizes = [32, 2], strides = [1, 1]} : vector<32x98xbf16> to vector<32x2xbf16>
    %c1344 = arith.constant 1344 : index
    %c0_107 = arith.constant 0 : index
    %173 = vector.load %arg20[%c1344, %c0_107] : memref<1568x2xbf16, #tpu.memory_space<vmem>>, vector<32x2xbf16>
    tpu.vector_store %arg20[%c1344, %c0_107], %172 {strides = array<i32>} : memref<1568x2xbf16, #tpu.memory_space<vmem>>, vector<32x2xbf16>,
    %174 = vector.extract_strided_slice %87 {offsets = [0, 86], sizes = [32, 2], strides = [1, 1]} : vector<32x98xbf16> to vector<32x2xbf16>
    %c1376 = arith.constant 1376 : index
    %c0_108 = arith.constant 0 : index
    %175 = vector.load %arg20[%c1376, %c0_108] : memref<1568x2xbf16, #tpu.memory_space<vmem>>, vector<32x2xbf16>
    tpu.vector_store %arg20[%c1376, %c0_108], %174 {strides = array<i32>} : memref<1568x2xbf16, #tpu.memory_space<vmem>>, vector<32x2xbf16>,
    %176 = vector.extract_strided_slice %87 {offsets = [0, 88], sizes = [32, 2], strides = [1, 1]} : vector<32x98xbf16> to vector<32x2xbf16>
    %c1408 = arith.constant 1408 : index
    %c0_109 = arith.constant 0 : index
    %177 = vector.load %arg20[%c1408, %c0_109] : memref<1568x2xbf16, #tpu.memory_space<vmem>>, vector<32x2xbf16>
    tpu.vector_store %arg20[%c1408, %c0_109], %176 {strides = array<i32>} : memref<1568x2xbf16, #tpu.memory_space<vmem>>, vector<32x2xbf16>,
    %178 = vector.extract_strided_slice %87 {offsets = [0, 90], sizes = [32, 2], strides = [1, 1]} : vector<32x98xbf16> to vector<32x2xbf16>
    %c1440 = arith.constant 1440 : index
    %c0_110 = arith.constant 0 : index
    %179 = vector.load %arg20[%c1440, %c0_110] : memref<1568x2xbf16, #tpu.memory_space<vmem>>, vector<32x2xbf16>
    tpu.vector_store %arg20[%c1440, %c0_110], %178 {strides = array<i32>} : memref<1568x2xbf16, #tpu.memory_space<vmem>>, vector<32x2xbf16>,
    %180 = vector.extract_strided_slice %87 {offsets = [0, 92], sizes = [32, 2], strides = [1, 1]} : vector<32x98xbf16> to vector<32x2xbf16>
    %c1472 = arith.constant 1472 : index
    %c0_111 = arith.constant 0 : index
    %181 = vector.load %arg20[%c1472, %c0_111] : memref<1568x2xbf16, #tpu.memory_space<vmem>>, vector<32x2xbf16>
    tpu.vector_store %arg20[%c1472, %c0_111], %180 {strides = array<i32>} : memref<1568x2xbf16, #tpu.memory_space<vmem>>, vector<32x2xbf16>,
    %182 = vector.extract_strided_slice %87 {offsets = [0, 94], sizes = [32, 2], strides = [1, 1]} : vector<32x98xbf16> to vector<32x2xbf16>
    %c1504 = arith.constant 1504 : index
    %c0_112 = arith.constant 0 : index
    %183 = vector.load %arg20[%c1504, %c0_112] : memref<1568x2xbf16, #tpu.memory_space<vmem>>, vector<32x2xbf16>
    tpu.vector_store %arg20[%c1504, %c0_112], %182 {strides = array<i32>} : memref<1568x2xbf16, #tpu.memory_space<vmem>>, vector<32x2xbf16>,
    %184 = vector.extract_strided_slice %87 {offsets = [0, 96], sizes = [32, 2], strides = [1, 1]} : vector<32x98xbf16> to vector<32x2xbf16>
    %c1536 = arith.constant 1536 : index
    %c0_113 = arith.constant 0 : index
    %185 = vector.load %arg20[%c1536, %c0_113] : memref<1568x2xbf16, #tpu.memory_space<vmem>>, vector<32x2xbf16>
    tpu.vector_store %arg20[%c1536, %c0_113], %184 {strides = array<i32>} : memref<1568x2xbf16, #tpu.memory_space<vmem>>, vector<32x2xbf16>,
    %c0_114 = arith.constant 0 : index
    %c0_115 = arith.constant 0 : index
    %186 = vector.load %arg5[%c0_114, %c0_115] : memref<64x1568xbf16, #tpu.memory_space<vmem>>, vector<64x1568xbf16>
    %c0_116 = arith.constant 0 : index
    %c0_117 = arith.constant 0 : index
    %187 = vector.load %arg20[%c0_116, %c0_117] : memref<1568x2xbf16, #tpu.memory_space<vmem>>, vector<1568x2xbf16>
    %cst_118 = arith.constant dense<0.000000e+00> : vector<64x2xf32>
    %188 = tpu.matmul %186, %187, %cst_118 {dimension_numbers = #tpu.dot_dimension_numbers<[1], [0], [0], [1], [0, 0, 1, 1], [], []>} : vector<64x1568xbf16>, vector<1568x2xbf16>, vector<64x2xf32> -> vector<64x2xf32>
    %c0_119 = arith.constant 0 : index
    %c0_120 = arith.constant 0 : index
    %189 = vector.load %arg6[%c0_119, %c0_120] : memref<64x1xf32, #tpu.memory_space<vmem>>, vector<64x1xf32>
    %190 = vector.broadcast %189 : vector<64x1xf32> to vector<64x2xf32>
    %191 = arith.addf %188, %190 : vector<64x2xf32>
    %192 = arith.truncf %191 : vector<64x2xf32> to vector<64x2xbf16>
    %c0_121 = arith.constant 0 : index
    %c0_122 = arith.constant 0 : index
    %193 = vector.load %arg7[%c0_121, %c0_122] : memref<1568x64xbf16, #tpu.memory_space<vmem>>, vector<1568x64xbf16>
    %cst_123 = arith.constant dense<0.000000e+00> : vector<1568x2xf32>
    %194 = tpu.matmul %193, %192, %cst_123 {dimension_numbers = #tpu.dot_dimension_numbers<[1], [0], [0], [1], [0, 0, 1, 1], [], []>} : vector<1568x64xbf16>, vector<64x2xbf16>, vector<1568x2xf32> -> vector<1568x2xf32>
    %c0_124 = arith.constant 0 : index
    %c0_125 = arith.constant 0 : index
    %195 = vector.load %arg8[%c0_124, %c0_125] : memref<1568x1xf32, #tpu.memory_space<vmem>>, vector<1568x1xf32>
    %196 = vector.broadcast %195 : vector<1568x1xf32> to vector<1568x2xf32>
    %197 = arith.addf %194, %196 : vector<1568x2xf32>
    %cst_126 = arith.constant 0.000000e+00 : f32
    %198 = vector.broadcast %cst_126 : f32 to vector<1568x2xf32>
    %199 = arith.maximumf %197, %198 : vector<1568x2xf32>
    %200 = arith.truncf %199 : vector<1568x2xf32> to vector<1568x2xbf16>
    %201 = vector.extract_strided_slice %200 {offsets = [0, 0], sizes = [32, 2], strides = [1, 1]} : vector<1568x2xbf16> to vector<32x2xbf16>
    %c0_127 = arith.constant 0 : index
    %c0_128 = arith.constant 0 : index
    %202 = vector.load %arg21[%c0_127, %c0_128] : memref<32x98xbf16, #tpu.memory_space<vmem>>, vector<32x2xbf16>
    tpu.vector_store %arg21[%c0_127, %c0_128], %201 {strides = array<i32>} : memref<32x98xbf16, #tpu.memory_space<vmem>>, vector<32x2xbf16>,
    %203 = vector.extract_strided_slice %200 {offsets = [32, 0], sizes = [32, 2], strides = [1, 1]} : vector<1568x2xbf16> to vector<32x2xbf16>
    %c0_129 = arith.constant 0 : index
    %c2_130 = arith.constant 2 : index
    %204 = vector.load %arg21[%c0_129, %c2_130] : memref<32x98xbf16, #tpu.memory_space<vmem>>, vector<32x2xbf16>
    tpu.vector_store %arg21[%c0_129, %c2_130], %203 {strides = array<i32>} : memref<32x98xbf16, #tpu.memory_space<vmem>>, vector<32x2xbf16>,
    %205 = vector.extract_strided_slice %200 {offsets = [64, 0], sizes = [32, 2], strides = [1, 1]} : vector<1568x2xbf16> to vector<32x2xbf16>
    %c0_131 = arith.constant 0 : index
    %c4_132 = arith.constant 4 : index
    %206 = vector.load %arg21[%c0_131, %c4_132] : memref<32x98xbf16, #tpu.memory_space<vmem>>, vector<32x2xbf16>
    tpu.vector_store %arg21[%c0_131, %c4_132], %205 {strides = array<i32>} : memref<32x98xbf16, #tpu.memory_space<vmem>>, vector<32x2xbf16>,
    %207 = vector.extract_strided_slice %200 {offsets = [96, 0], sizes = [32, 2], strides = [1, 1]} : vector<1568x2xbf16> to vector<32x2xbf16>
    %c0_133 = arith.constant 0 : index
    %c6_134 = arith.constant 6 : index
    %208 = vector.load %arg21[%c0_133, %c6_134] : memref<32x98xbf16, #tpu.memory_space<vmem>>, vector<32x2xbf16>
    tpu.vector_store %arg21[%c0_133, %c6_134], %207 {strides = array<i32>} : memref<32x98xbf16, #tpu.memory_space<vmem>>, vector<32x2xbf16>,
    %209 = vector.extract_strided_slice %200 {offsets = [128, 0], sizes = [32, 2], strides = [1, 1]} : vector<1568x2xbf16> to vector<32x2xbf16>
    %c0_135 = arith.constant 0 : index
    %c8_136 = arith.constant 8 : index
    %210 = vector.load %arg21[%c0_135, %c8_136] : memref<32x98xbf16, #tpu.memory_space<vmem>>, vector<32x2xbf16>
    tpu.vector_store %arg21[%c0_135, %c8_136], %209 {strides = array<i32>} : memref<32x98xbf16, #tpu.memory_space<vmem>>, vector<32x2xbf16>,
    %211 = vector.extract_strided_slice %200 {offsets = [160, 0], sizes = [32, 2], strides = [1, 1]} : vector<1568x2xbf16> to vector<32x2xbf16>
    %c0_137 = arith.constant 0 : index
    %c10 = arith.constant 10 : index
    %212 = vector.load %arg21[%c0_137, %c10] : memref<32x98xbf16, #tpu.memory_space<vmem>>, vector<32x2xbf16>
    tpu.vector_store %arg21[%c0_137, %c10], %211 {strides = array<i32>} : memref<32x98xbf16, #tpu.memory_space<vmem>>, vector<32x2xbf16>,
    %213 = vector.extract_strided_slice %200 {offsets = [192, 0], sizes = [32, 2], strides = [1, 1]} : vector<1568x2xbf16> to vector<32x2xbf16>
    %c0_138 = arith.constant 0 : index
    %c12 = arith.constant 12 : index
    %214 = vector.load %arg21[%c0_138, %c12] : memref<32x98xbf16, #tpu.memory_space<vmem>>, vector<32x2xbf16>
    tpu.vector_store %arg21[%c0_138, %c12], %213 {strides = array<i32>} : memref<32x98xbf16, #tpu.memory_space<vmem>>, vector<32x2xbf16>,
    %215 = vector.extract_strided_slice %200 {offsets = [224, 0], sizes = [32, 2], strides = [1, 1]} : vector<1568x2xbf16> to vector<32x2xbf16>
    %c0_139 = arith.constant 0 : index
    %c14 = arith.constant 14 : index
    %216 = vector.load %arg21[%c0_139, %c14] : memref<32x98xbf16, #tpu.memory_space<vmem>>, vector<32x2xbf16>
    tpu.vector_store %arg21[%c0_139, %c14], %215 {strides = array<i32>} : memref<32x98xbf16, #tpu.memory_space<vmem>>, vector<32x2xbf16>,
    %217 = vector.extract_strided_slice %200 {offsets = [256, 0], sizes = [32, 2], strides = [1, 1]} : vector<1568x2xbf16> to vector<32x2xbf16>
    %c0_140 = arith.constant 0 : index
    %c16 = arith.constant 16 : index
    %218 = vector.load %arg21[%c0_140, %c16] : memref<32x98xbf16, #tpu.memory_space<vmem>>, vector<32x2xbf16>
    tpu.vector_store %arg21[%c0_140, %c16], %217 {strides = array<i32>} : memref<32x98xbf16, #tpu.memory_space<vmem>>, vector<32x2xbf16>,
    %219 = vector.extract_strided_slice %200 {offsets = [288, 0], sizes = [32, 2], strides = [1, 1]} : vector<1568x2xbf16> to vector<32x2xbf16>
    %c0_141 = arith.constant 0 : index
    %c18 = arith.constant 18 : index
    %220 = vector.load %arg21[%c0_141, %c18] : memref<32x98xbf16, #tpu.memory_space<vmem>>, vector<32x2xbf16>
    tpu.vector_store %arg21[%c0_141, %c18], %219 {strides = array<i32>} : memref<32x98xbf16, #tpu.memory_space<vmem>>, vector<32x2xbf16>,
    %221 = vector.extract_strided_slice %200 {offsets = [320, 0], sizes = [32, 2], strides = [1, 1]} : vector<1568x2xbf16> to vector<32x2xbf16>
    %c0_142 = arith.constant 0 : index
    %c20 = arith.constant 20 : index
    %222 = vector.load %arg21[%c0_142, %c20] : memref<32x98xbf16, #tpu.memory_space<vmem>>, vector<32x2xbf16>
    tpu.vector_store %arg21[%c0_142, %c20], %221 {strides = array<i32>} : memref<32x98xbf16, #tpu.memory_space<vmem>>, vector<32x2xbf16>,
    %223 = vector.extract_strided_slice %200 {offsets = [352, 0], sizes = [32, 2], strides = [1, 1]} : vector<1568x2xbf16> to vector<32x2xbf16>
    %c0_143 = arith.constant 0 : index
    %c22 = arith.constant 22 : index
    %224 = vector.load %arg21[%c0_143, %c22] : memref<32x98xbf16, #tpu.memory_space<vmem>>, vector<32x2xbf16>
    tpu.vector_store %arg21[%c0_143, %c22], %223 {strides = array<i32>} : memref<32x98xbf16, #tpu.memory_space<vmem>>, vector<32x2xbf16>,
    %225 = vector.extract_strided_slice %200 {offsets = [384, 0], sizes = [32, 2], strides = [1, 1]} : vector<1568x2xbf16> to vector<32x2xbf16>
    %c0_144 = arith.constant 0 : index
    %c24 = arith.constant 24 : index
    %226 = vector.load %arg21[%c0_144, %c24] : memref<32x98xbf16, #tpu.memory_space<vmem>>, vector<32x2xbf16>
    tpu.vector_store %arg21[%c0_144, %c24], %225 {strides = array<i32>} : memref<32x98xbf16, #tpu.memory_space<vmem>>, vector<32x2xbf16>,
    %227 = vector.extract_strided_slice %200 {offsets = [416, 0], sizes = [32, 2], strides = [1, 1]} : vector<1568x2xbf16> to vector<32x2xbf16>
    %c0_145 = arith.constant 0 : index
    %c26 = arith.constant 26 : index
    %228 = vector.load %arg21[%c0_145, %c26] : memref<32x98xbf16, #tpu.memory_space<vmem>>, vector<32x2xbf16>
    tpu.vector_store %arg21[%c0_145, %c26], %227 {strides = array<i32>} : memref<32x98xbf16, #tpu.memory_space<vmem>>, vector<32x2xbf16>,
    %229 = vector.extract_strided_slice %200 {offsets = [448, 0], sizes = [32, 2], strides = [1, 1]} : vector<1568x2xbf16> to vector<32x2xbf16>
    %c0_146 = arith.constant 0 : index
    %c28 = arith.constant 28 : index
    %230 = vector.load %arg21[%c0_146, %c28] : memref<32x98xbf16, #tpu.memory_space<vmem>>, vector<32x2xbf16>
    tpu.vector_store %arg21[%c0_146, %c28], %229 {strides = array<i32>} : memref<32x98xbf16, #tpu.memory_space<vmem>>, vector<32x2xbf16>,
    %231 = vector.extract_strided_slice %200 {offsets = [480, 0], sizes = [32, 2], strides = [1, 1]} : vector<1568x2xbf16> to vector<32x2xbf16>
    %c0_147 = arith.constant 0 : index
    %c30 = arith.constant 30 : index
    %232 = vector.load %arg21[%c0_147, %c30] : memref<32x98xbf16, #tpu.memory_space<vmem>>, vector<32x2xbf16>
    tpu.vector_store %arg21[%c0_147, %c30], %231 {strides = array<i32>} : memref<32x98xbf16, #tpu.memory_space<vmem>>, vector<32x2xbf16>,
    %233 = vector.extract_strided_slice %200 {offsets = [512, 0], sizes = [32, 2], strides = [1, 1]} : vector<1568x2xbf16> to vector<32x2xbf16>
    %c0_148 = arith.constant 0 : index
    %c32_149 = arith.constant 32 : index
    %234 = vector.load %arg21[%c0_148, %c32_149] : memref<32x98xbf16, #tpu.memory_space<vmem>>, vector<32x2xbf16>
    tpu.vector_store %arg21[%c0_148, %c32_149], %233 {strides = array<i32>} : memref<32x98xbf16, #tpu.memory_space<vmem>>, vector<32x2xbf16>,
    %235 = vector.extract_strided_slice %200 {offsets = [544, 0], sizes = [32, 2], strides = [1, 1]} : vector<1568x2xbf16> to vector<32x2xbf16>
    %c0_150 = arith.constant 0 : index
    %c34 = arith.constant 34 : index
    %236 = vector.load %arg21[%c0_150, %c34] : memref<32x98xbf16, #tpu.memory_space<vmem>>, vector<32x2xbf16>
    tpu.vector_store %arg21[%c0_150, %c34], %235 {strides = array<i32>} : memref<32x98xbf16, #tpu.memory_space<vmem>>, vector<32x2xbf16>,
    %237 = vector.extract_strided_slice %200 {offsets = [576, 0], sizes = [32, 2], strides = [1, 1]} : vector<1568x2xbf16> to vector<32x2xbf16>
    %c0_151 = arith.constant 0 : index
    %c36 = arith.constant 36 : index
    %238 = vector.load %arg21[%c0_151, %c36] : memref<32x98xbf16, #tpu.memory_space<vmem>>, vector<32x2xbf16>
    tpu.vector_store %arg21[%c0_151, %c36], %237 {strides = array<i32>} : memref<32x98xbf16, #tpu.memory_space<vmem>>, vector<32x2xbf16>,
    %239 = vector.extract_strided_slice %200 {offsets = [608, 0], sizes = [32, 2], strides = [1, 1]} : vector<1568x2xbf16> to vector<32x2xbf16>
    %c0_152 = arith.constant 0 : index
    %c38 = arith.constant 38 : index
    %240 = vector.load %arg21[%c0_152, %c38] : memref<32x98xbf16, #tpu.memory_space<vmem>>, vector<32x2xbf16>
    tpu.vector_store %arg21[%c0_152, %c38], %239 {strides = array<i32>} : memref<32x98xbf16, #tpu.memory_space<vmem>>, vector<32x2xbf16>,
    %241 = vector.extract_strided_slice %200 {offsets = [640, 0], sizes = [32, 2], strides = [1, 1]} : vector<1568x2xbf16> to vector<32x2xbf16>
    %c0_153 = arith.constant 0 : index
    %c40 = arith.constant 40 : index
    %242 = vector.load %arg21[%c0_153, %c40] : memref<32x98xbf16, #tpu.memory_space<vmem>>, vector<32x2xbf16>
    tpu.vector_store %arg21[%c0_153, %c40], %241 {strides = array<i32>} : memref<32x98xbf16, #tpu.memory_space<vmem>>, vector<32x2xbf16>,
    %243 = vector.extract_strided_slice %200 {offsets = [672, 0], sizes = [32, 2], strides = [1, 1]} : vector<1568x2xbf16> to vector<32x2xbf16>
    %c0_154 = arith.constant 0 : index
    %c42 = arith.constant 42 : index
    %244 = vector.load %arg21[%c0_154, %c42] : memref<32x98xbf16, #tpu.memory_space<vmem>>, vector<32x2xbf16>
    tpu.vector_store %arg21[%c0_154, %c42], %243 {strides = array<i32>} : memref<32x98xbf16, #tpu.memory_space<vmem>>, vector<32x2xbf16>,
    %245 = vector.extract_strided_slice %200 {offsets = [704, 0], sizes = [32, 2], strides = [1, 1]} : vector<1568x2xbf16> to vector<32x2xbf16>
    %c0_155 = arith.constant 0 : index
    %c44 = arith.constant 44 : index
    %246 = vector.load %arg21[%c0_155, %c44] : memref<32x98xbf16, #tpu.memory_space<vmem>>, vector<32x2xbf16>
    tpu.vector_store %arg21[%c0_155, %c44], %245 {strides = array<i32>} : memref<32x98xbf16, #tpu.memory_space<vmem>>, vector<32x2xbf16>,
    %247 = vector.extract_strided_slice %200 {offsets = [736, 0], sizes = [32, 2], strides = [1, 1]} : vector<1568x2xbf16> to vector<32x2xbf16>
    %c0_156 = arith.constant 0 : index
    %c46 = arith.constant 46 : index
    %248 = vector.load %arg21[%c0_156, %c46] : memref<32x98xbf16, #tpu.memory_space<vmem>>, vector<32x2xbf16>
    tpu.vector_store %arg21[%c0_156, %c46], %247 {strides = array<i32>} : memref<32x98xbf16, #tpu.memory_space<vmem>>, vector<32x2xbf16>,
    %249 = vector.extract_strided_slice %200 {offsets = [768, 0], sizes = [32, 2], strides = [1, 1]} : vector<1568x2xbf16> to vector<32x2xbf16>
    %c0_157 = arith.constant 0 : index
    %c48 = arith.constant 48 : index
    %250 = vector.load %arg21[%c0_157, %c48] : memref<32x98xbf16, #tpu.memory_space<vmem>>, vector<32x2xbf16>
    tpu.vector_store %arg21[%c0_157, %c48], %249 {strides = array<i32>} : memref<32x98xbf16, #tpu.memory_space<vmem>>, vector<32x2xbf16>,
    %251 = vector.extract_strided_slice %200 {offsets = [800, 0], sizes = [32, 2], strides = [1, 1]} : vector<1568x2xbf16> to vector<32x2xbf16>
    %c0_158 = arith.constant 0 : index
    %c50 = arith.constant 50 : index
    %252 = vector.load %arg21[%c0_158, %c50] : memref<32x98xbf16, #tpu.memory_space<vmem>>, vector<32x2xbf16>
    tpu.vector_store %arg21[%c0_158, %c50], %251 {strides = array<i32>} : memref<32x98xbf16, #tpu.memory_space<vmem>>, vector<32x2xbf16>,
    %253 = vector.extract_strided_slice %200 {offsets = [832, 0], sizes = [32, 2], strides = [1, 1]} : vector<1568x2xbf16> to vector<32x2xbf16>
    %c0_159 = arith.constant 0 : index
    %c52 = arith.constant 52 : index
    %254 = vector.load %arg21[%c0_159, %c52] : memref<32x98xbf16, #tpu.memory_space<vmem>>, vector<32x2xbf16>
    tpu.vector_store %arg21[%c0_159, %c52], %253 {strides = array<i32>} : memref<32x98xbf16, #tpu.memory_space<vmem>>, vector<32x2xbf16>,
    %255 = vector.extract_strided_slice %200 {offsets = [864, 0], sizes = [32, 2], strides = [1, 1]} : vector<1568x2xbf16> to vector<32x2xbf16>
    %c0_160 = arith.constant 0 : index
    %c54 = arith.constant 54 : index
    %256 = vector.load %arg21[%c0_160, %c54] : memref<32x98xbf16, #tpu.memory_space<vmem>>, vector<32x2xbf16>
    tpu.vector_store %arg21[%c0_160, %c54], %255 {strides = array<i32>} : memref<32x98xbf16, #tpu.memory_space<vmem>>, vector<32x2xbf16>,
    %257 = vector.extract_strided_slice %200 {offsets = [896, 0], sizes = [32, 2], strides = [1, 1]} : vector<1568x2xbf16> to vector<32x2xbf16>
    %c0_161 = arith.constant 0 : index
    %c56 = arith.constant 56 : index
    %258 = vector.load %arg21[%c0_161, %c56] : memref<32x98xbf16, #tpu.memory_space<vmem>>, vector<32x2xbf16>
    tpu.vector_store %arg21[%c0_161, %c56], %257 {strides = array<i32>} : memref<32x98xbf16, #tpu.memory_space<vmem>>, vector<32x2xbf16>,
    %259 = vector.extract_strided_slice %200 {offsets = [928, 0], sizes = [32, 2], strides = [1, 1]} : vector<1568x2xbf16> to vector<32x2xbf16>
    %c0_162 = arith.constant 0 : index
    %c58 = arith.constant 58 : index
    %260 = vector.load %arg21[%c0_162, %c58] : memref<32x98xbf16, #tpu.memory_space<vmem>>, vector<32x2xbf16>
    tpu.vector_store %arg21[%c0_162, %c58], %259 {strides = array<i32>} : memref<32x98xbf16, #tpu.memory_space<vmem>>, vector<32x2xbf16>,
    %261 = vector.extract_strided_slice %200 {offsets = [960, 0], sizes = [32, 2], strides = [1, 1]} : vector<1568x2xbf16> to vector<32x2xbf16>
    %c0_163 = arith.constant 0 : index
    %c60 = arith.constant 60 : index
    %262 = vector.load %arg21[%c0_163, %c60] : memref<32x98xbf16, #tpu.memory_space<vmem>>, vector<32x2xbf16>
    tpu.vector_store %arg21[%c0_163, %c60], %261 {strides = array<i32>} : memref<32x98xbf16, #tpu.memory_space<vmem>>, vector<32x2xbf16>,
    %263 = vector.extract_strided_slice %200 {offsets = [992, 0], sizes = [32, 2], strides = [1, 1]} : vector<1568x2xbf16> to vector<32x2xbf16>
    %c0_164 = arith.constant 0 : index
    %c62 = arith.constant 62 : index
    %264 = vector.load %arg21[%c0_164, %c62] : memref<32x98xbf16, #tpu.memory_space<vmem>>, vector<32x2xbf16>
    tpu.vector_store %arg21[%c0_164, %c62], %263 {strides = array<i32>} : memref<32x98xbf16, #tpu.memory_space<vmem>>, vector<32x2xbf16>,
    %265 = vector.extract_strided_slice %200 {offsets = [1024, 0], sizes = [32, 2], strides = [1, 1]} : vector<1568x2xbf16> to vector<32x2xbf16>
    %c0_165 = arith.constant 0 : index
    %c64_166 = arith.constant 64 : index
    %266 = vector.load %arg21[%c0_165, %c64_166] : memref<32x98xbf16, #tpu.memory_space<vmem>>, vector<32x2xbf16>
    tpu.vector_store %arg21[%c0_165, %c64_166], %265 {strides = array<i32>} : memref<32x98xbf16, #tpu.memory_space<vmem>>, vector<32x2xbf16>,
    %267 = vector.extract_strided_slice %200 {offsets = [1056, 0], sizes = [32, 2], strides = [1, 1]} : vector<1568x2xbf16> to vector<32x2xbf16>
    %c0_167 = arith.constant 0 : index
    %c66 = arith.constant 66 : index
    %268 = vector.load %arg21[%c0_167, %c66] : memref<32x98xbf16, #tpu.memory_space<vmem>>, vector<32x2xbf16>
    tpu.vector_store %arg21[%c0_167, %c66], %267 {strides = array<i32>} : memref<32x98xbf16, #tpu.memory_space<vmem>>, vector<32x2xbf16>,
    %269 = vector.extract_strided_slice %200 {offsets = [1088, 0], sizes = [32, 2], strides = [1, 1]} : vector<1568x2xbf16> to vector<32x2xbf16>
    %c0_168 = arith.constant 0 : index
    %c68 = arith.constant 68 : index
    %270 = vector.load %arg21[%c0_168, %c68] : memref<32x98xbf16, #tpu.memory_space<vmem>>, vector<32x2xbf16>
    tpu.vector_store %arg21[%c0_168, %c68], %269 {strides = array<i32>} : memref<32x98xbf16, #tpu.memory_space<vmem>>, vector<32x2xbf16>,
    %271 = vector.extract_strided_slice %200 {offsets = [1120, 0], sizes = [32, 2], strides = [1, 1]} : vector<1568x2xbf16> to vector<32x2xbf16>
    %c0_169 = arith.constant 0 : index
    %c70 = arith.constant 70 : index
    %272 = vector.load %arg21[%c0_169, %c70] : memref<32x98xbf16, #tpu.memory_space<vmem>>, vector<32x2xbf16>
    tpu.vector_store %arg21[%c0_169, %c70], %271 {strides = array<i32>} : memref<32x98xbf16, #tpu.memory_space<vmem>>, vector<32x2xbf16>,
    %273 = vector.extract_strided_slice %200 {offsets = [1152, 0], sizes = [32, 2], strides = [1, 1]} : vector<1568x2xbf16> to vector<32x2xbf16>
    %c0_170 = arith.constant 0 : index
    %c72 = arith.constant 72 : index
    %274 = vector.load %arg21[%c0_170, %c72] : memref<32x98xbf16, #tpu.memory_space<vmem>>, vector<32x2xbf16>
    tpu.vector_store %arg21[%c0_170, %c72], %273 {strides = array<i32>} : memref<32x98xbf16, #tpu.memory_space<vmem>>, vector<32x2xbf16>,
    %275 = vector.extract_strided_slice %200 {offsets = [1184, 0], sizes = [32, 2], strides = [1, 1]} : vector<1568x2xbf16> to vector<32x2xbf16>
    %c0_171 = arith.constant 0 : index
    %c74 = arith.constant 74 : index
    %276 = vector.load %arg21[%c0_171, %c74] : memref<32x98xbf16, #tpu.memory_space<vmem>>, vector<32x2xbf16>
    tpu.vector_store %arg21[%c0_171, %c74], %275 {strides = array<i32>} : memref<32x98xbf16, #tpu.memory_space<vmem>>, vector<32x2xbf16>,
    %277 = vector.extract_strided_slice %200 {offsets = [1216, 0], sizes = [32, 2], strides = [1, 1]} : vector<1568x2xbf16> to vector<32x2xbf16>
    %c0_172 = arith.constant 0 : index
    %c76 = arith.constant 76 : index
    %278 = vector.load %arg21[%c0_172, %c76] : memref<32x98xbf16, #tpu.memory_space<vmem>>, vector<32x2xbf16>
    tpu.vector_store %arg21[%c0_172, %c76], %277 {strides = array<i32>} : memref<32x98xbf16, #tpu.memory_space<vmem>>, vector<32x2xbf16>,
    %279 = vector.extract_strided_slice %200 {offsets = [1248, 0], sizes = [32, 2], strides = [1, 1]} : vector<1568x2xbf16> to vector<32x2xbf16>
    %c0_173 = arith.constant 0 : index
    %c78 = arith.constant 78 : index
    %280 = vector.load %arg21[%c0_173, %c78] : memref<32x98xbf16, #tpu.memory_space<vmem>>, vector<32x2xbf16>
    tpu.vector_store %arg21[%c0_173, %c78], %279 {strides = array<i32>} : memref<32x98xbf16, #tpu.memory_space<vmem>>, vector<32x2xbf16>,
    %281 = vector.extract_strided_slice %200 {offsets = [1280, 0], sizes = [32, 2], strides = [1, 1]} : vector<1568x2xbf16> to vector<32x2xbf16>
    %c0_174 = arith.constant 0 : index
    %c80 = arith.constant 80 : index
    %282 = vector.load %arg21[%c0_174, %c80] : memref<32x98xbf16, #tpu.memory_space<vmem>>, vector<32x2xbf16>
    tpu.vector_store %arg21[%c0_174, %c80], %281 {strides = array<i32>} : memref<32x98xbf16, #tpu.memory_space<vmem>>, vector<32x2xbf16>,
    %283 = vector.extract_strided_slice %200 {offsets = [1312, 0], sizes = [32, 2], strides = [1, 1]} : vector<1568x2xbf16> to vector<32x2xbf16>
    %c0_175 = arith.constant 0 : index
    %c82 = arith.constant 82 : index
    %284 = vector.load %arg21[%c0_175, %c82] : memref<32x98xbf16, #tpu.memory_space<vmem>>, vector<32x2xbf16>
    tpu.vector_store %arg21[%c0_175, %c82], %283 {strides = array<i32>} : memref<32x98xbf16, #tpu.memory_space<vmem>>, vector<32x2xbf16>,
    %285 = vector.extract_strided_slice %200 {offsets = [1344, 0], sizes = [32, 2], strides = [1, 1]} : vector<1568x2xbf16> to vector<32x2xbf16>
    %c0_176 = arith.constant 0 : index
    %c84 = arith.constant 84 : index
    %286 = vector.load %arg21[%c0_176, %c84] : memref<32x98xbf16, #tpu.memory_space<vmem>>, vector<32x2xbf16>
    tpu.vector_store %arg21[%c0_176, %c84], %285 {strides = array<i32>} : memref<32x98xbf16, #tpu.memory_space<vmem>>, vector<32x2xbf16>,
    %287 = vector.extract_strided_slice %200 {offsets = [1376, 0], sizes = [32, 2], strides = [1, 1]} : vector<1568x2xbf16> to vector<32x2xbf16>
    %c0_177 = arith.constant 0 : index
    %c86 = arith.constant 86 : index
    %288 = vector.load %arg21[%c0_177, %c86] : memref<32x98xbf16, #tpu.memory_space<vmem>>, vector<32x2xbf16>
    tpu.vector_store %arg21[%c0_177, %c86], %287 {strides = array<i32>} : memref<32x98xbf16, #tpu.memory_space<vmem>>, vector<32x2xbf16>,
    %289 = vector.extract_strided_slice %200 {offsets = [1408, 0], sizes = [32, 2], strides = [1, 1]} : vector<1568x2xbf16> to vector<32x2xbf16>
    %c0_178 = arith.constant 0 : index
    %c88 = arith.constant 88 : index
    %290 = vector.load %arg21[%c0_178, %c88] : memref<32x98xbf16, #tpu.memory_space<vmem>>, vector<32x2xbf16>
    tpu.vector_store %arg21[%c0_178, %c88], %289 {strides = array<i32>} : memref<32x98xbf16, #tpu.memory_space<vmem>>, vector<32x2xbf16>,
    %291 = vector.extract_strided_slice %200 {offsets = [1440, 0], sizes = [32, 2], strides = [1, 1]} : vector<1568x2xbf16> to vector<32x2xbf16>
    %c0_179 = arith.constant 0 : index
    %c90 = arith.constant 90 : index
    %292 = vector.load %arg21[%c0_179, %c90] : memref<32x98xbf16, #tpu.memory_space<vmem>>, vector<32x2xbf16>
    tpu.vector_store %arg21[%c0_179, %c90], %291 {strides = array<i32>} : memref<32x98xbf16, #tpu.memory_space<vmem>>, vector<32x2xbf16>,
    %293 = vector.extract_strided_slice %200 {offsets = [1472, 0], sizes = [32, 2], strides = [1, 1]} : vector<1568x2xbf16> to vector<32x2xbf16>
    %c0_180 = arith.constant 0 : index
    %c92 = arith.constant 92 : index
    %294 = vector.load %arg21[%c0_180, %c92] : memref<32x98xbf16, #tpu.memory_space<vmem>>, vector<32x2xbf16>
    tpu.vector_store %arg21[%c0_180, %c92], %293 {strides = array<i32>} : memref<32x98xbf16, #tpu.memory_space<vmem>>, vector<32x2xbf16>,
    %295 = vector.extract_strided_slice %200 {offsets = [1504, 0], sizes = [32, 2], strides = [1, 1]} : vector<1568x2xbf16> to vector<32x2xbf16>
    %c0_181 = arith.constant 0 : index
    %c94 = arith.constant 94 : index
    %296 = vector.load %arg21[%c0_181, %c94] : memref<32x98xbf16, #tpu.memory_space<vmem>>, vector<32x2xbf16>
    tpu.vector_store %arg21[%c0_181, %c94], %295 {strides = array<i32>} : memref<32x98xbf16, #tpu.memory_space<vmem>>, vector<32x2xbf16>,
    %297 = vector.extract_strided_slice %200 {offsets = [1536, 0], sizes = [32, 2], strides = [1, 1]} : vector<1568x2xbf16> to vector<32x2xbf16>
    %c0_182 = arith.constant 0 : index
    %c96_183 = arith.constant 96 : index
    %298 = vector.load %arg21[%c0_182, %c96_183] : memref<32x98xbf16, #tpu.memory_space<vmem>>, vector<32x2xbf16>
    tpu.vector_store %arg21[%c0_182, %c96_183], %297 {strides = array<i32>} : memref<32x98xbf16, #tpu.memory_space<vmem>>, vector<32x2xbf16>,
    %c0_184 = arith.constant 0 : index
    %c0_185 = arith.constant 0 : index
    %299 = vector.load %arg21[%c0_184, %c0_185] : memref<32x98xbf16, #tpu.memory_space<vmem>>, vector<32x98xbf16>
    %c0_186 = arith.constant 0 : index
    %c0_187 = arith.constant 0 : index
    %300 = vector.load %arg16[%c0_186, %c0_187] : memref<98x98xbf16, #tpu.memory_space<vmem>>, vector<98x98xbf16>
    %c0_188 = arith.constant 0 : index
    %c0_189 = arith.constant 0 : index
    %301 = vector.load %arg17[%c0_188, %c0_189] : memref<98x98xbf16, #tpu.memory_space<vmem>>, vector<98x98xbf16>
    %c0_190 = arith.constant 0 : index
    %c0_191 = arith.constant 0 : index
    %302 = vector.load %arg18[%c0_190, %c0_191] : memref<98x98xbf16, #tpu.memory_space<vmem>>, vector<98x98xbf16>
    %cst_192 = arith.constant dense<0.000000e+00> : vector<32x98xf32>
    %303 = tpu.matmul %299, %300, %cst_192 {dimension_numbers = #tpu.dot_dimension_numbers<[1], [0], [0], [1], [0, 0, 1, 1], [], []>} : vector<32x98xbf16>, vector<98x98xbf16>, vector<32x98xf32> -> vector<32x98xf32>
    %304 = arith.truncf %303 : vector<32x98xf32> to vector<32x98xbf16>
    %cst_193 = arith.constant dense<0.000000e+00> : vector<32x98xf32>
    %305 = tpu.matmul %299, %301, %cst_193 {dimension_numbers = #tpu.dot_dimension_numbers<[1], [0], [0], [1], [0, 0, 1, 1], [], []>} : vector<32x98xbf16>, vector<98x98xbf16>, vector<32x98xf32> -> vector<32x98xf32>
    %306 = arith.truncf %305 : vector<32x98xf32> to vector<32x98xbf16>
    %cst_194 = arith.constant dense<0.000000e+00> : vector<32x98xf32>
    %307 = tpu.matmul %299, %302, %cst_194 {dimension_numbers = #tpu.dot_dimension_numbers<[1], [0], [0], [1], [0, 0, 1, 1], [], []>} : vector<32x98xbf16>, vector<98x98xbf16>, vector<32x98xf32> -> vector<32x98xf32>
    %308 = arith.truncf %307 : vector<32x98xf32> to vector<32x98xbf16>
    %c0_195 = arith.constant 0 : index
    %c0_196 = arith.constant 0 : index
    %309 = vector.load %arg10[%c0_195, %c0_196] : memref<16x1xf32, #tpu.memory_space<vmem>>, vector<16x1xf32>
    %c4_197 = arith.constant 4 : index
    %c0_198 = arith.constant 0 : index
    %c0_199 = arith.constant 0 : index
    %310 = vector.load %arg9[%c4_197, %c0_198, %c0_199] : memref<9x16x32xbf16, #tpu.memory_space<vmem>>, vector<1x16x32xbf16>
    %311 = vector.shape_cast %310 : vector<1x16x32xbf16> to vector<16x32xbf16>
    %cst_200 = arith.constant dense<0.000000e+00> : vector<16x98xf32>
    %312 = tpu.matmul %311, %299, %cst_200 {dimension_numbers = #tpu.dot_dimension_numbers<[1], [0], [0], [1], [0, 0, 1, 1], [], []>} : vector<16x32xbf16>, vector<32x98xbf16>, vector<16x98xf32> -> vector<16x98xf32>
    %313 = vector.broadcast %309 : vector<16x1xf32> to vector<16x98xf32>
    %314 = arith.addf %312, %313 : vector<16x98xf32>
    %cst_201 = arith.constant 0.000000e+00 : f32
    %315 = vector.broadcast %cst_201 : f32 to vector<16x98xf32>
    %316 = arith.maximumf %314, %315 : vector<16x98xf32>
    %317 = arith.truncf %316 : vector<16x98xf32> to vector<16x98xbf16>
    %c3_202 = arith.constant 3 : index
    %c0_203 = arith.constant 0 : index
    %c0_204 = arith.constant 0 : index
    %318 = vector.load %arg9[%c3_202, %c0_203, %c0_204] : memref<9x16x32xbf16, #tpu.memory_space<vmem>>, vector<1x16x32xbf16>
    %319 = vector.shape_cast %318 : vector<1x16x32xbf16> to vector<16x32xbf16>
    %cst_205 = arith.constant dense<0.000000e+00> : vector<16x98xf32>
    %320 = tpu.matmul %319, %304, %cst_205 {dimension_numbers = #tpu.dot_dimension_numbers<[1], [0], [0], [1], [0, 0, 1, 1], [], []>} : vector<16x32xbf16>, vector<32x98xbf16>, vector<16x98xf32> -> vector<16x98xf32>
    %c5_206 = arith.constant 5 : index
    %c0_207 = arith.constant 0 : index
    %c0_208 = arith.constant 0 : index
    %321 = vector.load %arg9[%c5_206, %c0_207, %c0_208] : memref<9x16x32xbf16, #tpu.memory_space<vmem>>, vector<1x16x32xbf16>
    %322 = vector.shape_cast %321 : vector<1x16x32xbf16> to vector<16x32xbf16>
    %cst_209 = arith.constant dense<0.000000e+00> : vector<16x98xf32>
    %323 = tpu.matmul %322, %299, %cst_209 {dimension_numbers = #tpu.dot_dimension_numbers<[1], [0], [0], [1], [0, 0, 1, 1], [], []>} : vector<16x32xbf16>, vector<32x98xbf16>, vector<16x98xf32> -> vector<16x98xf32>
    %324 = arith.addf %320, %323 : vector<16x98xf32>
    %325 = vector.broadcast %309 : vector<16x1xf32> to vector<16x98xf32>
    %326 = arith.addf %324, %325 : vector<16x98xf32>
    %cst_210 = arith.constant 0.000000e+00 : f32
    %327 = vector.broadcast %cst_210 : f32 to vector<16x98xf32>
    %328 = arith.maximumf %326, %327 : vector<16x98xf32>
    %329 = arith.truncf %328 : vector<16x98xf32> to vector<16x98xbf16>
    %c1_211 = arith.constant 1 : index
    %c0_212 = arith.constant 0 : index
    %c0_213 = arith.constant 0 : index
    %330 = vector.load %arg9[%c1_211, %c0_212, %c0_213] : memref<9x16x32xbf16, #tpu.memory_space<vmem>>, vector<1x16x32xbf16>
    %331 = vector.shape_cast %330 : vector<1x16x32xbf16> to vector<16x32xbf16>
    %cst_214 = arith.constant dense<0.000000e+00> : vector<16x98xf32>
    %332 = tpu.matmul %331, %306, %cst_214 {dimension_numbers = #tpu.dot_dimension_numbers<[1], [0], [0], [1], [0, 0, 1, 1], [], []>} : vector<16x32xbf16>, vector<32x98xbf16>, vector<16x98xf32> -> vector<16x98xf32>
    %c7_215 = arith.constant 7 : index
    %c0_216 = arith.constant 0 : index
    %c0_217 = arith.constant 0 : index
    %333 = vector.load %arg9[%c7_215, %c0_216, %c0_217] : memref<9x16x32xbf16, #tpu.memory_space<vmem>>, vector<1x16x32xbf16>
    %334 = vector.shape_cast %333 : vector<1x16x32xbf16> to vector<16x32xbf16>
    %cst_218 = arith.constant dense<0.000000e+00> : vector<16x98xf32>
    %335 = tpu.matmul %334, %299, %cst_218 {dimension_numbers = #tpu.dot_dimension_numbers<[1], [0], [0], [1], [0, 0, 1, 1], [], []>} : vector<16x32xbf16>, vector<32x98xbf16>, vector<16x98xf32> -> vector<16x98xf32>
    %336 = arith.addf %332, %335 : vector<16x98xf32>
    %337 = vector.broadcast %309 : vector<16x1xf32> to vector<16x98xf32>
    %338 = arith.addf %336, %337 : vector<16x98xf32>
    %cst_219 = arith.constant 0.000000e+00 : f32
    %339 = vector.broadcast %cst_219 : f32 to vector<16x98xf32>
    %340 = arith.maximumf %338, %339 : vector<16x98xf32>
    %341 = arith.truncf %340 : vector<16x98xf32> to vector<16x98xbf16>
    %c0_220 = arith.constant 0 : index
    %c0_221 = arith.constant 0 : index
    %c0_222 = arith.constant 0 : index
    %342 = vector.load %arg9[%c0_220, %c0_221, %c0_222] : memref<9x16x32xbf16, #tpu.memory_space<vmem>>, vector<1x16x32xbf16>
    %343 = vector.shape_cast %342 : vector<1x16x32xbf16> to vector<16x32xbf16>
    %cst_223 = arith.constant dense<0.000000e+00> : vector<16x98xf32>
    %344 = tpu.matmul %343, %308, %cst_223 {dimension_numbers = #tpu.dot_dimension_numbers<[1], [0], [0], [1], [0, 0, 1, 1], [], []>} : vector<16x32xbf16>, vector<32x98xbf16>, vector<16x98xf32> -> vector<16x98xf32>
    %c2_224 = arith.constant 2 : index
    %c0_225 = arith.constant 0 : index
    %c0_226 = arith.constant 0 : index
    %345 = vector.load %arg9[%c2_224, %c0_225, %c0_226] : memref<9x16x32xbf16, #tpu.memory_space<vmem>>, vector<1x16x32xbf16>
    %346 = vector.shape_cast %345 : vector<1x16x32xbf16> to vector<16x32xbf16>
    %cst_227 = arith.constant dense<0.000000e+00> : vector<16x98xf32>
    %347 = tpu.matmul %346, %306, %cst_227 {dimension_numbers = #tpu.dot_dimension_numbers<[1], [0], [0], [1], [0, 0, 1, 1], [], []>} : vector<16x32xbf16>, vector<32x98xbf16>, vector<16x98xf32> -> vector<16x98xf32>
    %348 = arith.addf %344, %347 : vector<16x98xf32>
    %c6_228 = arith.constant 6 : index
    %c0_229 = arith.constant 0 : index
    %c0_230 = arith.constant 0 : index
    %349 = vector.load %arg9[%c6_228, %c0_229, %c0_230] : memref<9x16x32xbf16, #tpu.memory_space<vmem>>, vector<1x16x32xbf16>
    %350 = vector.shape_cast %349 : vector<1x16x32xbf16> to vector<16x32xbf16>
    %cst_231 = arith.constant dense<0.000000e+00> : vector<16x98xf32>
    %351 = tpu.matmul %350, %304, %cst_231 {dimension_numbers = #tpu.dot_dimension_numbers<[1], [0], [0], [1], [0, 0, 1, 1], [], []>} : vector<16x32xbf16>, vector<32x98xbf16>, vector<16x98xf32> -> vector<16x98xf32>
    %352 = arith.addf %348, %351 : vector<16x98xf32>
    %c8_232 = arith.constant 8 : index
    %c0_233 = arith.constant 0 : index
    %c0_234 = arith.constant 0 : index
    %353 = vector.load %arg9[%c8_232, %c0_233, %c0_234] : memref<9x16x32xbf16, #tpu.memory_space<vmem>>, vector<1x16x32xbf16>
    %354 = vector.shape_cast %353 : vector<1x16x32xbf16> to vector<16x32xbf16>
    %cst_235 = arith.constant dense<0.000000e+00> : vector<16x98xf32>
    %355 = tpu.matmul %354, %299, %cst_235 {dimension_numbers = #tpu.dot_dimension_numbers<[1], [0], [0], [1], [0, 0, 1, 1], [], []>} : vector<16x32xbf16>, vector<32x98xbf16>, vector<16x98xf32> -> vector<16x98xf32>
    %356 = arith.addf %352, %355 : vector<16x98xf32>
    %357 = vector.broadcast %309 : vector<16x1xf32> to vector<16x98xf32>
    %358 = arith.addf %356, %357 : vector<16x98xf32>
    %cst_236 = arith.constant 0.000000e+00 : f32
    %359 = vector.broadcast %cst_236 : f32 to vector<16x98xf32>
    %360 = arith.maximumf %358, %359 : vector<16x98xf32>
    %361 = arith.truncf %360 : vector<16x98xf32> to vector<16x98xbf16>
    %cst_237 = arith.constant dense<0.000000e+00> : vector<16x98xf32>
    %362 = tpu.matmul %317, %300, %cst_237 {dimension_numbers = #tpu.dot_dimension_numbers<[1], [0], [0], [1], [0, 0, 1, 1], [], []>} : vector<16x98xbf16>, vector<98x98xbf16>, vector<16x98xf32> -> vector<16x98xf32>
    %363 = arith.truncf %362 : vector<16x98xf32> to vector<16x98xbf16>
    %cst_238 = arith.constant dense<0.000000e+00> : vector<16x98xf32>
    %364 = tpu.matmul %341, %300, %cst_238 {dimension_numbers = #tpu.dot_dimension_numbers<[1], [0], [0], [1], [0, 0, 1, 1], [], []>} : vector<16x98xbf16>, vector<98x98xbf16>, vector<16x98xf32> -> vector<16x98xf32>
    %365 = arith.truncf %364 : vector<16x98xf32> to vector<16x98xbf16>
    %cst_239 = arith.constant dense<0.000000e+00> : vector<16x98xf32>
    %366 = tpu.matmul %317, %301, %cst_239 {dimension_numbers = #tpu.dot_dimension_numbers<[1], [0], [0], [1], [0, 0, 1, 1], [], []>} : vector<16x98xbf16>, vector<98x98xbf16>, vector<16x98xf32> -> vector<16x98xf32>
    %367 = arith.truncf %366 : vector<16x98xf32> to vector<16x98xbf16>
    %cst_240 = arith.constant dense<0.000000e+00> : vector<16x98xf32>
    %368 = tpu.matmul %329, %301, %cst_240 {dimension_numbers = #tpu.dot_dimension_numbers<[1], [0], [0], [1], [0, 0, 1, 1], [], []>} : vector<16x98xbf16>, vector<98x98xbf16>, vector<16x98xf32> -> vector<16x98xf32>
    %369 = arith.truncf %368 : vector<16x98xf32> to vector<16x98xbf16>
    %cst_241 = arith.constant dense<0.000000e+00> : vector<16x98xf32>
    %370 = tpu.matmul %317, %302, %cst_241 {dimension_numbers = #tpu.dot_dimension_numbers<[1], [0], [0], [1], [0, 0, 1, 1], [], []>} : vector<16x98xbf16>, vector<98x98xbf16>, vector<16x98xf32> -> vector<16x98xf32>
    %371 = arith.truncf %370 : vector<16x98xf32> to vector<16x98xbf16>
    %c0_242 = arith.constant 0 : index
    %c0_243 = arith.constant 0 : index
    %372 = vector.load %arg22[%c0_242, %c0_243] : memref<16x392xbf16, #tpu.memory_space<vmem>>, vector<16x98xbf16>
    tpu.vector_store %arg22[%c0_242, %c0_243], %317 {strides = array<i32>} : memref<16x392xbf16, #tpu.memory_space<vmem>>, vector<16x98xbf16>,
    %c0_244 = arith.constant 0 : index
    %c98 = arith.constant 98 : index
    %373 = vector.load %arg22[%c0_244, %c98] : memref<16x392xbf16, #tpu.memory_space<vmem>>, vector<16x98xbf16>
    tpu.vector_store %arg22[%c0_244, %c98], %329 {strides = array<i32>} : memref<16x392xbf16, #tpu.memory_space<vmem>>, vector<16x98xbf16>,
    %c0_245 = arith.constant 0 : index
    %c196 = arith.constant 196 : index
    %374 = vector.load %arg22[%c0_245, %c196] : memref<16x392xbf16, #tpu.memory_space<vmem>>, vector<16x98xbf16>
    tpu.vector_store %arg22[%c0_245, %c196], %341 {strides = array<i32>} : memref<16x392xbf16, #tpu.memory_space<vmem>>, vector<16x98xbf16>,
    %c0_246 = arith.constant 0 : index
    %c294 = arith.constant 294 : index
    %375 = vector.load %arg22[%c0_246, %c294] : memref<16x392xbf16, #tpu.memory_space<vmem>>, vector<16x98xbf16>
    tpu.vector_store %arg22[%c0_246, %c294], %361 {strides = array<i32>} : memref<16x392xbf16, #tpu.memory_space<vmem>>, vector<16x98xbf16>,
    %c0_247 = arith.constant 0 : index
    %c0_248 = arith.constant 0 : index
    %376 = vector.load %arg23[%c0_247, %c0_248] : memref<16x392xbf16, #tpu.memory_space<vmem>>, vector<16x98xbf16>
    tpu.vector_store %arg23[%c0_247, %c0_248], %329 {strides = array<i32>} : memref<16x392xbf16, #tpu.memory_space<vmem>>, vector<16x98xbf16>,
    %c0_249 = arith.constant 0 : index
    %c98_250 = arith.constant 98 : index
    %377 = vector.load %arg23[%c0_249, %c98_250] : memref<16x392xbf16, #tpu.memory_space<vmem>>, vector<16x98xbf16>
    tpu.vector_store %arg23[%c0_249, %c98_250], %363 {strides = array<i32>} : memref<16x392xbf16, #tpu.memory_space<vmem>>, vector<16x98xbf16>,
    %c0_251 = arith.constant 0 : index
    %c196_252 = arith.constant 196 : index
    %378 = vector.load %arg23[%c0_251, %c196_252] : memref<16x392xbf16, #tpu.memory_space<vmem>>, vector<16x98xbf16>
    tpu.vector_store %arg23[%c0_251, %c196_252], %361 {strides = array<i32>} : memref<16x392xbf16, #tpu.memory_space<vmem>>, vector<16x98xbf16>,
    %c0_253 = arith.constant 0 : index
    %c294_254 = arith.constant 294 : index
    %379 = vector.load %arg23[%c0_253, %c294_254] : memref<16x392xbf16, #tpu.memory_space<vmem>>, vector<16x98xbf16>
    tpu.vector_store %arg23[%c0_253, %c294_254], %365 {strides = array<i32>} : memref<16x392xbf16, #tpu.memory_space<vmem>>, vector<16x98xbf16>,
    %c0_255 = arith.constant 0 : index
    %c0_256 = arith.constant 0 : index
    %380 = vector.load %arg24[%c0_255, %c0_256] : memref<16x392xbf16, #tpu.memory_space<vmem>>, vector<16x98xbf16>
    tpu.vector_store %arg24[%c0_255, %c0_256], %341 {strides = array<i32>} : memref<16x392xbf16, #tpu.memory_space<vmem>>, vector<16x98xbf16>,
    %c0_257 = arith.constant 0 : index
    %c98_258 = arith.constant 98 : index
    %381 = vector.load %arg24[%c0_257, %c98_258] : memref<16x392xbf16, #tpu.memory_space<vmem>>, vector<16x98xbf16>
    tpu.vector_store %arg24[%c0_257, %c98_258], %361 {strides = array<i32>} : memref<16x392xbf16, #tpu.memory_space<vmem>>, vector<16x98xbf16>,
    %c0_259 = arith.constant 0 : index
    %c196_260 = arith.constant 196 : index
    %382 = vector.load %arg24[%c0_259, %c196_260] : memref<16x392xbf16, #tpu.memory_space<vmem>>, vector<16x98xbf16>
    tpu.vector_store %arg24[%c0_259, %c196_260], %367 {strides = array<i32>} : memref<16x392xbf16, #tpu.memory_space<vmem>>, vector<16x98xbf16>,
    %c0_261 = arith.constant 0 : index
    %c294_262 = arith.constant 294 : index
    %383 = vector.load %arg24[%c0_261, %c294_262] : memref<16x392xbf16, #tpu.memory_space<vmem>>, vector<16x98xbf16>
    tpu.vector_store %arg24[%c0_261, %c294_262], %369 {strides = array<i32>} : memref<16x392xbf16, #tpu.memory_space<vmem>>, vector<16x98xbf16>,
    %c0_263 = arith.constant 0 : index
    %c0_264 = arith.constant 0 : index
    %384 = vector.load %arg25[%c0_263, %c0_264] : memref<16x392xbf16, #tpu.memory_space<vmem>>, vector<16x98xbf16>
    tpu.vector_store %arg25[%c0_263, %c0_264], %361 {strides = array<i32>} : memref<16x392xbf16, #tpu.memory_space<vmem>>, vector<16x98xbf16>,
    %c0_265 = arith.constant 0 : index
    %c98_266 = arith.constant 98 : index
    %385 = vector.load %arg25[%c0_265, %c98_266] : memref<16x392xbf16, #tpu.memory_space<vmem>>, vector<16x98xbf16>
    tpu.vector_store %arg25[%c0_265, %c98_266], %365 {strides = array<i32>} : memref<16x392xbf16, #tpu.memory_space<vmem>>, vector<16x98xbf16>,
    %c0_267 = arith.constant 0 : index
    %c196_268 = arith.constant 196 : index
    %386 = vector.load %arg25[%c0_267, %c196_268] : memref<16x392xbf16, #tpu.memory_space<vmem>>, vector<16x98xbf16>
    tpu.vector_store %arg25[%c0_267, %c196_268], %369 {strides = array<i32>} : memref<16x392xbf16, #tpu.memory_space<vmem>>, vector<16x98xbf16>,
    %c0_269 = arith.constant 0 : index
    %c294_270 = arith.constant 294 : index
    %387 = vector.load %arg25[%c0_269, %c294_270] : memref<16x392xbf16, #tpu.memory_space<vmem>>, vector<16x98xbf16>
    tpu.vector_store %arg25[%c0_269, %c294_270], %371 {strides = array<i32>} : memref<16x392xbf16, #tpu.memory_space<vmem>>, vector<16x98xbf16>,
    %c0_271 = arith.constant 0 : index
    %c0_272 = arith.constant 0 : index
    %388 = vector.load %arg22[%c0_271, %c0_272] : memref<16x392xbf16, #tpu.memory_space<vmem>>, vector<16x392xbf16>
    %c0_273 = arith.constant 0 : index
    %c0_274 = arith.constant 0 : index
    %389 = vector.load %arg23[%c0_273, %c0_274] : memref<16x392xbf16, #tpu.memory_space<vmem>>, vector<16x392xbf16>
    %c0_275 = arith.constant 0 : index
    %c0_276 = arith.constant 0 : index
    %390 = vector.load %arg24[%c0_275, %c0_276] : memref<16x392xbf16, #tpu.memory_space<vmem>>, vector<16x392xbf16>
    %c0_277 = arith.constant 0 : index
    %c0_278 = arith.constant 0 : index
    %391 = vector.load %arg25[%c0_277, %c0_278] : memref<16x392xbf16, #tpu.memory_space<vmem>>, vector<16x392xbf16>
    %c0_279 = arith.constant 0 : index
    %c0_280 = arith.constant 0 : index
    %392 = vector.load %arg12[%c0_279, %c0_280] : memref<3x1xf32, #tpu.memory_space<vmem>>, vector<3x1xf32>
    %c4_281 = arith.constant 4 : index
    %c0_282 = arith.constant 0 : index
    %c0_283 = arith.constant 0 : index
    %393 = vector.load %arg11[%c4_281, %c0_282, %c0_283] : memref<9x3x16xbf16, #tpu.memory_space<vmem>>, vector<1x3x16xbf16>
    %394 = vector.shape_cast %393 : vector<1x3x16xbf16> to vector<3x16xbf16>
    %cst_284 = arith.constant dense<0.000000e+00> : vector<3x392xf32>
    %395 = tpu.matmul %394, %388, %cst_284 {dimension_numbers = #tpu.dot_dimension_numbers<[1], [0], [0], [1], [0, 0, 1, 1], [], []>} : vector<3x16xbf16>, vector<16x392xbf16>, vector<3x392xf32> -> vector<3x392xf32>
    %396 = vector.broadcast %392 : vector<3x1xf32> to vector<3x392xf32>
    %397 = arith.addf %395, %396 : vector<3x392xf32>
    %cst_285 = arith.constant 0.000000e+00 : f32
    %398 = vector.broadcast %cst_285 : f32 to vector<3x392xf32>
    %399 = arith.subf %398, %397 : vector<3x392xf32>
    %400 = math.exp %399 : vector<3x392xf32>
    %cst_286 = arith.constant 1.000000e+00 : f32
    %401 = vector.broadcast %cst_286 : f32 to vector<3x392xf32>
    %402 = arith.addf %401, %400 : vector<3x392xf32>
    %403 = tpu.reciprocal %402 {approx = true} : vector<3x392xf32> -> vector<3x392xf32>
    %cst_287 = arith.constant 0.000000e+00 : f32
    %cst_288 = arith.constant 1.000000e+00 : f32
    %404 = vector.broadcast %cst_287 : f32 to vector<3x392xf32>
    %405 = arith.maximumf %404, %403 : vector<3x392xf32>
    %406 = vector.broadcast %cst_288 : f32 to vector<3x392xf32>
    %407 = arith.minimumf %406, %405 : vector<3x392xf32>
    %c3_289 = arith.constant 3 : index
    %c0_290 = arith.constant 0 : index
    %c0_291 = arith.constant 0 : index
    %408 = vector.load %arg11[%c3_289, %c0_290, %c0_291] : memref<9x3x16xbf16, #tpu.memory_space<vmem>>, vector<1x3x16xbf16>
    %409 = vector.shape_cast %408 : vector<1x3x16xbf16> to vector<3x16xbf16>
    %cst_292 = arith.constant dense<0.000000e+00> : vector<3x392xf32>
    %410 = tpu.matmul %409, %389, %cst_292 {dimension_numbers = #tpu.dot_dimension_numbers<[1], [0], [0], [1], [0, 0, 1, 1], [], []>} : vector<3x16xbf16>, vector<16x392xbf16>, vector<3x392xf32> -> vector<3x392xf32>
    %c5_293 = arith.constant 5 : index
    %c0_294 = arith.constant 0 : index
    %c0_295 = arith.constant 0 : index
    %411 = vector.load %arg11[%c5_293, %c0_294, %c0_295] : memref<9x3x16xbf16, #tpu.memory_space<vmem>>, vector<1x3x16xbf16>
    %412 = vector.shape_cast %411 : vector<1x3x16xbf16> to vector<3x16xbf16>
    %cst_296 = arith.constant dense<0.000000e+00> : vector<3x392xf32>
    %413 = tpu.matmul %412, %388, %cst_296 {dimension_numbers = #tpu.dot_dimension_numbers<[1], [0], [0], [1], [0, 0, 1, 1], [], []>} : vector<3x16xbf16>, vector<16x392xbf16>, vector<3x392xf32> -> vector<3x392xf32>
    %414 = arith.addf %410, %413 : vector<3x392xf32>
    %415 = vector.broadcast %392 : vector<3x1xf32> to vector<3x392xf32>
    %416 = arith.addf %414, %415 : vector<3x392xf32>
    %cst_297 = arith.constant 0.000000e+00 : f32
    %417 = vector.broadcast %cst_297 : f32 to vector<3x392xf32>
    %418 = arith.subf %417, %416 : vector<3x392xf32>
    %419 = math.exp %418 : vector<3x392xf32>
    %cst_298 = arith.constant 1.000000e+00 : f32
    %420 = vector.broadcast %cst_298 : f32 to vector<3x392xf32>
    %421 = arith.addf %420, %419 : vector<3x392xf32>
    %422 = tpu.reciprocal %421 {approx = true} : vector<3x392xf32> -> vector<3x392xf32>
    %cst_299 = arith.constant 0.000000e+00 : f32
    %cst_300 = arith.constant 1.000000e+00 : f32
    %423 = vector.broadcast %cst_299 : f32 to vector<3x392xf32>
    %424 = arith.maximumf %423, %422 : vector<3x392xf32>
    %425 = vector.broadcast %cst_300 : f32 to vector<3x392xf32>
    %426 = arith.minimumf %425, %424 : vector<3x392xf32>
    %c1_301 = arith.constant 1 : index
    %c0_302 = arith.constant 0 : index
    %c0_303 = arith.constant 0 : index
    %427 = vector.load %arg11[%c1_301, %c0_302, %c0_303] : memref<9x3x16xbf16, #tpu.memory_space<vmem>>, vector<1x3x16xbf16>
    %428 = vector.shape_cast %427 : vector<1x3x16xbf16> to vector<3x16xbf16>
    %cst_304 = arith.constant dense<0.000000e+00> : vector<3x392xf32>
    %429 = tpu.matmul %428, %390, %cst_304 {dimension_numbers = #tpu.dot_dimension_numbers<[1], [0], [0], [1], [0, 0, 1, 1], [], []>} : vector<3x16xbf16>, vector<16x392xbf16>, vector<3x392xf32> -> vector<3x392xf32>
    %c7_305 = arith.constant 7 : index
    %c0_306 = arith.constant 0 : index
    %c0_307 = arith.constant 0 : index
    %430 = vector.load %arg11[%c7_305, %c0_306, %c0_307] : memref<9x3x16xbf16, #tpu.memory_space<vmem>>, vector<1x3x16xbf16>
    %431 = vector.shape_cast %430 : vector<1x3x16xbf16> to vector<3x16xbf16>
    %cst_308 = arith.constant dense<0.000000e+00> : vector<3x392xf32>
    %432 = tpu.matmul %431, %388, %cst_308 {dimension_numbers = #tpu.dot_dimension_numbers<[1], [0], [0], [1], [0, 0, 1, 1], [], []>} : vector<3x16xbf16>, vector<16x392xbf16>, vector<3x392xf32> -> vector<3x392xf32>
    %433 = arith.addf %429, %432 : vector<3x392xf32>
    %434 = vector.broadcast %392 : vector<3x1xf32> to vector<3x392xf32>
    %435 = arith.addf %433, %434 : vector<3x392xf32>
    %cst_309 = arith.constant 0.000000e+00 : f32
    %436 = vector.broadcast %cst_309 : f32 to vector<3x392xf32>
    %437 = arith.subf %436, %435 : vector<3x392xf32>
    %438 = math.exp %437 : vector<3x392xf32>
    %cst_310 = arith.constant 1.000000e+00 : f32
    %439 = vector.broadcast %cst_310 : f32 to vector<3x392xf32>
    %440 = arith.addf %439, %438 : vector<3x392xf32>
    %441 = tpu.reciprocal %440 {approx = true} : vector<3x392xf32> -> vector<3x392xf32>
    %cst_311 = arith.constant 0.000000e+00 : f32
    %cst_312 = arith.constant 1.000000e+00 : f32
    %442 = vector.broadcast %cst_311 : f32 to vector<3x392xf32>
    %443 = arith.maximumf %442, %441 : vector<3x392xf32>
    %444 = vector.broadcast %cst_312 : f32 to vector<3x392xf32>
    %445 = arith.minimumf %444, %443 : vector<3x392xf32>
    %c0_313 = arith.constant 0 : index
    %c0_314 = arith.constant 0 : index
    %c0_315 = arith.constant 0 : index
    %446 = vector.load %arg11[%c0_313, %c0_314, %c0_315] : memref<9x3x16xbf16, #tpu.memory_space<vmem>>, vector<1x3x16xbf16>
    %447 = vector.shape_cast %446 : vector<1x3x16xbf16> to vector<3x16xbf16>
    %cst_316 = arith.constant dense<0.000000e+00> : vector<3x392xf32>
    %448 = tpu.matmul %447, %391, %cst_316 {dimension_numbers = #tpu.dot_dimension_numbers<[1], [0], [0], [1], [0, 0, 1, 1], [], []>} : vector<3x16xbf16>, vector<16x392xbf16>, vector<3x392xf32> -> vector<3x392xf32>
    %c2_317 = arith.constant 2 : index
    %c0_318 = arith.constant 0 : index
    %c0_319 = arith.constant 0 : index
    %449 = vector.load %arg11[%c2_317, %c0_318, %c0_319] : memref<9x3x16xbf16, #tpu.memory_space<vmem>>, vector<1x3x16xbf16>
    %450 = vector.shape_cast %449 : vector<1x3x16xbf16> to vector<3x16xbf16>
    %cst_320 = arith.constant dense<0.000000e+00> : vector<3x392xf32>
    %451 = tpu.matmul %450, %390, %cst_320 {dimension_numbers = #tpu.dot_dimension_numbers<[1], [0], [0], [1], [0, 0, 1, 1], [], []>} : vector<3x16xbf16>, vector<16x392xbf16>, vector<3x392xf32> -> vector<3x392xf32>
    %452 = arith.addf %448, %451 : vector<3x392xf32>
    %c6_321 = arith.constant 6 : index
    %c0_322 = arith.constant 0 : index
    %c0_323 = arith.constant 0 : index
    %453 = vector.load %arg11[%c6_321, %c0_322, %c0_323] : memref<9x3x16xbf16, #tpu.memory_space<vmem>>, vector<1x3x16xbf16>
    %454 = vector.shape_cast %453 : vector<1x3x16xbf16> to vector<3x16xbf16>
    %cst_324 = arith.constant dense<0.000000e+00> : vector<3x392xf32>
    %455 = tpu.matmul %454, %389, %cst_324 {dimension_numbers = #tpu.dot_dimension_numbers<[1], [0], [0], [1], [0, 0, 1, 1], [], []>} : vector<3x16xbf16>, vector<16x392xbf16>, vector<3x392xf32> -> vector<3x392xf32>
    %456 = arith.addf %452, %455 : vector<3x392xf32>
    %c8_325 = arith.constant 8 : index
    %c0_326 = arith.constant 0 : index
    %c0_327 = arith.constant 0 : index
    %457 = vector.load %arg11[%c8_325, %c0_326, %c0_327] : memref<9x3x16xbf16, #tpu.memory_space<vmem>>, vector<1x3x16xbf16>
    %458 = vector.shape_cast %457 : vector<1x3x16xbf16> to vector<3x16xbf16>
    %cst_328 = arith.constant dense<0.000000e+00> : vector<3x392xf32>
    %459 = tpu.matmul %458, %388, %cst_328 {dimension_numbers = #tpu.dot_dimension_numbers<[1], [0], [0], [1], [0, 0, 1, 1], [], []>} : vector<3x16xbf16>, vector<16x392xbf16>, vector<3x392xf32> -> vector<3x392xf32>
    %460 = arith.addf %456, %459 : vector<3x392xf32>
    %461 = vector.broadcast %392 : vector<3x1xf32> to vector<3x392xf32>
    %462 = arith.addf %460, %461 : vector<3x392xf32>
    %cst_329 = arith.constant 0.000000e+00 : f32
    %463 = vector.broadcast %cst_329 : f32 to vector<3x392xf32>
    %464 = arith.subf %463, %462 : vector<3x392xf32>
    %465 = math.exp %464 : vector<3x392xf32>
    %cst_330 = arith.constant 1.000000e+00 : f32
    %466 = vector.broadcast %cst_330 : f32 to vector<3x392xf32>
    %467 = arith.addf %466, %465 : vector<3x392xf32>
    %468 = tpu.reciprocal %467 {approx = true} : vector<3x392xf32> -> vector<3x392xf32>
    %cst_331 = arith.constant 0.000000e+00 : f32
    %cst_332 = arith.constant 1.000000e+00 : f32
    %469 = vector.broadcast %cst_331 : f32 to vector<3x392xf32>
    %470 = arith.maximumf %469, %468 : vector<3x392xf32>
    %471 = vector.broadcast %cst_332 : f32 to vector<3x392xf32>
    %472 = arith.minimumf %471, %470 : vector<3x392xf32>
    %c0_333 = arith.constant 0 : index
    %c0_334 = arith.constant 0 : index
    %c0_335 = arith.constant 0 : index
    %473 = vector.load %arg19[%c0_333, %c0_334, %c0_335] : memref<4x3x392xf32, #tpu.memory_space<vmem>>, vector<1x3x392xf32>
    %474 = vector.shape_cast %473 : vector<1x3x392xf32> to vector<3x392xf32>
    %475 = vector.shape_cast %407 : vector<3x392xf32> to vector<1x3x392xf32>
    tpu.vector_store %arg19[%c0_333, %c0_334, %c0_335], %475 {strides = array<i32>} : memref<4x3x392xf32, #tpu.memory_space<vmem>>, vector<1x3x392xf32>,
    %c1_336 = arith.constant 1 : index
    %c0_337 = arith.constant 0 : index
    %c0_338 = arith.constant 0 : index
    %476 = vector.load %arg19[%c1_336, %c0_337, %c0_338] : memref<4x3x392xf32, #tpu.memory_space<vmem>>, vector<1x3x392xf32>
    %477 = vector.shape_cast %476 : vector<1x3x392xf32> to vector<3x392xf32>
    %478 = vector.shape_cast %426 : vector<3x392xf32> to vector<1x3x392xf32>
    tpu.vector_store %arg19[%c1_336, %c0_337, %c0_338], %478 {strides = array<i32>} : memref<4x3x392xf32, #tpu.memory_space<vmem>>, vector<1x3x392xf32>,
    %c2_339 = arith.constant 2 : index
    %c0_340 = arith.constant 0 : index
    %c0_341 = arith.constant 0 : index
    %479 = vector.load %arg19[%c2_339, %c0_340, %c0_341] : memref<4x3x392xf32, #tpu.memory_space<vmem>>, vector<1x3x392xf32>
    %480 = vector.shape_cast %479 : vector<1x3x392xf32> to vector<3x392xf32>
    %481 = vector.shape_cast %445 : vector<3x392xf32> to vector<1x3x392xf32>
    tpu.vector_store %arg19[%c2_339, %c0_340, %c0_341], %481 {strides = array<i32>} : memref<4x3x392xf32, #tpu.memory_space<vmem>>, vector<1x3x392xf32>,
    %c3_342 = arith.constant 3 : index
    %c0_343 = arith.constant 0 : index
    %c0_344 = arith.constant 0 : index
    %482 = vector.load %arg19[%c3_342, %c0_343, %c0_344] : memref<4x3x392xf32, #tpu.memory_space<vmem>>, vector<1x3x392xf32>
    %483 = vector.shape_cast %482 : vector<1x3x392xf32> to vector<3x392xf32>
    %484 = vector.shape_cast %472 : vector<3x392xf32> to vector<1x3x392xf32>
    tpu.vector_store %arg19[%c3_342, %c0_343, %c0_344], %484 {strides = array<i32>} : memref<4x3x392xf32, #tpu.memory_space<vmem>>, vector<1x3x392xf32>,
    return
  }
}

</mosaic_0001>

<llo_original>
// kernel: autoencoder_forward.1
$region0: #{autoencoder_forward.1}
  #allocation0 [shape = 'u32[]', space=smem, size = 0x4, offset = 0x4, fixed_abs, tag = 'smem constant byte address 0x4 - core index']
  #allocation1 [shape = 'u32[144,128]{1,0:T(1,128)}', space=vmem, size = 0x12000, scoped, tag = 'internal scratch']
  #allocation2 [shape = 'bf16[1568,2]{1,0:T(16,128)(2,1)}', space=vmem, size = 0x62000, scoped, tag = 'scratch operand']
  #allocation3 [shape = 'bf16[32,98]{1,0:T(16,128)(2,1)}', space=vmem, size = 0x2000, scoped, tag = 'scratch operand']
  #allocation4 [shape = 'bf16[16,392]{1,0:T(16,128)(2,1)}', space=vmem, size = 0x4000, scoped, tag = 'scratch operand']
  #allocation5 [shape = 'bf16[16,392]{1,0:T(16,128)(2,1)}', space=vmem, size = 0x4000, scoped, tag = 'scratch operand']
  #allocation6 [shape = 'bf16[16,392]{1,0:T(16,128)(2,1)}', space=vmem, size = 0x4000, scoped, tag = 'scratch operand']
  #allocation7 [shape = 'bf16[16,392]{1,0:T(16,128)(2,1)}', space=vmem, size = 0x4000, scoped, tag = 'scratch operand']
  %s0 = inlined_call_operand.vmem [shape: bf16[4,27,98], index: 0, kind: input, shape index: {}]
  %s1 = inlined_call_operand.vmem [shape: bf16[16,27], index: 1, kind: input, shape index: {}]
  %s2 = inlined_call_operand.vmem [shape: f32[16,1], index: 2, kind: input, shape index: {}]
  %s3 = inlined_call_operand.vmem [shape: bf16[9,32,16], index: 3, kind: input, shape index: {}]
  %s4 = inlined_call_operand.vmem [shape: f32[32,1], index: 4, kind: input, shape index: {}]
  %s5 = inlined_call_operand.vmem [shape: bf16[64,1568], index: 5, kind: input, shape index: {}]
  %s6 = inlined_call_operand.vmem [shape: f32[64,1], index: 6, kind: input, shape index: {}]
  %s7 = inlined_call_operand.vmem [shape: bf16[1568,64], index: 7, kind: input, shape index: {}]
  %s8 = inlined_call_operand.vmem [shape: f32[1568,1], index: 8, kind: input, shape index: {}]
  %s9 = inlined_call_operand.vmem [shape: bf16[9,16,32], index: 9, kind: input, shape index: {}]
  %s10 = inlined_call_operand.vmem [shape: f32[16,1], index: 10, kind: input, shape index: {}]
  %s11 = inlined_call_operand.vmem [shape: bf16[9,3,16], index: 11, kind: input, shape index: {}]
  %s12 = inlined_call_operand.vmem [shape: f32[3,1], index: 12, kind: input, shape index: {}]
  %s13 = inlined_call_operand.vmem [shape: bf16[98,98], index: 13, kind: input, shape index: {}]
  %s14 = inlined_call_operand.vmem [shape: bf16[98,98], index: 14, kind: input, shape index: {}]
  %s15 = inlined_call_operand.vmem [shape: bf16[98,98], index: 15, kind: input, shape index: {}]
  %s16 = inlined_call_operand.vmem [shape: bf16[98,98], index: 16, kind: input, shape index: {}]
  %s17 = inlined_call_operand.vmem [shape: bf16[98,98], index: 17, kind: input, shape index: {}]
  %s18 = inlined_call_operand.vmem [shape: bf16[98,98], index: 18, kind: input, shape index: {}]
  %s19 = inlined_call_operand.vmem [shape: f32[4,3,392], index: 19, kind: output, shape index: {}]
  %s20 = sld [smem:[#allocation0]]
  $region86: #{autoencoder_forward.1} parent=0
    _
  %s22 = ssub.s32 1, %s20
  %s23 = scalar_select 0, %s22, %s20
  // Predicated region
  $region2: #{autoencoder_forward.1} parent=0 // pred_check
    _
  $region3: #{autoencoder_forward.1} parent=0 // pred_check_branch
    %25 = sbr.rel (0) target = $region5
  $region4: #{autoencoder_forward.1} parent=0 // pred_region
    _
  $region5: #{autoencoder_forward.1} parent=0 // pred_fallthru
    _
  // Predicated region
  $region6: #{autoencoder_forward.1} parent=0 // pred_check
    _
  $region7: #{autoencoder_forward.1} parent=0 // pred_check_branch
    %27 = sbr.rel (0) target = $region9
  $region8: #{autoencoder_forward.1} parent=0 // pred_region
    _
  $region9: #{autoencoder_forward.1} parent=0 // pred_fallthru
    _
  // Predicated region
  $region10: #{autoencoder_forward.1} parent=0 // pred_check
    _
  $region11: #{autoencoder_forward.1} parent=0 // pred_check_branch
    %29 = sbr.rel (0) target = $region13
  $region12: #{autoencoder_forward.1} parent=0 // pred_region
    _
  $region13: #{autoencoder_forward.1} parent=0 // pred_fallthru
    _
  // Predicated region
  $region14: #{autoencoder_forward.1} parent=0 // pred_check
    _
  $region15: #{autoencoder_forward.1} parent=0 // pred_check_branch
    %31 = sbr.rel (0) target = $region17
  $region16: #{autoencoder_forward.1} parent=0 // pred_region
    _
  $region17: #{autoencoder_forward.1} parent=0 // pred_fallthru
    _
  // Predicated region
  $region18: #{autoencoder_forward.1} parent=0 // pred_check
    _
  $region19: #{autoencoder_forward.1} parent=0 // pred_check_branch
    %33 = sbr.rel (0) target = $region21
  $region20: #{autoencoder_forward.1} parent=0 // pred_region
    _
  $region21: #{autoencoder_forward.1} parent=0 // pred_fallthru
    _
  // Predicated region
  $region22: #{autoencoder_forward.1} parent=0 // pred_check
    _
  $region23: #{autoencoder_forward.1} parent=0 // pred_check_branch
    %35 = sbr.rel (0) target = $region25
  $region24: #{autoencoder_forward.1} parent=0 // pred_region
    _
  $region25: #{autoencoder_forward.1} parent=0 // pred_fallthru
    _
  // Predicated region
  $region26: #{autoencoder_forward.1} parent=0 // pred_check
    _
  $region27: #{autoencoder_forward.1} parent=0 // pred_check_branch
    %37 = sbr.rel (0) target = $region29
  $region28: #{autoencoder_forward.1} parent=0 // pred_region
    _
  $region29: #{autoencoder_forward.1} parent=0 // pred_fallthru
    _
  // Predicated region
  $region30: #{autoencoder_forward.1} parent=0 // pred_check
    _
  $region31: #{autoencoder_forward.1} parent=0 // pred_check_branch
    %39 = sbr.rel (0) target = $region33
  $region32: #{autoencoder_forward.1} parent=0 // pred_region
    _
  $region33: #{autoencoder_forward.1} parent=0 // pred_fallthru
    _
  // Predicated region
  $region34: #{autoencoder_forward.1} parent=0 // pred_check
    _
  $region35: #{autoencoder_forward.1} parent=0 // pred_check_branch
    %41 = sbr.rel (0) target = $region37
  $region36: #{autoencoder_forward.1} parent=0 // pred_region
    _
  $region37: #{autoencoder_forward.1} parent=0 // pred_fallthru
    _
  // Predicated region
  $region38: #{autoencoder_forward.1} parent=0 // pred_check
    _
  $region39: #{autoencoder_forward.1} parent=0 // pred_check_branch
    %43 = sbr.rel (0) target = $region41
  $region40: #{autoencoder_forward.1} parent=0 // pred_region
    _
  $region41: #{autoencoder_forward.1} parent=0 // pred_fallthru
    _
  // Predicated region
  $region42: #{autoencoder_forward.1} parent=0 // pred_check
    _
  $region43: #{autoencoder_forward.1} parent=0 // pred_check_branch
    %45 = sbr.rel (0) target = $region45
  $region44: #{autoencoder_forward.1} parent=0 // pred_region
    _
  $region45: #{autoencoder_forward.1} parent=0 // pred_fallthru
    _
  // Predicated region
  $region46: #{autoencoder_forward.1} parent=0 // pred_check
    _
  $region47: #{autoencoder_forward.1} parent=0 // pred_check_branch
    %47 = sbr.rel (0) target = $region49
  $region48: #{autoencoder_forward.1} parent=0 // pred_region
    _
  $region49: #{autoencoder_forward.1} parent=0 // pred_fallthru
    _
  // Predicated region
  $region50: #{autoencoder_forward.1} parent=0 // pred_check
    _
  $region51: #{autoencoder_forward.1} parent=0 // pred_check_branch
    %49 = sbr.rel (0) target = $region53
  $region52: #{autoencoder_forward.1} parent=0 // pred_region
    _
  $region53: #{autoencoder_forward.1} parent=0 // pred_fallthru
    _
  // Predicated region
  $region54: #{autoencoder_forward.1} parent=0 // pred_check
    _
  $region55: #{autoencoder_forward.1} parent=0 // pred_check_branch
    %51 = sbr.rel (0) target = $region57
  $region56: #{autoencoder_forward.1} parent=0 // pred_region
    _
  $region57: #{autoencoder_forward.1} parent=0 // pred_fallthru
    _
  // Predicated region
  $region58: #{autoencoder_forward.1} parent=0 // pred_check
    _
  $region59: #{autoencoder_forward.1} parent=0 // pred_check_branch
    %53 = sbr.rel (0) target = $region61
  $region60: #{autoencoder_forward.1} parent=0 // pred_region
    _
  $region61: #{autoencoder_forward.1} parent=0 // pred_fallthru
    _
  // Predicated region
  $region62: #{autoencoder_forward.1} parent=0 // pred_check
    _
  $region63: #{autoencoder_forward.1} parent=0 // pred_check_branch
    %55 = sbr.rel (0) target = $region65
  $region64: #{autoencoder_forward.1} parent=0 // pred_region
    _
  $region65: #{autoencoder_forward.1} parent=0 // pred_fallthru
    _
  // Predicated region
  $region66: #{autoencoder_forward.1} parent=0 // pred_check
    _
  $region67: #{autoencoder_forward.1} parent=0 // pred_check_branch
    %57 = sbr.rel (0) target = $region69
  $region68: #{autoencoder_forward.1} parent=0 // pred_region
    _
  $region69: #{autoencoder_forward.1} parent=0 // pred_fallthru
    _
  // Predicated region
  $region70: #{autoencoder_forward.1} parent=0 // pred_check
    _
  $region71: #{autoencoder_forward.1} parent=0 // pred_check_branch
    %59 = sbr.rel (0) target = $region73
  $region72: #{autoencoder_forward.1} parent=0 // pred_region
    _
  $region73: #{autoencoder_forward.1} parent=0 // pred_fallthru
    _
  // Predicated region
  $region74: #{autoencoder_forward.1} parent=0 // pred_check
    _
  $region75: #{autoencoder_forward.1} parent=0 // pred_check_branch
    %61 = sbr.rel (0) target = $region77
  $region76: #{autoencoder_forward.1} parent=0 // pred_region
    _
  $region77: #{autoencoder_forward.1} parent=0 // pred_fallthru
    _
  %v63 = vld [vmem:[%s1] sm:$0xf]
  %v64 = vld [vmem:[%s1 + $0x4] sm:$0xf]
  %v65 = vld [vmem:[%s2] sm:$0xff]
  %v66 = vld [vmem:[%s2 + $0x8] sm:$0xff]
  %v67 = vld [vmem:[%s0] sm:$0xf]
  %v68 = vld [vmem:[%s0 + $0x4] sm:$0xf]
  %v69 = vld [vmem:[%s0 + $0x8] sm:$0xf]
  %v70 = vld [vmem:[%s0 + $0xc] sm:$0x3]
  %72 = vset.pattern.permute.xlu0 0
  %73 = vperm.xlu0 %72, %v65
  %v74 = vpop.permute.xlu0 %73
  %77 = vset.pattern.permute.xlu0 0
  %78 = vperm.xlu0 %77, %v66
  %v79 = vpop.permute.xlu0 %78
  %v83 = vunpack.c.l.b16 %v63
  %v84 = vunpack.c.l.b16 %v64
  %v85 = vpack.c.b16 %v84, %v83
  %v90 = vunpack.c.l.b16 %v67
  %v91 = vunpack.c.l.b16 %v68
  %v92 = vunpack.c.l.b16 %v69
  %v93 = vunpack.c.l.b16 %v70
  %v94 = vpack.c.b16 %v91, %v90
  %v95 = vpack.c.b16 %v93, %v92
  %vm97 = vcmask 220160
  %v99 = vsel %vm97, %v85, 0
  %vm101 = vcmask 1044480
  %vm102 = vcmask 1045504
  %v103 = vsel %vm101, 4294967295, 65535
  %v104 = vsel %vm102, %v103, 0
  %v106 = vand.u32 %v95, %v104
  %108 = vmatprep.subr.bf16.mxu0 0
  %109 = vmatpush1.bf16.msra.mxu0 %v94
  %110 = vmatprep.subr.bf16.mxu0 0
  %111 = vmatpush1.bf16.msra.mxu0 %v106
  %112 = vmatprep.subr.bf16.mxu0 0
  %113 = vmatpush1.bf16.msra.mxu0 0
  %114 = vmatprep.subr.bf16.mxu0 0
  %115 = vmatpush1.bf16.msra.mxu0 0
  %116 = vmatprep.subr.bf16.mxu0 0
  %117 = vmatpush1.bf16.msra.mxu0 0
  %118 = vmatprep.subr.bf16.mxu0 0
  %119 = vmatpush1.bf16.msra.mxu0 0
  %120 = vmatprep.subr.bf16.mxu0 0
  %121 = vmatpush1.bf16.msra.mxu0 0
  %122 = vmatprep.subr.bf16.mxu0 0
  %123 = vmatpush1.bf16.msra.mxu0 0
  %124 = vmatprep.subr.bf16.mxu0 0
  %125 = vmatpush1.bf16.msra.mxu0 0
  %126 = vmatprep.subr.bf16.mxu0 0
  %127 = vmatpush1.bf16.msra.mxu0 0
  %128 = vmatprep.subr.bf16.mxu0 0
  %129 = vmatpush1.bf16.msra.mxu0 0
  %130 = vmatprep.subr.bf16.mxu0 0
  %131 = vmatpush1.bf16.msra.mxu0 0
  %132 = vmatprep.subr.bf16.mxu0 0
  %133 = vmatpush1.bf16.msra.mxu0 0
  %134 = vmatprep.subr.bf16.mxu0 0
  %135 = vmatpush1.bf16.msra.mxu0 0
  %136 = vmatprep.subr.bf16.mxu0 0
  %137 = vmatpush1.bf16.msra.mxu0 0
  %138 = vmatprep.subr.bf16.mxu0 0
  %139 = vmatpush1.bf16.msra.mxu0 0
  %140 = vmatprep.mubr.bf16.mxu0 0
  %141 = vmatmul.mubr.bf16.gmra.mrb[0].mxu0 %v99
  %v142 = vpop.f32.mrb[0].mxu0
  %v143 = vadd.f32 %v74, %v142
  %v144 = vpop.f32.mrb[0].mxu0
  %v145 = vpop.f32.mrb[0].mxu0
  %v146 = vadd.f32 %v79, %v145
  %v147 = vpop.f32.mrb[0].mxu0
  %148 = vdwg.mxu0
  %v149 = vmax.f32 %v143, 0.0
  %v150 = vmax.f32 %v146, 0.0
  %v151 = vpack.c.bf16 %v150, %v149
  %s152 = scalar_lea.vmem %s0, 16
  %v153 = vld [vmem:[%s152] sm:$0xf]
  %v154 = vld [vmem:[%s152 + $0x4] sm:$0xf]
  %v155 = vld [vmem:[%s152 + $0x8] sm:$0xf]
  %v156 = vld [vmem:[%s152 + $0xc] sm:$0x3]
  %v161 = vunpack.c.l.b16 %v153
  %v162 = vunpack.c.l.b16 %v154
  %v163 = vunpack.c.l.b16 %v155
  %v164 = vunpack.c.l.b16 %v156
  %v165 = vpack.c.b16 %v162, %v161
  %v166 = vpack.c.b16 %v164, %v163
  %v169 = vand.u32 %v166, %v104
  %171 = vmatprep.subr.bf16.mxu0 0
  %172 = vmatpush1.bf16.msra.mxu0 %v165
  %173 = vmatprep.subr.bf16.mxu0 0
  %174 = vmatpush1.bf16.msra.mxu0 %v169
  %175 = vmatprep.subr.bf16.mxu0 0
  %176 = vmatpush1.bf16.msra.mxu0 0
  %177 = vmatprep.subr.bf16.mxu0 0
  %178 = vmatpush1.bf16.msra.mxu0 0
  %179 = vmatprep.subr.bf16.mxu0 0
  %180 = vmatpush1.bf16.msra.mxu0 0
  %181 = vmatprep.subr.bf16.mxu0 0
  %182 = vmatpush1.bf16.msra.mxu0 0
  %183 = vmatprep.subr.bf16.mxu0 0
  %184 = vmatpush1.bf16.msra.mxu0 0
  %185 = vmatprep.subr.bf16.mxu0 0
  %186 = vmatpush1.bf16.msra.mxu0 0
  %187 = vmatprep.subr.bf16.mxu0 0
  %188 = vmatpush1.bf16.msra.mxu0 0
  %189 = vmatprep.subr.bf16.mxu0 0
  %190 = vmatpush1.bf16.msra.mxu0 0
  %191 = vmatprep.subr.bf16.mxu0 0
  %192 = vmatpush1.bf16.msra.mxu0 0
  %193 = vmatprep.subr.bf16.mxu0 0
  %194 = vmatpush1.bf16.msra.mxu0 0
  %195 = vmatprep.subr.bf16.mxu0 0
  %196 = vmatpush1.bf16.msra.mxu0 0
  %197 = vmatprep.subr.bf16.mxu0 0
  %198 = vmatpush1.bf16.msra.mxu0 0
  %199 = vmatprep.subr.bf16.mxu0 0
  %200 = vmatpush1.bf16.msra.mxu0 0
  %201 = vmatprep.subr.bf16.mxu0 0
  %202 = vmatpush1.bf16.msra.mxu0 0
  %203 = vmatprep.mubr.bf16.mxu0 0
  %204 = vmatmul.mubr.bf16.gmra.mrb[0].mxu0 %v99
  %v205 = vpop.f32.mrb[0].mxu0
  %v206 = vadd.f32 %v74, %v205
  %v207 = vpop.f32.mrb[0].mxu0
  %v208 = vpop.f32.mrb[0].mxu0
  %v209 = vadd.f32 %v79, %v208
  %v210 = vpop.f32.mrb[0].mxu0
  %211 = vdwg.mxu0
  %v212 = vmax.f32 %v206, 0.0
  %v213 = vmax.f32 %v209, 0.0
  %v214 = vpack.c.bf16 %v213, %v212
  %s215 = scalar_lea.vmem %s0, 32
  %v216 = vld [vmem:[%s215] sm:$0xf]
  %v217 = vld [vmem:[%s215 + $0x4] sm:$0xf]
  %v218 = vld [vmem:[%s215 + $0x8] sm:$0xf]
  %v219 = vld [vmem:[%s215 + $0xc] sm:$0x3]
  %v224 = vunpack.c.l.b16 %v216
  %v225 = vunpack.c.l.b16 %v217
  %v226 = vunpack.c.l.b16 %v218
  %v227 = vunpack.c.l.b16 %v219
  %v228 = vpack.c.b16 %v225, %v224
  %v229 = vpack.c.b16 %v227, %v226
  %v232 = vand.u32 %v229, %v104
  %234 = vmatprep.subr.bf16.mxu0 0
  %235 = vmatpush1.bf16.msra.mxu0 %v228
  %236 = vmatprep.subr.bf16.mxu0 0
  %237 = vmatpush1.bf16.msra.mxu0 %v232
  %238 = vmatprep.subr.bf16.mxu0 0
  %239 = vmatpush1.bf16.msra.mxu0 0
  %240 = vmatprep.subr.bf16.mxu0 0
  %241 = vmatpush1.bf16.msra.mxu0 0
  %242 = vmatprep.subr.bf16.mxu0 0
  %243 = vmatpush1.bf16.msra.mxu0 0
  %244 = vmatprep.subr.bf16.mxu0 0
  %245 = vmatpush1.bf16.msra.mxu0 0
  %246 = vmatprep.subr.bf16.mxu0 0
  %247 = vmatpush1.bf16.msra.mxu0 0
  %248 = vmatprep.subr.bf16.mxu0 0
  %249 = vmatpush1.bf16.msra.mxu0 0
  %250 = vmatprep.subr.bf16.mxu0 0
  %251 = vmatpush1.bf16.msra.mxu0 0
  %252 = vmatprep.subr.bf16.mxu0 0
  %253 = vmatpush1.bf16.msra.mxu0 0
  %254 = vmatprep.subr.bf16.mxu0 0
  %255 = vmatpush1.bf16.msra.mxu0 0
  %256 = vmatprep.subr.bf16.mxu0 0
  %257 = vmatpush1.bf16.msra.mxu0 0
  %258 = vmatprep.subr.bf16.mxu0 0
  %259 = vmatpush1.bf16.msra.mxu0 0
  %260 = vmatprep.subr.bf16.mxu0 0
  %261 = vmatpush1.bf16.msra.mxu0 0
  %262 = vmatprep.subr.bf16.mxu0 0
  %263 = vmatpush1.bf16.msra.mxu0 0
  %264 = vmatprep.subr.bf16.mxu0 0
  %265 = vmatpush1.bf16.msra.mxu0 0
  %266 = vmatprep.mubr.bf16.mxu0 0
  %267 = vmatmul.mubr.bf16.gmra.mrb[0].mxu0 %v99
  %v268 = vpop.f32.mrb[0].mxu0
  %v269 = vadd.f32 %v74, %v268
  %v270 = vpop.f32.mrb[0].mxu0
  %v271 = vpop.f32.mrb[0].mxu0
  %v272 = vadd.f32 %v79, %v271
  %v273 = vpop.f32.mrb[0].mxu0
  %274 = vdwg.mxu0
  %v275 = vmax.f32 %v269, 0.0
  %v276 = vmax.f32 %v272, 0.0
  %v277 = vpack.c.bf16 %v276, %v275
  %s278 = scalar_lea.vmem %s0, 48
  %v279 = vld [vmem:[%s278] sm:$0xf]
  %v280 = vld [vmem:[%s278 + $0x4] sm:$0xf]
  %v281 = vld [vmem:[%s278 + $0x8] sm:$0xf]
  %v282 = vld [vmem:[%s278 + $0xc] sm:$0x3]
  %v287 = vunpack.c.l.b16 %v279
  %v288 = vunpack.c.l.b16 %v280
  %v289 = vunpack.c.l.b16 %v281
  %v290 = vunpack.c.l.b16 %v282
  %v291 = vpack.c.b16 %v288, %v287
  %v292 = vpack.c.b16 %v290, %v289
  %v295 = vand.u32 %v292, %v104
  %297 = vmatprep.subr.bf16.mxu0 0
  %298 = vmatpush1.bf16.msra.mxu0 %v291
  %299 = vmatprep.subr.bf16.mxu0 0
  %300 = vmatpush1.bf16.msra.mxu0 %v295
  %301 = vmatprep.subr.bf16.mxu0 0
  %302 = vmatpush1.bf16.msra.mxu0 0
  %303 = vmatprep.subr.bf16.mxu0 0
  %304 = vmatpush1.bf16.msra.mxu0 0
  %305 = vmatprep.subr.bf16.mxu0 0
  %306 = vmatpush1.bf16.msra.mxu0 0
  %307 = vmatprep.subr.bf16.mxu0 0
  %308 = vmatpush1.bf16.msra.mxu0 0
  %309 = vmatprep.subr.bf16.mxu0 0
  %310 = vmatpush1.bf16.msra.mxu0 0
  %311 = vmatprep.subr.bf16.mxu0 0
  %312 = vmatpush1.bf16.msra.mxu0 0
  %313 = vmatprep.subr.bf16.mxu0 0
  %314 = vmatpush1.bf16.msra.mxu0 0
  %315 = vmatprep.subr.bf16.mxu0 0
  %316 = vmatpush1.bf16.msra.mxu0 0
  %317 = vmatprep.subr.bf16.mxu0 0
  %318 = vmatpush1.bf16.msra.mxu0 0
  %319 = vmatprep.subr.bf16.mxu0 0
  %320 = vmatpush1.bf16.msra.mxu0 0
  %321 = vmatprep.subr.bf16.mxu0 0
  %322 = vmatpush1.bf16.msra.mxu0 0
  %323 = vmatprep.subr.bf16.mxu0 0
  %324 = vmatpush1.bf16.msra.mxu0 0
  %325 = vmatprep.subr.bf16.mxu0 0
  %326 = vmatpush1.bf16.msra.mxu0 0
  %327 = vmatprep.subr.bf16.mxu0 0
  %328 = vmatpush1.bf16.msra.mxu0 0
  %329 = vmatprep.mubr.bf16.mxu0 0
  %330 = vmatmul.mubr.bf16.gmra.mrb[0].mxu0 %v99
  %v331 = vpop.f32.mrb[0].mxu0
  %v332 = vadd.f32 %v74, %v331
  %v333 = vpop.f32.mrb[0].mxu0
  %v334 = vpop.f32.mrb[0].mxu0
  %v335 = vadd.f32 %v79, %v334
  %v336 = vpop.f32.mrb[0].mxu0
  %337 = vdwg.mxu0
  %v338 = vmax.f32 %v332, 0.0
  %v339 = vmax.f32 %v335, 0.0
  %v340 = vpack.c.bf16 %v339, %v338
  %v341 = vld [vmem:[%s13] sm:$0xf]
  %v342 = vld [vmem:[%s13 + $0x4] sm:$0xf]
  %v343 = vld [vmem:[%s13 + $0x8] sm:$0xf]
  %v344 = vld [vmem:[%s13 + $0xc] sm:$0xf]
  %v345 = vld [vmem:[%s13 + $0x10] sm:$0xf]
  %v346 = vld [vmem:[%s13 + $0x14] sm:$0xf]
  %v347 = vld [vmem:[%s13 + $0x18] sm:$0xf]
  %v348 = vld [vmem:[%s13 + $0x1c] sm:$0xf]
  %v349 = vld [vmem:[%s13 + $0x20] sm:$0xf]
  %v350 = vld [vmem:[%s13 + $0x24] sm:$0xf]
  %v351 = vld [vmem:[%s13 + $0x28] sm:$0xf]
  %v352 = vld [vmem:[%s13 + $0x2c] sm:$0xf]
  %v353 = vld [vmem:[%s13 + $0x30] sm:$0x1]
  %v354 = vld [vmem:[%s14] sm:$0xf]
  %v355 = vld [vmem:[%s14 + $0x4] sm:$0xf]
  %v356 = vld [vmem:[%s14 + $0x8] sm:$0xf]
  %v357 = vld [vmem:[%s14 + $0xc] sm:$0xf]
  %v358 = vld [vmem:[%s14 + $0x10] sm:$0xf]
  %v359 = vld [vmem:[%s14 + $0x14] sm:$0xf]
  %v360 = vld [vmem:[%s14 + $0x18] sm:$0xf]
  %v361 = vld [vmem:[%s14 + $0x1c] sm:$0xf]
  %v362 = vld [vmem:[%s14 + $0x20] sm:$0xf]
  %v363 = vld [vmem:[%s14 + $0x24] sm:$0xf]
  %v364 = vld [vmem:[%s14 + $0x28] sm:$0xf]
  %v365 = vld [vmem:[%s14 + $0x2c] sm:$0xf]
  %v366 = vld [vmem:[%s14 + $0x30] sm:$0x1]
  %v367 = vld [vmem:[%s15] sm:$0xf]
  %v368 = vld [vmem:[%s15 + $0x4] sm:$0xf]
  %v369 = vld [vmem:[%s15 + $0x8] sm:$0xf]
  %v370 = vld [vmem:[%s15 + $0xc] sm:$0xf]
  %v371 = vld [vmem:[%s15 + $0x10] sm:$0xf]
  %v372 = vld [vmem:[%s15 + $0x14] sm:$0xf]
  %v373 = vld [vmem:[%s15 + $0x18] sm:$0xf]
  %v374 = vld [vmem:[%s15 + $0x1c] sm:$0xf]
  %v375 = vld [vmem:[%s15 + $0x20] sm:$0xf]
  %v376 = vld [vmem:[%s15 + $0x24] sm:$0xf]
  %v377 = vld [vmem:[%s15 + $0x28] sm:$0xf]
  %v378 = vld [vmem:[%s15 + $0x2c] sm:$0xf]
  %v379 = vld [vmem:[%s15 + $0x30] sm:$0x1]
  %v393 = vunpack.c.l.b16 %v341
  %v394 = vunpack.c.l.b16 %v342
  %v395 = vunpack.c.l.b16 %v343
  %v396 = vunpack.c.l.b16 %v344
  %v397 = vunpack.c.l.b16 %v345
  %v398 = vunpack.c.l.b16 %v346
  %v399 = vunpack.c.l.b16 %v347
  %v400 = vunpack.c.l.b16 %v348
  %v401 = vunpack.c.l.b16 %v349
  %v402 = vunpack.c.l.b16 %v350
  %v403 = vunpack.c.l.b16 %v351
  %v404 = vunpack.c.l.b16 %v352
  %v405 = vunpack.c.l.b16 %v353
  %v406 = vpack.c.b16 %v394, %v393
  %v407 = vpack.c.b16 %v396, %v395
  %v408 = vpack.c.b16 %v398, %v397
  %v409 = vpack.c.b16 %v400, %v399
  %v410 = vpack.c.b16 %v402, %v401
  %v411 = vpack.c.b16 %v404, %v403
  %v412 = vpack.c.b16 %v405, %v405
  %vm419 = vcmask 801792
  %v421 = vsel %vm419, %v214, 0
  %vm423 = vcmask 1040384
  %v425 = vsel %vm423, %v412, 0
  %427 = vmatprep.subr.bf16.mxu0 0
  %428 = vmatpush1.bf16.msra.mxu0 %v406
  %429 = vmatprep.subr.bf16.mxu0 0
  %430 = vmatpush1.bf16.msra.mxu0 %v407
  %431 = vmatprep.subr.bf16.mxu0 0
  %432 = vmatpush1.bf16.msra.mxu0 %v408
  %433 = vmatprep.subr.bf16.mxu0 0
  %434 = vmatpush1.bf16.msra.mxu0 %v409
  %435 = vmatprep.subr.bf16.mxu0 0
  %436 = vmatpush1.bf16.msra.mxu0 %v410
  %437 = vmatprep.subr.bf16.mxu0 0
  %438 = vmatpush1.bf16.msra.mxu0 %v411
  %439 = vmatprep.subr.bf16.mxu0 0
  %440 = vmatpush1.bf16.msra.mxu0 %v425
  %441 = vmatprep.subr.bf16.mxu0 0
  %442 = vmatpush1.bf16.msra.mxu0 0
  %443 = vmatprep.subr.bf16.mxu0 0
  %444 = vmatpush1.bf16.msra.mxu0 0
  %445 = vmatprep.subr.bf16.mxu0 0
  %446 = vmatpush1.bf16.msra.mxu0 0
  %447 = vmatprep.subr.bf16.mxu0 0
  %448 = vmatpush1.bf16.msra.mxu0 0
  %449 = vmatprep.subr.bf16.mxu0 0
  %450 = vmatpush1.bf16.msra.mxu0 0
  %451 = vmatprep.subr.bf16.mxu0 0
  %452 = vmatpush1.bf16.msra.mxu0 0
  %453 = vmatprep.subr.bf16.mxu0 0
  %454 = vmatpush1.bf16.msra.mxu0 0
  %455 = vmatprep.subr.bf16.mxu0 0
  %456 = vmatpush1.bf16.msra.mxu0 0
  %457 = vmatprep.subr.bf16.mxu0 0
  %458 = vmatpush1.bf16.msra.mxu0 0
  %459 = vmatprep.mubr.bf16.mxu0 0
  %460 = vmatmul.mubr.bf16.gmra.mrb[0].mxu0 %v421
  %v461 = vpop.f32.mrb[0].mxu0
  %v462 = vadd.f32 0.0, %v461
  %v463 = vpop.f32.mrb[0].mxu0
  %v464 = vpop.f32.mrb[0].mxu0
  %v465 = vadd.f32 0.0, %v464
  %v466 = vpop.f32.mrb[0].mxu0
  %467 = vdwg.mxu0
  %v468 = vpack.c.bf16 %v465, %v462
  %v482 = vunpack.c.l.b16 %v354
  %v483 = vunpack.c.l.b16 %v355
  %v484 = vunpack.c.l.b16 %v356
  %v485 = vunpack.c.l.b16 %v357
  %v486 = vunpack.c.l.b16 %v358
  %v487 = vunpack.c.l.b16 %v359
  %v488 = vunpack.c.l.b16 %v360
  %v489 = vunpack.c.l.b16 %v361
  %v490 = vunpack.c.l.b16 %v362
  %v491 = vunpack.c.l.b16 %v363
  %v492 = vunpack.c.l.b16 %v364
  %v493 = vunpack.c.l.b16 %v365
  %v494 = vunpack.c.l.b16 %v366
  %v495 = vpack.c.b16 %v483, %v482
  %v496 = vpack.c.b16 %v485, %v484
  %v497 = vpack.c.b16 %v487, %v486
  %v498 = vpack.c.b16 %v489, %v488
  %v499 = vpack.c.b16 %v491, %v490
  %v500 = vpack.c.b16 %v493, %v492
  %v501 = vpack.c.b16 %v494, %v494
  %v509 = vsel %vm419, %v277, 0
  %v512 = vsel %vm423, %v501, 0
  %514 = vmatprep.subr.bf16.mxu0 0
  %515 = vmatpush1.bf16.msra.mxu0 %v495
  %516 = vmatprep.subr.bf16.mxu0 0
  %517 = vmatpush1.bf16.msra.mxu0 %v496
  %518 = vmatprep.subr.bf16.mxu0 0
  %519 = vmatpush1.bf16.msra.mxu0 %v497
  %520 = vmatprep.subr.bf16.mxu0 0
  %521 = vmatpush1.bf16.msra.mxu0 %v498
  %522 = vmatprep.subr.bf16.mxu0 0
  %523 = vmatpush1.bf16.msra.mxu0 %v499
  %524 = vmatprep.subr.bf16.mxu0 0
  %525 = vmatpush1.bf16.msra.mxu0 %v500
  %526 = vmatprep.subr.bf16.mxu0 0
  %527 = vmatpush1.bf16.msra.mxu0 %v512
  %528 = vmatprep.subr.bf16.mxu0 0
  %529 = vmatpush1.bf16.msra.mxu0 0
  %530 = vmatprep.subr.bf16.mxu0 0
  %531 = vmatpush1.bf16.msra.mxu0 0
  %532 = vmatprep.subr.bf16.mxu0 0
  %533 = vmatpush1.bf16.msra.mxu0 0
  %534 = vmatprep.subr.bf16.mxu0 0
  %535 = vmatpush1.bf16.msra.mxu0 0
  %536 = vmatprep.subr.bf16.mxu0 0
  %537 = vmatpush1.bf16.msra.mxu0 0
  %538 = vmatprep.subr.bf16.mxu0 0
  %539 = vmatpush1.bf16.msra.mxu0 0
  %540 = vmatprep.subr.bf16.mxu0 0
  %541 = vmatpush1.bf16.msra.mxu0 0
  %542 = vmatprep.subr.bf16.mxu0 0
  %543 = vmatpush1.bf16.msra.mxu0 0
  %544 = vmatprep.subr.bf16.mxu0 0
  %545 = vmatpush1.bf16.msra.mxu0 0
  %546 = vmatprep.mubr.bf16.mxu0 0
  %547 = vmatmul.mubr.bf16.gmra.mrb[0].mxu0 %v509
  %v548 = vpop.f32.mrb[0].mxu0
  %v549 = vadd.f32 0.0, %v548
  %v550 = vpop.f32.mrb[0].mxu0
  %v551 = vpop.f32.mrb[0].mxu0
  %v552 = vadd.f32 0.0, %v551
  %v553 = vpop.f32.mrb[0].mxu0
  %554 = vdwg.mxu0
  %v555 = vpack.c.bf16 %v552, %v549
  %v557 = vsel %vm419, %v340, 0
  %559 = vmatprep.subr.bf16.mxu0 0
  %560 = vmatpush1.bf16.msra.mxu0 %v406
  %561 = vmatprep.subr.bf16.mxu0 0
  %562 = vmatpush1.bf16.msra.mxu0 %v407
  %563 = vmatprep.subr.bf16.mxu0 0
  %564 = vmatpush1.bf16.msra.mxu0 %v408
  %565 = vmatprep.subr.bf16.mxu0 0
  %566 = vmatpush1.bf16.msra.mxu0 %v409
  %567 = vmatprep.subr.bf16.mxu0 0
  %568 = vmatpush1.bf16.msra.mxu0 %v410
  %569 = vmatprep.subr.bf16.mxu0 0
  %570 = vmatpush1.bf16.msra.mxu0 %v411
  %571 = vmatprep.subr.bf16.mxu0 0
  %572 = vmatpush1.bf16.msra.mxu0 %v425
  %573 = vmatprep.subr.bf16.mxu0 0
  %574 = vmatpush1.bf16.msra.mxu0 0
  %575 = vmatprep.subr.bf16.mxu0 0
  %576 = vmatpush1.bf16.msra.mxu0 0
  %577 = vmatprep.subr.bf16.mxu0 0
  %578 = vmatpush1.bf16.msra.mxu0 0
  %579 = vmatprep.subr.bf16.mxu0 0
  %580 = vmatpush1.bf16.msra.mxu0 0
  %581 = vmatprep.subr.bf16.mxu0 0
  %582 = vmatpush1.bf16.msra.mxu0 0
  %583 = vmatprep.subr.bf16.mxu0 0
  %584 = vmatpush1.bf16.msra.mxu0 0
  %585 = vmatprep.subr.bf16.mxu0 0
  %586 = vmatpush1.bf16.msra.mxu0 0
  %587 = vmatprep.subr.bf16.mxu0 0
  %588 = vmatpush1.bf16.msra.mxu0 0
  %589 = vmatprep.subr.bf16.mxu0 0
  %590 = vmatpush1.bf16.msra.mxu0 0
  %591 = vmatprep.mubr.bf16.mxu0 0
  %592 = vmatmul.mubr.bf16.gmra.mrb[0].mxu0 %v557
  %v593 = vpop.f32.mrb[0].mxu0
  %v594 = vadd.f32 0.0, %v593
  %v595 = vpop.f32.mrb[0].mxu0
  %v596 = vpop.f32.mrb[0].mxu0
  %v597 = vadd.f32 0.0, %v596
  %v598 = vpop.f32.mrb[0].mxu0
  %599 = vdwg.mxu0
  %v600 = vpack.c.bf16 %v597, %v594
  %601 = vmatprep.subr.bf16.mxu0 0
  %602 = vmatpush1.bf16.msra.mxu0 %v495
  %603 = vmatprep.subr.bf16.mxu0 0
  %604 = vmatpush1.bf16.msra.mxu0 %v496
  %605 = vmatprep.subr.bf16.mxu0 0
  %606 = vmatpush1.bf16.msra.mxu0 %v497
  %607 = vmatprep.subr.bf16.mxu0 0
  %608 = vmatpush1.bf16.msra.mxu0 %v498
  %609 = vmatprep.subr.bf16.mxu0 0
  %610 = vmatpush1.bf16.msra.mxu0 %v499
  %611 = vmatprep.subr.bf16.mxu0 0
  %612 = vmatpush1.bf16.msra.mxu0 %v500
  %613 = vmatprep.subr.bf16.mxu0 0
  %614 = vmatpush1.bf16.msra.mxu0 %v512
  %615 = vmatprep.subr.bf16.mxu0 0
  %616 = vmatpush1.bf16.msra.mxu0 0
  %617 = vmatprep.subr.bf16.mxu0 0
  %618 = vmatpush1.bf16.msra.mxu0 0
  %619 = vmatprep.subr.bf16.mxu0 0
  %620 = vmatpush1.bf16.msra.mxu0 0
  %621 = vmatprep.subr.bf16.mxu0 0
  %622 = vmatpush1.bf16.msra.mxu0 0
  %623 = vmatprep.subr.bf16.mxu0 0
  %624 = vmatpush1.bf16.msra.mxu0 0
  %625 = vmatprep.subr.bf16.mxu0 0
  %626 = vmatpush1.bf16.msra.mxu0 0
  %627 = vmatprep.subr.bf16.mxu0 0
  %628 = vmatpush1.bf16.msra.mxu0 0
  %629 = vmatprep.subr.bf16.mxu0 0
  %630 = vmatpush1.bf16.msra.mxu0 0
  %631 = vmatprep.subr.bf16.mxu0 0
  %632 = vmatpush1.bf16.msra.mxu0 0
  %633 = vmatprep.mubr.bf16.mxu0 0
  %634 = vmatmul.mubr.bf16.gmra.mrb[0].mxu0 %v557
  %v635 = vpop.f32.mrb[0].mxu0
  %v636 = vadd.f32 0.0, %v635
  %v637 = vpop.f32.mrb[0].mxu0
  %v638 = vpop.f32.mrb[0].mxu0
  %v639 = vadd.f32 0.0, %v638
  %v640 = vpop.f32.mrb[0].mxu0
  %641 = vdwg.mxu0
  %v642 = vpack.c.bf16 %v639, %v636
  %v656 = vunpack.c.l.b16 %v367
  %v657 = vunpack.c.l.b16 %v368
  %v658 = vunpack.c.l.b16 %v369
  %v659 = vunpack.c.l.b16 %v370
  %v660 = vunpack.c.l.b16 %v371
  %v661 = vunpack.c.l.b16 %v372
  %v662 = vunpack.c.l.b16 %v373
  %v663 = vunpack.c.l.b16 %v374
  %v664 = vunpack.c.l.b16 %v375
  %v665 = vunpack.c.l.b16 %v376
  %v666 = vunpack.c.l.b16 %v377
  %v667 = vunpack.c.l.b16 %v378
  %v668 = vunpack.c.l.b16 %v379
  %v669 = vpack.c.b16 %v657, %v656
  %v670 = vpack.c.b16 %v659, %v658
  %v671 = vpack.c.b16 %v661, %v660
  %v672 = vpack.c.b16 %v663, %v662
  %v673 = vpack.c.b16 %v665, %v664
  %v674 = vpack.c.b16 %v667, %v666
  %v675 = vpack.c.b16 %v668, %v668
  %v683 = vsel %vm423, %v675, 0
  %685 = vmatprep.subr.bf16.mxu0 0
  %686 = vmatpush1.bf16.msra.mxu0 %v669
  %687 = vmatprep.subr.bf16.mxu0 0
  %688 = vmatpush1.bf16.msra.mxu0 %v670
  %689 = vmatprep.subr.bf16.mxu0 0
  %690 = vmatpush1.bf16.msra.mxu0 %v671
  %691 = vmatprep.subr.bf16.mxu0 0
  %692 = vmatpush1.bf16.msra.mxu0 %v672
  %693 = vmatprep.subr.bf16.mxu0 0
  %694 = vmatpush1.bf16.msra.mxu0 %v673
  %695 = vmatprep.subr.bf16.mxu0 0
  %696 = vmatpush1.bf16.msra.mxu0 %v674
  %697 = vmatprep.subr.bf16.mxu0 0
  %698 = vmatpush1.bf16.msra.mxu0 %v683
  %699 = vmatprep.subr.bf16.mxu0 0
  %700 = vmatpush1.bf16.msra.mxu0 0
  %701 = vmatprep.subr.bf16.mxu0 0
  %702 = vmatpush1.bf16.msra.mxu0 0
  %703 = vmatprep.subr.bf16.mxu0 0
  %704 = vmatpush1.bf16.msra.mxu0 0
  %705 = vmatprep.subr.bf16.mxu0 0
  %706 = vmatpush1.bf16.msra.mxu0 0
  %707 = vmatprep.subr.bf16.mxu0 0
  %708 = vmatpush1.bf16.msra.mxu0 0
  %709 = vmatprep.subr.bf16.mxu0 0
  %710 = vmatpush1.bf16.msra.mxu0 0
  %711 = vmatprep.subr.bf16.mxu0 0
  %712 = vmatpush1.bf16.msra.mxu0 0
  %713 = vmatprep.subr.bf16.mxu0 0
  %714 = vmatpush1.bf16.msra.mxu0 0
  %715 = vmatprep.subr.bf16.mxu0 0
  %716 = vmatpush1.bf16.msra.mxu0 0
  %717 = vmatprep.mubr.bf16.mxu0 0
  %718 = vmatmul.mubr.bf16.gmra.mrb[0].mxu0 %v557
  %v719 = vpop.f32.mrb[0].mxu0
  %v720 = vadd.f32 0.0, %v719
  %v721 = vpop.f32.mrb[0].mxu0
  %v722 = vpop.f32.mrb[0].mxu0
  %v723 = vadd.f32 0.0, %v722
  %v724 = vpop.f32.mrb[0].mxu0
  %725 = vdwg.mxu0
  %v726 = vpack.c.bf16 %v723, %v720
  %s727 = scalar_lea.vmem %s3, 64
  %v728 = vld [vmem:[%s727] sm:$0xf]
  %v729 = vld [vmem:[%s727 + $0x4] sm:$0xf]
  %v730 = vld [vmem:[%s727 + $0x8] sm:$0xf]
  %v731 = vld [vmem:[%s727 + $0xc] sm:$0xf]
  %s732 = scalar_lea.vmem %s3, 80
  %v733 = vld [vmem:[%s732] sm:$0xf]
  %v734 = vld [vmem:[%s732 + $0x4] sm:$0xf]
  %v735 = vld [vmem:[%s732 + $0x8] sm:$0xf]
  %v736 = vld [vmem:[%s732 + $0xc] sm:$0xf]
  %v741 = vunpack.c.l.b16 %v733
  %v742 = vunpack.c.l.b16 %v734
  %v743 = vunpack.c.l.b16 %v735
  %v744 = vunpack.c.l.b16 %v736
  %v745 = vpack.c.b16 %v742, %v741
  %v746 = vpack.c.b16 %v744, %v743
  %vm747 = vcmask 130048
  %v749 = vsel %vm747, %v745, 0
  %v752 = vsel %vm747, %v746, 0
  %754 = vmatprep.subr.bf16.mxu0 0
  %755 = vmatpush1.bf16.msra.mxu0 %v214
  %756 = vmatprep.subr.bf16.mxu0 0
  %757 = vmatpush1.bf16.msra.mxu0 0
  %758 = vmatprep.subr.bf16.mxu0 0
  %759 = vmatpush1.bf16.msra.mxu0 0
  %760 = vmatprep.subr.bf16.mxu0 0
  %761 = vmatpush1.bf16.msra.mxu0 0
  %762 = vmatprep.subr.bf16.mxu0 0
  %763 = vmatpush1.bf16.msra.mxu0 0
  %764 = vmatprep.subr.bf16.mxu0 0
  %765 = vmatpush1.bf16.msra.mxu0 0
  %766 = vmatprep.subr.bf16.mxu0 0
  %767 = vmatpush1.bf16.msra.mxu0 0
  %768 = vmatprep.subr.bf16.mxu0 0
  %769 = vmatpush1.bf16.msra.mxu0 0
  %770 = vmatprep.subr.bf16.mxu0 0
  %771 = vmatpush1.bf16.msra.mxu0 0
  %772 = vmatprep.subr.bf16.mxu0 0
  %773 = vmatpush1.bf16.msra.mxu0 0
  %774 = vmatprep.subr.bf16.mxu0 0
  %775 = vmatpush1.bf16.msra.mxu0 0
  %776 = vmatprep.subr.bf16.mxu0 0
  %777 = vmatpush1.bf16.msra.mxu0 0
  %778 = vmatprep.subr.bf16.mxu0 0
  %779 = vmatpush1.bf16.msra.mxu0 0
  %780 = vmatprep.subr.bf16.mxu0 0
  %781 = vmatpush1.bf16.msra.mxu0 0
  %782 = vmatprep.subr.bf16.mxu0 0
  %783 = vmatpush1.bf16.msra.mxu0 0
  %784 = vmatprep.subr.bf16.mxu0 0
  %785 = vmatpush1.bf16.msra.mxu0 0
  %786 = vmatprep.mubr.bf16.mxu0 0
  %787 = vmatmul.mubr.bf16.gmra.mrb[0].mxu0 %v749
  %v788 = vpop.f32.mrb[0].mxu0
  %v789 = vadd.f32 0.0, %v788
  %v790 = vpop.f32.mrb[0].mxu0
  %v791 = vpop.f32.mrb[0].mxu0
  %v792 = vadd.f32 0.0, %v791
  %v793 = vpop.f32.mrb[0].mxu0
  %794 = vmatprep.mubr.bf16.mxu0 0
  %795 = vmatmul.mubr.bf16.gmra.mrb[0].mxu0 %v752
  %v796 = vpop.f32.mrb[0].mxu0
  %v797 = vadd.f32 0.0, %v796
  %v798 = vpop.f32.mrb[0].mxu0
  %v799 = vpop.f32.mrb[0].mxu0
  %v800 = vadd.f32 0.0, %v799
  %v801 = vpop.f32.mrb[0].mxu0
  %802 = vdwg.mxu0
  %v807 = vunpack.c.l.b16 %v728
  %v808 = vunpack.c.l.b16 %v729
  %v809 = vunpack.c.l.b16 %v730
  %v810 = vunpack.c.l.b16 %v731
  %v811 = vpack.c.b16 %v808, %v807
  %v812 = vpack.c.b16 %v810, %v809
  %v814 = vsel %vm747, %v811, 0
  %v817 = vsel %vm747, %v812, 0
  %819 = vmatprep.subr.bf16.mxu0 0
  %820 = vmatpush1.bf16.msra.mxu0 %v151
  %821 = vmatprep.subr.bf16.mxu0 0
  %822 = vmatpush1.bf16.msra.mxu0 0
  %823 = vmatprep.subr.bf16.mxu0 0
  %824 = vmatpush1.bf16.msra.mxu0 0
  %825 = vmatprep.subr.bf16.mxu0 0
  %826 = vmatpush1.bf16.msra.mxu0 0
  %827 = vmatprep.subr.bf16.mxu0 0
  %828 = vmatpush1.bf16.msra.mxu0 0
  %829 = vmatprep.subr.bf16.mxu0 0
  %830 = vmatpush1.bf16.msra.mxu0 0
  %831 = vmatprep.subr.bf16.mxu0 0
  %832 = vmatpush1.bf16.msra.mxu0 0
  %833 = vmatprep.subr.bf16.mxu0 0
  %834 = vmatpush1.bf16.msra.mxu0 0
  %835 = vmatprep.subr.bf16.mxu0 0
  %836 = vmatpush1.bf16.msra.mxu0 0
  %837 = vmatprep.subr.bf16.mxu0 0
  %838 = vmatpush1.bf16.msra.mxu0 0
  %839 = vmatprep.subr.bf16.mxu0 0
  %840 = vmatpush1.bf16.msra.mxu0 0
  %841 = vmatprep.subr.bf16.mxu0 0
  %842 = vmatpush1.bf16.msra.mxu0 0
  %843 = vmatprep.subr.bf16.mxu0 0
  %844 = vmatpush1.bf16.msra.mxu0 0
  %845 = vmatprep.subr.bf16.mxu0 0
  %846 = vmatpush1.bf16.msra.mxu0 0
  %847 = vmatprep.subr.bf16.mxu0 0
  %848 = vmatpush1.bf16.msra.mxu0 0
  %849 = vmatprep.subr.bf16.mxu0 0
  %850 = vmatpush1.bf16.msra.mxu0 0
  %851 = vmatprep.mubr.bf16.mxu0 0
  %852 = vmatmul.mubr.bf16.gmra.mrb[0].mxu0 %v814
  %v853 = vpop.f32.mrb[0].mxu0
  %v854 = vadd.f32 %v789, %v853
  %v855 = vpop.f32.mrb[0].mxu0
  %v856 = vpop.f32.mrb[0].mxu0
  %v857 = vadd.f32 %v792, %v856
  %v858 = vpop.f32.mrb[0].mxu0
  %859 = vmatprep.mubr.bf16.mxu0 0
  %860 = vmatmul.mubr.bf16.gmra.mrb[0].mxu0 %v817
  %v861 = vpop.f32.mrb[0].mxu0
  %v862 = vadd.f32 %v797, %v861
  %v863 = vpop.f32.mrb[0].mxu0
  %v864 = vpop.f32.mrb[0].mxu0
  %v865 = vadd.f32 %v800, %v864
  %v866 = vpop.f32.mrb[0].mxu0
  %867 = vdwg.mxu0
  %s868 = scalar_lea.vmem %s3, 48
  %v869 = vld [vmem:[%s868] sm:$0xf]
  %v870 = vld [vmem:[%s868 + $0x4] sm:$0xf]
  %v871 = vld [vmem:[%s868 + $0x8] sm:$0xf]
  %v872 = vld [vmem:[%s868 + $0xc] sm:$0xf]
  %v877 = vunpack.c.l.b16 %v869
  %v878 = vunpack.c.l.b16 %v870
  %v879 = vunpack.c.l.b16 %v871
  %v880 = vunpack.c.l.b16 %v872
  %v881 = vpack.c.b16 %v878, %v877
  %v882 = vpack.c.b16 %v880, %v879
  %v884 = vsel %vm747, %v881, 0
  %v887 = vsel %vm747, %v882, 0
  %889 = vmatprep.subr.bf16.mxu0 0
  %890 = vmatpush1.bf16.msra.mxu0 %v468
  %891 = vmatprep.subr.bf16.mxu0 0
  %892 = vmatpush1.bf16.msra.mxu0 0
  %893 = vmatprep.subr.bf16.mxu0 0
  %894 = vmatpush1.bf16.msra.mxu0 0
  %895 = vmatprep.subr.bf16.mxu0 0
  %896 = vmatpush1.bf16.msra.mxu0 0
  %897 = vmatprep.subr.bf16.mxu0 0
  %898 = vmatpush1.bf16.msra.mxu0 0
  %899 = vmatprep.subr.bf16.mxu0 0
  %900 = vmatpush1.bf16.msra.mxu0 0
  %901 = vmatprep.subr.bf16.mxu0 0
  %902 = vmatpush1.bf16.msra.mxu0 0
  %903 = vmatprep.subr.bf16.mxu0 0
  %904 = vmatpush1.bf16.msra.mxu0 0
  %905 = vmatprep.subr.bf16.mxu0 0
  %906 = vmatpush1.bf16.msra.mxu0 0
  %907 = vmatprep.subr.bf16.mxu0 0
  %908 = vmatpush1.bf16.msra.mxu0 0
  %909 = vmatprep.subr.bf16.mxu0 0
  %910 = vmatpush1.bf16.msra.mxu0 0
  %911 = vmatprep.subr.bf16.mxu0 0
  %912 = vmatpush1.bf16.msra.mxu0 0
  %913 = vmatprep.subr.bf16.mxu0 0
  %914 = vmatpush1.bf16.msra.mxu0 0
  %915 = vmatprep.subr.bf16.mxu0 0
  %916 = vmatpush1.bf16.msra.mxu0 0
  %917 = vmatprep.subr.bf16.mxu0 0
  %918 = vmatpush1.bf16.msra.mxu0 0
  %919 = vmatprep.subr.bf16.mxu0 0
  %920 = vmatpush1.bf16.msra.mxu0 0
  %921 = vmatprep.mubr.bf16.mxu0 0
  %922 = vmatmul.mubr.bf16.gmra.mrb[0].mxu0 %v884
  %v923 = vpop.f32.mrb[0].mxu0
  %v924 = vadd.f32 0.0, %v923
  %v925 = vpop.f32.mrb[0].mxu0
  %v926 = vpop.f32.mrb[0].mxu0
  %v927 = vadd.f32 0.0, %v926
  %v928 = vpop.f32.mrb[0].mxu0
  %929 = vmatprep.mubr.bf16.mxu0 0
  %930 = vmatmul.mubr.bf16.gmra.mrb[0].mxu0 %v887
  %v931 = vpop.f32.mrb[0].mxu0
  %v932 = vadd.f32 0.0, %v931
  %v933 = vpop.f32.mrb[0].mxu0
  %v934 = vpop.f32.mrb[0].mxu0
  %v935 = vadd.f32 0.0, %v934
  %v936 = vpop.f32.mrb[0].mxu0
  %937 = vdwg.mxu0
  %v938 = vadd.f32 %v854, %v924
  %v939 = vadd.f32 %v857, %v927
  %v940 = vadd.f32 %v862, %v932
  %v941 = vadd.f32 %v865, %v935
  %s942 = scalar_lea.vmem %s3, 112
  %v943 = vld [vmem:[%s942] sm:$0xf]
  %v944 = vld [vmem:[%s942 + $0x4] sm:$0xf]
  %v945 = vld [vmem:[%s942 + $0x8] sm:$0xf]
  %v946 = vld [vmem:[%s942 + $0xc] sm:$0xf]
  %v951 = vunpack.c.l.b16 %v943
  %v952 = vunpack.c.l.b16 %v944
  %v953 = vunpack.c.l.b16 %v945
  %v954 = vunpack.c.l.b16 %v946
  %v955 = vpack.c.b16 %v952, %v951
  %v956 = vpack.c.b16 %v954, %v953
  %v958 = vsel %vm747, %v955, 0
  %v961 = vsel %vm747, %v956, 0
  %963 = vmatprep.subr.bf16.mxu0 0
  %964 = vmatpush1.bf16.msra.mxu0 %v277
  %965 = vmatprep.subr.bf16.mxu0 0
  %966 = vmatpush1.bf16.msra.mxu0 0
  %967 = vmatprep.subr.bf16.mxu0 0
  %968 = vmatpush1.bf16.msra.mxu0 0
  %969 = vmatprep.subr.bf16.mxu0 0
  %970 = vmatpush1.bf16.msra.mxu0 0
  %971 = vmatprep.subr.bf16.mxu0 0
  %972 = vmatpush1.bf16.msra.mxu0 0
  %973 = vmatprep.subr.bf16.mxu0 0
  %974 = vmatpush1.bf16.msra.mxu0 0
  %975 = vmatprep.subr.bf16.mxu0 0
  %976 = vmatpush1.bf16.msra.mxu0 0
  %977 = vmatprep.subr.bf16.mxu0 0
  %978 = vmatpush1.bf16.msra.mxu0 0
  %979 = vmatprep.subr.bf16.mxu0 0
  %980 = vmatpush1.bf16.msra.mxu0 0
  %981 = vmatprep.subr.bf16.mxu0 0
  %982 = vmatpush1.bf16.msra.mxu0 0
  %983 = vmatprep.subr.bf16.mxu0 0
  %984 = vmatpush1.bf16.msra.mxu0 0
  %985 = vmatprep.subr.bf16.mxu0 0
  %986 = vmatpush1.bf16.msra.mxu0 0
  %987 = vmatprep.subr.bf16.mxu0 0
  %988 = vmatpush1.bf16.msra.mxu0 0
  %989 = vmatprep.subr.bf16.mxu0 0
  %990 = vmatpush1.bf16.msra.mxu0 0
  %991 = vmatprep.subr.bf16.mxu0 0
  %992 = vmatpush1.bf16.msra.mxu0 0
  %993 = vmatprep.subr.bf16.mxu0 0
  %994 = vmatpush1.bf16.msra.mxu0 0
  %995 = vmatprep.mubr.bf16.mxu0 0
  %996 = vmatmul.mubr.bf16.gmra.mrb[0].mxu0 %v958
  %v997 = vpop.f32.mrb[0].mxu0
  %v998 = vadd.f32 0.0, %v997
  %v999 = vpop.f32.mrb[0].mxu0
  %v1000 = vpop.f32.mrb[0].mxu0
  %v1001 = vadd.f32 0.0, %v1000
  %v1002 = vpop.f32.mrb[0].mxu0
  %1003 = vmatprep.mubr.bf16.mxu0 0
  %1004 = vmatmul.mubr.bf16.gmra.mrb[0].mxu0 %v961
  %v1005 = vpop.f32.mrb[0].mxu0
  %v1006 = vadd.f32 0.0, %v1005
  %v1007 = vpop.f32.mrb[0].mxu0
  %v1008 = vpop.f32.mrb[0].mxu0
  %v1009 = vadd.f32 0.0, %v1008
  %v1010 = vpop.f32.mrb[0].mxu0
  %1011 = vdwg.mxu0
  %v1012 = vadd.f32 %v938, %v998
  %v1013 = vadd.f32 %v939, %v1001
  %v1014 = vadd.f32 %v940, %v1006
  %v1015 = vadd.f32 %v941, %v1009
  %s1016 = scalar_lea.vmem %s3, 16
  %v1017 = vld [vmem:[%s1016] sm:$0xf]
  %v1018 = vld [vmem:[%s1016 + $0x4] sm:$0xf]
  %v1019 = vld [vmem:[%s1016 + $0x8] sm:$0xf]
  %v1020 = vld [vmem:[%s1016 + $0xc] sm:$0xf]
  %v1025 = vunpack.c.l.b16 %v1017
  %v1026 = vunpack.c.l.b16 %v1018
  %v1027 = vunpack.c.l.b16 %v1019
  %v1028 = vunpack.c.l.b16 %v1020
  %v1029 = vpack.c.b16 %v1026, %v1025
  %v1030 = vpack.c.b16 %v1028, %v1027
  %v1032 = vsel %vm747, %v1029, 0
  %v1035 = vsel %vm747, %v1030, 0
  %1037 = vmatprep.subr.bf16.mxu0 0
  %1038 = vmatpush1.bf16.msra.mxu0 %v555
  %1039 = vmatprep.subr.bf16.mxu0 0
  %1040 = vmatpush1.bf16.msra.mxu0 0
  %1041 = vmatprep.subr.bf16.mxu0 0
  %1042 = vmatpush1.bf16.msra.mxu0 0
  %1043 = vmatprep.subr.bf16.mxu0 0
  %1044 = vmatpush1.bf16.msra.mxu0 0
  %1045 = vmatprep.subr.bf16.mxu0 0
  %1046 = vmatpush1.bf16.msra.mxu0 0
  %1047 = vmatprep.subr.bf16.mxu0 0
  %1048 = vmatpush1.bf16.msra.mxu0 0
  %1049 = vmatprep.subr.bf16.mxu0 0
  %1050 = vmatpush1.bf16.msra.mxu0 0
  %1051 = vmatprep.subr.bf16.mxu0 0
  %1052 = vmatpush1.bf16.msra.mxu0 0
  %1053 = vmatprep.subr.bf16.mxu0 0
  %1054 = vmatpush1.bf16.msra.mxu0 0
  %1055 = vmatprep.subr.bf16.mxu0 0
  %1056 = vmatpush1.bf16.msra.mxu0 0
  %1057 = vmatprep.subr.bf16.mxu0 0
  %1058 = vmatpush1.bf16.msra.mxu0 0
  %1059 = vmatprep.subr.bf16.mxu0 0
  %1060 = vmatpush1.bf16.msra.mxu0 0
  %1061 = vmatprep.subr.bf16.mxu0 0
  %1062 = vmatpush1.bf16.msra.mxu0 0
  %1063 = vmatprep.subr.bf16.mxu0 0
  %1064 = vmatpush1.bf16.msra.mxu0 0
  %1065 = vmatprep.subr.bf16.mxu0 0
  %1066 = vmatpush1.bf16.msra.mxu0 0
  %1067 = vmatprep.subr.bf16.mxu0 0
  %1068 = vmatpush1.bf16.msra.mxu0 0
  %1069 = vmatprep.mubr.bf16.mxu0 0
  %1070 = vmatmul.mubr.bf16.gmra.mrb[0].mxu0 %v1032
  %v1071 = vpop.f32.mrb[0].mxu0
  %v1072 = vadd.f32 0.0, %v1071
  %v1073 = vpop.f32.mrb[0].mxu0
  %v1074 = vpop.f32.mrb[0].mxu0
  %v1075 = vadd.f32 0.0, %v1074
  %v1076 = vpop.f32.mrb[0].mxu0
  %1077 = vmatprep.mubr.bf16.mxu0 0
  %1078 = vmatmul.mubr.bf16.gmra.mrb[0].mxu0 %v1035
  %v1079 = vpop.f32.mrb[0].mxu0
  %v1080 = vadd.f32 0.0, %v1079
  %v1081 = vpop.f32.mrb[0].mxu0
  %v1082 = vpop.f32.mrb[0].mxu0
  %v1083 = vadd.f32 0.0, %v1082
  %v1084 = vpop.f32.mrb[0].mxu0
  %1085 = vdwg.mxu0
  %v1086 = vadd.f32 %v1012, %v1072
  %v1087 = vadd.f32 %v1013, %v1075
  %v1088 = vadd.f32 %v1014, %v1080
  %v1089 = vadd.f32 %v1015, %v1083
  %s1090 = scalar_lea.vmem %s3, 128
  %v1091 = vld [vmem:[%s1090] sm:$0xf]
  %v1092 = vld [vmem:[%s1090 + $0x4] sm:$0xf]
  %v1093 = vld [vmem:[%s1090 + $0x8] sm:$0xf]
  %v1094 = vld [vmem:[%s1090 + $0xc] sm:$0xf]
  %v1099 = vunpack.c.l.b16 %v1091
  %v1100 = vunpack.c.l.b16 %v1092
  %v1101 = vunpack.c.l.b16 %v1093
  %v1102 = vunpack.c.l.b16 %v1094
  %v1103 = vpack.c.b16 %v1100, %v1099
  %v1104 = vpack.c.b16 %v1102, %v1101
  %v1106 = vsel %vm747, %v1103, 0
  %v1109 = vsel %vm747, %v1104, 0
  %1111 = vmatprep.subr.bf16.mxu0 0
  %1112 = vmatpush1.bf16.msra.mxu0 %v340
  %1113 = vmatprep.subr.bf16.mxu0 0
  %1114 = vmatpush1.bf16.msra.mxu0 0
  %1115 = vmatprep.subr.bf16.mxu0 0
  %1116 = vmatpush1.bf16.msra.mxu0 0
  %1117 = vmatprep.subr.bf16.mxu0 0
  %1118 = vmatpush1.bf16.msra.mxu0 0
  %1119 = vmatprep.subr.bf16.mxu0 0
  %1120 = vmatpush1.bf16.msra.mxu0 0
  %1121 = vmatprep.subr.bf16.mxu0 0
  %1122 = vmatpush1.bf16.msra.mxu0 0
  %1123 = vmatprep.subr.bf16.mxu0 0
  %1124 = vmatpush1.bf16.msra.mxu0 0
  %1125 = vmatprep.subr.bf16.mxu0 0
  %1126 = vmatpush1.bf16.msra.mxu0 0
  %1127 = vmatprep.subr.bf16.mxu0 0
  %1128 = vmatpush1.bf16.msra.mxu0 0
  %1129 = vmatprep.subr.bf16.mxu0 0
  %1130 = vmatpush1.bf16.msra.mxu0 0
  %1131 = vmatprep.subr.bf16.mxu0 0
  %1132 = vmatpush1.bf16.msra.mxu0 0
  %1133 = vmatprep.subr.bf16.mxu0 0
  %1134 = vmatpush1.bf16.msra.mxu0 0
  %1135 = vmatprep.subr.bf16.mxu0 0
  %1136 = vmatpush1.bf16.msra.mxu0 0
  %1137 = vmatprep.subr.bf16.mxu0 0
  %1138 = vmatpush1.bf16.msra.mxu0 0
  %1139 = vmatprep.subr.bf16.mxu0 0
  %1140 = vmatpush1.bf16.msra.mxu0 0
  %1141 = vmatprep.subr.bf16.mxu0 0
  %1142 = vmatpush1.bf16.msra.mxu0 0
  %1143 = vmatprep.mubr.bf16.mxu0 0
  %1144 = vmatmul.mubr.bf16.gmra.mrb[0].mxu0 %v1106
  %v1145 = vpop.f32.mrb[0].mxu0
  %v1146 = vadd.f32 0.0, %v1145
  %v1147 = vpop.f32.mrb[0].mxu0
  %v1148 = vpop.f32.mrb[0].mxu0
  %v1149 = vadd.f32 0.0, %v1148
  %v1150 = vpop.f32.mrb[0].mxu0
  %1151 = vmatprep.mubr.bf16.mxu0 0
  %1152 = vmatmul.mubr.bf16.gmra.mrb[0].mxu0 %v1109
  %v1153 = vpop.f32.mrb[0].mxu0
  %v1154 = vadd.f32 0.0, %v1153
  %v1155 = vpop.f32.mrb[0].mxu0
  %v1156 = vpop.f32.mrb[0].mxu0
  %v1157 = vadd.f32 0.0, %v1156
  %v1158 = vpop.f32.mrb[0].mxu0
  %1159 = vdwg.mxu0
  %v1160 = vadd.f32 %v1086, %v1146
  %v1161 = vadd.f32 %v1087, %v1149
  %v1162 = vadd.f32 %v1088, %v1154
  %v1163 = vadd.f32 %v1089, %v1157
  %s1164 = scalar_lea.vmem %s3, 96
  %v1165 = vld [vmem:[%s1164] sm:$0xf]
  %v1166 = vld [vmem:[%s1164 + $0x4] sm:$0xf]
  %v1167 = vld [vmem:[%s1164 + $0x8] sm:$0xf]
  %v1168 = vld [vmem:[%s1164 + $0xc] sm:$0xf]
  %v1173 = vunpack.c.l.b16 %v1165
  %v1174 = vunpack.c.l.b16 %v1166
  %v1175 = vunpack.c.l.b16 %v1167
  %v1176 = vunpack.c.l.b16 %v1168
  %v1177 = vpack.c.b16 %v1174, %v1173
  %v1178 = vpack.c.b16 %v1176, %v1175
  %v1180 = vsel %vm747, %v1177, 0
  %v1183 = vsel %vm747, %v1178, 0
  %1185 = vmatprep.subr.bf16.mxu0 0
  %1186 = vmatpush1.bf16.msra.mxu0 %v600
  %1187 = vmatprep.subr.bf16.mxu0 0
  %1188 = vmatpush1.bf16.msra.mxu0 0
  %1189 = vmatprep.subr.bf16.mxu0 0
  %1190 = vmatpush1.bf16.msra.mxu0 0
  %1191 = vmatprep.subr.bf16.mxu0 0
  %1192 = vmatpush1.bf16.msra.mxu0 0
  %1193 = vmatprep.subr.bf16.mxu0 0
  %1194 = vmatpush1.bf16.msra.mxu0 0
  %1195 = vmatprep.subr.bf16.mxu0 0
  %1196 = vmatpush1.bf16.msra.mxu0 0
  %1197 = vmatprep.subr.bf16.mxu0 0
  %1198 = vmatpush1.bf16.msra.mxu0 0
  %1199 = vmatprep.subr.bf16.mxu0 0
  %1200 = vmatpush1.bf16.msra.mxu0 0
  %1201 = vmatprep.subr.bf16.mxu0 0
  %1202 = vmatpush1.bf16.msra.mxu0 0
  %1203 = vmatprep.subr.bf16.mxu0 0
  %1204 = vmatpush1.bf16.msra.mxu0 0
  %1205 = vmatprep.subr.bf16.mxu0 0
  %1206 = vmatpush1.bf16.msra.mxu0 0
  %1207 = vmatprep.subr.bf16.mxu0 0
  %1208 = vmatpush1.bf16.msra.mxu0 0
  %1209 = vmatprep.subr.bf16.mxu0 0
  %1210 = vmatpush1.bf16.msra.mxu0 0
  %1211 = vmatprep.subr.bf16.mxu0 0
  %1212 = vmatpush1.bf16.msra.mxu0 0
  %1213 = vmatprep.subr.bf16.mxu0 0
  %1214 = vmatpush1.bf16.msra.mxu0 0
  %1215 = vmatprep.subr.bf16.mxu0 0
  %1216 = vmatpush1.bf16.msra.mxu0 0
  %1217 = vmatprep.mubr.bf16.mxu0 0
  %1218 = vmatmul.mubr.bf16.gmra.mrb[0].mxu0 %v1180
  %v1219 = vpop.f32.mrb[0].mxu0
  %v1220 = vadd.f32 0.0, %v1219
  %v1221 = vpop.f32.mrb[0].mxu0
  %v1222 = vpop.f32.mrb[0].mxu0
  %v1223 = vadd.f32 0.0, %v1222
  %v1224 = vpop.f32.mrb[0].mxu0
  %1225 = vmatprep.mubr.bf16.mxu0 0
  %1226 = vmatmul.mubr.bf16.gmra.mrb[0].mxu0 %v1183
  %v1227 = vpop.f32.mrb[0].mxu0
  %v1228 = vadd.f32 0.0, %v1227
  %v1229 = vpop.f32.mrb[0].mxu0
  %v1230 = vpop.f32.mrb[0].mxu0
  %v1231 = vadd.f32 0.0, %v1230
  %v1232 = vpop.f32.mrb[0].mxu0
  %1233 = vdwg.mxu0
  %v1234 = vadd.f32 %v1160, %v1220
  %v1235 = vadd.f32 %v1161, %v1223
  %v1236 = vadd.f32 %v1162, %v1228
  %v1237 = vadd.f32 %v1163, %v1231
  %s1238 = scalar_lea.vmem %s3, 32
  %v1239 = vld [vmem:[%s1238] sm:$0xf]
  %v1240 = vld [vmem:[%s1238 + $0x4] sm:$0xf]
  %v1241 = vld [vmem:[%s1238 + $0x8] sm:$0xf]
  %v1242 = vld [vmem:[%s1238 + $0xc] sm:$0xf]
  %v1247 = vunpack.c.l.b16 %v1239
  %v1248 = vunpack.c.l.b16 %v1240
  %v1249 = vunpack.c.l.b16 %v1241
  %v1250 = vunpack.c.l.b16 %v1242
  %v1251 = vpack.c.b16 %v1248, %v1247
  %v1252 = vpack.c.b16 %v1250, %v1249
  %v1254 = vsel %vm747, %v1251, 0
  %v1257 = vsel %vm747, %v1252, 0
  %1259 = vmatprep.subr.bf16.mxu0 0
  %1260 = vmatpush1.bf16.msra.mxu0 %v642
  %1261 = vmatprep.subr.bf16.mxu0 0
  %1262 = vmatpush1.bf16.msra.mxu0 0
  %1263 = vmatprep.subr.bf16.mxu0 0
  %1264 = vmatpush1.bf16.msra.mxu0 0
  %1265 = vmatprep.subr.bf16.mxu0 0
  %1266 = vmatpush1.bf16.msra.mxu0 0
  %1267 = vmatprep.subr.bf16.mxu0 0
  %1268 = vmatpush1.bf16.msra.mxu0 0
  %1269 = vmatprep.subr.bf16.mxu0 0
  %1270 = vmatpush1.bf16.msra.mxu0 0
  %1271 = vmatprep.subr.bf16.mxu0 0
  %1272 = vmatpush1.bf16.msra.mxu0 0
  %1273 = vmatprep.subr.bf16.mxu0 0
  %1274 = vmatpush1.bf16.msra.mxu0 0
  %1275 = vmatprep.subr.bf16.mxu0 0
  %1276 = vmatpush1.bf16.msra.mxu0 0
  %1277 = vmatprep.subr.bf16.mxu0 0
  %1278 = vmatpush1.bf16.msra.mxu0 0
  %1279 = vmatprep.subr.bf16.mxu0 0
  %1280 = vmatpush1.bf16.msra.mxu0 0
  %1281 = vmatprep.subr.bf16.mxu0 0
  %1282 = vmatpush1.bf16.msra.mxu0 0
  %1283 = vmatprep.subr.bf16.mxu0 0
  %1284 = vmatpush1.bf16.msra.mxu0 0
  %1285 = vmatprep.subr.bf16.mxu0 0
  %1286 = vmatpush1.bf16.msra.mxu0 0
  %1287 = vmatprep.subr.bf16.mxu0 0
  %1288 = vmatpush1.bf16.msra.mxu0 0
  %1289 = vmatprep.subr.bf16.mxu0 0
  %1290 = vmatpush1.bf16.msra.mxu0 0
  %1291 = vmatprep.mubr.bf16.mxu0 0
  %1292 = vmatmul.mubr.bf16.gmra.mrb[0].mxu0 %v1254
  %v1293 = vpop.f32.mrb[0].mxu0
  %v1294 = vadd.f32 0.0, %v1293
  %v1295 = vpop.f32.mrb[0].mxu0
  %v1296 = vpop.f32.mrb[0].mxu0
  %v1297 = vadd.f32 0.0, %v1296
  %v1298 = vpop.f32.mrb[0].mxu0
  %1299 = vmatprep.mubr.bf16.mxu0 0
  %1300 = vmatmul.mubr.bf16.gmra.mrb[0].mxu0 %v1257
  %v1301 = vpop.f32.mrb[0].mxu0
  %v1302 = vadd.f32 0.0, %v1301
  %v1303 = vpop.f32.mrb[0].mxu0
  %v1304 = vpop.f32.mrb[0].mxu0
  %v1305 = vadd.f32 0.0, %v1304
  %v1306 = vpop.f32.mrb[0].mxu0
  %1307 = vdwg.mxu0
  %v1308 = vadd.f32 %v1234, %v1294
  %v1309 = vadd.f32 %v1235, %v1297
  %v1310 = vadd.f32 %v1236, %v1302
  %v1311 = vadd.f32 %v1237, %v1305
  %v1312 = vld [vmem:[%s3] sm:$0xf]
  %v1313 = vld [vmem:[%s3 + $0x4] sm:$0xf]
  %v1314 = vld [vmem:[%s3 + $0x8] sm:$0xf]
  %v1315 = vld [vmem:[%s3 + $0xc] sm:$0xf]
  %v1320 = vunpack.c.l.b16 %v1312
  %v1321 = vunpack.c.l.b16 %v1313
  %v1322 = vunpack.c.l.b16 %v1314
  %v1323 = vunpack.c.l.b16 %v1315
  %v1324 = vpack.c.b16 %v1321, %v1320
  %v1325 = vpack.c.b16 %v1323, %v1322
  %v1327 = vsel %vm747, %v1324, 0
  %v1330 = vsel %vm747, %v1325, 0
  %1332 = vmatprep.subr.bf16.mxu0 0
  %1333 = vmatpush1.bf16.msra.mxu0 %v726
  %1334 = vmatprep.subr.bf16.mxu0 0
  %1335 = vmatpush1.bf16.msra.mxu0 0
  %1336 = vmatprep.subr.bf16.mxu0 0
  %1337 = vmatpush1.bf16.msra.mxu0 0
  %1338 = vmatprep.subr.bf16.mxu0 0
  %1339 = vmatpush1.bf16.msra.mxu0 0
  %1340 = vmatprep.subr.bf16.mxu0 0
  %1341 = vmatpush1.bf16.msra.mxu0 0
  %1342 = vmatprep.subr.bf16.mxu0 0
  %1343 = vmatpush1.bf16.msra.mxu0 0
  %1344 = vmatprep.subr.bf16.mxu0 0
  %1345 = vmatpush1.bf16.msra.mxu0 0
  %1346 = vmatprep.subr.bf16.mxu0 0
  %1347 = vmatpush1.bf16.msra.mxu0 0
  %1348 = vmatprep.subr.bf16.mxu0 0
  %1349 = vmatpush1.bf16.msra.mxu0 0
  %1350 = vmatprep.subr.bf16.mxu0 0
  %1351 = vmatpush1.bf16.msra.mxu0 0
  %1352 = vmatprep.subr.bf16.mxu0 0
  %1353 = vmatpush1.bf16.msra.mxu0 0
  %1354 = vmatprep.subr.bf16.mxu0 0
  %1355 = vmatpush1.bf16.msra.mxu0 0
  %1356 = vmatprep.subr.bf16.mxu0 0
  %1357 = vmatpush1.bf16.msra.mxu0 0
  %1358 = vmatprep.subr.bf16.mxu0 0
  %1359 = vmatpush1.bf16.msra.mxu0 0
  %1360 = vmatprep.subr.bf16.mxu0 0
  %1361 = vmatpush1.bf16.msra.mxu0 0
  %1362 = vmatprep.subr.bf16.mxu0 0
  %1363 = vmatpush1.bf16.msra.mxu0 0
  %1364 = vmatprep.mubr.bf16.mxu0 0
  %1365 = vmatmul.mubr.bf16.gmra.mrb[0].mxu0 %v1327
  %v1366 = vpop.f32.mrb[0].mxu0
  %v1367 = vadd.f32 0.0, %v1366
  %v1368 = vpop.f32.mrb[0].mxu0
  %v1369 = vpop.f32.mrb[0].mxu0
  %v1370 = vadd.f32 0.0, %v1369
  %v1371 = vpop.f32.mrb[0].mxu0
  %1372 = vmatprep.mubr.bf16.mxu0 0
  %1373 = vmatmul.mubr.bf16.gmra.mrb[0].mxu0 %v1330
  %v1374 = vpop.f32.mrb[0].mxu0
  %v1375 = vadd.f32 0.0, %v1374
  %v1376 = vpop.f32.mrb[0].mxu0
  %v1377 = vpop.f32.mrb[0].mxu0
  %v1378 = vadd.f32 0.0, %v1377
  %v1379 = vpop.f32.mrb[0].mxu0
  %1380 = vdwg.mxu0
  %v1381 = vadd.f32 %v1308, %v1367
  %v1382 = vadd.f32 %v1309, %v1370
  %v1383 = vadd.f32 %v1310, %v1375
  %v1384 = vadd.f32 %v1311, %v1378
  %v1385 = vld [vmem:[%s4] sm:$0xff]
  %v1386 = vld [vmem:[%s4 + $0x8] sm:$0xff]
  %v1387 = vld [vmem:[%s4 + $0x10] sm:$0xff]
  %v1388 = vld [vmem:[%s4 + $0x18] sm:$0xff]
  %1390 = vset.pattern.permute.xlu0 0
  %1391 = vperm.xlu0 %1390, %v1385
  %v1392 = vpop.permute.xlu0 %1391
  %1395 = vset.pattern.permute.xlu0 0
  %1396 = vperm.xlu0 %1395, %v1386
  %v1397 = vpop.permute.xlu0 %1396
  %1400 = vset.pattern.permute.xlu0 0
  %1401 = vperm.xlu0 %1400, %v1387
  %v1402 = vpop.permute.xlu0 %1401
  %1405 = vset.pattern.permute.xlu0 0
  %1406 = vperm.xlu0 %1405, %v1388
  %v1407 = vpop.permute.xlu0 %1406
  %v1409 = vadd.f32 %v1381, %v1392
  %v1410 = vadd.f32 %v1382, %v1397
  %v1411 = vadd.f32 %v1383, %v1402
  %v1412 = vadd.f32 %v1384, %v1407
  %v1413 = vmax.f32 %v1409, 0.0
  %v1414 = vmax.f32 %v1410, 0.0
  %v1415 = vmax.f32 %v1411, 0.0
  %v1416 = vmax.f32 %v1412, 0.0
  %v1417 = vpack.c.bf16 %v1414, %v1413
  %v1418 = vpack.c.bf16 %v1416, %v1415
  %vm1419 = vcmask 15360
  %1420 = vst.msk [vmem:[#allocation2] sm:$0xff] %vm1419, %v1417
  %1421 = vst.msk [vmem:[#allocation2 + $0x8] sm:$0xff] %vm1419, %v1418
  %1424 = vrot.lane.b32.xlu0 %v1417, 126
  %v1425 = vpop.permute.xlu0 %1424
  %1426 = vrot.lane.b32.xlu0 %v1418, 126
  %v1427 = vpop.permute.xlu0 %1426
  %1430 = vst.msk [vmem:[#allocation2 + $0x10] sm:$0xff] %vm1419, %v1425
  %1431 = vst.msk [vmem:[#allocation2 + $0x18] sm:$0xff] %vm1419, %v1427
  %1432 = vrot.lane.b32.xlu0 %v1417, 124
  %v1433 = vpop.permute.xlu0 %1432
  %1434 = vrot.lane.b32.xlu0 %v1418, 124
  %v1435 = vpop.permute.xlu0 %1434
  %1438 = vst.msk [vmem:[#allocation2 + $0x20] sm:$0xff] %vm1419, %v1433
  %1439 = vst.msk [vmem:[#allocation2 + $0x28] sm:$0xff] %vm1419, %v1435
  %1440 = vrot.lane.b32.xlu0 %v1417, 122
  %v1441 = vpop.permute.xlu0 %1440
  %1442 = vrot.lane.b32.xlu0 %v1418, 122
  %v1443 = vpop.permute.xlu0 %1442
  %1446 = vst.msk [vmem:[#allocation2 + $0x30] sm:$0xff] %vm1419, %v1441
  %1447 = vst.msk [vmem:[#allocation2 + $0x38] sm:$0xff] %vm1419, %v1443
  %1448 = vrot.lane.b32.xlu0 %v1417, 120
  %v1449 = vpop.permute.xlu0 %1448
  %1450 = vrot.lane.b32.xlu0 %v1418, 120
  %v1451 = vpop.permute.xlu0 %1450
  %1454 = vst.msk [vmem:[#allocation2 + $0x40] sm:$0xff] %vm1419, %v1449
  %1455 = vst.msk [vmem:[#allocation2 + $0x48] sm:$0xff] %vm1419, %v1451
  %1456 = vrot.lane.b32.xlu0 %v1417, 118
  %v1457 = vpop.permute.xlu0 %1456
  %1458 = vrot.lane.b32.xlu0 %v1418, 118
  %v1459 = vpop.permute.xlu0 %1458
  %1462 = vst.msk [vmem:[#allocation2 + $0x50] sm:$0xff] %vm1419, %v1457
  %1463 = vst.msk [vmem:[#allocation2 + $0x58] sm:$0xff] %vm1419, %v1459
  %1464 = vrot.lane.b32.xlu0 %v1417, 116
  %v1465 = vpop.permute.xlu0 %1464
  %1466 = vrot.lane.b32.xlu0 %v1418, 116
  %v1467 = vpop.permute.xlu0 %1466
  %1470 = vst.msk [vmem:[#allocation2 + $0x60] sm:$0xff] %vm1419, %v1465
  %1471 = vst.msk [vmem:[#allocation2 + $0x68] sm:$0xff] %vm1419, %v1467
  %1472 = vrot.lane.b32.xlu0 %v1417, 114
  %v1473 = vpop.permute.xlu0 %1472
  %1474 = vrot.lane.b32.xlu0 %v1418, 114
  %v1475 = vpop.permute.xlu0 %1474
  %1478 = vst.msk [vmem:[#allocation2 + $0x70] sm:$0xff] %vm1419, %v1473
  %1479 = vst.msk [vmem:[#allocation2 + $0x78] sm:$0xff] %vm1419, %v1475
  %1480 = vrot.lane.b32.xlu0 %v1417, 112
  %v1481 = vpop.permute.xlu0 %1480
  %1482 = vrot.lane.b32.xlu0 %v1418, 112
  %v1483 = vpop.permute.xlu0 %1482
  %1486 = vst.msk [vmem:[#allocation2 + $0x80] sm:$0xff] %vm1419, %v1481
  %1487 = vst.msk [vmem:[#allocation2 + $0x88] sm:$0xff] %vm1419, %v1483
  %1488 = vrot.lane.b32.xlu0 %v1417, 110
  %v1489 = vpop.permute.xlu0 %1488
  %1490 = vrot.lane.b32.xlu0 %v1418, 110
  %v1491 = vpop.permute.xlu0 %1490
  %1494 = vst.msk [vmem:[#allocation2 + $0x90] sm:$0xff] %vm1419, %v1489
  %1495 = vst.msk [vmem:[#allocation2 + $0x98] sm:$0xff] %vm1419, %v1491
  %1496 = vrot.lane.b32.xlu0 %v1417, 108
  %v1497 = vpop.permute.xlu0 %1496
  %1498 = vrot.lane.b32.xlu0 %v1418, 108
  %v1499 = vpop.permute.xlu0 %1498
  %1502 = vst.msk [vmem:[#allocation2 + $0xa0] sm:$0xff] %vm1419, %v1497
  %1503 = vst.msk [vmem:[#allocation2 + $0xa8] sm:$0xff] %vm1419, %v1499
  %1504 = vrot.lane.b32.xlu0 %v1417, 106
  %v1505 = vpop.permute.xlu0 %1504
  %1506 = vrot.lane.b32.xlu0 %v1418, 106
  %v1507 = vpop.permute.xlu0 %1506
  %1510 = vst.msk [vmem:[#allocation2 + $0xb0] sm:$0xff] %vm1419, %v1505
  %1511 = vst.msk [vmem:[#allocation2 + $0xb8] sm:$0xff] %vm1419, %v1507
  %1512 = vrot.lane.b32.xlu0 %v1417, 104
  %v1513 = vpop.permute.xlu0 %1512
  %1514 = vrot.lane.b32.xlu0 %v1418, 104
  %v1515 = vpop.permute.xlu0 %1514
  %1518 = vst.msk [vmem:[#allocation2 + $0xc0] sm:$0xff] %vm1419, %v1513
  %1519 = vst.msk [vmem:[#allocation2 + $0xc8] sm:$0xff] %vm1419, %v1515
  %1520 = vrot.lane.b32.xlu0 %v1417, 102
  %v1521 = vpop.permute.xlu0 %1520
  %1522 = vrot.lane.b32.xlu0 %v1418, 102
  %v1523 = vpop.permute.xlu0 %1522
  %1526 = vst.msk [vmem:[#allocation2 + $0xd0] sm:$0xff] %vm1419, %v1521
  %1527 = vst.msk [vmem:[#allocation2 + $0xd8] sm:$0xff] %vm1419, %v1523
  %1528 = vrot.lane.b32.xlu0 %v1417, 100
  %v1529 = vpop.permute.xlu0 %1528
  %1530 = vrot.lane.b32.xlu0 %v1418, 100
  %v1531 = vpop.permute.xlu0 %1530
  %1534 = vst.msk [vmem:[#allocation2 + $0xe0] sm:$0xff] %vm1419, %v1529
  %1535 = vst.msk [vmem:[#allocation2 + $0xe8] sm:$0xff] %vm1419, %v1531
  %1536 = vrot.lane.b32.xlu0 %v1417, 98
  %v1537 = vpop.permute.xlu0 %1536
  %1538 = vrot.lane.b32.xlu0 %v1418, 98
  %v1539 = vpop.permute.xlu0 %1538
  %1542 = vst.msk [vmem:[#allocation2 + $0xf0] sm:$0xff] %vm1419, %v1537
  %1543 = vst.msk [vmem:[#allocation2 + $0xf8] sm:$0xff] %vm1419, %v1539
  %1544 = vrot.lane.b32.xlu0 %v1417, 96
  %v1545 = vpop.permute.xlu0 %1544
  %1546 = vrot.lane.b32.xlu0 %v1418, 96
  %v1547 = vpop.permute.xlu0 %1546
  %1550 = vst.msk [vmem:[#allocation2 + $0x100] sm:$0xff] %vm1419, %v1545
  %1551 = vst.msk [vmem:[#allocation2 + $0x108] sm:$0xff] %vm1419, %v1547
  %1552 = vrot.lane.b32.xlu0 %v1417, 94
  %v1553 = vpop.permute.xlu0 %1552
  %1554 = vrot.lane.b32.xlu0 %v1418, 94
  %v1555 = vpop.permute.xlu0 %1554
  %1558 = vst.msk [vmem:[#allocation2 + $0x110] sm:$0xff] %vm1419, %v1553
  %1559 = vst.msk [vmem:[#allocation2 + $0x118] sm:$0xff] %vm1419, %v1555
  %1560 = vrot.lane.b32.xlu0 %v1417, 92
  %v1561 = vpop.permute.xlu0 %1560
  %1562 = vrot.lane.b32.xlu0 %v1418, 92
  %v1563 = vpop.permute.xlu0 %1562
  %1566 = vst.msk [vmem:[#allocation2 + $0x120] sm:$0xff] %vm1419, %v1561
  %1567 = vst.msk [vmem:[#allocation2 + $0x128] sm:$0xff] %vm1419, %v1563
  %1568 = vrot.lane.b32.xlu0 %v1417, 90
  %v1569 = vpop.permute.xlu0 %1568
  %1570 = vrot.lane.b32.xlu0 %v1418, 90
  %v1571 = vpop.permute.xlu0 %1570
  %1574 = vst.msk [vmem:[#allocation2 + $0x130] sm:$0xff] %vm1419, %v1569
  %1575 = vst.msk [vmem:[#allocation2 + $0x138] sm:$0xff] %vm1419, %v1571
  %1576 = vrot.lane.b32.xlu0 %v1417, 88
  %v1577 = vpop.permute.xlu0 %1576
  %1578 = vrot.lane.b32.xlu0 %v1418, 88
  %v1579 = vpop.permute.xlu0 %1578
  %1582 = vst.msk [vmem:[#allocation2 + $0x140] sm:$0xff] %vm1419, %v1577
  %1583 = vst.msk [vmem:[#allocation2 + $0x148] sm:$0xff] %vm1419, %v1579
  %1584 = vrot.lane.b32.xlu0 %v1417, 86
  %v1585 = vpop.permute.xlu0 %1584
  %1586 = vrot.lane.b32.xlu0 %v1418, 86
  %v1587 = vpop.permute.xlu0 %1586
  %1590 = vst.msk [vmem:[#allocation2 + $0x150] sm:$0xff] %vm1419, %v1585
  %1591 = vst.msk [vmem:[#allocation2 + $0x158] sm:$0xff] %vm1419, %v1587
  %1592 = vrot.lane.b32.xlu0 %v1417, 84
  %v1593 = vpop.permute.xlu0 %1592
  %1594 = vrot.lane.b32.xlu0 %v1418, 84
  %v1595 = vpop.permute.xlu0 %1594
  %1598 = vst.msk [vmem:[#allocation2 + $0x160] sm:$0xff] %vm1419, %v1593
  %1599 = vst.msk [vmem:[#allocation2 + $0x168] sm:$0xff] %vm1419, %v1595
  %1600 = vrot.lane.b32.xlu0 %v1417, 82
  %v1601 = vpop.permute.xlu0 %1600
  %1602 = vrot.lane.b32.xlu0 %v1418, 82
  %v1603 = vpop.permute.xlu0 %1602
  %1606 = vst.msk [vmem:[#allocation2 + $0x170] sm:$0xff] %vm1419, %v1601
  %1607 = vst.msk [vmem:[#allocation2 + $0x178] sm:$0xff] %vm1419, %v1603
  %1608 = vrot.lane.b32.xlu0 %v1417, 80
  %v1609 = vpop.permute.xlu0 %1608
  %1610 = vrot.lane.b32.xlu0 %v1418, 80
  %v1611 = vpop.permute.xlu0 %1610
  %1614 = vst.msk [vmem:[#allocation2 + $0x180] sm:$0xff] %vm1419, %v1609
  %1615 = vst.msk [vmem:[#allocation2 + $0x188] sm:$0xff] %vm1419, %v1611
  %1616 = vrot.lane.b32.xlu0 %v1417, 78
  %v1617 = vpop.permute.xlu0 %1616
  %1618 = vrot.lane.b32.xlu0 %v1418, 78
  %v1619 = vpop.permute.xlu0 %1618
  %1622 = vst.msk [vmem:[#allocation2 + $0x190] sm:$0xff] %vm1419, %v1617
  %1623 = vst.msk [vmem:[#allocation2 + $0x198] sm:$0xff] %vm1419, %v1619
  %1624 = vrot.lane.b32.xlu0 %v1417, 76
  %v1625 = vpop.permute.xlu0 %1624
  %1626 = vrot.lane.b32.xlu0 %v1418, 76
  %v1627 = vpop.permute.xlu0 %1626
  %1630 = vst.msk [vmem:[#allocation2 + $0x1a0] sm:$0xff] %vm1419, %v1625
  %1631 = vst.msk [vmem:[#allocation2 + $0x1a8] sm:$0xff] %vm1419, %v1627
  %1632 = vrot.lane.b32.xlu0 %v1417, 74
  %v1633 = vpop.permute.xlu0 %1632
  %1634 = vrot.lane.b32.xlu0 %v1418, 74
  %v1635 = vpop.permute.xlu0 %1634
  %1638 = vst.msk [vmem:[#allocation2 + $0x1b0] sm:$0xff] %vm1419, %v1633
  %1639 = vst.msk [vmem:[#allocation2 + $0x1b8] sm:$0xff] %vm1419, %v1635
  %1640 = vrot.lane.b32.xlu0 %v1417, 72
  %v1641 = vpop.permute.xlu0 %1640
  %1642 = vrot.lane.b32.xlu0 %v1418, 72
  %v1643 = vpop.permute.xlu0 %1642
  %1646 = vst.msk [vmem:[#allocation2 + $0x1c0] sm:$0xff] %vm1419, %v1641
  %1647 = vst.msk [vmem:[#allocation2 + $0x1c8] sm:$0xff] %vm1419, %v1643
  %1648 = vrot.lane.b32.xlu0 %v1417, 70
  %v1649 = vpop.permute.xlu0 %1648
  %1650 = vrot.lane.b32.xlu0 %v1418, 70
  %v1651 = vpop.permute.xlu0 %1650
  %1654 = vst.msk [vmem:[#allocation2 + $0x1d0] sm:$0xff] %vm1419, %v1649
  %1655 = vst.msk [vmem:[#allocation2 + $0x1d8] sm:$0xff] %vm1419, %v1651
  %1656 = vrot.lane.b32.xlu0 %v1417, 68
  %v1657 = vpop.permute.xlu0 %1656
  %1658 = vrot.lane.b32.xlu0 %v1418, 68
  %v1659 = vpop.permute.xlu0 %1658
  %1662 = vst.msk [vmem:[#allocation2 + $0x1e0] sm:$0xff] %vm1419, %v1657
  %1663 = vst.msk [vmem:[#allocation2 + $0x1e8] sm:$0xff] %vm1419, %v1659
  %1664 = vrot.lane.b32.xlu0 %v1417, 66
  %v1665 = vpop.permute.xlu0 %1664
  %1666 = vrot.lane.b32.xlu0 %v1418, 66
  %v1667 = vpop.permute.xlu0 %1666
  %1670 = vst.msk [vmem:[#allocation2 + $0x1f0] sm:$0xff] %vm1419, %v1665
  %1671 = vst.msk [vmem:[#allocation2 + $0x1f8] sm:$0xff] %vm1419, %v1667
  %1672 = vrot.lane.b32.xlu0 %v1417, 64
  %v1673 = vpop.permute.xlu0 %1672
  %1674 = vrot.lane.b32.xlu0 %v1418, 64
  %v1675 = vpop.permute.xlu0 %1674
  %1678 = vst.msk [vmem:[#allocation2 + $0x200] sm:$0xff] %vm1419, %v1673
  %1679 = vst.msk [vmem:[#allocation2 + $0x208] sm:$0xff] %vm1419, %v1675
  %1680 = vrot.lane.b32.xlu0 %v1417, 62
  %v1681 = vpop.permute.xlu0 %1680
  %1682 = vrot.lane.b32.xlu0 %v1418, 62
  %v1683 = vpop.permute.xlu0 %1682
  %1686 = vst.msk [vmem:[#allocation2 + $0x210] sm:$0xff] %vm1419, %v1681
  %1687 = vst.msk [vmem:[#allocation2 + $0x218] sm:$0xff] %vm1419, %v1683
  %1688 = vrot.lane.b32.xlu0 %v1417, 60
  %v1689 = vpop.permute.xlu0 %1688
  %1690 = vrot.lane.b32.xlu0 %v1418, 60
  %v1691 = vpop.permute.xlu0 %1690
  %1694 = vst.msk [vmem:[#allocation2 + $0x220] sm:$0xff] %vm1419, %v1689
  %1695 = vst.msk [vmem:[#allocation2 + $0x228] sm:$0xff] %vm1419, %v1691
  %1696 = vrot.lane.b32.xlu0 %v1417, 58
  %v1697 = vpop.permute.xlu0 %1696
  %1698 = vrot.lane.b32.xlu0 %v1418, 58
  %v1699 = vpop.permute.xlu0 %1698
  %1702 = vst.msk [vmem:[#allocation2 + $0x230] sm:$0xff] %vm1419, %v1697
  %1703 = vst.msk [vmem:[#allocation2 + $0x238] sm:$0xff] %vm1419, %v1699
  %1704 = vrot.lane.b32.xlu0 %v1417, 56
  %v1705 = vpop.permute.xlu0 %1704
  %1706 = vrot.lane.b32.xlu0 %v1418, 56
  %v1707 = vpop.permute.xlu0 %1706
  %1710 = vst.msk [vmem:[#allocation2 + $0x240] sm:$0xff] %vm1419, %v1705
  %1711 = vst.msk [vmem:[#allocation2 + $0x248] sm:$0xff] %vm1419, %v1707
  %1712 = vrot.lane.b32.xlu0 %v1417, 54
  %v1713 = vpop.permute.xlu0 %1712
  %1714 = vrot.lane.b32.xlu0 %v1418, 54
  %v1715 = vpop.permute.xlu0 %1714
  %1718 = vst.msk [vmem:[#allocation2 + $0x250] sm:$0xff] %vm1419, %v1713
  %1719 = vst.msk [vmem:[#allocation2 + $0x258] sm:$0xff] %vm1419, %v1715
  %1720 = vrot.lane.b32.xlu0 %v1417, 52
  %v1721 = vpop.permute.xlu0 %1720
  %1722 = vrot.lane.b32.xlu0 %v1418, 52
  %v1723 = vpop.permute.xlu0 %1722
  %1726 = vst.msk [vmem:[#allocation2 + $0x260] sm:$0xff] %vm1419, %v1721
  %1727 = vst.msk [vmem:[#allocation2 + $0x268] sm:$0xff] %vm1419, %v1723
  %1728 = vrot.lane.b32.xlu0 %v1417, 50
  %v1729 = vpop.permute.xlu0 %1728
  %1730 = vrot.lane.b32.xlu0 %v1418, 50
  %v1731 = vpop.permute.xlu0 %1730
  %1734 = vst.msk [vmem:[#allocation2 + $0x270] sm:$0xff] %vm1419, %v1729
  %1735 = vst.msk [vmem:[#allocation2 + $0x278] sm:$0xff] %vm1419, %v1731
  %1736 = vrot.lane.b32.xlu0 %v1417, 48
  %v1737 = vpop.permute.xlu0 %1736
  %1738 = vrot.lane.b32.xlu0 %v1418, 48
  %v1739 = vpop.permute.xlu0 %1738
  %1742 = vst.msk [vmem:[#allocation2 + $0x280] sm:$0xff] %vm1419, %v1737
  %1743 = vst.msk [vmem:[#allocation2 + $0x288] sm:$0xff] %vm1419, %v1739
  %1744 = vrot.lane.b32.xlu0 %v1417, 46
  %v1745 = vpop.permute.xlu0 %1744
  %1746 = vrot.lane.b32.xlu0 %v1418, 46
  %v1747 = vpop.permute.xlu0 %1746
  %1750 = vst.msk [vmem:[#allocation2 + $0x290] sm:$0xff] %vm1419, %v1745
  %1751 = vst.msk [vmem:[#allocation2 + $0x298] sm:$0xff] %vm1419, %v1747
  %1752 = vrot.lane.b32.xlu0 %v1417, 44
  %v1753 = vpop.permute.xlu0 %1752
  %1754 = vrot.lane.b32.xlu0 %v1418, 44
  %v1755 = vpop.permute.xlu0 %1754
  %1758 = vst.msk [vmem:[#allocation2 + $0x2a0] sm:$0xff] %vm1419, %v1753
  %1759 = vst.msk [vmem:[#allocation2 + $0x2a8] sm:$0xff] %vm1419, %v1755
  %1760 = vrot.lane.b32.xlu0 %v1417, 42
  %v1761 = vpop.permute.xlu0 %1760
  %1762 = vrot.lane.b32.xlu0 %v1418, 42
  %v1763 = vpop.permute.xlu0 %1762
  %1766 = vst.msk [vmem:[#allocation2 + $0x2b0] sm:$0xff] %vm1419, %v1761
  %1767 = vst.msk [vmem:[#allocation2 + $0x2b8] sm:$0xff] %vm1419, %v1763
  %1768 = vrot.lane.b32.xlu0 %v1417, 40
  %v1769 = vpop.permute.xlu0 %1768
  %1770 = vrot.lane.b32.xlu0 %v1418, 40
  %v1771 = vpop.permute.xlu0 %1770
  %1774 = vst.msk [vmem:[#allocation2 + $0x2c0] sm:$0xff] %vm1419, %v1769
  %1775 = vst.msk [vmem:[#allocation2 + $0x2c8] sm:$0xff] %vm1419, %v1771
  %1776 = vrot.lane.b32.xlu0 %v1417, 38
  %v1777 = vpop.permute.xlu0 %1776
  %1778 = vrot.lane.b32.xlu0 %v1418, 38
  %v1779 = vpop.permute.xlu0 %1778
  %1782 = vst.msk [vmem:[#allocation2 + $0x2d0] sm:$0xff] %vm1419, %v1777
  %1783 = vst.msk [vmem:[#allocation2 + $0x2d8] sm:$0xff] %vm1419, %v1779
  %1784 = vrot.lane.b32.xlu0 %v1417, 36
  %v1785 = vpop.permute.xlu0 %1784
  %1786 = vrot.lane.b32.xlu0 %v1418, 36
  %v1787 = vpop.permute.xlu0 %1786
  %1790 = vst.msk [vmem:[#allocation2 + $0x2e0] sm:$0xff] %vm1419, %v1785
  %1791 = vst.msk [vmem:[#allocation2 + $0x2e8] sm:$0xff] %vm1419, %v1787
  %1792 = vrot.lane.b32.xlu0 %v1417, 34
  %v1793 = vpop.permute.xlu0 %1792
  %1794 = vrot.lane.b32.xlu0 %v1418, 34
  %v1795 = vpop.permute.xlu0 %1794
  %1798 = vst.msk [vmem:[#allocation2 + $0x2f0] sm:$0xff] %vm1419, %v1793
  %1799 = vst.msk [vmem:[#allocation2 + $0x2f8] sm:$0xff] %vm1419, %v1795
  %1800 = vrot.lane.b32.xlu0 %v1417, 32
  %v1801 = vpop.permute.xlu0 %1800
  %1802 = vrot.lane.b32.xlu0 %v1418, 32
  %v1803 = vpop.permute.xlu0 %1802
  %1806 = vst.msk [vmem:[#allocation2 + $0x300] sm:$0xff] %vm1419, %v1801
  %1807 = vst.msk [vmem:[#allocation2 + $0x308] sm:$0xff] %vm1419, %v1803
  %v1808 = vld [vmem:[%s5] sm:$0xff]
  %v1809 = vld [vmem:[%s5 + $0x8] sm:$0xff]
  %v1810 = vld [vmem:[%s5 + $0x10] sm:$0xff]
  %v1811 = vld [vmem:[%s5 + $0x18] sm:$0xff]
  %v1812 = vld [vmem:[%s5 + $0x20] sm:$0xff]
  %v1813 = vld [vmem:[%s5 + $0x28] sm:$0xff]
  %v1814 = vld [vmem:[%s5 + $0x30] sm:$0xf]
  %v1815 = vld [vmem:[%s5 + $0x34] sm:$0xff]
  %v1816 = vld [vmem:[%s5 + $0x3c] sm:$0xff]
  %v1817 = vld [vmem:[%s5 + $0x44] sm:$0xff]
  %v1818 = vld [vmem:[%s5 + $0x4c] sm:$0xff]
  %v1819 = vld [vmem:[%s5 + $0x54] sm:$0xff]
  %v1820 = vld [vmem:[%s5 + $0x5c] sm:$0xff]
  %v1821 = vld [vmem:[%s5 + $0x64] sm:$0xf]
  %v1822 = vld [vmem:[%s5 + $0x68] sm:$0xff]
  %v1823 = vld [vmem:[%s5 + $0x70] sm:$0xff]
  %v1824 = vld [vmem:[%s5 + $0x78] sm:$0xff]
  %v1825 = vld [vmem:[%s5 + $0x80] sm:$0xff]
  %v1826 = vld [vmem:[%s5 + $0x88] sm:$0xff]
  %v1827 = vld [vmem:[%s5 + $0x90] sm:$0xff]
  %v1828 = vld [vmem:[%s5 + $0x98] sm:$0xf]
  %v1829 = vld [vmem:[%s5 + $0x9c] sm:$0xff]
  %v1830 = vld [vmem:[%s5 + $0xa4] sm:$0xff]
  %v1831 = vld [vmem:[%s5 + $0xac] sm:$0xff]
  %v1832 = vld [vmem:[%s5 + $0xb4] sm:$0xff]
  %v1833 = vld [vmem:[%s5 + $0xbc] sm:$0xff]
  %v1834 = vld [vmem:[%s5 + $0xc4] sm:$0xff]
  %v1835 = vld [vmem:[%s5 + $0xcc] sm:$0xf]
  %v1836 = vld [vmem:[%s5 + $0xd0] sm:$0xff]
  %v1837 = vld [vmem:[%s5 + $0xd8] sm:$0xff]
  %v1838 = vld [vmem:[%s5 + $0xe0] sm:$0xff]
  %v1839 = vld [vmem:[%s5 + $0xe8] sm:$0xff]
  %v1840 = vld [vmem:[%s5 + $0xf0] sm:$0xff]
  %v1841 = vld [vmem:[%s5 + $0xf8] sm:$0xff]
  %v1842 = vld [vmem:[%s5 + $0x100] sm:$0xf]
  %v1843 = vld [vmem:[%s5 + $0x104] sm:$0xff]
  %v1844 = vld [vmem:[%s5 + $0x10c] sm:$0xff]
  %v1845 = vld [vmem:[%s5 + $0x114] sm:$0xff]
  %v1846 = vld [vmem:[%s5 + $0x11c] sm:$0xff]
  %v1847 = vld [vmem:[%s5 + $0x124] sm:$0xff]
  %v1848 = vld [vmem:[%s5 + $0x12c] sm:$0xff]
  %v1849 = vld [vmem:[%s5 + $0x134] sm:$0xf]
  %v1850 = vld [vmem:[%s5 + $0x138] sm:$0xff]
  %v1851 = vld [vmem:[%s5 + $0x140] sm:$0xff]
  %v1852 = vld [vmem:[%s5 + $0x148] sm:$0xff]
  %v1853 = vld [vmem:[%s5 + $0x150] sm:$0xff]
  %v1854 = vld [vmem:[%s5 + $0x158] sm:$0xff]
  %v1855 = vld [vmem:[%s5 + $0x160] sm:$0xff]
  %v1856 = vld [vmem:[%s5 + $0x168] sm:$0xf]
  %v1857 = vld [vmem:[%s5 + $0x16c] sm:$0xff]
  %v1858 = vld [vmem:[%s5 + $0x174] sm:$0xff]
  %v1859 = vld [vmem:[%s5 + $0x17c] sm:$0xff]
  %v1860 = vld [vmem:[%s5 + $0x184] sm:$0xff]
  %v1861 = vld [vmem:[%s5 + $0x18c] sm:$0xff]
  %v1862 = vld [vmem:[%s5 + $0x194] sm:$0xff]
  %v1863 = vld [vmem:[%s5 + $0x19c] sm:$0xf]
  %v1864 = vld [vmem:[#allocation2] sm:$0xff]
  %v1865 = vld [vmem:[#allocation2 + $0x8] sm:$0xff]
  %v1866 = vld [vmem:[#allocation2 + $0x10] sm:$0xff]
  %v1867 = vld [vmem:[#allocation2 + $0x18] sm:$0xff]
  %v1868 = vld [vmem:[#allocation2 + $0x20] sm:$0xff]
  %v1869 = vld [vmem:[#allocation2 + $0x28] sm:$0xff]
  %v1870 = vld [vmem:[#allocation2 + $0x30] sm:$0xff]
  %v1871 = vld [vmem:[#allocation2 + $0x38] sm:$0xff]
  %v1872 = vld [vmem:[#allocation2 + $0x40] sm:$0xff]
  %v1873 = vld [vmem:[#allocation2 + $0x48] sm:$0xff]
  %v1874 = vld [vmem:[#allocation2 + $0x50] sm:$0xff]
  %v1875 = vld [vmem:[#allocation2 + $0x58] sm:$0xff]
  %v1876 = vld [vmem:[#allocation2 + $0x60] sm:$0xff]
  %v1877 = vld [vmem:[#allocation2 + $0x68] sm:$0xff]
  %v1878 = vld [vmem:[#allocation2 + $0x70] sm:$0xff]
  %v1879 = vld [vmem:[#allocation2 + $0x78] sm:$0xff]
  %v1880 = vld [vmem:[#allocation2 + $0x80] sm:$0xff]
  %v1881 = vld [vmem:[#allocation2 + $0x88] sm:$0xff]
  %v1882 = vld [vmem:[#allocation2 + $0x90] sm:$0xff]
  %v1883 = vld [vmem:[#allocation2 + $0x98] sm:$0xff]
  %v1884 = vld [vmem:[#allocation2 + $0xa0] sm:$0xff]
  %v1885 = vld [vmem:[#allocation2 + $0xa8] sm:$0xff]
  %v1886 = vld [vmem:[#allocation2 + $0xb0] sm:$0xff]
  %v1887 = vld [vmem:[#allocation2 + $0xb8] sm:$0xff]
  %v1888 = vld [vmem:[#allocation2 + $0xc0] sm:$0xff]
  %v1889 = vld [vmem:[#allocation2 + $0xc8] sm:$0xff]
  %v1890 = vld [vmem:[#allocation2 + $0xd0] sm:$0xff]
  %v1891 = vld [vmem:[#allocation2 + $0xd8] sm:$0xff]
  %v1892 = vld [vmem:[#allocation2 + $0xe0] sm:$0xff]
  %v1893 = vld [vmem:[#allocation2 + $0xe8] sm:$0xff]
  %v1894 = vld [vmem:[#allocation2 + $0xf0] sm:$0xff]
  %v1895 = vld [vmem:[#allocation2 + $0xf8] sm:$0xff]
  %v1896 = vld [vmem:[#allocation2 + $0x100] sm:$0xff]
  %v1897 = vld [vmem:[#allocation2 + $0x108] sm:$0xff]
  %v1898 = vld [vmem:[#allocation2 + $0x110] sm:$0xff]
  %v1899 = vld [vmem:[#allocation2 + $0x118] sm:$0xff]
  %v1900 = vld [vmem:[#allocation2 + $0x120] sm:$0xff]
  %v1901 = vld [vmem:[#allocation2 + $0x128] sm:$0xff]
  %v1902 = vld [vmem:[#allocation2 + $0x130] sm:$0xff]
  %v1903 = vld [vmem:[#allocation2 + $0x138] sm:$0xff]
  %v1904 = vld [vmem:[#allocation2 + $0x140] sm:$0xff]
  %v1905 = vld [vmem:[#allocation2 + $0x148] sm:$0xff]
  %v1906 = vld [vmem:[#allocation2 + $0x150] sm:$0xff]
  %v1907 = vld [vmem:[#allocation2 + $0x158] sm:$0xff]
  %v1908 = vld [vmem:[#allocation2 + $0x160] sm:$0xff]
  %v1909 = vld [vmem:[#allocation2 + $0x168] sm:$0xff]
  %v1910 = vld [vmem:[#allocation2 + $0x170] sm:$0xff]
  %v1911 = vld [vmem:[#allocation2 + $0x178] sm:$0xff]
  %v1912 = vld [vmem:[#allocation2 + $0x180] sm:$0xff]
  %v1913 = vld [vmem:[#allocation2 + $0x188] sm:$0xff]
  %v1914 = vld [vmem:[#allocation2 + $0x190] sm:$0xff]
  %v1915 = vld [vmem:[#allocation2 + $0x198] sm:$0xff]
  %v1916 = vld [vmem:[#allocation2 + $0x1a0] sm:$0xff]
  %v1917 = vld [vmem:[#allocation2 + $0x1a8] sm:$0xff]
  %v1918 = vld [vmem:[#allocation2 + $0x1b0] sm:$0xff]
  %v1919 = vld [vmem:[#allocation2 + $0x1b8] sm:$0xff]
  %v1920 = vld [vmem:[#allocation2 + $0x1c0] sm:$0xff]
  %v1921 = vld [vmem:[#allocation2 + $0x1c8] sm:$0xff]
  %v1922 = vld [vmem:[#allocation2 + $0x1d0] sm:$0xff]
  %v1923 = vld [vmem:[#allocation2 + $0x1d8] sm:$0xff]
  %v1924 = vld [vmem:[#allocation2 + $0x1e0] sm:$0xff]
  %v1925 = vld [vmem:[#allocation2 + $0x1e8] sm:$0xff]
  %v1926 = vld [vmem:[#allocation2 + $0x1f0] sm:$0xff]
  %v1927 = vld [vmem:[#allocation2 + $0x1f8] sm:$0xff]
  %v1928 = vld [vmem:[#allocation2 + $0x200] sm:$0xff]
  %v1929 = vld [vmem:[#allocation2 + $0x208] sm:$0xff]
  %v1930 = vld [vmem:[#allocation2 + $0x210] sm:$0xff]
  %v1931 = vld [vmem:[#allocation2 + $0x218] sm:$0xff]
  %v1932 = vld [vmem:[#allocation2 + $0x220] sm:$0xff]
  %v1933 = vld [vmem:[#allocation2 + $0x228] sm:$0xff]
  %v1934 = vld [vmem:[#allocation2 + $0x230] sm:$0xff]
  %v1935 = vld [vmem:[#allocation2 + $0x238] sm:$0xff]
  %v1936 = vld [vmem:[#allocation2 + $0x240] sm:$0xff]
  %v1937 = vld [vmem:[#allocation2 + $0x248] sm:$0xff]
  %v1938 = vld [vmem:[#allocation2 + $0x250] sm:$0xff]
  %v1939 = vld [vmem:[#allocation2 + $0x258] sm:$0xff]
  %v1940 = vld [vmem:[#allocation2 + $0x260] sm:$0xff]
  %v1941 = vld [vmem:[#allocation2 + $0x268] sm:$0xff]
  %v1942 = vld [vmem:[#allocation2 + $0x270] sm:$0xff]
  %v1943 = vld [vmem:[#allocation2 + $0x278] sm:$0xff]
  %v1944 = vld [vmem:[#allocation2 + $0x280] sm:$0xff]
  %v1945 = vld [vmem:[#allocation2 + $0x288] sm:$0xff]
  %v1946 = vld [vmem:[#allocation2 + $0x290] sm:$0xff]
  %v1947 = vld [vmem:[#allocation2 + $0x298] sm:$0xff]
  %v1948 = vld [vmem:[#allocation2 + $0x2a0] sm:$0xff]
  %v1949 = vld [vmem:[#allocation2 + $0x2a8] sm:$0xff]
  %v1950 = vld [vmem:[#allocation2 + $0x2b0] sm:$0xff]
  %v1951 = vld [vmem:[#allocation2 + $0x2b8] sm:$0xff]
  %v1952 = vld [vmem:[#allocation2 + $0x2c0] sm:$0xff]
  %v1953 = vld [vmem:[#allocation2 + $0x2c8] sm:$0xff]
  %v1954 = vld [vmem:[#allocation2 + $0x2d0] sm:$0xff]
  %v1955 = vld [vmem:[#allocation2 + $0x2d8] sm:$0xff]
  %v1956 = vld [vmem:[#allocation2 + $0x2e0] sm:$0xff]
  %v1957 = vld [vmem:[#allocation2 + $0x2e8] sm:$0xff]
  %v1958 = vld [vmem:[#allocation2 + $0x2f0] sm:$0xff]
  %v1959 = vld [vmem:[#allocation2 + $0x2f8] sm:$0xff]
  %v1960 = vld [vmem:[#allocation2 + $0x300] sm:$0xff]
  %v1961 = vld [vmem:[#allocation2 + $0x308] sm:$0xff]
  %v1962 = vld [vmem:[%s6] sm:$0xff]
  %v1963 = vld [vmem:[%s6 + $0x8] sm:$0xff]
  %v1964 = vld [vmem:[%s6 + $0x10] sm:$0xff]
  %v1965 = vld [vmem:[%s6 + $0x18] sm:$0xff]
  %v1966 = vld [vmem:[%s6 + $0x20] sm:$0xff]
  %v1967 = vld [vmem:[%s6 + $0x28] sm:$0xff]
  %v1968 = vld [vmem:[%s6 + $0x30] sm:$0xff]
  %v1969 = vld [vmem:[%s6 + $0x38] sm:$0xff]
  %1971 = vset.pattern.permute.xlu0 0
  %1972 = vperm.xlu0 %1971, %v1962
  %v1973 = vpop.permute.xlu0 %1972
  %1976 = vset.pattern.permute.xlu0 0
  %1977 = vperm.xlu0 %1976, %v1963
  %v1978 = vpop.permute.xlu0 %1977
  %1981 = vset.pattern.permute.xlu0 0
  %1982 = vperm.xlu0 %1981, %v1964
  %v1983 = vpop.permute.xlu0 %1982
  %1986 = vset.pattern.permute.xlu0 0
  %1987 = vperm.xlu0 %1986, %v1965
  %v1988 = vpop.permute.xlu0 %1987
  %1991 = vset.pattern.permute.xlu0 0
  %1992 = vperm.xlu0 %1991, %v1966
  %v1993 = vpop.permute.xlu0 %1992
  %1996 = vset.pattern.permute.xlu0 0
  %1997 = vperm.xlu0 %1996, %v1967
  %v1998 = vpop.permute.xlu0 %1997
  %2001 = vset.pattern.permute.xlu0 0
  %2002 = vperm.xlu0 %2001, %v1968
  %v2003 = vpop.permute.xlu0 %2002
  %2006 = vset.pattern.permute.xlu0 0
  %2007 = vperm.xlu0 %2006, %v1969
  %v2008 = vpop.permute.xlu0 %2007
  %v2066 = vunpack.c.l.b16 %v1808
  %v2067 = vunpack.c.h.b16 %v1808
  %v2068 = vunpack.c.l.b16 %v1809
  %v2069 = vunpack.c.h.b16 %v1809
  %v2070 = vunpack.c.l.b16 %v1810
  %v2071 = vunpack.c.h.b16 %v1810
  %v2072 = vunpack.c.l.b16 %v1811
  %v2073 = vunpack.c.h.b16 %v1811
  %v2074 = vunpack.c.l.b16 %v1812
  %v2075 = vunpack.c.h.b16 %v1812
  %v2076 = vunpack.c.l.b16 %v1813
  %v2077 = vunpack.c.h.b16 %v1813
  %v2078 = vunpack.c.l.b16 %v1814
  %v2079 = vunpack.c.l.b16 %v1815
  %v2080 = vunpack.c.h.b16 %v1815
  %v2081 = vunpack.c.l.b16 %v1816
  %v2082 = vunpack.c.h.b16 %v1816
  %v2083 = vunpack.c.l.b16 %v1817
  %v2084 = vunpack.c.h.b16 %v1817
  %v2085 = vunpack.c.l.b16 %v1818
  %v2086 = vunpack.c.h.b16 %v1818
  %v2087 = vunpack.c.l.b16 %v1819
  %v2088 = vunpack.c.h.b16 %v1819
  %v2089 = vunpack.c.l.b16 %v1820
  %v2090 = vunpack.c.h.b16 %v1820
  %v2091 = vunpack.c.l.b16 %v1821
  %v2092 = vunpack.c.l.b16 %v1822
  %v2093 = vunpack.c.h.b16 %v1822
  %v2094 = vunpack.c.l.b16 %v1823
  %v2095 = vunpack.c.h.b16 %v1823
  %v2096 = vunpack.c.l.b16 %v1824
  %v2097 = vunpack.c.h.b16 %v1824
  %v2098 = vunpack.c.l.b16 %v1825
  %v2099 = vunpack.c.h.b16 %v1825
  %v2100 = vunpack.c.l.b16 %v1826
  %v2101 = vunpack.c.h.b16 %v1826
  %v2102 = vunpack.c.l.b16 %v1827
  %v2103 = vunpack.c.h.b16 %v1827
  %v2104 = vunpack.c.l.b16 %v1828
  %v2105 = vunpack.c.l.b16 %v1829
  %v2106 = vunpack.c.h.b16 %v1829
  %v2107 = vunpack.c.l.b16 %v1830
  %v2108 = vunpack.c.h.b16 %v1830
  %v2109 = vunpack.c.l.b16 %v1831
  %v2110 = vunpack.c.h.b16 %v1831
  %v2111 = vunpack.c.l.b16 %v1832
  %v2112 = vunpack.c.h.b16 %v1832
  %v2113 = vunpack.c.l.b16 %v1833
  %v2114 = vunpack.c.h.b16 %v1833
  %v2115 = vunpack.c.l.b16 %v1834
  %v2116 = vunpack.c.h.b16 %v1834
  %v2117 = vunpack.c.l.b16 %v1835
  %v2118 = vunpack.c.l.b16 %v1836
  %v2119 = vunpack.c.h.b16 %v1836
  %v2120 = vunpack.c.l.b16 %v1837
  %v2121 = vunpack.c.h.b16 %v1837
  %v2122 = vunpack.c.l.b16 %v1838
  %v2123 = vunpack.c.h.b16 %v1838
  %v2124 = vunpack.c.l.b16 %v1839
  %v2125 = vunpack.c.h.b16 %v1839
  %v2126 = vunpack.c.l.b16 %v1840
  %v2127 = vunpack.c.h.b16 %v1840
  %v2128 = vunpack.c.l.b16 %v1841
  %v2129 = vunpack.c.h.b16 %v1841
  %v2130 = vunpack.c.l.b16 %v1842
  %v2131 = vunpack.c.l.b16 %v1843
  %v2132 = vunpack.c.h.b16 %v1843
  %v2133 = vunpack.c.l.b16 %v1844
  %v2134 = vunpack.c.h.b16 %v1844
  %v2135 = vunpack.c.l.b16 %v1845
  %v2136 = vunpack.c.h.b16 %v1845
  %v2137 = vunpack.c.l.b16 %v1846
  %v2138 = vunpack.c.h.b16 %v1846
  %v2139 = vunpack.c.l.b16 %v1847
  %v2140 = vunpack.c.h.b16 %v1847
  %v2141 = vunpack.c.l.b16 %v1848
  %v2142 = vunpack.c.h.b16 %v1848
  %v2143 = vunpack.c.l.b16 %v1849
  %v2144 = vunpack.c.l.b16 %v1850
  %v2145 = vunpack.c.h.b16 %v1850
  %v2146 = vunpack.c.l.b16 %v1851
  %v2147 = vunpack.c.h.b16 %v1851
  %v2148 = vunpack.c.l.b16 %v1852
  %v2149 = vunpack.c.h.b16 %v1852
  %v2150 = vunpack.c.l.b16 %v1853
  %v2151 = vunpack.c.h.b16 %v1853
  %v2152 = vunpack.c.l.b16 %v1854
  %v2153 = vunpack.c.h.b16 %v1854
  %v2154 = vunpack.c.l.b16 %v1855
  %v2155 = vunpack.c.h.b16 %v1855
  %v2156 = vunpack.c.l.b16 %v1856
  %v2157 = vunpack.c.l.b16 %v1857
  %v2158 = vunpack.c.h.b16 %v1857
  %v2159 = vunpack.c.l.b16 %v1858
  %v2160 = vunpack.c.h.b16 %v1858
  %v2161 = vunpack.c.l.b16 %v1859
  %v2162 = vunpack.c.h.b16 %v1859
  %v2163 = vunpack.c.l.b16 %v1860
  %v2164 = vunpack.c.h.b16 %v1860
  %v2165 = vunpack.c.l.b16 %v1861
  %v2166 = vunpack.c.h.b16 %v1861
  %v2167 = vunpack.c.l.b16 %v1862
  %v2168 = vunpack.c.h.b16 %v1862
  %v2169 = vunpack.c.l.b16 %v1863
  %v2170 = vpack.c.b16 %v2079, %v2066
  %v2171 = vpack.c.b16 %v2080, %v2067
  %v2172 = vpack.c.b16 %v2081, %v2068
  %v2173 = vpack.c.b16 %v2082, %v2069
  %v2174 = vpack.c.b16 %v2083, %v2070
  %v2175 = vpack.c.b16 %v2084, %v2071
  %v2176 = vpack.c.b16 %v2085, %v2072
  %v2177 = vpack.c.b16 %v2086, %v2073
  %v2178 = vpack.c.b16 %v2087, %v2074
  %v2179 = vpack.c.b16 %v2088, %v2075
  %v2180 = vpack.c.b16 %v2089, %v2076
  %v2181 = vpack.c.b16 %v2090, %v2077
  %v2182 = vpack.c.b16 %v2091, %v2078
  %v2183 = vpack.c.b16 %v2105, %v2092
  %v2184 = vpack.c.b16 %v2106, %v2093
  %v2185 = vpack.c.b16 %v2107, %v2094
  %v2186 = vpack.c.b16 %v2108, %v2095
  %v2187 = vpack.c.b16 %v2109, %v2096
  %v2188 = vpack.c.b16 %v2110, %v2097
  %v2189 = vpack.c.b16 %v2111, %v2098
  %v2190 = vpack.c.b16 %v2112, %v2099
  %v2191 = vpack.c.b16 %v2113, %v2100
  %v2192 = vpack.c.b16 %v2114, %v2101
  %v2193 = vpack.c.b16 %v2115, %v2102
  %v2194 = vpack.c.b16 %v2116, %v2103
  %v2195 = vpack.c.b16 %v2117, %v2104
  %v2196 = vpack.c.b16 %v2131, %v2118
  %v2197 = vpack.c.b16 %v2132, %v2119
  %v2198 = vpack.c.b16 %v2133, %v2120
  %v2199 = vpack.c.b16 %v2134, %v2121
  %v2200 = vpack.c.b16 %v2135, %v2122
  %v2201 = vpack.c.b16 %v2136, %v2123
  %v2202 = vpack.c.b16 %v2137, %v2124
  %v2203 = vpack.c.b16 %v2138, %v2125
  %v2204 = vpack.c.b16 %v2139, %v2126
  %v2205 = vpack.c.b16 %v2140, %v2127
  %v2206 = vpack.c.b16 %v2141, %v2128
  %v2207 = vpack.c.b16 %v2142, %v2129
  %v2208 = vpack.c.b16 %v2143, %v2130
  %v2209 = vpack.c.b16 %v2157, %v2144
  %v2210 = vpack.c.b16 %v2158, %v2145
  %v2211 = vpack.c.b16 %v2159, %v2146
  %v2212 = vpack.c.b16 %v2160, %v2147
  %v2213 = vpack.c.b16 %v2161, %v2148
  %v2214 = vpack.c.b16 %v2162, %v2149
  %v2215 = vpack.c.b16 %v2163, %v2150
  %v2216 = vpack.c.b16 %v2164, %v2151
  %v2217 = vpack.c.b16 %v2165, %v2152
  %v2218 = vpack.c.b16 %v2166, %v2153
  %v2219 = vpack.c.b16 %v2167, %v2154
  %v2220 = vpack.c.b16 %v2168, %v2155
  %v2221 = vpack.c.b16 %v2169, %v2156
  %vm2270 = vcmask 261120
  %v2272 = vsel %vm2270, %v2182, 0
  %v2275 = vsel %vm2270, %v2195, 0
  %v2278 = vsel %vm2270, %v2208, 0
  %v2281 = vsel %vm2270, %v2221, 0
  %2283 = vmatprep.subr.bf16.mxu0 0
  %2284 = vmatpush1.bf16.msra.mxu0 %v1864
  %2285 = vmatprep.subr.bf16.mxu0 0
  %2286 = vmatpush1.bf16.msra.mxu0 %v1865
  %2287 = vmatprep.subr.bf16.mxu0 0
  %2288 = vmatpush1.bf16.msra.mxu0 %v1866
  %2289 = vmatprep.subr.bf16.mxu0 0
  %2290 = vmatpush1.bf16.msra.mxu0 %v1867
  %2291 = vmatprep.subr.bf16.mxu0 0
  %2292 = vmatpush1.bf16.msra.mxu0 %v1868
  %2293 = vmatprep.subr.bf16.mxu0 0
  %2294 = vmatpush1.bf16.msra.mxu0 %v1869
  %2295 = vmatprep.subr.bf16.mxu0 0
  %2296 = vmatpush1.bf16.msra.mxu0 %v1870
  %2297 = vmatprep.subr.bf16.mxu0 0
  %2298 = vmatpush1.bf16.msra.mxu0 %v1871
  %2299 = vmatprep.subr.bf16.mxu0 0
  %2300 = vmatpush1.bf16.msra.mxu0 %v1872
  %2301 = vmatprep.subr.bf16.mxu0 0
  %2302 = vmatpush1.bf16.msra.mxu0 %v1873
  %2303 = vmatprep.subr.bf16.mxu0 0
  %2304 = vmatpush1.bf16.msra.mxu0 %v1874
  %2305 = vmatprep.subr.bf16.mxu0 0
  %2306 = vmatpush1.bf16.msra.mxu0 %v1875
  %2307 = vmatprep.subr.bf16.mxu0 0
  %2308 = vmatpush1.bf16.msra.mxu0 %v1876
  %2309 = vmatprep.subr.bf16.mxu0 0
  %2310 = vmatpush1.bf16.msra.mxu0 %v1877
  %2311 = vmatprep.subr.bf16.mxu0 0
  %2312 = vmatpush1.bf16.msra.mxu0 %v1878
  %2313 = vmatprep.subr.bf16.mxu0 0
  %2314 = vmatpush1.bf16.msra.mxu0 %v1879
  %2315 = vmatprep.mubr.bf16.mxu0 %v2171
  %2316 = vmatmul.mubr.bf16.gmra.mrb[0].mxu0 %v2170
  %v2317 = vpop.f32.mrb[0].mxu0
  %v2318 = vadd.f32 %v1973, %v2317
  %v2319 = vpop.f32.mrb[0].mxu0
  %v2320 = vpop.f32.mrb[0].mxu0
  %v2321 = vadd.f32 %v1978, %v2320
  %v2322 = vpop.f32.mrb[0].mxu0
  %2323 = vmatprep.mubr.bf16.mxu0 %v2184
  %2324 = vmatmul.mubr.bf16.gmra.mrb[0].mxu0 %v2183
  %v2325 = vpop.f32.mrb[0].mxu0
  %v2326 = vadd.f32 %v1983, %v2325
  %v2327 = vpop.f32.mrb[0].mxu0
  %v2328 = vpop.f32.mrb[0].mxu0
  %v2329 = vadd.f32 %v1988, %v2328
  %v2330 = vpop.f32.mrb[0].mxu0
  %2331 = vmatprep.mubr.bf16.mxu0 %v2197
  %2332 = vmatmul.mubr.bf16.gmra.mrb[0].mxu0 %v2196
  %v2333 = vpop.f32.mrb[0].mxu0
  %v2334 = vadd.f32 %v1993, %v2333
  %v2335 = vpop.f32.mrb[0].mxu0
  %v2336 = vpop.f32.mrb[0].mxu0
  %v2337 = vadd.f32 %v1998, %v2336
  %v2338 = vpop.f32.mrb[0].mxu0
  %2339 = vmatprep.mubr.bf16.mxu0 %v2210
  %2340 = vmatmul.mubr.bf16.gmra.mrb[0].mxu0 %v2209
  %v2341 = vpop.f32.mrb[0].mxu0
  %v2342 = vadd.f32 %v2003, %v2341
  %v2343 = vpop.f32.mrb[0].mxu0
  %v2344 = vpop.f32.mrb[0].mxu0
  %v2345 = vadd.f32 %v2008, %v2344
  %v2346 = vpop.f32.mrb[0].mxu0
  %2347 = vdwg.mxu0
  %2348 = vmatprep.subr.bf16.mxu0 0
  %2349 = vmatpush1.bf16.msra.mxu0 %v1880
  %2350 = vmatprep.subr.bf16.mxu0 0
  %2351 = vmatpush1.bf16.msra.mxu0 %v1881
  %2352 = vmatprep.subr.bf16.mxu0 0
  %2353 = vmatpush1.bf16.msra.mxu0 %v1882
  %2354 = vmatprep.subr.bf16.mxu0 0
  %2355 = vmatpush1.bf16.msra.mxu0 %v1883
  %2356 = vmatprep.subr.bf16.mxu0 0
  %2357 = vmatpush1.bf16.msra.mxu0 %v1884
  %2358 = vmatprep.subr.bf16.mxu0 0
  %2359 = vmatpush1.bf16.msra.mxu0 %v1885
  %2360 = vmatprep.subr.bf16.mxu0 0
  %2361 = vmatpush1.bf16.msra.mxu0 %v1886
  %2362 = vmatprep.subr.bf16.mxu0 0
  %2363 = vmatpush1.bf16.msra.mxu0 %v1887
  %2364 = vmatprep.subr.bf16.mxu0 0
  %2365 = vmatpush1.bf16.msra.mxu0 %v1888
  %2366 = vmatprep.subr.bf16.mxu0 0
  %2367 = vmatpush1.bf16.msra.mxu0 %v1889
  %2368 = vmatprep.subr.bf16.mxu0 0
  %2369 = vmatpush1.bf16.msra.mxu0 %v1890
  %2370 = vmatprep.subr.bf16.mxu0 0
  %2371 = vmatpush1.bf16.msra.mxu0 %v1891
  %2372 = vmatprep.subr.bf16.mxu0 0
  %2373 = vmatpush1.bf16.msra.mxu0 %v1892
  %2374 = vmatprep.subr.bf16.mxu0 0
  %2375 = vmatpush1.bf16.msra.mxu0 %v1893
  %2376 = vmatprep.subr.bf16.mxu0 0
  %2377 = vmatpush1.bf16.msra.mxu0 %v1894
  %2378 = vmatprep.subr.bf16.mxu0 0
  %2379 = vmatpush1.bf16.msra.mxu0 %v1895
  %2380 = vmatprep.mubr.bf16.mxu0 %v2173
  %2381 = vmatmul.mubr.bf16.gmra.mrb[0].mxu0 %v2172
  %v2382 = vpop.f32.mrb[0].mxu0
  %v2383 = vadd.f32 %v2318, %v2382
  %v2384 = vpop.f32.mrb[0].mxu0
  %v2385 = vpop.f32.mrb[0].mxu0
  %v2386 = vadd.f32 %v2321, %v2385
  %v2387 = vpop.f32.mrb[0].mxu0
  %2388 = vmatprep.mubr.bf16.mxu0 %v2186
  %2389 = vmatmul.mubr.bf16.gmra.mrb[0].mxu0 %v2185
  %v2390 = vpop.f32.mrb[0].mxu0
  %v2391 = vadd.f32 %v2326, %v2390
  %v2392 = vpop.f32.mrb[0].mxu0
  %v2393 = vpop.f32.mrb[0].mxu0
  %v2394 = vadd.f32 %v2329, %v2393
  %v2395 = vpop.f32.mrb[0].mxu0
  %2396 = vmatprep.mubr.bf16.mxu0 %v2199
  %2397 = vmatmul.mubr.bf16.gmra.mrb[0].mxu0 %v2198
  %v2398 = vpop.f32.mrb[0].mxu0
  %v2399 = vadd.f32 %v2334, %v2398
  %v2400 = vpop.f32.mrb[0].mxu0
  %v2401 = vpop.f32.mrb[0].mxu0
  %v2402 = vadd.f32 %v2337, %v2401
  %v2403 = vpop.f32.mrb[0].mxu0
  %2404 = vmatprep.mubr.bf16.mxu0 %v2212
  %2405 = vmatmul.mubr.bf16.gmra.mrb[0].mxu0 %v2211
  %v2406 = vpop.f32.mrb[0].mxu0
  %v2407 = vadd.f32 %v2342, %v2406
  %v2408 = vpop.f32.mrb[0].mxu0
  %v2409 = vpop.f32.mrb[0].mxu0
  %v2410 = vadd.f32 %v2345, %v2409
  %v2411 = vpop.f32.mrb[0].mxu0
  %2412 = vdwg.mxu0
  %2413 = vmatprep.subr.bf16.mxu0 0
  %2414 = vmatpush1.bf16.msra.mxu0 %v1896
  %2415 = vmatprep.subr.bf16.mxu0 0
  %2416 = vmatpush1.bf16.msra.mxu0 %v1897
  %2417 = vmatprep.subr.bf16.mxu0 0
  %2418 = vmatpush1.bf16.msra.mxu0 %v1898
  %2419 = vmatprep.subr.bf16.mxu0 0
  %2420 = vmatpush1.bf16.msra.mxu0 %v1899
  %2421 = vmatprep.subr.bf16.mxu0 0
  %2422 = vmatpush1.bf16.msra.mxu0 %v1900
  %2423 = vmatprep.subr.bf16.mxu0 0
  %2424 = vmatpush1.bf16.msra.mxu0 %v1901
  %2425 = vmatprep.subr.bf16.mxu0 0
  %2426 = vmatpush1.bf16.msra.mxu0 %v1902
  %2427 = vmatprep.subr.bf16.mxu0 0
  %2428 = vmatpush1.bf16.msra.mxu0 %v1903
  %2429 = vmatprep.subr.bf16.mxu0 0
  %2430 = vmatpush1.bf16.msra.mxu0 %v1904
  %2431 = vmatprep.subr.bf16.mxu0 0
  %2432 = vmatpush1.bf16.msra.mxu0 %v1905
  %2433 = vmatprep.subr.bf16.mxu0 0
  %2434 = vmatpush1.bf16.msra.mxu0 %v1906
  %2435 = vmatprep.subr.bf16.mxu0 0
  %2436 = vmatpush1.bf16.msra.mxu0 %v1907
  %2437 = vmatprep.subr.bf16.mxu0 0
  %2438 = vmatpush1.bf16.msra.mxu0 %v1908
  %2439 = vmatprep.subr.bf16.mxu0 0
  %2440 = vmatpush1.bf16.msra.mxu0 %v1909
  %2441 = vmatprep.subr.bf16.mxu0 0
  %2442 = vmatpush1.bf16.msra.mxu0 %v1910
  %2443 = vmatprep.subr.bf16.mxu0 0
  %2444 = vmatpush1.bf16.msra.mxu0 %v1911
  %2445 = vmatprep.mubr.bf16.mxu0 %v2175
  %2446 = vmatmul.mubr.bf16.gmra.mrb[0].mxu0 %v2174
  %v2447 = vpop.f32.mrb[0].mxu0
  %v2448 = vadd.f32 %v2383, %v2447
  %v2449 = vpop.f32.mrb[0].mxu0
  %v2450 = vpop.f32.mrb[0].mxu0
  %v2451 = vadd.f32 %v2386, %v2450
  %v2452 = vpop.f32.mrb[0].mxu0
  %2453 = vmatprep.mubr.bf16.mxu0 %v2188
  %2454 = vmatmul.mubr.bf16.gmra.mrb[0].mxu0 %v2187
  %v2455 = vpop.f32.mrb[0].mxu0
  %v2456 = vadd.f32 %v2391, %v2455
  %v2457 = vpop.f32.mrb[0].mxu0
  %v2458 = vpop.f32.mrb[0].mxu0
  %v2459 = vadd.f32 %v2394, %v2458
  %v2460 = vpop.f32.mrb[0].mxu0
  %2461 = vmatprep.mubr.bf16.mxu0 %v2201
  %2462 = vmatmul.mubr.bf16.gmra.mrb[0].mxu0 %v2200
  %v2463 = vpop.f32.mrb[0].mxu0
  %v2464 = vadd.f32 %v2399, %v2463
  %v2465 = vpop.f32.mrb[0].mxu0
  %v2466 = vpop.f32.mrb[0].mxu0
  %v2467 = vadd.f32 %v2402, %v2466
  %v2468 = vpop.f32.mrb[0].mxu0
  %2469 = vmatprep.mubr.bf16.mxu0 %v2214
  %2470 = vmatmul.mubr.bf16.gmra.mrb[0].mxu0 %v2213
  %v2471 = vpop.f32.mrb[0].mxu0
  %v2472 = vadd.f32 %v2407, %v2471
  %v2473 = vpop.f32.mrb[0].mxu0
  %v2474 = vpop.f32.mrb[0].mxu0
  %v2475 = vadd.f32 %v2410, %v2474
  %v2476 = vpop.f32.mrb[0].mxu0
  %2477 = vdwg.mxu0
  %2478 = vmatprep.subr.bf16.mxu0 0
  %2479 = vmatpush1.bf16.msra.mxu0 %v1912
  %2480 = vmatprep.subr.bf16.mxu0 0
  %2481 = vmatpush1.bf16.msra.mxu0 %v1913
  %2482 = vmatprep.subr.bf16.mxu0 0
  %2483 = vmatpush1.bf16.msra.mxu0 %v1914
  %2484 = vmatprep.subr.bf16.mxu0 0
  %2485 = vmatpush1.bf16.msra.mxu0 %v1915
  %2486 = vmatprep.subr.bf16.mxu0 0
  %2487 = vmatpush1.bf16.msra.mxu0 %v1916
  %2488 = vmatprep.subr.bf16.mxu0 0
  %2489 = vmatpush1.bf16.msra.mxu0 %v1917
  %2490 = vmatprep.subr.bf16.mxu0 0
  %2491 = vmatpush1.bf16.msra.mxu0 %v1918
  %2492 = vmatprep.subr.bf16.mxu0 0
  %2493 = vmatpush1.bf16.msra.mxu0 %v1919
  %2494 = vmatprep.subr.bf16.mxu0 0
  %2495 = vmatpush1.bf16.msra.mxu0 %v1920
  %2496 = vmatprep.subr.bf16.mxu0 0
  %2497 = vmatpush1.bf16.msra.mxu0 %v1921
  %2498 = vmatprep.subr.bf16.mxu0 0
  %2499 = vmatpush1.bf16.msra.mxu0 %v1922
  %2500 = vmatprep.subr.bf16.mxu0 0
  %2501 = vmatpush1.bf16.msra.mxu0 %v1923
  %2502 = vmatprep.subr.bf16.mxu0 0
  %2503 = vmatpush1.bf16.msra.mxu0 %v1924
  %2504 = vmatprep.subr.bf16.mxu0 0
  %2505 = vmatpush1.bf16.msra.mxu0 %v1925
  %2506 = vmatprep.subr.bf16.mxu0 0
  %2507 = vmatpush1.bf16.msra.mxu0 %v1926
  %2508 = vmatprep.subr.bf16.mxu0 0
  %2509 = vmatpush1.bf16.msra.mxu0 %v1927
  %2510 = vmatprep.mubr.bf16.mxu0 %v2177
  %2511 = vmatmul.mubr.bf16.gmra.mrb[0].mxu0 %v2176
  %v2512 = vpop.f32.mrb[0].mxu0
  %v2513 = vadd.f32 %v2448, %v2512
  %v2514 = vpop.f32.mrb[0].mxu0
  %v2515 = vpop.f32.mrb[0].mxu0
  %v2516 = vadd.f32 %v2451, %v2515
  %v2517 = vpop.f32.mrb[0].mxu0
  %2518 = vmatprep.mubr.bf16.mxu0 %v2190
  %2519 = vmatmul.mubr.bf16.gmra.mrb[0].mxu0 %v2189
  %v2520 = vpop.f32.mrb[0].mxu0
  %v2521 = vadd.f32 %v2456, %v2520
  %v2522 = vpop.f32.mrb[0].mxu0
  %v2523 = vpop.f32.mrb[0].mxu0
  %v2524 = vadd.f32 %v2459, %v2523
  %v2525 = vpop.f32.mrb[0].mxu0
  %2526 = vmatprep.mubr.bf16.mxu0 %v2203
  %2527 = vmatmul.mubr.bf16.gmra.mrb[0].mxu0 %v2202
  %v2528 = vpop.f32.mrb[0].mxu0
  %v2529 = vadd.f32 %v2464, %v2528
  %v2530 = vpop.f32.mrb[0].mxu0
  %v2531 = vpop.f32.mrb[0].mxu0
  %v2532 = vadd.f32 %v2467, %v2531
  %v2533 = vpop.f32.mrb[0].mxu0
  %2534 = vmatprep.mubr.bf16.mxu0 %v2216
  %2535 = vmatmul.mubr.bf16.gmra.mrb[0].mxu0 %v2215
  %v2536 = vpop.f32.mrb[0].mxu0
  %v2537 = vadd.f32 %v2472, %v2536
  %v2538 = vpop.f32.mrb[0].mxu0
  %v2539 = vpop.f32.mrb[0].mxu0
  %v2540 = vadd.f32 %v2475, %v2539
  %v2541 = vpop.f32.mrb[0].mxu0
  %2542 = vdwg.mxu0
  %2543 = vmatprep.subr.bf16.mxu0 0
  %2544 = vmatpush1.bf16.msra.mxu0 %v1928
  %2545 = vmatprep.subr.bf16.mxu0 0
  %2546 = vmatpush1.bf16.msra.mxu0 %v1929
  %2547 = vmatprep.subr.bf16.mxu0 0
  %2548 = vmatpush1.bf16.msra.mxu0 %v1930
  %2549 = vmatprep.subr.bf16.mxu0 0
  %2550 = vmatpush1.bf16.msra.mxu0 %v1931
  %2551 = vmatprep.subr.bf16.mxu0 0
  %2552 = vmatpush1.bf16.msra.mxu0 %v1932
  %2553 = vmatprep.subr.bf16.mxu0 0
  %2554 = vmatpush1.bf16.msra.mxu0 %v1933
  %2555 = vmatprep.subr.bf16.mxu0 0
  %2556 = vmatpush1.bf16.msra.mxu0 %v1934
  %2557 = vmatprep.subr.bf16.mxu0 0
  %2558 = vmatpush1.bf16.msra.mxu0 %v1935
  %2559 = vmatprep.subr.bf16.mxu0 0
  %2560 = vmatpush1.bf16.msra.mxu0 %v1936
  %2561 = vmatprep.subr.bf16.mxu0 0
  %2562 = vmatpush1.bf16.msra.mxu0 %v1937
  %2563 = vmatprep.subr.bf16.mxu0 0
  %2564 = vmatpush1.bf16.msra.mxu0 %v1938
  %2565 = vmatprep.subr.bf16.mxu0 0
  %2566 = vmatpush1.bf16.msra.mxu0 %v1939
  %2567 = vmatprep.subr.bf16.mxu0 0
  %2568 = vmatpush1.bf16.msra.mxu0 %v1940
  %2569 = vmatprep.subr.bf16.mxu0 0
  %2570 = vmatpush1.bf16.msra.mxu0 %v1941
  %2571 = vmatprep.subr.bf16.mxu0 0
  %2572 = vmatpush1.bf16.msra.mxu0 %v1942
  %2573 = vmatprep.subr.bf16.mxu0 0
  %2574 = vmatpush1.bf16.msra.mxu0 %v1943
  %2575 = vmatprep.mubr.bf16.mxu0 %v2179
  %2576 = vmatmul.mubr.bf16.gmra.mrb[0].mxu0 %v2178
  %v2577 = vpop.f32.mrb[0].mxu0
  %v2578 = vadd.f32 %v2513, %v2577
  %v2579 = vpop.f32.mrb[0].mxu0
  %v2580 = vpop.f32.mrb[0].mxu0
  %v2581 = vadd.f32 %v2516, %v2580
  %v2582 = vpop.f32.mrb[0].mxu0
  %2583 = vmatprep.mubr.bf16.mxu0 %v2192
  %2584 = vmatmul.mubr.bf16.gmra.mrb[0].mxu0 %v2191
  %v2585 = vpop.f32.mrb[0].mxu0
  %v2586 = vadd.f32 %v2521, %v2585
  %v2587 = vpop.f32.mrb[0].mxu0
  %v2588 = vpop.f32.mrb[0].mxu0
  %v2589 = vadd.f32 %v2524, %v2588
  %v2590 = vpop.f32.mrb[0].mxu0
  %2591 = vmatprep.mubr.bf16.mxu0 %v2205
  %2592 = vmatmul.mubr.bf16.gmra.mrb[0].mxu0 %v2204
  %v2593 = vpop.f32.mrb[0].mxu0
  %v2594 = vadd.f32 %v2529, %v2593
  %v2595 = vpop.f32.mrb[0].mxu0
  %v2596 = vpop.f32.mrb[0].mxu0
  %v2597 = vadd.f32 %v2532, %v2596
  %v2598 = vpop.f32.mrb[0].mxu0
  %2599 = vmatprep.mubr.bf16.mxu0 %v2218
  %2600 = vmatmul.mubr.bf16.gmra.mrb[0].mxu0 %v2217
  %v2601 = vpop.f32.mrb[0].mxu0
  %v2602 = vadd.f32 %v2537, %v2601
  %v2603 = vpop.f32.mrb[0].mxu0
  %v2604 = vpop.f32.mrb[0].mxu0
  %v2605 = vadd.f32 %v2540, %v2604
  %v2606 = vpop.f32.mrb[0].mxu0
  %2607 = vdwg.mxu0
  %2608 = vmatprep.subr.bf16.mxu0 0
  %2609 = vmatpush1.bf16.msra.mxu0 %v1944
  %2610 = vmatprep.subr.bf16.mxu0 0
  %2611 = vmatpush1.bf16.msra.mxu0 %v1945
  %2612 = vmatprep.subr.bf16.mxu0 0
  %2613 = vmatpush1.bf16.msra.mxu0 %v1946
  %2614 = vmatprep.subr.bf16.mxu0 0
  %2615 = vmatpush1.bf16.msra.mxu0 %v1947
  %2616 = vmatprep.subr.bf16.mxu0 0
  %2617 = vmatpush1.bf16.msra.mxu0 %v1948
  %2618 = vmatprep.subr.bf16.mxu0 0
  %2619 = vmatpush1.bf16.msra.mxu0 %v1949
  %2620 = vmatprep.subr.bf16.mxu0 0
  %2621 = vmatpush1.bf16.msra.mxu0 %v1950
  %2622 = vmatprep.subr.bf16.mxu0 0
  %2623 = vmatpush1.bf16.msra.mxu0 %v1951
  %2624 = vmatprep.subr.bf16.mxu0 0
  %2625 = vmatpush1.bf16.msra.mxu0 %v1952
  %2626 = vmatprep.subr.bf16.mxu0 0
  %2627 = vmatpush1.bf16.msra.mxu0 %v1953
  %2628 = vmatprep.subr.bf16.mxu0 0
  %2629 = vmatpush1.bf16.msra.mxu0 %v1954
  %2630 = vmatprep.subr.bf16.mxu0 0
  %2631 = vmatpush1.bf16.msra.mxu0 %v1955
  %2632 = vmatprep.subr.bf16.mxu0 0
  %2633 = vmatpush1.bf16.msra.mxu0 %v1956
  %2634 = vmatprep.subr.bf16.mxu0 0
  %2635 = vmatpush1.bf16.msra.mxu0 %v1957
  %2636 = vmatprep.subr.bf16.mxu0 0
  %2637 = vmatpush1.bf16.msra.mxu0 %v1958
  %2638 = vmatprep.subr.bf16.mxu0 0
  %2639 = vmatpush1.bf16.msra.mxu0 %v1959
  %2640 = vmatprep.mubr.bf16.mxu0 %v2181
  %2641 = vmatmul.mubr.bf16.gmra.mrb[0].mxu0 %v2180
  %v2642 = vpop.f32.mrb[0].mxu0
  %v2643 = vadd.f32 %v2578, %v2642
  %v2644 = vpop.f32.mrb[0].mxu0
  %v2645 = vpop.f32.mrb[0].mxu0
  %v2646 = vadd.f32 %v2581, %v2645
  %v2647 = vpop.f32.mrb[0].mxu0
  %2648 = vmatprep.mubr.bf16.mxu0 %v2194
  %2649 = vmatmul.mubr.bf16.gmra.mrb[0].mxu0 %v2193
  %v2650 = vpop.f32.mrb[0].mxu0
  %v2651 = vadd.f32 %v2586, %v2650
  %v2652 = vpop.f32.mrb[0].mxu0
  %v2653 = vpop.f32.mrb[0].mxu0
  %v2654 = vadd.f32 %v2589, %v2653
  %v2655 = vpop.f32.mrb[0].mxu0
  %2656 = vmatprep.mubr.bf16.mxu0 %v2207
  %2657 = vmatmul.mubr.bf16.gmra.mrb[0].mxu0 %v2206
  %v2658 = vpop.f32.mrb[0].mxu0
  %v2659 = vadd.f32 %v2594, %v2658
  %v2660 = vpop.f32.mrb[0].mxu0
  %v2661 = vpop.f32.mrb[0].mxu0
  %v2662 = vadd.f32 %v2597, %v2661
  %v2663 = vpop.f32.mrb[0].mxu0
  %2664 = vmatprep.mubr.bf16.mxu0 %v2220
  %2665 = vmatmul.mubr.bf16.gmra.mrb[0].mxu0 %v2219
  %v2666 = vpop.f32.mrb[0].mxu0
  %v2667 = vadd.f32 %v2602, %v2666
  %v2668 = vpop.f32.mrb[0].mxu0
  %v2669 = vpop.f32.mrb[0].mxu0
  %v2670 = vadd.f32 %v2605, %v2669
  %v2671 = vpop.f32.mrb[0].mxu0
  %2672 = vdwg.mxu0
  %2673 = vmatprep.subr.bf16.mxu0 0
  %2674 = vmatpush1.bf16.msra.mxu0 %v1960
  %2675 = vmatprep.subr.bf16.mxu0 0
  %2676 = vmatpush1.bf16.msra.mxu0 %v1961
  %2677 = vmatprep.subr.bf16.mxu0 0
  %2678 = vmatpush1.bf16.msra.mxu0 0
  %2679 = vmatprep.subr.bf16.mxu0 0
  %2680 = vmatpush1.bf16.msra.mxu0 0
  %2681 = vmatprep.subr.bf16.mxu0 0
  %2682 = vmatpush1.bf16.msra.mxu0 0
  %2683 = vmatprep.subr.bf16.mxu0 0
  %2684 = vmatpush1.bf16.msra.mxu0 0
  %2685 = vmatprep.subr.bf16.mxu0 0
  %2686 = vmatpush1.bf16.msra.mxu0 0
  %2687 = vmatprep.subr.bf16.mxu0 0
  %2688 = vmatpush1.bf16.msra.mxu0 0
  %2689 = vmatprep.subr.bf16.mxu0 0
  %2690 = vmatpush1.bf16.msra.mxu0 0
  %2691 = vmatprep.subr.bf16.mxu0 0
  %2692 = vmatpush1.bf16.msra.mxu0 0
  %2693 = vmatprep.subr.bf16.mxu0 0
  %2694 = vmatpush1.bf16.msra.mxu0 0
  %2695 = vmatprep.subr.bf16.mxu0 0
  %2696 = vmatpush1.bf16.msra.mxu0 0
  %2697 = vmatprep.subr.bf16.mxu0 0
  %2698 = vmatpush1.bf16.msra.mxu0 0
  %2699 = vmatprep.subr.bf16.mxu0 0
  %2700 = vmatpush1.bf16.msra.mxu0 0
  %2701 = vmatprep.subr.bf16.mxu0 0
  %2702 = vmatpush1.bf16.msra.mxu0 0
  %2703 = vmatprep.subr.bf16.mxu0 0
  %2704 = vmatpush1.bf16.msra.mxu0 0
  %2705 = vmatprep.mubr.bf16.mxu0 0
  %2706 = vmatmul.mubr.bf16.gmra.mrb[0].mxu0 %v2272
  %v2707 = vpop.f32.mrb[0].mxu0
  %v2708 = vadd.f32 %v2643, %v2707
  %v2709 = vpop.f32.mrb[0].mxu0
  %v2710 = vpop.f32.mrb[0].mxu0
  %v2711 = vadd.f32 %v2646, %v2710
  %v2712 = vpop.f32.mrb[0].mxu0
  %2713 = vmatprep.mubr.bf16.mxu0 0
  %2714 = vmatmul.mubr.bf16.gmra.mrb[0].mxu0 %v2275
  %v2715 = vpop.f32.mrb[0].mxu0
  %v2716 = vadd.f32 %v2651, %v2715
  %v2717 = vpop.f32.mrb[0].mxu0
  %v2718 = vpop.f32.mrb[0].mxu0
  %v2719 = vadd.f32 %v2654, %v2718
  %v2720 = vpop.f32.mrb[0].mxu0
  %2721 = vmatprep.mubr.bf16.mxu0 0
  %2722 = vmatmul.mubr.bf16.gmra.mrb[0].mxu0 %v2278
  %v2723 = vpop.f32.mrb[0].mxu0
  %v2724 = vadd.f32 %v2659, %v2723
  %v2725 = vpop.f32.mrb[0].mxu0
  %v2726 = vpop.f32.mrb[0].mxu0
  %v2727 = vadd.f32 %v2662, %v2726
  %v2728 = vpop.f32.mrb[0].mxu0
  %2729 = vmatprep.mubr.bf16.mxu0 0
  %2730 = vmatmul.mubr.bf16.gmra.mrb[0].mxu0 %v2281
  %v2731 = vpop.f32.mrb[0].mxu0
  %v2732 = vadd.f32 %v2667, %v2731
  %v2733 = vpop.f32.mrb[0].mxu0
  %v2734 = vpop.f32.mrb[0].mxu0
  %v2735 = vadd.f32 %v2670, %v2734
  %v2736 = vpop.f32.mrb[0].mxu0
  %2737 = vdwg.mxu0
  %v2738 = vpack.c.bf16 %v2711, %v2708
  %v2739 = vpack.c.bf16 %v2719, %v2716
  %v2740 = vpack.c.bf16 %v2727, %v2724
  %v2741 = vpack.c.bf16 %v2735, %v2732
  %v2742 = vld [vmem:[%s7] sm:$0xf]
  %v2743 = vld [vmem:[%s7 + $0x4] sm:$0xf]
  %v2744 = vld [vmem:[%s7 + $0x8] sm:$0xf]
  %v2745 = vld [vmem:[%s7 + $0xc] sm:$0xf]
  %v2746 = vld [vmem:[%s7 + $0x10] sm:$0xf]
  %v2747 = vld [vmem:[%s7 + $0x14] sm:$0xf]
  %v2748 = vld [vmem:[%s7 + $0x18] sm:$0xf]
  %v2749 = vld [vmem:[%s7 + $0x1c] sm:$0xf]
  %v2750 = vld [vmem:[%s7 + $0x20] sm:$0xf]
  %v2751 = vld [vmem:[%s7 + $0x24] sm:$0xf]
  %v2752 = vld [vmem:[%s7 + $0x28] sm:$0xf]
  %v2753 = vld [vmem:[%s7 + $0x2c] sm:$0xf]
  %v2754 = vld [vmem:[%s7 + $0x30] sm:$0xf]
  %v2755 = vld [vmem:[%s7 + $0x34] sm:$0xf]
  %v2756 = vld [vmem:[%s7 + $0x38] sm:$0xf]
  %v2757 = vld [vmem:[%s7 + $0x3c] sm:$0xf]
  %v2758 = vld [vmem:[%s7 + $0x40] sm:$0xf]
  %v2759 = vld [vmem:[%s7 + $0x44] sm:$0xf]
  %v2760 = vld [vmem:[%s7 + $0x48] sm:$0xf]
  %v2761 = vld [vmem:[%s7 + $0x4c] sm:$0xf]
  %v2762 = vld [vmem:[%s7 + $0x50] sm:$0xf]
  %v2763 = vld [vmem:[%s7 + $0x54] sm:$0xf]
  %v2764 = vld [vmem:[%s7 + $0x58] sm:$0xf]
  %v2765 = vld [vmem:[%s7 + $0x5c] sm:$0xf]
  %v2766 = vld [vmem:[%s7 + $0x60] sm:$0xf]
  %v2767 = vld [vmem:[%s7 + $0x64] sm:$0xf]
  %v2768 = vld [vmem:[%s7 + $0x68] sm:$0xf]
  %v2769 = vld [vmem:[%s7 + $0x6c] sm:$0xf]
  %v2770 = vld [vmem:[%s7 + $0x70] sm:$0xf]
  %v2771 = vld [vmem:[%s7 + $0x74] sm:$0xf]
  %v2772 = vld [vmem:[%s7 + $0x78] sm:$0xf]
  %v2773 = vld [vmem:[%s7 + $0x7c] sm:$0xf]
  %v2774 = vld [vmem:[%s7 + $0x80] sm:$0xf]
  %v2775 = vld [vmem:[%s7 + $0x84] sm:$0xf]
  %v2776 = vld [vmem:[%s7 + $0x88] sm:$0xf]
  %v2777 = vld [vmem:[%s7 + $0x8c] sm:$0xf]
  %v2778 = vld [vmem:[%s7 + $0x90] sm:$0xf]
  %v2779 = vld [vmem:[%s7 + $0x94] sm:$0xf]
  %v2780 = vld [vmem:[%s7 + $0x98] sm:$0xf]
  %v2781 = vld [vmem:[%s7 + $0x9c] sm:$0xf]
  %v2782 = vld [vmem:[%s7 + $0xa0] sm:$0xf]
  %v2783 = vld [vmem:[%s7 + $0xa4] sm:$0xf]
  %v2784 = vld [vmem:[%s7 + $0xa8] sm:$0xf]
  %v2785 = vld [vmem:[%s7 + $0xac] sm:$0xf]
  %v2786 = vld [vmem:[%s7 + $0xb0] sm:$0xf]
  %v2787 = vld [vmem:[%s7 + $0xb4] sm:$0xf]
  %v2788 = vld [vmem:[%s7 + $0xb8] sm:$0xf]
  %v2789 = vld [vmem:[%s7 + $0xbc] sm:$0xf]
  %v2790 = vld [vmem:[%s7 + $0xc0] sm:$0xf]
  %v2791 = vld [vmem:[%s7 + $0xc4] sm:$0xf]
  %v2792 = vld [vmem:[%s7 + $0xc8] sm:$0xf]
  %v2793 = vld [vmem:[%s7 + $0xcc] sm:$0xf]
  %v2794 = vld [vmem:[%s7 + $0xd0] sm:$0xf]
  %v2795 = vld [vmem:[%s7 + $0xd4] sm:$0xf]
  %v2796 = vld [vmem:[%s7 + $0xd8] sm:$0xf]
  %v2797 = vld [vmem:[%s7 + $0xdc] sm:$0xf]
  %v2798 = vld [vmem:[%s7 + $0xe0] sm:$0xf]
  %v2799 = vld [vmem:[%s7 + $0xe4] sm:$0xf]
  %v2800 = vld [vmem:[%s7 + $0xe8] sm:$0xf]
  %v2801 = vld [vmem:[%s7 + $0xec] sm:$0xf]
  %v2802 = vld [vmem:[%s7 + $0xf0] sm:$0xf]
  %v2803 = vld [vmem:[%s7 + $0xf4] sm:$0xf]
  %v2804 = vld [vmem:[%s7 + $0xf8] sm:$0xf]
  %v2805 = vld [vmem:[%s7 + $0xfc] sm:$0xf]
  %v2806 = vld [vmem:[%s7 + $0x100] sm:$0xf]
  %v2807 = vld [vmem:[%s7 + $0x104] sm:$0xf]
  %v2808 = vld [vmem:[%s7 + $0x108] sm:$0xf]
  %v2809 = vld [vmem:[%s7 + $0x10c] sm:$0xf]
  %v2810 = vld [vmem:[%s7 + $0x110] sm:$0xf]
  %v2811 = vld [vmem:[%s7 + $0x114] sm:$0xf]
  %v2812 = vld [vmem:[%s7 + $0x118] sm:$0xf]
  %v2813 = vld [vmem:[%s7 + $0x11c] sm:$0xf]
  %v2814 = vld [vmem:[%s7 + $0x120] sm:$0xf]
  %v2815 = vld [vmem:[%s7 + $0x124] sm:$0xf]
  %v2816 = vld [vmem:[%s7 + $0x128] sm:$0xf]
  %v2817 = vld [vmem:[%s7 + $0x12c] sm:$0xf]
  %v2818 = vld [vmem:[%s7 + $0x130] sm:$0xf]
  %v2819 = vld [vmem:[%s7 + $0x134] sm:$0xf]
  %v2820 = vld [vmem:[%s7 + $0x138] sm:$0xf]
  %v2821 = vld [vmem:[%s7 + $0x13c] sm:$0xf]
  %v2822 = vld [vmem:[%s7 + $0x140] sm:$0xf]
  %v2823 = vld [vmem:[%s7 + $0x144] sm:$0xf]
  %v2824 = vld [vmem:[%s7 + $0x148] sm:$0xf]
  %v2825 = vld [vmem:[%s7 + $0x14c] sm:$0xf]
  %v2826 = vld [vmem:[%s7 + $0x150] sm:$0xf]
  %v2827 = vld [vmem:[%s7 + $0x154] sm:$0xf]
  %v2828 = vld [vmem:[%s7 + $0x158] sm:$0xf]
  %v2829 = vld [vmem:[%s7 + $0x15c] sm:$0xf]
  %v2830 = vld [vmem:[%s7 + $0x160] sm:$0xf]
  %v2831 = vld [vmem:[%s7 + $0x164] sm:$0xf]
  %v2832 = vld [vmem:[%s7 + $0x168] sm:$0xf]
  %v2833 = vld [vmem:[%s7 + $0x16c] sm:$0xf]
  %v2834 = vld [vmem:[%s7 + $0x170] sm:$0xf]
  %v2835 = vld [vmem:[%s7 + $0x174] sm:$0xf]
  %v2836 = vld [vmem:[%s7 + $0x178] sm:$0xf]
  %v2837 = vld [vmem:[%s7 + $0x17c] sm:$0xf]
  %v2838 = vld [vmem:[%s7 + $0x180] sm:$0xf]
  %v2839 = vld [vmem:[%s7 + $0x184] sm:$0xf]
  %v2840 = vld [vmem:[%s7 + $0x188] sm:$0xf]
  %v2841 = vld [vmem:[%s7 + $0x18c] sm:$0xf]
  %v2842 = vld [vmem:[%s7 + $0x190] sm:$0xf]
  %v2843 = vld [vmem:[%s7 + $0x194] sm:$0xf]
  %v2844 = vld [vmem:[%s7 + $0x198] sm:$0xf]
  %v2845 = vld [vmem:[%s7 + $0x19c] sm:$0xf]
  %v2846 = vld [vmem:[%s7 + $0x1a0] sm:$0xf]
  %v2847 = vld [vmem:[%s7 + $0x1a4] sm:$0xf]
  %v2848 = vld [vmem:[%s7 + $0x1a8] sm:$0xf]
  %v2849 = vld [vmem:[%s7 + $0x1ac] sm:$0xf]
  %v2850 = vld [vmem:[%s7 + $0x1b0] sm:$0xf]
  %v2851 = vld [vmem:[%s7 + $0x1b4] sm:$0xf]
  %v2852 = vld [vmem:[%s7 + $0x1b8] sm:$0xf]
  %v2853 = vld [vmem:[%s7 + $0x1bc] sm:$0xf]
  %v2854 = vld [vmem:[%s7 + $0x1c0] sm:$0xf]
  %v2855 = vld [vmem:[%s7 + $0x1c4] sm:$0xf]
  %v2856 = vld [vmem:[%s7 + $0x1c8] sm:$0xf]
  %v2857 = vld [vmem:[%s7 + $0x1cc] sm:$0xf]
  %v2858 = vld [vmem:[%s7 + $0x1d0] sm:$0xf]
  %v2859 = vld [vmem:[%s7 + $0x1d4] sm:$0xf]
  %v2860 = vld [vmem:[%s7 + $0x1d8] sm:$0xf]
  %v2861 = vld [vmem:[%s7 + $0x1dc] sm:$0xf]
  %v2862 = vld [vmem:[%s7 + $0x1e0] sm:$0xf]
  %v2863 = vld [vmem:[%s7 + $0x1e4] sm:$0xf]
  %v2864 = vld [vmem:[%s7 + $0x1e8] sm:$0xf]
  %v2865 = vld [vmem:[%s7 + $0x1ec] sm:$0xf]
  %v2866 = vld [vmem:[%s7 + $0x1f0] sm:$0xf]
  %v2867 = vld [vmem:[%s7 + $0x1f4] sm:$0xf]
  %v2868 = vld [vmem:[%s7 + $0x1f8] sm:$0xf]
  %v2869 = vld [vmem:[%s7 + $0x1fc] sm:$0xf]
  %v2870 = vld [vmem:[%s7 + $0x200] sm:$0xf]
  %v2871 = vld [vmem:[%s7 + $0x204] sm:$0xf]
  %v2872 = vld [vmem:[%s7 + $0x208] sm:$0xf]
  %v2873 = vld [vmem:[%s7 + $0x20c] sm:$0xf]
  %v2874 = vld [vmem:[%s7 + $0x210] sm:$0xf]
  %v2875 = vld [vmem:[%s7 + $0x214] sm:$0xf]
  %v2876 = vld [vmem:[%s7 + $0x218] sm:$0xf]
  %v2877 = vld [vmem:[%s7 + $0x21c] sm:$0xf]
  %v2878 = vld [vmem:[%s7 + $0x220] sm:$0xf]
  %v2879 = vld [vmem:[%s7 + $0x224] sm:$0xf]
  %v2880 = vld [vmem:[%s7 + $0x228] sm:$0xf]
  %v2881 = vld [vmem:[%s7 + $0x22c] sm:$0xf]
  %v2882 = vld [vmem:[%s7 + $0x230] sm:$0xf]
  %v2883 = vld [vmem:[%s7 + $0x234] sm:$0xf]
  %v2884 = vld [vmem:[%s7 + $0x238] sm:$0xf]
  %v2885 = vld [vmem:[%s7 + $0x23c] sm:$0xf]
  %v2886 = vld [vmem:[%s7 + $0x240] sm:$0xf]
  %v2887 = vld [vmem:[%s7 + $0x244] sm:$0xf]
  %v2888 = vld [vmem:[%s7 + $0x248] sm:$0xf]
  %v2889 = vld [vmem:[%s7 + $0x24c] sm:$0xf]
  %v2890 = vld [vmem:[%s7 + $0x250] sm:$0xf]
  %v2891 = vld [vmem:[%s7 + $0x254] sm:$0xf]
  %v2892 = vld [vmem:[%s7 + $0x258] sm:$0xf]
  %v2893 = vld [vmem:[%s7 + $0x25c] sm:$0xf]
  %v2894 = vld [vmem:[%s7 + $0x260] sm:$0xf]
  %v2895 = vld [vmem:[%s7 + $0x264] sm:$0xf]
  %v2896 = vld [vmem:[%s7 + $0x268] sm:$0xf]
  %v2897 = vld [vmem:[%s7 + $0x26c] sm:$0xf]
  %v2898 = vld [vmem:[%s7 + $0x270] sm:$0xf]
  %v2899 = vld [vmem:[%s7 + $0x274] sm:$0xf]
  %v2900 = vld [vmem:[%s7 + $0x278] sm:$0xf]
  %v2901 = vld [vmem:[%s7 + $0x27c] sm:$0xf]
  %v2902 = vld [vmem:[%s7 + $0x280] sm:$0xf]
  %v2903 = vld [vmem:[%s7 + $0x284] sm:$0xf]
  %v2904 = vld [vmem:[%s7 + $0x288] sm:$0xf]
  %v2905 = vld [vmem:[%s7 + $0x28c] sm:$0xf]
  %v2906 = vld [vmem:[%s7 + $0x290] sm:$0xf]
  %v2907 = vld [vmem:[%s7 + $0x294] sm:$0xf]
  %v2908 = vld [vmem:[%s7 + $0x298] sm:$0xf]
  %v2909 = vld [vmem:[%s7 + $0x29c] sm:$0xf]
  %v2910 = vld [vmem:[%s7 + $0x2a0] sm:$0xf]
  %v2911 = vld [vmem:[%s7 + $0x2a4] sm:$0xf]
  %v2912 = vld [vmem:[%s7 + $0x2a8] sm:$0xf]
  %v2913 = vld [vmem:[%s7 + $0x2ac] sm:$0xf]
  %v2914 = vld [vmem:[%s7 + $0x2b0] sm:$0xf]
  %v2915 = vld [vmem:[%s7 + $0x2b4] sm:$0xf]
  %v2916 = vld [vmem:[%s7 + $0x2b8] sm:$0xf]
  %v2917 = vld [vmem:[%s7 + $0x2bc] sm:$0xf]
  %v2918 = vld [vmem:[%s7 + $0x2c0] sm:$0xf]
  %v2919 = vld [vmem:[%s7 + $0x2c4] sm:$0xf]
  %v2920 = vld [vmem:[%s7 + $0x2c8] sm:$0xf]
  %v2921 = vld [vmem:[%s7 + $0x2cc] sm:$0xf]
  %v2922 = vld [vmem:[%s7 + $0x2d0] sm:$0xf]
  %v2923 = vld [vmem:[%s7 + $0x2d4] sm:$0xf]
  %v2924 = vld [vmem:[%s7 + $0x2d8] sm:$0xf]
  %v2925 = vld [vmem:[%s7 + $0x2dc] sm:$0xf]
  %v2926 = vld [vmem:[%s7 + $0x2e0] sm:$0xf]
  %v2927 = vld [vmem:[%s7 + $0x2e4] sm:$0xf]
  %v2928 = vld [vmem:[%s7 + $0x2e8] sm:$0xf]
  %v2929 = vld [vmem:[%s7 + $0x2ec] sm:$0xf]
  %v2930 = vld [vmem:[%s7 + $0x2f0] sm:$0xf]
  %v2931 = vld [vmem:[%s7 + $0x2f4] sm:$0xf]
  %v2932 = vld [vmem:[%s7 + $0x2f8] sm:$0xf]
  %v2933 = vld [vmem:[%s7 + $0x2fc] sm:$0xf]
  %v2934 = vld [vmem:[%s7 + $0x300] sm:$0xf]
  %v2935 = vld [vmem:[%s7 + $0x304] sm:$0xf]
  %v2936 = vld [vmem:[%s7 + $0x308] sm:$0xf]
  %v2937 = vld [vmem:[%s7 + $0x30c] sm:$0xf]
  %v2938 = vld [vmem:[%s8] sm:$0xff]
  %v2939 = vld [vmem:[%s8 + $0x8] sm:$0xff]
  %v2940 = vld [vmem:[%s8 + $0x10] sm:$0xff]
  %v2941 = vld [vmem:[%s8 + $0x18] sm:$0xff]
  %v2942 = vld [vmem:[%s8 + $0x20] sm:$0xff]
  %v2943 = vld [vmem:[%s8 + $0x28] sm:$0xff]
  %v2944 = vld [vmem:[%s8 + $0x30] sm:$0xff]
  %v2945 = vld [vmem:[%s8 + $0x38] sm:$0xff]
  %v2946 = vld [vmem:[%s8 + $0x40] sm:$0xff]
  %v2947 = vld [vmem:[%s8 + $0x48] sm:$0xff]
  %v2948 = vld [vmem:[%s8 + $0x50] sm:$0xff]
  %v2949 = vld [vmem:[%s8 + $0x58] sm:$0xff]
  %v2950 = vld [vmem:[%s8 + $0x60] sm:$0xff]
  %v2951 = vld [vmem:[%s8 + $0x68] sm:$0xff]
  %v2952 = vld [vmem:[%s8 + $0x70] sm:$0xff]
  %v2953 = vld [vmem:[%s8 + $0x78] sm:$0xff]
  %v2954 = vld [vmem:[%s8 + $0x80] sm:$0xff]
  %v2955 = vld [vmem:[%s8 + $0x88] sm:$0xff]
  %v2956 = vld [vmem:[%s8 + $0x90] sm:$0xff]
  %v2957 = vld [vmem:[%s8 + $0x98] sm:$0xff]
  %v2958 = vld [vmem:[%s8 + $0xa0] sm:$0xff]
  %v2959 = vld [vmem:[%s8 + $0xa8] sm:$0xff]
  %v2960 = vld [vmem:[%s8 + $0xb0] sm:$0xff]
  %v2961 = vld [vmem:[%s8 + $0xb8] sm:$0xff]
  %v2962 = vld [vmem:[%s8 + $0xc0] sm:$0xff]
  %v2963 = vld [vmem:[%s8 + $0xc8] sm:$0xff]
  %v2964 = vld [vmem:[%s8 + $0xd0] sm:$0xff]
  %v2965 = vld [vmem:[%s8 + $0xd8] sm:$0xff]
  %v2966 = vld [vmem:[%s8 + $0xe0] sm:$0xff]
  %v2967 = vld [vmem:[%s8 + $0xe8] sm:$0xff]
  %v2968 = vld [vmem:[%s8 + $0xf0] sm:$0xff]
  %v2969 = vld [vmem:[%s8 + $0xf8] sm:$0xff]
  %v2970 = vld [vmem:[%s8 + $0x100] sm:$0xff]
  %v2971 = vld [vmem:[%s8 + $0x108] sm:$0xff]
  %v2972 = vld [vmem:[%s8 + $0x110] sm:$0xff]
  %v2973 = vld [vmem:[%s8 + $0x118] sm:$0xff]
  %v2974 = vld [vmem:[%s8 + $0x120] sm:$0xff]
  %v2975 = vld [vmem:[%s8 + $0x128] sm:$0xff]
  %v2976 = vld [vmem:[%s8 + $0x130] sm:$0xff]
  %v2977 = vld [vmem:[%s8 + $0x138] sm:$0xff]
  %v2978 = vld [vmem:[%s8 + $0x140] sm:$0xff]
  %v2979 = vld [vmem:[%s8 + $0x148] sm:$0xff]
  %v2980 = vld [vmem:[%s8 + $0x150] sm:$0xff]
  %v2981 = vld [vmem:[%s8 + $0x158] sm:$0xff]
  %v2982 = vld [vmem:[%s8 + $0x160] sm:$0xff]
  %v2983 = vld [vmem:[%s8 + $0x168] sm:$0xff]
  %v2984 = vld [vmem:[%s8 + $0x170] sm:$0xff]
  %v2985 = vld [vmem:[%s8 + $0x178] sm:$0xff]
  %v2986 = vld [vmem:[%s8 + $0x180] sm:$0xff]
  %v2987 = vld [vmem:[%s8 + $0x188] sm:$0xff]
  %v2988 = vld [vmem:[%s8 + $0x190] sm:$0xff]
  %v2989 = vld [vmem:[%s8 + $0x198] sm:$0xff]
  %v2990 = vld [vmem:[%s8 + $0x1a0] sm:$0xff]
  %v2991 = vld [vmem:[%s8 + $0x1a8] sm:$0xff]
  %v2992 = vld [vmem:[%s8 + $0x1b0] sm:$0xff]
  %v2993 = vld [vmem:[%s8 + $0x1b8] sm:$0xff]
  %v2994 = vld [vmem:[%s8 + $0x1c0] sm:$0xff]
  %v2995 = vld [vmem:[%s8 + $0x1c8] sm:$0xff]
  %v2996 = vld [vmem:[%s8 + $0x1d0] sm:$0xff]
  %v2997 = vld [vmem:[%s8 + $0x1d8] sm:$0xff]
  %v2998 = vld [vmem:[%s8 + $0x1e0] sm:$0xff]
  %v2999 = vld [vmem:[%s8 + $0x1e8] sm:$0xff]
  %v3000 = vld [vmem:[%s8 + $0x1f0] sm:$0xff]
  %v3001 = vld [vmem:[%s8 + $0x1f8] sm:$0xff]
  %v3002 = vld [vmem:[%s8 + $0x200] sm:$0xff]
  %v3003 = vld [vmem:[%s8 + $0x208] sm:$0xff]
  %v3004 = vld [vmem:[%s8 + $0x210] sm:$0xff]
  %v3005 = vld [vmem:[%s8 + $0x218] sm:$0xff]
  %v3006 = vld [vmem:[%s8 + $0x220] sm:$0xff]
  %v3007 = vld [vmem:[%s8 + $0x228] sm:$0xff]
  %v3008 = vld [vmem:[%s8 + $0x230] sm:$0xff]
  %v3009 = vld [vmem:[%s8 + $0x238] sm:$0xff]
  %v3010 = vld [vmem:[%s8 + $0x240] sm:$0xff]
  %v3011 = vld [vmem:[%s8 + $0x248] sm:$0xff]
  %v3012 = vld [vmem:[%s8 + $0x250] sm:$0xff]
  %v3013 = vld [vmem:[%s8 + $0x258] sm:$0xff]
  %v3014 = vld [vmem:[%s8 + $0x260] sm:$0xff]
  %v3015 = vld [vmem:[%s8 + $0x268] sm:$0xff]
  %v3016 = vld [vmem:[%s8 + $0x270] sm:$0xff]
  %v3017 = vld [vmem:[%s8 + $0x278] sm:$0xff]
  %v3018 = vld [vmem:[%s8 + $0x280] sm:$0xff]
  %v3019 = vld [vmem:[%s8 + $0x288] sm:$0xff]
  %v3020 = vld [vmem:[%s8 + $0x290] sm:$0xff]
  %v3021 = vld [vmem:[%s8 + $0x298] sm:$0xff]
  %v3022 = vld [vmem:[%s8 + $0x2a0] sm:$0xff]
  %v3023 = vld [vmem:[%s8 + $0x2a8] sm:$0xff]
  %v3024 = vld [vmem:[%s8 + $0x2b0] sm:$0xff]
  %v3025 = vld [vmem:[%s8 + $0x2b8] sm:$0xff]
  %v3026 = vld [vmem:[%s8 + $0x2c0] sm:$0xff]
  %v3027 = vld [vmem:[%s8 + $0x2c8] sm:$0xff]
  %v3028 = vld [vmem:[%s8 + $0x2d0] sm:$0xff]
  %v3029 = vld [vmem:[%s8 + $0x2d8] sm:$0xff]
  %v3030 = vld [vmem:[%s8 + $0x2e0] sm:$0xff]
  %v3031 = vld [vmem:[%s8 + $0x2e8] sm:$0xff]
  %v3032 = vld [vmem:[%s8 + $0x2f0] sm:$0xff]
  %v3033 = vld [vmem:[%s8 + $0x2f8] sm:$0xff]
  %v3034 = vld [vmem:[%s8 + $0x300] sm:$0xff]
  %v3035 = vld [vmem:[%s8 + $0x308] sm:$0xff]
  %v3036 = vld [vmem:[%s8 + $0x310] sm:$0xff]
  %v3037 = vld [vmem:[%s8 + $0x318] sm:$0xff]
  %v3038 = vld [vmem:[%s8 + $0x320] sm:$0xff]
  %v3039 = vld [vmem:[%s8 + $0x328] sm:$0xff]
  %v3040 = vld [vmem:[%s8 + $0x330] sm:$0xff]
  %v3041 = vld [vmem:[%s8 + $0x338] sm:$0xff]
  %v3042 = vld [vmem:[%s8 + $0x340] sm:$0xff]
  %v3043 = vld [vmem:[%s8 + $0x348] sm:$0xff]
  %v3044 = vld [vmem:[%s8 + $0x350] sm:$0xff]
  %v3045 = vld [vmem:[%s8 + $0x358] sm:$0xff]
  %v3046 = vld [vmem:[%s8 + $0x360] sm:$0xff]
  %v3047 = vld [vmem:[%s8 + $0x368] sm:$0xff]
  %v3048 = vld [vmem:[%s8 + $0x370] sm:$0xff]
  %v3049 = vld [vmem:[%s8 + $0x378] sm:$0xff]
  %v3050 = vld [vmem:[%s8 + $0x380] sm:$0xff]
  %v3051 = vld [vmem:[%s8 + $0x388] sm:$0xff]
  %v3052 = vld [vmem:[%s8 + $0x390] sm:$0xff]
  %v3053 = vld [vmem:[%s8 + $0x398] sm:$0xff]
  %v3054 = vld [vmem:[%s8 + $0x3a0] sm:$0xff]
  %v3055 = vld [vmem:[%s8 + $0x3a8] sm:$0xff]
  %v3056 = vld [vmem:[%s8 + $0x3b0] sm:$0xff]
  %v3057 = vld [vmem:[%s8 + $0x3b8] sm:$0xff]
  %v3058 = vld [vmem:[%s8 + $0x3c0] sm:$0xff]
  %v3059 = vld [vmem:[%s8 + $0x3c8] sm:$0xff]
  %v3060 = vld [vmem:[%s8 + $0x3d0] sm:$0xff]
  %v3061 = vld [vmem:[%s8 + $0x3d8] sm:$0xff]
  %v3062 = vld [vmem:[%s8 + $0x3e0] sm:$0xff]
  %v3063 = vld [vmem:[%s8 + $0x3e8] sm:$0xff]
  %v3064 = vld [vmem:[%s8 + $0x3f0] sm:$0xff]
  %v3065 = vld [vmem:[%s8 + $0x3f8] sm:$0xff]
  %v3066 = vld [vmem:[%s8 + $0x400] sm:$0xff]
  %v3067 = vld [vmem:[%s8 + $0x408] sm:$0xff]
  %v3068 = vld [vmem:[%s8 + $0x410] sm:$0xff]
  %v3069 = vld [vmem:[%s8 + $0x418] sm:$0xff]
  %v3070 = vld [vmem:[%s8 + $0x420] sm:$0xff]
  %v3071 = vld [vmem:[%s8 + $0x428] sm:$0xff]
  %v3072 = vld [vmem:[%s8 + $0x430] sm:$0xff]
  %v3073 = vld [vmem:[%s8 + $0x438] sm:$0xff]
  %v3074 = vld [vmem:[%s8 + $0x440] sm:$0xff]
  %v3075 = vld [vmem:[%s8 + $0x448] sm:$0xff]
  %v3076 = vld [vmem:[%s8 + $0x450] sm:$0xff]
  %v3077 = vld [vmem:[%s8 + $0x458] sm:$0xff]
  %v3078 = vld [vmem:[%s8 + $0x460] sm:$0xff]
  %v3079 = vld [vmem:[%s8 + $0x468] sm:$0xff]
  %v3080 = vld [vmem:[%s8 + $0x470] sm:$0xff]
  %v3081 = vld [vmem:[%s8 + $0x478] sm:$0xff]
  %v3082 = vld [vmem:[%s8 + $0x480] sm:$0xff]
  %v3083 = vld [vmem:[%s8 + $0x488] sm:$0xff]
  %v3084 = vld [vmem:[%s8 + $0x490] sm:$0xff]
  %v3085 = vld [vmem:[%s8 + $0x498] sm:$0xff]
  %v3086 = vld [vmem:[%s8 + $0x4a0] sm:$0xff]
  %v3087 = vld [vmem:[%s8 + $0x4a8] sm:$0xff]
  %v3088 = vld [vmem:[%s8 + $0x4b0] sm:$0xff]
  %v3089 = vld [vmem:[%s8 + $0x4b8] sm:$0xff]
  %v3090 = vld [vmem:[%s8 + $0x4c0] sm:$0xff]
  %v3091 = vld [vmem:[%s8 + $0x4c8] sm:$0xff]
  %v3092 = vld [vmem:[%s8 + $0x4d0] sm:$0xff]
  %v3093 = vld [vmem:[%s8 + $0x4d8] sm:$0xff]
  %v3094 = vld [vmem:[%s8 + $0x4e0] sm:$0xff]
  %v3095 = vld [vmem:[%s8 + $0x4e8] sm:$0xff]
  %v3096 = vld [vmem:[%s8 + $0x4f0] sm:$0xff]
  %v3097 = vld [vmem:[%s8 + $0x4f8] sm:$0xff]
  %v3098 = vld [vmem:[%s8 + $0x500] sm:$0xff]
  %v3099 = vld [vmem:[%s8 + $0x508] sm:$0xff]
  %v3100 = vld [vmem:[%s8 + $0x510] sm:$0xff]
  %v3101 = vld [vmem:[%s8 + $0x518] sm:$0xff]
  %v3102 = vld [vmem:[%s8 + $0x520] sm:$0xff]
  %v3103 = vld [vmem:[%s8 + $0x528] sm:$0xff]
  %v3104 = vld [vmem:[%s8 + $0x530] sm:$0xff]
  %v3105 = vld [vmem:[%s8 + $0x538] sm:$0xff]
  %v3106 = vld [vmem:[%s8 + $0x540] sm:$0xff]
  %v3107 = vld [vmem:[%s8 + $0x548] sm:$0xff]
  %v3108 = vld [vmem:[%s8 + $0x550] sm:$0xff]
  %v3109 = vld [vmem:[%s8 + $0x558] sm:$0xff]
  %v3110 = vld [vmem:[%s8 + $0x560] sm:$0xff]
  %v3111 = vld [vmem:[%s8 + $0x568] sm:$0xff]
  %v3112 = vld [vmem:[%s8 + $0x570] sm:$0xff]
  %v3113 = vld [vmem:[%s8 + $0x578] sm:$0xff]
  %v3114 = vld [vmem:[%s8 + $0x580] sm:$0xff]
  %v3115 = vld [vmem:[%s8 + $0x588] sm:$0xff]
  %v3116 = vld [vmem:[%s8 + $0x590] sm:$0xff]
  %v3117 = vld [vmem:[%s8 + $0x598] sm:$0xff]
  %v3118 = vld [vmem:[%s8 + $0x5a0] sm:$0xff]
  %v3119 = vld [vmem:[%s8 + $0x5a8] sm:$0xff]
  %v3120 = vld [vmem:[%s8 + $0x5b0] sm:$0xff]
  %v3121 = vld [vmem:[%s8 + $0x5b8] sm:$0xff]
  %v3122 = vld [vmem:[%s8 + $0x5c0] sm:$0xff]
  %v3123 = vld [vmem:[%s8 + $0x5c8] sm:$0xff]
  %v3124 = vld [vmem:[%s8 + $0x5d0] sm:$0xff]
  %v3125 = vld [vmem:[%s8 + $0x5d8] sm:$0xff]
  %v3126 = vld [vmem:[%s8 + $0x5e0] sm:$0xff]
  %v3127 = vld [vmem:[%s8 + $0x5e8] sm:$0xff]
  %v3128 = vld [vmem:[%s8 + $0x5f0] sm:$0xff]
  %v3129 = vld [vmem:[%s8 + $0x5f8] sm:$0xff]
  %v3130 = vld [vmem:[%s8 + $0x600] sm:$0xff]
  %v3131 = vld [vmem:[%s8 + $0x608] sm:$0xff]
  %v3132 = vld [vmem:[%s8 + $0x610] sm:$0xff]
  %v3133 = vld [vmem:[%s8 + $0x618] sm:$0xff]
  %3135 = vset.pattern.permute.xlu0 0
  %3136 = vperm.xlu0 %3135, %v2938
  %v3137 = vpop.permute.xlu0 %3136
  %3140 = vset.pattern.permute.xlu0 0
  %3141 = vperm.xlu0 %3140, %v2939
  %v3142 = vpop.permute.xlu0 %3141
  %3145 = vset.pattern.permute.xlu0 0
  %3146 = vperm.xlu0 %3145, %v2940
  %v3147 = vpop.permute.xlu0 %3146
  %3150 = vset.pattern.permute.xlu0 0
  %3151 = vperm.xlu0 %3150, %v2941
  %v3152 = vpop.permute.xlu0 %3151
  %3155 = vset.pattern.permute.xlu0 0
  %3156 = vperm.xlu0 %3155, %v2942
  %v3157 = vpop.permute.xlu0 %3156
  %3160 = vset.pattern.permute.xlu0 0
  %3161 = vperm.xlu0 %3160, %v2943
  %v3162 = vpop.permute.xlu0 %3161
  %3165 = vset.pattern.permute.xlu0 0
  %3166 = vperm.xlu0 %3165, %v2944
  %v3167 = vpop.permute.xlu0 %3166
  %3170 = vset.pattern.permute.xlu0 0
  %3171 = vperm.xlu0 %3170, %v2945
  %v3172 = vpop.permute.xlu0 %3171
  %3175 = vset.pattern.permute.xlu0 0
  %3176 = vperm.xlu0 %3175, %v2946
  %v3177 = vpop.permute.xlu0 %3176
  %3180 = vset.pattern.permute.xlu0 0
  %3181 = vperm.xlu0 %3180, %v2947
  %v3182 = vpop.permute.xlu0 %3181
  %3185 = vset.pattern.permute.xlu0 0
  %3186 = vperm.xlu0 %3185, %v2948
  %v3187 = vpop.permute.xlu0 %3186
  %3190 = vset.pattern.permute.xlu0 0
  %3191 = vperm.xlu0 %3190, %v2949
  %v3192 = vpop.permute.xlu0 %3191
  %3195 = vset.pattern.permute.xlu0 0
  %3196 = vperm.xlu0 %3195, %v2950
  %v3197 = vpop.permute.xlu0 %3196
  %3200 = vset.pattern.permute.xlu0 0
  %3201 = vperm.xlu0 %3200, %v2951
  %v3202 = vpop.permute.xlu0 %3201
  %3205 = vset.pattern.permute.xlu0 0
  %3206 = vperm.xlu0 %3205, %v2952
  %v3207 = vpop.permute.xlu0 %3206
  %3210 = vset.pattern.permute.xlu0 0
  %3211 = vperm.xlu0 %3210, %v2953
  %v3212 = vpop.permute.xlu0 %3211
  %3215 = vset.pattern.permute.xlu0 0
  %3216 = vperm.xlu0 %3215, %v2954
  %v3217 = vpop.permute.xlu0 %3216
  %3220 = vset.pattern.permute.xlu0 0
  %3221 = vperm.xlu0 %3220, %v2955
  %v3222 = vpop.permute.xlu0 %3221
  %3225 = vset.pattern.permute.xlu0 0
  %3226 = vperm.xlu0 %3225, %v2956
  %v3227 = vpop.permute.xlu0 %3226
  %3230 = vset.pattern.permute.xlu0 0
  %3231 = vperm.xlu0 %3230, %v2957
  %v3232 = vpop.permute.xlu0 %3231
  %3235 = vset.pattern.permute.xlu0 0
  %3236 = vperm.xlu0 %3235, %v2958
  %v3237 = vpop.permute.xlu0 %3236
  %3240 = vset.pattern.permute.xlu0 0
  %3241 = vperm.xlu0 %3240, %v2959
  %v3242 = vpop.permute.xlu0 %3241
  %3245 = vset.pattern.permute.xlu0 0
  %3246 = vperm.xlu0 %3245, %v2960
  %v3247 = vpop.permute.xlu0 %3246
  %3250 = vset.pattern.permute.xlu0 0
  %3251 = vperm.xlu0 %3250, %v2961
  %v3252 = vpop.permute.xlu0 %3251
  %3255 = vset.pattern.permute.xlu0 0
  %3256 = vperm.xlu0 %3255, %v2962
  %v3257 = vpop.permute.xlu0 %3256
  %3260 = vset.pattern.permute.xlu0 0
  %3261 = vperm.xlu0 %3260, %v2963
  %v3262 = vpop.permute.xlu0 %3261
  %3265 = vset.pattern.permute.xlu0 0
  %3266 = vperm.xlu0 %3265, %v2964
  %v3267 = vpop.permute.xlu0 %3266
  %3270 = vset.pattern.permute.xlu0 0
  %3271 = vperm.xlu0 %3270, %v2965
  %v3272 = vpop.permute.xlu0 %3271
  %3275 = vset.pattern.permute.xlu0 0
  %3276 = vperm.xlu0 %3275, %v2966
  %v3277 = vpop.permute.xlu0 %3276
  %3280 = vset.pattern.permute.xlu0 0
  %3281 = vperm.xlu0 %3280, %v2967
  %v3282 = vpop.permute.xlu0 %3281
  %3285 = vset.pattern.permute.xlu0 0
  %3286 = vperm.xlu0 %3285, %v2968
  %v3287 = vpop.permute.xlu0 %3286
  %3290 = vset.pattern.permute.xlu0 0
  %3291 = vperm.xlu0 %3290, %v2969
  %v3292 = vpop.permute.xlu0 %3291
  %3295 = vset.pattern.permute.xlu0 0
  %3296 = vperm.xlu0 %3295, %v2970
  %v3297 = vpop.permute.xlu0 %3296
  %3300 = vset.pattern.permute.xlu0 0
  %3301 = vperm.xlu0 %3300, %v2971
  %v3302 = vpop.permute.xlu0 %3301
  %3305 = vset.pattern.permute.xlu0 0
  %3306 = vperm.xlu0 %3305, %v2972
  %v3307 = vpop.permute.xlu0 %3306
  %3310 = vset.pattern.permute.xlu0 0
  %3311 = vperm.xlu0 %3310, %v2973
  %v3312 = vpop.permute.xlu0 %3311
  %3315 = vset.pattern.permute.xlu0 0
  %3316 = vperm.xlu0 %3315, %v2974
  %v3317 = vpop.permute.xlu0 %3316
  %3320 = vset.pattern.permute.xlu0 0
  %3321 = vperm.xlu0 %3320, %v2975
  %v3322 = vpop.permute.xlu0 %3321
  %3325 = vset.pattern.permute.xlu0 0
  %3326 = vperm.xlu0 %3325, %v2976
  %v3327 = vpop.permute.xlu0 %3326
  %3330 = vset.pattern.permute.xlu0 0
  %3331 = vperm.xlu0 %3330, %v2977
  %v3332 = vpop.permute.xlu0 %3331
  %3335 = vset.pattern.permute.xlu0 0
  %3336 = vperm.xlu0 %3335, %v2978
  %v3337 = vpop.permute.xlu0 %3336
  %3340 = vset.pattern.permute.xlu0 0
  %3341 = vperm.xlu0 %3340, %v2979
  %v3342 = vpop.permute.xlu0 %3341
  %3345 = vset.pattern.permute.xlu0 0
  %3346 = vperm.xlu0 %3345, %v2980
  %v3347 = vpop.permute.xlu0 %3346
  %3350 = vset.pattern.permute.xlu0 0
  %3351 = vperm.xlu0 %3350, %v2981
  %v3352 = vpop.permute.xlu0 %3351
  %3355 = vset.pattern.permute.xlu0 0
  %3356 = vperm.xlu0 %3355, %v2982
  %v3357 = vpop.permute.xlu0 %3356
  %3360 = vset.pattern.permute.xlu0 0
  %3361 = vperm.xlu0 %3360, %v2983
  %v3362 = vpop.permute.xlu0 %3361
  %3365 = vset.pattern.permute.xlu0 0
  %3366 = vperm.xlu0 %3365, %v2984
  %v3367 = vpop.permute.xlu0 %3366
  %3370 = vset.pattern.permute.xlu0 0
  %3371 = vperm.xlu0 %3370, %v2985
  %v3372 = vpop.permute.xlu0 %3371
  %3375 = vset.pattern.permute.xlu0 0
  %3376 = vperm.xlu0 %3375, %v2986
  %v3377 = vpop.permute.xlu0 %3376
  %3380 = vset.pattern.permute.xlu0 0
  %3381 = vperm.xlu0 %3380, %v2987
  %v3382 = vpop.permute.xlu0 %3381
  %3385 = vset.pattern.permute.xlu0 0
  %3386 = vperm.xlu0 %3385, %v2988
  %v3387 = vpop.permute.xlu0 %3386
  %3390 = vset.pattern.permute.xlu0 0
  %3391 = vperm.xlu0 %3390, %v2989
  %v3392 = vpop.permute.xlu0 %3391
  %3395 = vset.pattern.permute.xlu0 0
  %3396 = vperm.xlu0 %3395, %v2990
  %v3397 = vpop.permute.xlu0 %3396
  %3400 = vset.pattern.permute.xlu0 0
  %3401 = vperm.xlu0 %3400, %v2991
  %v3402 = vpop.permute.xlu0 %3401
  %3405 = vset.pattern.permute.xlu0 0
  %3406 = vperm.xlu0 %3405, %v2992
  %v3407 = vpop.permute.xlu0 %3406
  %3410 = vset.pattern.permute.xlu0 0
  %3411 = vperm.xlu0 %3410, %v2993
  %v3412 = vpop.permute.xlu0 %3411
  %3415 = vset.pattern.permute.xlu0 0
  %3416 = vperm.xlu0 %3415, %v2994
  %v3417 = vpop.permute.xlu0 %3416
  %3420 = vset.pattern.permute.xlu0 0
  %3421 = vperm.xlu0 %3420, %v2995
  %v3422 = vpop.permute.xlu0 %3421
  %3425 = vset.pattern.permute.xlu0 0
  %3426 = vperm.xlu0 %3425, %v2996
  %v3427 = vpop.permute.xlu0 %3426
  %3430 = vset.pattern.permute.xlu0 0
  %3431 = vperm.xlu0 %3430, %v2997
  %v3432 = vpop.permute.xlu0 %3431
  %3435 = vset.pattern.permute.xlu0 0
  %3436 = vperm.xlu0 %3435, %v2998
  %v3437 = vpop.permute.xlu0 %3436
  %3440 = vset.pattern.permute.xlu0 0
  %3441 = vperm.xlu0 %3440, %v2999
  %v3442 = vpop.permute.xlu0 %3441
  %3445 = vset.pattern.permute.xlu0 0
  %3446 = vperm.xlu0 %3445, %v3000
  %v3447 = vpop.permute.xlu0 %3446
  %3450 = vset.pattern.permute.xlu0 0
  %3451 = vperm.xlu0 %3450, %v3001
  %v3452 = vpop.permute.xlu0 %3451
  %3455 = vset.pattern.permute.xlu0 0
  %3456 = vperm.xlu0 %3455, %v3002
  %v3457 = vpop.permute.xlu0 %3456
  %3460 = vset.pattern.permute.xlu0 0
  %3461 = vperm.xlu0 %3460, %v3003
  %v3462 = vpop.permute.xlu0 %3461
  %3465 = vset.pattern.permute.xlu0 0
  %3466 = vperm.xlu0 %3465, %v3004
  %v3467 = vpop.permute.xlu0 %3466
  %3470 = vset.pattern.permute.xlu0 0
  %3471 = vperm.xlu0 %3470, %v3005
  %v3472 = vpop.permute.xlu0 %3471
  %3475 = vset.pattern.permute.xlu0 0
  %3476 = vperm.xlu0 %3475, %v3006
  %v3477 = vpop.permute.xlu0 %3476
  %3480 = vset.pattern.permute.xlu0 0
  %3481 = vperm.xlu0 %3480, %v3007
  %v3482 = vpop.permute.xlu0 %3481
  %3485 = vset.pattern.permute.xlu0 0
  %3486 = vperm.xlu0 %3485, %v3008
  %v3487 = vpop.permute.xlu0 %3486
  %3490 = vset.pattern.permute.xlu0 0
  %3491 = vperm.xlu0 %3490, %v3009
  %v3492 = vpop.permute.xlu0 %3491
  %3495 = vset.pattern.permute.xlu0 0
  %3496 = vperm.xlu0 %3495, %v3010
  %v3497 = vpop.permute.xlu0 %3496
  %3500 = vset.pattern.permute.xlu0 0
  %3501 = vperm.xlu0 %3500, %v3011
  %v3502 = vpop.permute.xlu0 %3501
  %3505 = vset.pattern.permute.xlu0 0
  %3506 = vperm.xlu0 %3505, %v3012
  %v3507 = vpop.permute.xlu0 %3506
  %3510 = vset.pattern.permute.xlu0 0
  %3511 = vperm.xlu0 %3510, %v3013
  %v3512 = vpop.permute.xlu0 %3511
  %3515 = vset.pattern.permute.xlu0 0
  %3516 = vperm.xlu0 %3515, %v3014
  %v3517 = vpop.permute.xlu0 %3516
  %3520 = vset.pattern.permute.xlu0 0
  %3521 = vperm.xlu0 %3520, %v3015
  %v3522 = vpop.permute.xlu0 %3521
  %3525 = vset.pattern.permute.xlu0 0
  %3526 = vperm.xlu0 %3525, %v3016
  %v3527 = vpop.permute.xlu0 %3526
  %3530 = vset.pattern.permute.xlu0 0
  %3531 = vperm.xlu0 %3530, %v3017
  %v3532 = vpop.permute.xlu0 %3531
  %3535 = vset.pattern.permute.xlu0 0
  %3536 = vperm.xlu0 %3535, %v3018
  %v3537 = vpop.permute.xlu0 %3536
  %3540 = vset.pattern.permute.xlu0 0
  %3541 = vperm.xlu0 %3540, %v3019
  %v3542 = vpop.permute.xlu0 %3541
  %3545 = vset.pattern.permute.xlu0 0
  %3546 = vperm.xlu0 %3545, %v3020
  %v3547 = vpop.permute.xlu0 %3546
  %3550 = vset.pattern.permute.xlu0 0
  %3551 = vperm.xlu0 %3550, %v3021
  %v3552 = vpop.permute.xlu0 %3551
  %3555 = vset.pattern.permute.xlu0 0
  %3556 = vperm.xlu0 %3555, %v3022
  %v3557 = vpop.permute.xlu0 %3556
  %3560 = vset.pattern.permute.xlu0 0
  %3561 = vperm.xlu0 %3560, %v3023
  %v3562 = vpop.permute.xlu0 %3561
  %3565 = vset.pattern.permute.xlu0 0
  %3566 = vperm.xlu0 %3565, %v3024
  %v3567 = vpop.permute.xlu0 %3566
  %3570 = vset.pattern.permute.xlu0 0
  %3571 = vperm.xlu0 %3570, %v3025
  %v3572 = vpop.permute.xlu0 %3571
  %3575 = vset.pattern.permute.xlu0 0
  %3576 = vperm.xlu0 %3575, %v3026
  %v3577 = vpop.permute.xlu0 %3576
  %3580 = vset.pattern.permute.xlu0 0
  %3581 = vperm.xlu0 %3580, %v3027
  %v3582 = vpop.permute.xlu0 %3581
  %3585 = vset.pattern.permute.xlu0 0
  %3586 = vperm.xlu0 %3585, %v3028
  %v3587 = vpop.permute.xlu0 %3586
  %3590 = vset.pattern.permute.xlu0 0
  %3591 = vperm.xlu0 %3590, %v3029
  %v3592 = vpop.permute.xlu0 %3591
  %3595 = vset.pattern.permute.xlu0 0
  %3596 = vperm.xlu0 %3595, %v3030
  %v3597 = vpop.permute.xlu0 %3596
  %3600 = vset.pattern.permute.xlu0 0
  %3601 = vperm.xlu0 %3600, %v3031
  %v3602 = vpop.permute.xlu0 %3601
  %3605 = vset.pattern.permute.xlu0 0
  %3606 = vperm.xlu0 %3605, %v3032
  %v3607 = vpop.permute.xlu0 %3606
  %3610 = vset.pattern.permute.xlu0 0
  %3611 = vperm.xlu0 %3610, %v3033
  %v3612 = vpop.permute.xlu0 %3611
  %3615 = vset.pattern.permute.xlu0 0
  %3616 = vperm.xlu0 %3615, %v3034
  %v3617 = vpop.permute.xlu0 %3616
  %3620 = vset.pattern.permute.xlu0 0
  %3621 = vperm.xlu0 %3620, %v3035
  %v3622 = vpop.permute.xlu0 %3621
  %3625 = vset.pattern.permute.xlu0 0
  %3626 = vperm.xlu0 %3625, %v3036
  %v3627 = vpop.permute.xlu0 %3626
  %3630 = vset.pattern.permute.xlu0 0
  %3631 = vperm.xlu0 %3630, %v3037
  %v3632 = vpop.permute.xlu0 %3631
  %3635 = vset.pattern.permute.xlu0 0
  %3636 = vperm.xlu0 %3635, %v3038
  %v3637 = vpop.permute.xlu0 %3636
  %3640 = vset.pattern.permute.xlu0 0
  %3641 = vperm.xlu0 %3640, %v3039
  %v3642 = vpop.permute.xlu0 %3641
  %3645 = vset.pattern.permute.xlu0 0
  %3646 = vperm.xlu0 %3645, %v3040
  %v3647 = vpop.permute.xlu0 %3646
  %3650 = vset.pattern.permute.xlu0 0
  %3651 = vperm.xlu0 %3650, %v3041
  %v3652 = vpop.permute.xlu0 %3651
  %3655 = vset.pattern.permute.xlu0 0
  %3656 = vperm.xlu0 %3655, %v3042
  %v3657 = vpop.permute.xlu0 %3656
  %3660 = vset.pattern.permute.xlu0 0
  %3661 = vperm.xlu0 %3660, %v3043
  %v3662 = vpop.permute.xlu0 %3661
  %3665 = vset.pattern.permute.xlu0 0
  %3666 = vperm.xlu0 %3665, %v3044
  %v3667 = vpop.permute.xlu0 %3666
  %3670 = vset.pattern.permute.xlu0 0
  %3671 = vperm.xlu0 %3670, %v3045
  %v3672 = vpop.permute.xlu0 %3671
  %3675 = vset.pattern.permute.xlu0 0
  %3676 = vperm.xlu0 %3675, %v3046
  %v3677 = vpop.permute.xlu0 %3676
  %3680 = vset.pattern.permute.xlu0 0
  %3681 = vperm.xlu0 %3680, %v3047
  %v3682 = vpop.permute.xlu0 %3681
  %3685 = vset.pattern.permute.xlu0 0
  %3686 = vperm.xlu0 %3685, %v3048
  %v3687 = vpop.permute.xlu0 %3686
  %3690 = vset.pattern.permute.xlu0 0
  %3691 = vperm.xlu0 %3690, %v3049
  %v3692 = vpop.permute.xlu0 %3691
  %3695 = vset.pattern.permute.xlu0 0
  %3696 = vperm.xlu0 %3695, %v3050
  %v3697 = vpop.permute.xlu0 %3696
  %3700 = vset.pattern.permute.xlu0 0
  %3701 = vperm.xlu0 %3700, %v3051
  %v3702 = vpop.permute.xlu0 %3701
  %3705 = vset.pattern.permute.xlu0 0
  %3706 = vperm.xlu0 %3705, %v3052
  %v3707 = vpop.permute.xlu0 %3706
  %3710 = vset.pattern.permute.xlu0 0
  %3711 = vperm.xlu0 %3710, %v3053
  %v3712 = vpop.permute.xlu0 %3711
  %3715 = vset.pattern.permute.xlu0 0
  %3716 = vperm.xlu0 %3715, %v3054
  %v3717 = vpop.permute.xlu0 %3716
  %3720 = vset.pattern.permute.xlu0 0
  %3721 = vperm.xlu0 %3720, %v3055
  %v3722 = vpop.permute.xlu0 %3721
  %3725 = vset.pattern.permute.xlu0 0
  %3726 = vperm.xlu0 %3725, %v3056
  %v3727 = vpop.permute.xlu0 %3726
  %3730 = vset.pattern.permute.xlu0 0
  %3731 = vperm.xlu0 %3730, %v3057
  %v3732 = vpop.permute.xlu0 %3731
  %3735 = vset.pattern.permute.xlu0 0
  %3736 = vperm.xlu0 %3735, %v3058
  %v3737 = vpop.permute.xlu0 %3736
  %3740 = vset.pattern.permute.xlu0 0
  %3741 = vperm.xlu0 %3740, %v3059
  %v3742 = vpop.permute.xlu0 %3741
  %3745 = vset.pattern.permute.xlu0 0
  %3746 = vperm.xlu0 %3745, %v3060
  %v3747 = vpop.permute.xlu0 %3746
  %3750 = vset.pattern.permute.xlu0 0
  %3751 = vperm.xlu0 %3750, %v3061
  %v3752 = vpop.permute.xlu0 %3751
  %3755 = vset.pattern.permute.xlu0 0
  %3756 = vperm.xlu0 %3755, %v3062
  %v3757 = vpop.permute.xlu0 %3756
  %3760 = vset.pattern.permute.xlu0 0
  %3761 = vperm.xlu0 %3760, %v3063
  %v3762 = vpop.permute.xlu0 %3761
  %3765 = vset.pattern.permute.xlu0 0
  %3766 = vperm.xlu0 %3765, %v3064
  %v3767 = vpop.permute.xlu0 %3766
  %3770 = vset.pattern.permute.xlu0 0
  %3771 = vperm.xlu0 %3770, %v3065
  %v3772 = vpop.permute.xlu0 %3771
  %3775 = vset.pattern.permute.xlu0 0
  %3776 = vperm.xlu0 %3775, %v3066
  %v3777 = vpop.permute.xlu0 %3776
  %3780 = vset.pattern.permute.xlu0 0
  %3781 = vperm.xlu0 %3780, %v3067
  %v3782 = vpop.permute.xlu0 %3781
  %3785 = vset.pattern.permute.xlu0 0
  %3786 = vperm.xlu0 %3785, %v3068
  %v3787 = vpop.permute.xlu0 %3786
  %3790 = vset.pattern.permute.xlu0 0
  %3791 = vperm.xlu0 %3790, %v3069
  %v3792 = vpop.permute.xlu0 %3791
  %3795 = vset.pattern.permute.xlu0 0
  %3796 = vperm.xlu0 %3795, %v3070
  %v3797 = vpop.permute.xlu0 %3796
  %3800 = vset.pattern.permute.xlu0 0
  %3801 = vperm.xlu0 %3800, %v3071
  %v3802 = vpop.permute.xlu0 %3801
  %3805 = vset.pattern.permute.xlu0 0
  %3806 = vperm.xlu0 %3805, %v3072
  %v3807 = vpop.permute.xlu0 %3806
  %3810 = vset.pattern.permute.xlu0 0
  %3811 = vperm.xlu0 %3810, %v3073
  %v3812 = vpop.permute.xlu0 %3811
  %3815 = vset.pattern.permute.xlu0 0
  %3816 = vperm.xlu0 %3815, %v3074
  %v3817 = vpop.permute.xlu0 %3816
  %3820 = vset.pattern.permute.xlu0 0
  %3821 = vperm.xlu0 %3820, %v3075
  %v3822 = vpop.permute.xlu0 %3821
  %3825 = vset.pattern.permute.xlu0 0
  %3826 = vperm.xlu0 %3825, %v3076
  %v3827 = vpop.permute.xlu0 %3826
  %3830 = vset.pattern.permute.xlu0 0
  %3831 = vperm.xlu0 %3830, %v3077
  %v3832 = vpop.permute.xlu0 %3831
  %3835 = vset.pattern.permute.xlu0 0
  %3836 = vperm.xlu0 %3835, %v3078
  %v3837 = vpop.permute.xlu0 %3836
  %3840 = vset.pattern.permute.xlu0 0
  %3841 = vperm.xlu0 %3840, %v3079
  %v3842 = vpop.permute.xlu0 %3841
  %3845 = vset.pattern.permute.xlu0 0
  %3846 = vperm.xlu0 %3845, %v3080
  %v3847 = vpop.permute.xlu0 %3846
  %3850 = vset.pattern.permute.xlu0 0
  %3851 = vperm.xlu0 %3850, %v3081
  %v3852 = vpop.permute.xlu0 %3851
  %3855 = vset.pattern.permute.xlu0 0
  %3856 = vperm.xlu0 %3855, %v3082
  %v3857 = vpop.permute.xlu0 %3856
  %3860 = vset.pattern.permute.xlu0 0
  %3861 = vperm.xlu0 %3860, %v3083
  %v3862 = vpop.permute.xlu0 %3861
  %3865 = vset.pattern.permute.xlu0 0
  %3866 = vperm.xlu0 %3865, %v3084
  %v3867 = vpop.permute.xlu0 %3866
  %3870 = vset.pattern.permute.xlu0 0
  %3871 = vperm.xlu0 %3870, %v3085
  %v3872 = vpop.permute.xlu0 %3871
  %3875 = vset.pattern.permute.xlu0 0
  %3876 = vperm.xlu0 %3875, %v3086
  %v3877 = vpop.permute.xlu0 %3876
  %3880 = vset.pattern.permute.xlu0 0
  %3881 = vperm.xlu0 %3880, %v3087
  %v3882 = vpop.permute.xlu0 %3881
  %3885 = vset.pattern.permute.xlu0 0
  %3886 = vperm.xlu0 %3885, %v3088
  %v3887 = vpop.permute.xlu0 %3886
  %3890 = vset.pattern.permute.xlu0 0
  %3891 = vperm.xlu0 %3890, %v3089
  %v3892 = vpop.permute.xlu0 %3891
  %3895 = vset.pattern.permute.xlu0 0
  %3896 = vperm.xlu0 %3895, %v3090
  %v3897 = vpop.permute.xlu0 %3896
  %3900 = vset.pattern.permute.xlu0 0
  %3901 = vperm.xlu0 %3900, %v3091
  %v3902 = vpop.permute.xlu0 %3901
  %3905 = vset.pattern.permute.xlu0 0
  %3906 = vperm.xlu0 %3905, %v3092
  %v3907 = vpop.permute.xlu0 %3906
  %3910 = vset.pattern.permute.xlu0 0
  %3911 = vperm.xlu0 %3910, %v3093
  %v3912 = vpop.permute.xlu0 %3911
  %3915 = vset.pattern.permute.xlu0 0
  %3916 = vperm.xlu0 %3915, %v3094
  %v3917 = vpop.permute.xlu0 %3916
  %3920 = vset.pattern.permute.xlu0 0
  %3921 = vperm.xlu0 %3920, %v3095
  %v3922 = vpop.permute.xlu0 %3921
  %3925 = vset.pattern.permute.xlu0 0
  %3926 = vperm.xlu0 %3925, %v3096
  %v3927 = vpop.permute.xlu0 %3926
  %3930 = vset.pattern.permute.xlu0 0
  %3931 = vperm.xlu0 %3930, %v3097
  %v3932 = vpop.permute.xlu0 %3931
  %3935 = vset.pattern.permute.xlu0 0
  %3936 = vperm.xlu0 %3935, %v3098
  %v3937 = vpop.permute.xlu0 %3936
  %3940 = vset.pattern.permute.xlu0 0
  %3941 = vperm.xlu0 %3940, %v3099
  %v3942 = vpop.permute.xlu0 %3941
  %3945 = vset.pattern.permute.xlu0 0
  %3946 = vperm.xlu0 %3945, %v3100
  %v3947 = vpop.permute.xlu0 %3946
  %3950 = vset.pattern.permute.xlu0 0
  %3951 = vperm.xlu0 %3950, %v3101
  %v3952 = vpop.permute.xlu0 %3951
  %3955 = vset.pattern.permute.xlu0 0
  %3956 = vperm.xlu0 %3955, %v3102
  %v3957 = vpop.permute.xlu0 %3956
  %3960 = vset.pattern.permute.xlu0 0
  %3961 = vperm.xlu0 %3960, %v3103
  %v3962 = vpop.permute.xlu0 %3961
  %3965 = vset.pattern.permute.xlu0 0
  %3966 = vperm.xlu0 %3965, %v3104
  %v3967 = vpop.permute.xlu0 %3966
  %3970 = vset.pattern.permute.xlu0 0
  %3971 = vperm.xlu0 %3970, %v3105
  %v3972 = vpop.permute.xlu0 %3971
  %3975 = vset.pattern.permute.xlu0 0
  %3976 = vperm.xlu0 %3975, %v3106
  %v3977 = vpop.permute.xlu0 %3976
  %3980 = vset.pattern.permute.xlu0 0
  %3981 = vperm.xlu0 %3980, %v3107
  %v3982 = vpop.permute.xlu0 %3981
  %3985 = vset.pattern.permute.xlu0 0
  %3986 = vperm.xlu0 %3985, %v3108
  %v3987 = vpop.permute.xlu0 %3986
  %3990 = vset.pattern.permute.xlu0 0
  %3991 = vperm.xlu0 %3990, %v3109
  %v3992 = vpop.permute.xlu0 %3991
  %3995 = vset.pattern.permute.xlu0 0
  %3996 = vperm.xlu0 %3995, %v3110
  %v3997 = vpop.permute.xlu0 %3996
  %4000 = vset.pattern.permute.xlu0 0
  %4001 = vperm.xlu0 %4000, %v3111
  %v4002 = vpop.permute.xlu0 %4001
  %4005 = vset.pattern.permute.xlu0 0
  %4006 = vperm.xlu0 %4005, %v3112
  %v4007 = vpop.permute.xlu0 %4006
  %4010 = vset.pattern.permute.xlu0 0
  %4011 = vperm.xlu0 %4010, %v3113
  %v4012 = vpop.permute.xlu0 %4011
  %4015 = vset.pattern.permute.xlu0 0
  %4016 = vperm.xlu0 %4015, %v3114
  %v4017 = vpop.permute.xlu0 %4016
  %4020 = vset.pattern.permute.xlu0 0
  %4021 = vperm.xlu0 %4020, %v3115
  %v4022 = vpop.permute.xlu0 %4021
  %4025 = vset.pattern.permute.xlu0 0
  %4026 = vperm.xlu0 %4025, %v3116
  %v4027 = vpop.permute.xlu0 %4026
  %4030 = vset.pattern.permute.xlu0 0
  %4031 = vperm.xlu0 %4030, %v3117
  %v4032 = vpop.permute.xlu0 %4031
  %4035 = vset.pattern.permute.xlu0 0
  %4036 = vperm.xlu0 %4035, %v3118
  %v4037 = vpop.permute.xlu0 %4036
  %4040 = vset.pattern.permute.xlu0 0
  %4041 = vperm.xlu0 %4040, %v3119
  %v4042 = vpop.permute.xlu0 %4041
  %4045 = vset.pattern.permute.xlu0 0
  %4046 = vperm.xlu0 %4045, %v3120
  %v4047 = vpop.permute.xlu0 %4046
  %4050 = vset.pattern.permute.xlu0 0
  %4051 = vperm.xlu0 %4050, %v3121
  %v4052 = vpop.permute.xlu0 %4051
  %4055 = vset.pattern.permute.xlu0 0
  %4056 = vperm.xlu0 %4055, %v3122
  %v4057 = vpop.permute.xlu0 %4056
  %4060 = vset.pattern.permute.xlu0 0
  %4061 = vperm.xlu0 %4060, %v3123
  %v4062 = vpop.permute.xlu0 %4061
  %4065 = vset.pattern.permute.xlu0 0
  %4066 = vperm.xlu0 %4065, %v3124
  %v4067 = vpop.permute.xlu0 %4066
  %4070 = vset.pattern.permute.xlu0 0
  %4071 = vperm.xlu0 %4070, %v3125
  %v4072 = vpop.permute.xlu0 %4071
  %4075 = vset.pattern.permute.xlu0 0
  %4076 = vperm.xlu0 %4075, %v3126
  %v4077 = vpop.permute.xlu0 %4076
  %4080 = vset.pattern.permute.xlu0 0
  %4081 = vperm.xlu0 %4080, %v3127
  %v4082 = vpop.permute.xlu0 %4081
  %4085 = vset.pattern.permute.xlu0 0
  %4086 = vperm.xlu0 %4085, %v3128
  %v4087 = vpop.permute.xlu0 %4086
  %4090 = vset.pattern.permute.xlu0 0
  %4091 = vperm.xlu0 %4090, %v3129
  %v4092 = vpop.permute.xlu0 %4091
  %4095 = vset.pattern.permute.xlu0 0
  %4096 = vperm.xlu0 %4095, %v3130
  %v4097 = vpop.permute.xlu0 %4096
  %4100 = vset.pattern.permute.xlu0 0
  %4101 = vperm.xlu0 %4100, %v3131
  %v4102 = vpop.permute.xlu0 %4101
  %4105 = vset.pattern.permute.xlu0 0
  %4106 = vperm.xlu0 %4105, %v3132
  %v4107 = vpop.permute.xlu0 %4106
  %4110 = vset.pattern.permute.xlu0 0
  %4111 = vperm.xlu0 %4110, %v3133
  %v4112 = vpop.permute.xlu0 %4111
  %v4310 = vunpack.c.l.b16 %v2742
  %v4311 = vunpack.c.l.b16 %v2743
  %v4312 = vunpack.c.l.b16 %v2744
  %v4313 = vunpack.c.l.b16 %v2745
  %v4314 = vunpack.c.l.b16 %v2746
  %v4315 = vunpack.c.l.b16 %v2747
  %v4316 = vunpack.c.l.b16 %v2748
  %v4317 = vunpack.c.l.b16 %v2749
  %v4318 = vunpack.c.l.b16 %v2750
  %v4319 = vunpack.c.l.b16 %v2751
  %v4320 = vunpack.c.l.b16 %v2752
  %v4321 = vunpack.c.l.b16 %v2753
  %v4322 = vunpack.c.l.b16 %v2754
  %v4323 = vunpack.c.l.b16 %v2755
  %v4324 = vunpack.c.l.b16 %v2756
  %v4325 = vunpack.c.l.b16 %v2757
  %v4326 = vunpack.c.l.b16 %v2758
  %v4327 = vunpack.c.l.b16 %v2759
  %v4328 = vunpack.c.l.b16 %v2760
  %v4329 = vunpack.c.l.b16 %v2761
  %v4330 = vunpack.c.l.b16 %v2762
  %v4331 = vunpack.c.l.b16 %v2763
  %v4332 = vunpack.c.l.b16 %v2764
  %v4333 = vunpack.c.l.b16 %v2765
  %v4334 = vunpack.c.l.b16 %v2766
  %v4335 = vunpack.c.l.b16 %v2767
  %v4336 = vunpack.c.l.b16 %v2768
  %v4337 = vunpack.c.l.b16 %v2769
  %v4338 = vunpack.c.l.b16 %v2770
  %v4339 = vunpack.c.l.b16 %v2771
  %v4340 = vunpack.c.l.b16 %v2772
  %v4341 = vunpack.c.l.b16 %v2773
  %v4342 = vunpack.c.l.b16 %v2774
  %v4343 = vunpack.c.l.b16 %v2775
  %v4344 = vunpack.c.l.b16 %v2776
  %v4345 = vunpack.c.l.b16 %v2777
  %v4346 = vunpack.c.l.b16 %v2778
  %v4347 = vunpack.c.l.b16 %v2779
  %v4348 = vunpack.c.l.b16 %v2780
  %v4349 = vunpack.c.l.b16 %v2781
  %v4350 = vunpack.c.l.b16 %v2782
  %v4351 = vunpack.c.l.b16 %v2783
  %v4352 = vunpack.c.l.b16 %v2784
  %v4353 = vunpack.c.l.b16 %v2785
  %v4354 = vunpack.c.l.b16 %v2786
  %v4355 = vunpack.c.l.b16 %v2787
  %v4356 = vunpack.c.l.b16 %v2788
  %v4357 = vunpack.c.l.b16 %v2789
  %v4358 = vunpack.c.l.b16 %v2790
  %v4359 = vunpack.c.l.b16 %v2791
  %v4360 = vunpack.c.l.b16 %v2792
  %v4361 = vunpack.c.l.b16 %v2793
  %v4362 = vunpack.c.l.b16 %v2794
  %v4363 = vunpack.c.l.b16 %v2795
  %v4364 = vunpack.c.l.b16 %v2796
  %v4365 = vunpack.c.l.b16 %v2797
  %v4366 = vunpack.c.l.b16 %v2798
  %v4367 = vunpack.c.l.b16 %v2799
  %v4368 = vunpack.c.l.b16 %v2800
  %v4369 = vunpack.c.l.b16 %v2801
  %v4370 = vunpack.c.l.b16 %v2802
  %v4371 = vunpack.c.l.b16 %v2803
  %v4372 = vunpack.c.l.b16 %v2804
  %v4373 = vunpack.c.l.b16 %v2805
  %v4374 = vunpack.c.l.b16 %v2806
  %v4375 = vunpack.c.l.b16 %v2807
  %v4376 = vunpack.c.l.b16 %v2808
  %v4377 = vunpack.c.l.b16 %v2809
  %v4378 = vunpack.c.l.b16 %v2810
  %v4379 = vunpack.c.l.b16 %v2811
  %v4380 = vunpack.c.l.b16 %v2812
  %v4381 = vunpack.c.l.b16 %v2813
  %v4382 = vunpack.c.l.b16 %v2814
  %v4383 = vunpack.c.l.b16 %v2815
  %v4384 = vunpack.c.l.b16 %v2816
  %v4385 = vunpack.c.l.b16 %v2817
  %v4386 = vunpack.c.l.b16 %v2818
  %v4387 = vunpack.c.l.b16 %v2819
  %v4388 = vunpack.c.l.b16 %v2820
  %v4389 = vunpack.c.l.b16 %v2821
  %v4390 = vunpack.c.l.b16 %v2822
  %v4391 = vunpack.c.l.b16 %v2823
  %v4392 = vunpack.c.l.b16 %v2824
  %v4393 = vunpack.c.l.b16 %v2825
  %v4394 = vunpack.c.l.b16 %v2826
  %v4395 = vunpack.c.l.b16 %v2827
  %v4396 = vunpack.c.l.b16 %v2828
  %v4397 = vunpack.c.l.b16 %v2829
  %v4398 = vunpack.c.l.b16 %v2830
  %v4399 = vunpack.c.l.b16 %v2831
  %v4400 = vunpack.c.l.b16 %v2832
  %v4401 = vunpack.c.l.b16 %v2833
  %v4402 = vunpack.c.l.b16 %v2834
  %v4403 = vunpack.c.l.b16 %v2835
  %v4404 = vunpack.c.l.b16 %v2836
  %v4405 = vunpack.c.l.b16 %v2837
  %v4406 = vunpack.c.l.b16 %v2838
  %v4407 = vunpack.c.l.b16 %v2839
  %v4408 = vunpack.c.l.b16 %v2840
  %v4409 = vunpack.c.l.b16 %v2841
  %v4410 = vunpack.c.l.b16 %v2842
  %v4411 = vunpack.c.l.b16 %v2843
  %v4412 = vunpack.c.l.b16 %v2844
  %v4413 = vunpack.c.l.b16 %v2845
  %v4414 = vunpack.c.l.b16 %v2846
  %v4415 = vunpack.c.l.b16 %v2847
  %v4416 = vunpack.c.l.b16 %v2848
  %v4417 = vunpack.c.l.b16 %v2849
  %v4418 = vunpack.c.l.b16 %v2850
  %v4419 = vunpack.c.l.b16 %v2851
  %v4420 = vunpack.c.l.b16 %v2852
  %v4421 = vunpack.c.l.b16 %v2853
  %v4422 = vunpack.c.l.b16 %v2854
  %v4423 = vunpack.c.l.b16 %v2855
  %v4424 = vunpack.c.l.b16 %v2856
  %v4425 = vunpack.c.l.b16 %v2857
  %v4426 = vunpack.c.l.b16 %v2858
  %v4427 = vunpack.c.l.b16 %v2859
  %v4428 = vunpack.c.l.b16 %v2860
  %v4429 = vunpack.c.l.b16 %v2861
  %v4430 = vunpack.c.l.b16 %v2862
  %v4431 = vunpack.c.l.b16 %v2863
  %v4432 = vunpack.c.l.b16 %v2864
  %v4433 = vunpack.c.l.b16 %v2865
  %v4434 = vunpack.c.l.b16 %v2866
  %v4435 = vunpack.c.l.b16 %v2867
  %v4436 = vunpack.c.l.b16 %v2868
  %v4437 = vunpack.c.l.b16 %v2869
  %v4438 = vunpack.c.l.b16 %v2870
  %v4439 = vunpack.c.l.b16 %v2871
  %v4440 = vunpack.c.l.b16 %v2872
  %v4441 = vunpack.c.l.b16 %v2873
  %v4442 = vunpack.c.l.b16 %v2874
  %v4443 = vunpack.c.l.b16 %v2875
  %v4444 = vunpack.c.l.b16 %v2876
  %v4445 = vunpack.c.l.b16 %v2877
  %v4446 = vunpack.c.l.b16 %v2878
  %v4447 = vunpack.c.l.b16 %v2879
  %v4448 = vunpack.c.l.b16 %v2880
  %v4449 = vunpack.c.l.b16 %v2881
  %v4450 = vunpack.c.l.b16 %v2882
  %v4451 = vunpack.c.l.b16 %v2883
  %v4452 = vunpack.c.l.b16 %v2884
  %v4453 = vunpack.c.l.b16 %v2885
  %v4454 = vunpack.c.l.b16 %v2886
  %v4455 = vunpack.c.l.b16 %v2887
  %v4456 = vunpack.c.l.b16 %v2888
  %v4457 = vunpack.c.l.b16 %v2889
  %v4458 = vunpack.c.l.b16 %v2890
  %v4459 = vunpack.c.l.b16 %v2891
  %v4460 = vunpack.c.l.b16 %v2892
  %v4461 = vunpack.c.l.b16 %v2893
  %v4462 = vunpack.c.l.b16 %v2894
  %v4463 = vunpack.c.l.b16 %v2895
  %v4464 = vunpack.c.l.b16 %v2896
  %v4465 = vunpack.c.l.b16 %v2897
  %v4466 = vunpack.c.l.b16 %v2898
  %v4467 = vunpack.c.l.b16 %v2899
  %v4468 = vunpack.c.l.b16 %v2900
  %v4469 = vunpack.c.l.b16 %v2901
  %v4470 = vunpack.c.l.b16 %v2902
  %v4471 = vunpack.c.l.b16 %v2903
  %v4472 = vunpack.c.l.b16 %v2904
  %v4473 = vunpack.c.l.b16 %v2905
  %v4474 = vunpack.c.l.b16 %v2906
  %v4475 = vunpack.c.l.b16 %v2907
  %v4476 = vunpack.c.l.b16 %v2908
  %v4477 = vunpack.c.l.b16 %v2909
  %v4478 = vunpack.c.l.b16 %v2910
  %v4479 = vunpack.c.l.b16 %v2911
  %v4480 = vunpack.c.l.b16 %v2912
  %v4481 = vunpack.c.l.b16 %v2913
  %v4482 = vunpack.c.l.b16 %v2914
  %v4483 = vunpack.c.l.b16 %v2915
  %v4484 = vunpack.c.l.b16 %v2916
  %v4485 = vunpack.c.l.b16 %v2917
  %v4486 = vunpack.c.l.b16 %v2918
  %v4487 = vunpack.c.l.b16 %v2919
  %v4488 = vunpack.c.l.b16 %v2920
  %v4489 = vunpack.c.l.b16 %v2921
  %v4490 = vunpack.c.l.b16 %v2922
  %v4491 = vunpack.c.l.b16 %v2923
  %v4492 = vunpack.c.l.b16 %v2924
  %v4493 = vunpack.c.l.b16 %v2925
  %v4494 = vunpack.c.l.b16 %v2926
  %v4495 = vunpack.c.l.b16 %v2927
  %v4496 = vunpack.c.l.b16 %v2928
  %v4497 = vunpack.c.l.b16 %v2929
  %v4498 = vunpack.c.l.b16 %v2930
  %v4499 = vunpack.c.l.b16 %v2931
  %v4500 = vunpack.c.l.b16 %v2932
  %v4501 = vunpack.c.l.b16 %v2933
  %v4502 = vunpack.c.l.b16 %v2934
  %v4503 = vunpack.c.l.b16 %v2935
  %v4504 = vunpack.c.l.b16 %v2936
  %v4505 = vunpack.c.l.b16 %v2937
  %v4506 = vpack.c.b16 %v4311, %v4310
  %v4507 = vpack.c.b16 %v4313, %v4312
  %v4508 = vpack.c.b16 %v4315, %v4314
  %v4509 = vpack.c.b16 %v4317, %v4316
  %v4510 = vpack.c.b16 %v4319, %v4318
  %v4511 = vpack.c.b16 %v4321, %v4320
  %v4512 = vpack.c.b16 %v4323, %v4322
  %v4513 = vpack.c.b16 %v4325, %v4324
  %v4514 = vpack.c.b16 %v4327, %v4326
  %v4515 = vpack.c.b16 %v4329, %v4328
  %v4516 = vpack.c.b16 %v4331, %v4330
  %v4517 = vpack.c.b16 %v4333, %v4332
  %v4518 = vpack.c.b16 %v4335, %v4334
  %v4519 = vpack.c.b16 %v4337, %v4336
  %v4520 = vpack.c.b16 %v4339, %v4338
  %v4521 = vpack.c.b16 %v4341, %v4340
  %v4522 = vpack.c.b16 %v4343, %v4342
  %v4523 = vpack.c.b16 %v4345, %v4344
  %v4524 = vpack.c.b16 %v4347, %v4346
  %v4525 = vpack.c.b16 %v4349, %v4348
  %v4526 = vpack.c.b16 %v4351, %v4350
  %v4527 = vpack.c.b16 %v4353, %v4352
  %v4528 = vpack.c.b16 %v4355, %v4354
  %v4529 = vpack.c.b16 %v4357, %v4356
  %v4530 = vpack.c.b16 %v4359, %v4358
  %v4531 = vpack.c.b16 %v4361, %v4360
  %v4532 = vpack.c.b16 %v4363, %v4362
  %v4533 = vpack.c.b16 %v4365, %v4364
  %v4534 = vpack.c.b16 %v4367, %v4366
  %v4535 = vpack.c.b16 %v4369, %v4368
  %v4536 = vpack.c.b16 %v4371, %v4370
  %v4537 = vpack.c.b16 %v4373, %v4372
  %v4538 = vpack.c.b16 %v4375, %v4374
  %v4539 = vpack.c.b16 %v4377, %v4376
  %v4540 = vpack.c.b16 %v4379, %v4378
  %v4541 = vpack.c.b16 %v4381, %v4380
  %v4542 = vpack.c.b16 %v4383, %v4382
  %v4543 = vpack.c.b16 %v4385, %v4384
  %v4544 = vpack.c.b16 %v4387, %v4386
  %v4545 = vpack.c.b16 %v4389, %v4388
  %v4546 = vpack.c.b16 %v4391, %v4390
  %v4547 = vpack.c.b16 %v4393, %v4392
  %v4548 = vpack.c.b16 %v4395, %v4394
  %v4549 = vpack.c.b16 %v4397, %v4396
  %v4550 = vpack.c.b16 %v4399, %v4398
  %v4551 = vpack.c.b16 %v4401, %v4400
  %v4552 = vpack.c.b16 %v4403, %v4402
  %v4553 = vpack.c.b16 %v4405, %v4404
  %v4554 = vpack.c.b16 %v4407, %v4406
  %v4555 = vpack.c.b16 %v4409, %v4408
  %v4556 = vpack.c.b16 %v4411, %v4410
  %v4557 = vpack.c.b16 %v4413, %v4412
  %v4558 = vpack.c.b16 %v4415, %v4414
  %v4559 = vpack.c.b16 %v4417, %v4416
  %v4560 = vpack.c.b16 %v4419, %v4418
  %v4561 = vpack.c.b16 %v4421, %v4420
  %v4562 = vpack.c.b16 %v4423, %v4422
  %v4563 = vpack.c.b16 %v4425, %v4424
  %v4564 = vpack.c.b16 %v4427, %v4426
  %v4565 = vpack.c.b16 %v4429, %v4428
  %v4566 = vpack.c.b16 %v4431, %v4430
  %v4567 = vpack.c.b16 %v4433, %v4432
  %v4568 = vpack.c.b16 %v4435, %v4434
  %v4569 = vpack.c.b16 %v4437, %v4436
  %v4570 = vpack.c.b16 %v4439, %v4438
  %v4571 = vpack.c.b16 %v4441, %v4440
  %v4572 = vpack.c.b16 %v4443, %v4442
  %v4573 = vpack.c.b16 %v4445, %v4444
  %v4574 = vpack.c.b16 %v4447, %v4446
  %v4575 = vpack.c.b16 %v4449, %v4448
  %v4576 = vpack.c.b16 %v4451, %v4450
  %v4577 = vpack.c.b16 %v4453, %v4452
  %v4578 = vpack.c.b16 %v4455, %v4454
  %v4579 = vpack.c.b16 %v4457, %v4456
  %v4580 = vpack.c.b16 %v4459, %v4458
  %v4581 = vpack.c.b16 %v4461, %v4460
  %v4582 = vpack.c.b16 %v4463, %v4462
  %v4583 = vpack.c.b16 %v4465, %v4464
  %v4584 = vpack.c.b16 %v4467, %v4466
  %v4585 = vpack.c.b16 %v4469, %v4468
  %v4586 = vpack.c.b16 %v4471, %v4470
  %v4587 = vpack.c.b16 %v4473, %v4472
  %v4588 = vpack.c.b16 %v4475, %v4474
  %v4589 = vpack.c.b16 %v4477, %v4476
  %v4590 = vpack.c.b16 %v4479, %v4478
  %v4591 = vpack.c.b16 %v4481, %v4480
  %v4592 = vpack.c.b16 %v4483, %v4482
  %v4593 = vpack.c.b16 %v4485, %v4484
  %v4594 = vpack.c.b16 %v4487, %v4486
  %v4595 = vpack.c.b16 %v4489, %v4488
  %v4596 = vpack.c.b16 %v4491, %v4490
  %v4597 = vpack.c.b16 %v4493, %v4492
  %v4598 = vpack.c.b16 %v4495, %v4494
  %v4599 = vpack.c.b16 %v4497, %v4496
  %v4600 = vpack.c.b16 %v4499, %v4498
  %v4601 = vpack.c.b16 %v4501, %v4500
  %v4602 = vpack.c.b16 %v4503, %v4502
  %v4603 = vpack.c.b16 %v4505, %v4504
  %vm4604 = vcmask 523264
  %v4606 = vsel %vm4604, %v4506, 0
  %v4609 = vsel %vm4604, %v4507, 0
  %v4612 = vsel %vm4604, %v4508, 0
  %v4615 = vsel %vm4604, %v4509, 0
  %v4618 = vsel %vm4604, %v4510, 0
  %v4621 = vsel %vm4604, %v4511, 0
  %v4624 = vsel %vm4604, %v4512, 0
  %v4627 = vsel %vm4604, %v4513, 0
  %v4630 = vsel %vm4604, %v4514, 0
  %v4633 = vsel %vm4604, %v4515, 0
  %v4636 = vsel %vm4604, %v4516, 0
  %v4639 = vsel %vm4604, %v4517, 0
  %v4642 = vsel %vm4604, %v4518, 0
  %v4645 = vsel %vm4604, %v4519, 0
  %v4648 = vsel %vm4604, %v4520, 0
  %v4651 = vsel %vm4604, %v4521, 0
  %v4654 = vsel %vm4604, %v4522, 0
  %v4657 = vsel %vm4604, %v4523, 0
  %v4660 = vsel %vm4604, %v4524, 0
  %v4663 = vsel %vm4604, %v4525, 0
  %v4666 = vsel %vm4604, %v4526, 0
  %v4669 = vsel %vm4604, %v4527, 0
  %v4672 = vsel %vm4604, %v4528, 0
  %v4675 = vsel %vm4604, %v4529, 0
  %v4678 = vsel %vm4604, %v4530, 0
  %v4681 = vsel %vm4604, %v4531, 0
  %v4684 = vsel %vm4604, %v4532, 0
  %v4687 = vsel %vm4604, %v4533, 0
  %v4690 = vsel %vm4604, %v4534, 0
  %v4693 = vsel %vm4604, %v4535, 0
  %v4696 = vsel %vm4604, %v4536, 0
  %v4699 = vsel %vm4604, %v4537, 0
  %v4702 = vsel %vm4604, %v4538, 0
  %v4705 = vsel %vm4604, %v4539, 0
  %v4708 = vsel %vm4604, %v4540, 0
  %v4711 = vsel %vm4604, %v4541, 0
  %v4714 = vsel %vm4604, %v4542, 0
  %v4717 = vsel %vm4604, %v4543, 0
  %v4720 = vsel %vm4604, %v4544, 0
  %v4723 = vsel %vm4604, %v4545, 0
  %v4726 = vsel %vm4604, %v4546, 0
  %v4729 = vsel %vm4604, %v4547, 0
  %v4732 = vsel %vm4604, %v4548, 0
  %v4735 = vsel %vm4604, %v4549, 0
  %v4738 = vsel %vm4604, %v4550, 0
  %v4741 = vsel %vm4604, %v4551, 0
  %v4744 = vsel %vm4604, %v4552, 0
  %v4747 = vsel %vm4604, %v4553, 0
  %v4750 = vsel %vm4604, %v4554, 0
  %v4753 = vsel %vm4604, %v4555, 0
  %v4756 = vsel %vm4604, %v4556, 0
  %v4759 = vsel %vm4604, %v4557, 0
  %v4762 = vsel %vm4604, %v4558, 0
  %v4765 = vsel %vm4604, %v4559, 0
  %v4768 = vsel %vm4604, %v4560, 0
  %v4771 = vsel %vm4604, %v4561, 0
  %v4774 = vsel %vm4604, %v4562, 0
  %v4777 = vsel %vm4604, %v4563, 0
  %v4780 = vsel %vm4604, %v4564, 0
  %v4783 = vsel %vm4604, %v4565, 0
  %v4786 = vsel %vm4604, %v4566, 0
  %v4789 = vsel %vm4604, %v4567, 0
  %v4792 = vsel %vm4604, %v4568, 0
  %v4795 = vsel %vm4604, %v4569, 0
  %v4798 = vsel %vm4604, %v4570, 0
  %v4801 = vsel %vm4604, %v4571, 0
  %v4804 = vsel %vm4604, %v4572, 0
  %v4807 = vsel %vm4604, %v4573, 0
  %v4810 = vsel %vm4604, %v4574, 0
  %v4813 = vsel %vm4604, %v4575, 0
  %v4816 = vsel %vm4604, %v4576, 0
  %v4819 = vsel %vm4604, %v4577, 0
  %v4822 = vsel %vm4604, %v4578, 0
  %v4825 = vsel %vm4604, %v4579, 0
  %v4828 = vsel %vm4604, %v4580, 0
  %v4831 = vsel %vm4604, %v4581, 0
  %v4834 = vsel %vm4604, %v4582, 0
  %v4837 = vsel %vm4604, %v4583, 0
  %v4840 = vsel %vm4604, %v4584, 0
  %v4843 = vsel %vm4604, %v4585, 0
  %v4846 = vsel %vm4604, %v4586, 0
  %v4849 = vsel %vm4604, %v4587, 0
  %v4852 = vsel %vm4604, %v4588, 0
  %v4855 = vsel %vm4604, %v4589, 0
  %v4858 = vsel %vm4604, %v4590, 0
  %v4861 = vsel %vm4604, %v4591, 0
  %v4864 = vsel %vm4604, %v4592, 0
  %v4867 = vsel %vm4604, %v4593, 0
  %v4870 = vsel %vm4604, %v4594, 0
  %v4873 = vsel %vm4604, %v4595, 0
  %v4876 = vsel %vm4604, %v4596, 0
  %v4879 = vsel %vm4604, %v4597, 0
  %v4882 = vsel %vm4604, %v4598, 0
  %v4885 = vsel %vm4604, %v4599, 0
  %v4888 = vsel %vm4604, %v4600, 0
  %v4891 = vsel %vm4604, %v4601, 0
  %v4894 = vsel %vm4604, %v4602, 0
  %v4897 = vsel %vm4604, %v4603, 0
  %4899 = vmatprep.subr.bf16.mxu0 0
  %4900 = vmatpush1.bf16.msra.mxu0 %v2738
  %4901 = vmatprep.subr.bf16.mxu0 0
  %4902 = vmatpush1.bf16.msra.mxu0 %v2739
  %4903 = vmatprep.subr.bf16.mxu0 0
  %4904 = vmatpush1.bf16.msra.mxu0 %v2740
  %4905 = vmatprep.subr.bf16.mxu0 0
  %4906 = vmatpush1.bf16.msra.mxu0 %v2741
  %4907 = vmatprep.subr.bf16.mxu0 0
  %4908 = vmatpush1.bf16.msra.mxu0 0
  %4909 = vmatprep.subr.bf16.mxu0 0
  %4910 = vmatpush1.bf16.msra.mxu0 0
  %4911 = vmatprep.subr.bf16.mxu0 0
  %4912 = vmatpush1.bf16.msra.mxu0 0
  %4913 = vmatprep.subr.bf16.mxu0 0
  %4914 = vmatpush1.bf16.msra.mxu0 0
  %4915 = vmatprep.subr.bf16.mxu0 0
  %4916 = vmatpush1.bf16.msra.mxu0 0
  %4917 = vmatprep.subr.bf16.mxu0 0
  %4918 = vmatpush1.bf16.msra.mxu0 0
  %4919 = vmatprep.subr.bf16.mxu0 0
  %4920 = vmatpush1.bf16.msra.mxu0 0
  %4921 = vmatprep.subr.bf16.mxu0 0
  %4922 = vmatpush1.bf16.msra.mxu0 0
  %4923 = vmatprep.subr.bf16.mxu0 0
  %4924 = vmatpush1.bf16.msra.mxu0 0
  %4925 = vmatprep.subr.bf16.mxu0 0
  %4926 = vmatpush1.bf16.msra.mxu0 0
  %4927 = vmatprep.subr.bf16.mxu0 0
  %4928 = vmatpush1.bf16.msra.mxu0 0
  %4929 = vmatprep.subr.bf16.mxu0 0
  %4930 = vmatpush1.bf16.msra.mxu0 0
  %4931 = vmatprep.mubr.bf16.mxu0 0
  %4932 = vmatmul.mubr.bf16.gmra.mrb[0].mxu0 %v4606
  %v4933 = vpop.f32.mrb[0].mxu0
  %v4934 = vadd.f32 %v3137, %v4933
  %v4935 = vpop.f32.mrb[0].mxu0
  %v4936 = vpop.f32.mrb[0].mxu0
  %v4937 = vadd.f32 %v3142, %v4936
  %v4938 = vpop.f32.mrb[0].mxu0
  %4939 = vmatprep.mubr.bf16.mxu0 0
  %4940 = vmatmul.mubr.bf16.gmra.mrb[0].mxu0 %v4609
  %v4941 = vpop.f32.mrb[0].mxu0
  %v4942 = vadd.f32 %v3147, %v4941
  %v4943 = vpop.f32.mrb[0].mxu0
  %v4944 = vpop.f32.mrb[0].mxu0
  %v4945 = vadd.f32 %v3152, %v4944
  %v4946 = vpop.f32.mrb[0].mxu0
  %4947 = vmatprep.mubr.bf16.mxu0 0
  %4948 = vmatmul.mubr.bf16.gmra.mrb[0].mxu0 %v4612
  %v4949 = vpop.f32.mrb[0].mxu0
  %v4950 = vadd.f32 %v3157, %v4949
  %v4951 = vpop.f32.mrb[0].mxu0
  %v4952 = vpop.f32.mrb[0].mxu0
  %v4953 = vadd.f32 %v3162, %v4952
  %v4954 = vpop.f32.mrb[0].mxu0
  %4955 = vmatprep.mubr.bf16.mxu0 0
  %4956 = vmatmul.mubr.bf16.gmra.mrb[0].mxu0 %v4615
  %v4957 = vpop.f32.mrb[0].mxu0
  %v4958 = vadd.f32 %v3167, %v4957
  %v4959 = vpop.f32.mrb[0].mxu0
  %v4960 = vpop.f32.mrb[0].mxu0
  %v4961 = vadd.f32 %v3172, %v4960
  %v4962 = vpop.f32.mrb[0].mxu0
  %4963 = vmatprep.mubr.bf16.mxu0 0
  %4964 = vmatmul.mubr.bf16.gmra.mrb[0].mxu0 %v4618
  %v4965 = vpop.f32.mrb[0].mxu0
  %v4966 = vadd.f32 %v3177, %v4965
  %v4967 = vpop.f32.mrb[0].mxu0
  %v4968 = vpop.f32.mrb[0].mxu0
  %v4969 = vadd.f32 %v3182, %v4968
  %v4970 = vpop.f32.mrb[0].mxu0
  %4971 = vmatprep.mubr.bf16.mxu0 0
  %4972 = vmatmul.mubr.bf16.gmra.mrb[0].mxu0 %v4621
  %v4973 = vpop.f32.mrb[0].mxu0
  %v4974 = vadd.f32 %v3187, %v4973
  %v4975 = vpop.f32.mrb[0].mxu0
  %v4976 = vpop.f32.mrb[0].mxu0
  %v4977 = vadd.f32 %v3192, %v4976
  %v4978 = vpop.f32.mrb[0].mxu0
  %4979 = vmatprep.mubr.bf16.mxu0 0
  %4980 = vmatmul.mubr.bf16.gmra.mrb[0].mxu0 %v4624
  %v4981 = vpop.f32.mrb[0].mxu0
  %v4982 = vadd.f32 %v3197, %v4981
  %v4983 = vpop.f32.mrb[0].mxu0
  %v4984 = vpop.f32.mrb[0].mxu0
  %v4985 = vadd.f32 %v3202, %v4984
  %v4986 = vpop.f32.mrb[0].mxu0
  %4987 = vmatprep.mubr.bf16.mxu0 0
  %4988 = vmatmul.mubr.bf16.gmra.mrb[0].mxu0 %v4627
  %v4989 = vpop.f32.mrb[0].mxu0
  %v4990 = vadd.f32 %v3207, %v4989
  %v4991 = vpop.f32.mrb[0].mxu0
  %v4992 = vpop.f32.mrb[0].mxu0
  %v4993 = vadd.f32 %v3212, %v4992
  %v4994 = vpop.f32.mrb[0].mxu0
  %4995 = vmatprep.mubr.bf16.mxu0 0
  %4996 = vmatmul.mubr.bf16.gmra.mrb[0].mxu0 %v4630
  %v4997 = vpop.f32.mrb[0].mxu0
  %v4998 = vadd.f32 %v3217, %v4997
  %v4999 = vpop.f32.mrb[0].mxu0
  %v5000 = vpop.f32.mrb[0].mxu0
  %v5001 = vadd.f32 %v3222, %v5000
  %v5002 = vpop.f32.mrb[0].mxu0
  %5003 = vmatprep.mubr.bf16.mxu0 0
  %5004 = vmatmul.mubr.bf16.gmra.mrb[0].mxu0 %v4633
  %v5005 = vpop.f32.mrb[0].mxu0
  %v5006 = vadd.f32 %v3227, %v5005
  %v5007 = vpop.f32.mrb[0].mxu0
  %v5008 = vpop.f32.mrb[0].mxu0
  %v5009 = vadd.f32 %v3232, %v5008
  %v5010 = vpop.f32.mrb[0].mxu0
  %5011 = vmatprep.mubr.bf16.mxu0 0
  %5012 = vmatmul.mubr.bf16.gmra.mrb[0].mxu0 %v4636
  %v5013 = vpop.f32.mrb[0].mxu0
  %v5014 = vadd.f32 %v3237, %v5013
  %v5015 = vpop.f32.mrb[0].mxu0
  %v5016 = vpop.f32.mrb[0].mxu0
  %v5017 = vadd.f32 %v3242, %v5016
  %v5018 = vpop.f32.mrb[0].mxu0
  %5019 = vmatprep.mubr.bf16.mxu0 0
  %5020 = vmatmul.mubr.bf16.gmra.mrb[0].mxu0 %v4639
  %v5021 = vpop.f32.mrb[0].mxu0
  %v5022 = vadd.f32 %v3247, %v5021
  %v5023 = vpop.f32.mrb[0].mxu0
  %v5024 = vpop.f32.mrb[0].mxu0
  %v5025 = vadd.f32 %v3252, %v5024
  %v5026 = vpop.f32.mrb[0].mxu0
  %5027 = vmatprep.mubr.bf16.mxu0 0
  %5028 = vmatmul.mubr.bf16.gmra.mrb[0].mxu0 %v4642
  %v5029 = vpop.f32.mrb[0].mxu0
  %v5030 = vadd.f32 %v3257, %v5029
  %v5031 = vpop.f32.mrb[0].mxu0
  %v5032 = vpop.f32.mrb[0].mxu0
  %v5033 = vadd.f32 %v3262, %v5032
  %v5034 = vpop.f32.mrb[0].mxu0
  %5035 = vmatprep.mubr.bf16.mxu0 0
  %5036 = vmatmul.mubr.bf16.gmra.mrb[0].mxu0 %v4645
  %v5037 = vpop.f32.mrb[0].mxu0
  %v5038 = vadd.f32 %v3267, %v5037
  %v5039 = vpop.f32.mrb[0].mxu0
  %v5040 = vpop.f32.mrb[0].mxu0
  %v5041 = vadd.f32 %v3272, %v5040
  %v5042 = vpop.f32.mrb[0].mxu0
  %5043 = vmatprep.mubr.bf16.mxu0 0
  %5044 = vmatmul.mubr.bf16.gmra.mrb[0].mxu0 %v4648
  %v5045 = vpop.f32.mrb[0].mxu0
  %v5046 = vadd.f32 %v3277, %v5045
  %v5047 = vpop.f32.mrb[0].mxu0
  %v5048 = vpop.f32.mrb[0].mxu0
  %v5049 = vadd.f32 %v3282, %v5048
  %v5050 = vpop.f32.mrb[0].mxu0
  %5051 = vmatprep.mubr.bf16.mxu0 0
  %5052 = vmatmul.mubr.bf16.gmra.mrb[0].mxu0 %v4651
  %v5053 = vpop.f32.mrb[0].mxu0
  %v5054 = vadd.f32 %v3287, %v5053
  %v5055 = vpop.f32.mrb[0].mxu0
  %v5056 = vpop.f32.mrb[0].mxu0
  %v5057 = vadd.f32 %v3292, %v5056
  %v5058 = vpop.f32.mrb[0].mxu0
  %5059 = vmatprep.mubr.bf16.mxu0 0
  %5060 = vmatmul.mubr.bf16.gmra.mrb[0].mxu0 %v4654
  %v5061 = vpop.f32.mrb[0].mxu0
  %v5062 = vadd.f32 %v3297, %v5061
  %v5063 = vpop.f32.mrb[0].mxu0
  %v5064 = vpop.f32.mrb[0].mxu0
  %v5065 = vadd.f32 %v3302, %v5064
  %v5066 = vpop.f32.mrb[0].mxu0
  %5067 = vmatprep.mubr.bf16.mxu0 0
  %5068 = vmatmul.mubr.bf16.gmra.mrb[0].mxu0 %v4657
  %v5069 = vpop.f32.mrb[0].mxu0
  %v5070 = vadd.f32 %v3307, %v5069
  %v5071 = vpop.f32.mrb[0].mxu0
  %v5072 = vpop.f32.mrb[0].mxu0
  %v5073 = vadd.f32 %v3312, %v5072
  %v5074 = vpop.f32.mrb[0].mxu0
  %5075 = vmatprep.mubr.bf16.mxu0 0
  %5076 = vmatmul.mubr.bf16.gmra.mrb[0].mxu0 %v4660
  %v5077 = vpop.f32.mrb[0].mxu0
  %v5078 = vadd.f32 %v3317, %v5077
  %v5079 = vpop.f32.mrb[0].mxu0
  %v5080 = vpop.f32.mrb[0].mxu0
  %v5081 = vadd.f32 %v3322, %v5080
  %v5082 = vpop.f32.mrb[0].mxu0
  %5083 = vmatprep.mubr.bf16.mxu0 0
  %5084 = vmatmul.mubr.bf16.gmra.mrb[0].mxu0 %v4663
  %v5085 = vpop.f32.mrb[0].mxu0
  %v5086 = vadd.f32 %v3327, %v5085
  %v5087 = vpop.f32.mrb[0].mxu0
  %v5088 = vpop.f32.mrb[0].mxu0
  %v5089 = vadd.f32 %v3332, %v5088
  %v5090 = vpop.f32.mrb[0].mxu0
  %5091 = vmatprep.mubr.bf16.mxu0 0
  %5092 = vmatmul.mubr.bf16.gmra.mrb[0].mxu0 %v4666
  %v5093 = vpop.f32.mrb[0].mxu0
  %v5094 = vadd.f32 %v3337, %v5093
  %v5095 = vpop.f32.mrb[0].mxu0
  %v5096 = vpop.f32.mrb[0].mxu0
  %v5097 = vadd.f32 %v3342, %v5096
  %v5098 = vpop.f32.mrb[0].mxu0
  %5099 = vmatprep.mubr.bf16.mxu0 0
  %5100 = vmatmul.mubr.bf16.gmra.mrb[0].mxu0 %v4669
  %v5101 = vpop.f32.mrb[0].mxu0
  %v5102 = vadd.f32 %v3347, %v5101
  %v5103 = vpop.f32.mrb[0].mxu0
  %v5104 = vpop.f32.mrb[0].mxu0
  %v5105 = vadd.f32 %v3352, %v5104
  %v5106 = vpop.f32.mrb[0].mxu0
  %5107 = vmatprep.mubr.bf16.mxu0 0
  %5108 = vmatmul.mubr.bf16.gmra.mrb[0].mxu0 %v4672
  %v5109 = vpop.f32.mrb[0].mxu0
  %v5110 = vadd.f32 %v3357, %v5109
  %v5111 = vpop.f32.mrb[0].mxu0
  %v5112 = vpop.f32.mrb[0].mxu0
  %v5113 = vadd.f32 %v3362, %v5112
  %v5114 = vpop.f32.mrb[0].mxu0
  %5115 = vmatprep.mubr.bf16.mxu0 0
  %5116 = vmatmul.mubr.bf16.gmra.mrb[0].mxu0 %v4675
  %v5117 = vpop.f32.mrb[0].mxu0
  %v5118 = vadd.f32 %v3367, %v5117
  %v5119 = vpop.f32.mrb[0].mxu0
  %v5120 = vpop.f32.mrb[0].mxu0
  %v5121 = vadd.f32 %v3372, %v5120
  %v5122 = vpop.f32.mrb[0].mxu0
  %5123 = vmatprep.mubr.bf16.mxu0 0
  %5124 = vmatmul.mubr.bf16.gmra.mrb[0].mxu0 %v4678
  %v5125 = vpop.f32.mrb[0].mxu0
  %v5126 = vadd.f32 %v3377, %v5125
  %v5127 = vpop.f32.mrb[0].mxu0
  %v5128 = vpop.f32.mrb[0].mxu0
  %v5129 = vadd.f32 %v3382, %v5128
  %v5130 = vpop.f32.mrb[0].mxu0
  %5131 = vmatprep.mubr.bf16.mxu0 0
  %5132 = vmatmul.mubr.bf16.gmra.mrb[0].mxu0 %v4681
  %v5133 = vpop.f32.mrb[0].mxu0
  %v5134 = vadd.f32 %v3387, %v5133
  %v5135 = vpop.f32.mrb[0].mxu0
  %v5136 = vpop.f32.mrb[0].mxu0
  %v5137 = vadd.f32 %v3392, %v5136
  %v5138 = vpop.f32.mrb[0].mxu0
  %5139 = vmatprep.mubr.bf16.mxu0 0
  %5140 = vmatmul.mubr.bf16.gmra.mrb[0].mxu0 %v4684
  %v5141 = vpop.f32.mrb[0].mxu0
  %v5142 = vadd.f32 %v3397, %v5141
  %v5143 = vpop.f32.mrb[0].mxu0
  %v5144 = vpop.f32.mrb[0].mxu0
  %v5145 = vadd.f32 %v3402, %v5144
  %v5146 = vpop.f32.mrb[0].mxu0
  %5147 = vmatprep.mubr.bf16.mxu0 0
  %5148 = vmatmul.mubr.bf16.gmra.mrb[0].mxu0 %v4687
  %v5149 = vpop.f32.mrb[0].mxu0
  %v5150 = vadd.f32 %v3407, %v5149
  %v5151 = vpop.f32.mrb[0].mxu0
  %v5152 = vpop.f32.mrb[0].mxu0
  %v5153 = vadd.f32 %v3412, %v5152
  %v5154 = vpop.f32.mrb[0].mxu0
  %5155 = vmatprep.mubr.bf16.mxu0 0
  %5156 = vmatmul.mubr.bf16.gmra.mrb[0].mxu0 %v4690
  %v5157 = vpop.f32.mrb[0].mxu0
  %v5158 = vadd.f32 %v3417, %v5157
  %v5159 = vpop.f32.mrb[0].mxu0
  %v5160 = vpop.f32.mrb[0].mxu0
  %v5161 = vadd.f32 %v3422, %v5160
  %v5162 = vpop.f32.mrb[0].mxu0
  %5163 = vmatprep.mubr.bf16.mxu0 0
  %5164 = vmatmul.mubr.bf16.gmra.mrb[0].mxu0 %v4693
  %v5165 = vpop.f32.mrb[0].mxu0
  %v5166 = vadd.f32 %v3427, %v5165
  %v5167 = vpop.f32.mrb[0].mxu0
  %v5168 = vpop.f32.mrb[0].mxu0
  %v5169 = vadd.f32 %v3432, %v5168
  %v5170 = vpop.f32.mrb[0].mxu0
  %5171 = vmatprep.mubr.bf16.mxu0 0
  %5172 = vmatmul.mubr.bf16.gmra.mrb[0].mxu0 %v4696
  %v5173 = vpop.f32.mrb[0].mxu0
  %v5174 = vadd.f32 %v3437, %v5173
  %v5175 = vpop.f32.mrb[0].mxu0
  %v5176 = vpop.f32.mrb[0].mxu0
  %v5177 = vadd.f32 %v3442, %v5176
  %v5178 = vpop.f32.mrb[0].mxu0
  %5179 = vmatprep.mubr.bf16.mxu0 0
  %5180 = vmatmul.mubr.bf16.gmra.mrb[0].mxu0 %v4699
  %v5181 = vpop.f32.mrb[0].mxu0
  %v5182 = vadd.f32 %v3447, %v5181
  %v5183 = vpop.f32.mrb[0].mxu0
  %v5184 = vpop.f32.mrb[0].mxu0
  %v5185 = vadd.f32 %v3452, %v5184
  %v5186 = vpop.f32.mrb[0].mxu0
  %5187 = vmatprep.mubr.bf16.mxu0 0
  %5188 = vmatmul.mubr.bf16.gmra.mrb[0].mxu0 %v4702
  %v5189 = vpop.f32.mrb[0].mxu0
  %v5190 = vadd.f32 %v3457, %v5189
  %v5191 = vpop.f32.mrb[0].mxu0
  %v5192 = vpop.f32.mrb[0].mxu0
  %v5193 = vadd.f32 %v3462, %v5192
  %v5194 = vpop.f32.mrb[0].mxu0
  %5195 = vmatprep.mubr.bf16.mxu0 0
  %5196 = vmatmul.mubr.bf16.gmra.mrb[0].mxu0 %v4705
  %v5197 = vpop.f32.mrb[0].mxu0
  %v5198 = vadd.f32 %v3467, %v5197
  %v5199 = vpop.f32.mrb[0].mxu0
  %v5200 = vpop.f32.mrb[0].mxu0
  %v5201 = vadd.f32 %v3472, %v5200
  %v5202 = vpop.f32.mrb[0].mxu0
  %5203 = vmatprep.mubr.bf16.mxu0 0
  %5204 = vmatmul.mubr.bf16.gmra.mrb[0].mxu0 %v4708
  %v5205 = vpop.f32.mrb[0].mxu0
  %v5206 = vadd.f32 %v3477, %v5205
  %v5207 = vpop.f32.mrb[0].mxu0
  %v5208 = vpop.f32.mrb[0].mxu0
  %v5209 = vadd.f32 %v3482, %v5208
  %v5210 = vpop.f32.mrb[0].mxu0
  %5211 = vmatprep.mubr.bf16.mxu0 0
  %5212 = vmatmul.mubr.bf16.gmra.mrb[0].mxu0 %v4711
  %v5213 = vpop.f32.mrb[0].mxu0
  %v5214 = vadd.f32 %v3487, %v5213
  %v5215 = vpop.f32.mrb[0].mxu0
  %v5216 = vpop.f32.mrb[0].mxu0
  %v5217 = vadd.f32 %v3492, %v5216
  %v5218 = vpop.f32.mrb[0].mxu0
  %5219 = vmatprep.mubr.bf16.mxu0 0
  %5220 = vmatmul.mubr.bf16.gmra.mrb[0].mxu0 %v4714
  %v5221 = vpop.f32.mrb[0].mxu0
  %v5222 = vadd.f32 %v3497, %v5221
  %v5223 = vpop.f32.mrb[0].mxu0
  %v5224 = vpop.f32.mrb[0].mxu0
  %v5225 = vadd.f32 %v3502, %v5224
  %v5226 = vpop.f32.mrb[0].mxu0
  %5227 = vmatprep.mubr.bf16.mxu0 0
  %5228 = vmatmul.mubr.bf16.gmra.mrb[0].mxu0 %v4717
  %v5229 = vpop.f32.mrb[0].mxu0
  %v5230 = vadd.f32 %v3507, %v5229
  %v5231 = vpop.f32.mrb[0].mxu0
  %v5232 = vpop.f32.mrb[0].mxu0
  %v5233 = vadd.f32 %v3512, %v5232
  %v5234 = vpop.f32.mrb[0].mxu0
  %5235 = vmatprep.mubr.bf16.mxu0 0
  %5236 = vmatmul.mubr.bf16.gmra.mrb[0].mxu0 %v4720
  %v5237 = vpop.f32.mrb[0].mxu0
  %v5238 = vadd.f32 %v3517, %v5237
  %v5239 = vpop.f32.mrb[0].mxu0
  %v5240 = vpop.f32.mrb[0].mxu0
  %v5241 = vadd.f32 %v3522, %v5240
  %v5242 = vpop.f32.mrb[0].mxu0
  %5243 = vmatprep.mubr.bf16.mxu0 0
  %5244 = vmatmul.mubr.bf16.gmra.mrb[0].mxu0 %v4723
  %v5245 = vpop.f32.mrb[0].mxu0
  %v5246 = vadd.f32 %v3527, %v5245
  %v5247 = vpop.f32.mrb[0].mxu0
  %v5248 = vpop.f32.mrb[0].mxu0
  %v5249 = vadd.f32 %v3532, %v5248
  %v5250 = vpop.f32.mrb[0].mxu0
  %5251 = vmatprep.mubr.bf16.mxu0 0
  %5252 = vmatmul.mubr.bf16.gmra.mrb[0].mxu0 %v4726
  %v5253 = vpop.f32.mrb[0].mxu0
  %v5254 = vadd.f32 %v3537, %v5253
  %v5255 = vpop.f32.mrb[0].mxu0
  %v5256 = vpop.f32.mrb[0].mxu0
  %v5257 = vadd.f32 %v3542, %v5256
  %v5258 = vpop.f32.mrb[0].mxu0
  %5259 = vmatprep.mubr.bf16.mxu0 0
  %5260 = vmatmul.mubr.bf16.gmra.mrb[0].mxu0 %v4729
  %v5261 = vpop.f32.mrb[0].mxu0
  %v5262 = vadd.f32 %v3547, %v5261
  %v5263 = vpop.f32.mrb[0].mxu0
  %v5264 = vpop.f32.mrb[0].mxu0
  %v5265 = vadd.f32 %v3552, %v5264
  %v5266 = vpop.f32.mrb[0].mxu0
  %5267 = vmatprep.mubr.bf16.mxu0 0
  %5268 = vmatmul.mubr.bf16.gmra.mrb[0].mxu0 %v4732
  %v5269 = vpop.f32.mrb[0].mxu0
  %v5270 = vadd.f32 %v3557, %v5269
  %v5271 = vpop.f32.mrb[0].mxu0
  %v5272 = vpop.f32.mrb[0].mxu0
  %v5273 = vadd.f32 %v3562, %v5272
  %v5274 = vpop.f32.mrb[0].mxu0
  %5275 = vmatprep.mubr.bf16.mxu0 0
  %5276 = vmatmul.mubr.bf16.gmra.mrb[0].mxu0 %v4735
  %v5277 = vpop.f32.mrb[0].mxu0
  %v5278 = vadd.f32 %v3567, %v5277
  %v5279 = vpop.f32.mrb[0].mxu0
  %v5280 = vpop.f32.mrb[0].mxu0
  %v5281 = vadd.f32 %v3572, %v5280
  %v5282 = vpop.f32.mrb[0].mxu0
  %5283 = vmatprep.mubr.bf16.mxu0 0
  %5284 = vmatmul.mubr.bf16.gmra.mrb[0].mxu0 %v4738
  %v5285 = vpop.f32.mrb[0].mxu0
  %v5286 = vadd.f32 %v3577, %v5285
  %v5287 = vpop.f32.mrb[0].mxu0
  %v5288 = vpop.f32.mrb[0].mxu0
  %v5289 = vadd.f32 %v3582, %v5288
  %v5290 = vpop.f32.mrb[0].mxu0
  %5291 = vmatprep.mubr.bf16.mxu0 0
  %5292 = vmatmul.mubr.bf16.gmra.mrb[0].mxu0 %v4741
  %v5293 = vpop.f32.mrb[0].mxu0
  %v5294 = vadd.f32 %v3587, %v5293
  %v5295 = vpop.f32.mrb[0].mxu0
  %v5296 = vpop.f32.mrb[0].mxu0
  %v5297 = vadd.f32 %v3592, %v5296
  %v5298 = vpop.f32.mrb[0].mxu0
  %5299 = vmatprep.mubr.bf16.mxu0 0
  %5300 = vmatmul.mubr.bf16.gmra.mrb[0].mxu0 %v4744
  %v5301 = vpop.f32.mrb[0].mxu0
  %v5302 = vadd.f32 %v3597, %v5301
  %v5303 = vpop.f32.mrb[0].mxu0
  %v5304 = vpop.f32.mrb[0].mxu0
  %v5305 = vadd.f32 %v3602, %v5304
  %v5306 = vpop.f32.mrb[0].mxu0
  %5307 = vmatprep.mubr.bf16.mxu0 0
  %5308 = vmatmul.mubr.bf16.gmra.mrb[0].mxu0 %v4747
  %v5309 = vpop.f32.mrb[0].mxu0
  %v5310 = vadd.f32 %v3607, %v5309
  %v5311 = vpop.f32.mrb[0].mxu0
  %v5312 = vpop.f32.mrb[0].mxu0
  %v5313 = vadd.f32 %v3612, %v5312
  %v5314 = vpop.f32.mrb[0].mxu0
  %5315 = vmatprep.mubr.bf16.mxu0 0
  %5316 = vmatmul.mubr.bf16.gmra.mrb[0].mxu0 %v4750
  %v5317 = vpop.f32.mrb[0].mxu0
  %v5318 = vadd.f32 %v3617, %v5317
  %v5319 = vpop.f32.mrb[0].mxu0
  %v5320 = vpop.f32.mrb[0].mxu0
  %v5321 = vadd.f32 %v3622, %v5320
  %v5322 = vpop.f32.mrb[0].mxu0
  %5323 = vmatprep.mubr.bf16.mxu0 0
  %5324 = vmatmul.mubr.bf16.gmra.mrb[0].mxu0 %v4753
  %v5325 = vpop.f32.mrb[0].mxu0
  %v5326 = vadd.f32 %v3627, %v5325
  %v5327 = vpop.f32.mrb[0].mxu0
  %v5328 = vpop.f32.mrb[0].mxu0
  %v5329 = vadd.f32 %v3632, %v5328
  %v5330 = vpop.f32.mrb[0].mxu0
  %5331 = vmatprep.mubr.bf16.mxu0 0
  %5332 = vmatmul.mubr.bf16.gmra.mrb[0].mxu0 %v4756
  %v5333 = vpop.f32.mrb[0].mxu0
  %v5334 = vadd.f32 %v3637, %v5333
  %v5335 = vpop.f32.mrb[0].mxu0
  %v5336 = vpop.f32.mrb[0].mxu0
  %v5337 = vadd.f32 %v3642, %v5336
  %v5338 = vpop.f32.mrb[0].mxu0
  %5339 = vmatprep.mubr.bf16.mxu0 0
  %5340 = vmatmul.mubr.bf16.gmra.mrb[0].mxu0 %v4759
  %v5341 = vpop.f32.mrb[0].mxu0
  %v5342 = vadd.f32 %v3647, %v5341
  %v5343 = vpop.f32.mrb[0].mxu0
  %v5344 = vpop.f32.mrb[0].mxu0
  %v5345 = vadd.f32 %v3652, %v5344
  %v5346 = vpop.f32.mrb[0].mxu0
  %5347 = vmatprep.mubr.bf16.mxu0 0
  %5348 = vmatmul.mubr.bf16.gmra.mrb[0].mxu0 %v4762
  %v5349 = vpop.f32.mrb[0].mxu0
  %v5350 = vadd.f32 %v3657, %v5349
  %v5351 = vpop.f32.mrb[0].mxu0
  %v5352 = vpop.f32.mrb[0].mxu0
  %v5353 = vadd.f32 %v3662, %v5352
  %v5354 = vpop.f32.mrb[0].mxu0
  %5355 = vmatprep.mubr.bf16.mxu0 0
  %5356 = vmatmul.mubr.bf16.gmra.mrb[0].mxu0 %v4765
  %v5357 = vpop.f32.mrb[0].mxu0
  %v5358 = vadd.f32 %v3667, %v5357
  %v5359 = vpop.f32.mrb[0].mxu0
  %v5360 = vpop.f32.mrb[0].mxu0
  %v5361 = vadd.f32 %v3672, %v5360
  %v5362 = vpop.f32.mrb[0].mxu0
  %5363 = vmatprep.mubr.bf16.mxu0 0
  %5364 = vmatmul.mubr.bf16.gmra.mrb[0].mxu0 %v4768
  %v5365 = vpop.f32.mrb[0].mxu0
  %v5366 = vadd.f32 %v3677, %v5365
  %v5367 = vpop.f32.mrb[0].mxu0
  %v5368 = vpop.f32.mrb[0].mxu0
  %v5369 = vadd.f32 %v3682, %v5368
  %v5370 = vpop.f32.mrb[0].mxu0
  %5371 = vmatprep.mubr.bf16.mxu0 0
  %5372 = vmatmul.mubr.bf16.gmra.mrb[0].mxu0 %v4771
  %v5373 = vpop.f32.mrb[0].mxu0
  %v5374 = vadd.f32 %v3687, %v5373
  %v5375 = vpop.f32.mrb[0].mxu0
  %v5376 = vpop.f32.mrb[0].mxu0
  %v5377 = vadd.f32 %v3692, %v5376
  %v5378 = vpop.f32.mrb[0].mxu0
  %5379 = vmatprep.mubr.bf16.mxu0 0
  %5380 = vmatmul.mubr.bf16.gmra.mrb[0].mxu0 %v4774
  %v5381 = vpop.f32.mrb[0].mxu0
  %v5382 = vadd.f32 %v3697, %v5381
  %v5383 = vpop.f32.mrb[0].mxu0
  %v5384 = vpop.f32.mrb[0].mxu0
  %v5385 = vadd.f32 %v3702, %v5384
  %v5386 = vpop.f32.mrb[0].mxu0
  %5387 = vmatprep.mubr.bf16.mxu0 0
  %5388 = vmatmul.mubr.bf16.gmra.mrb[0].mxu0 %v4777
  %v5389 = vpop.f32.mrb[0].mxu0
  %v5390 = vadd.f32 %v3707, %v5389
  %v5391 = vpop.f32.mrb[0].mxu0
  %v5392 = vpop.f32.mrb[0].mxu0
  %v5393 = vadd.f32 %v3712, %v5392
  %v5394 = vpop.f32.mrb[0].mxu0
  %5395 = vmatprep.mubr.bf16.mxu0 0
  %5396 = vmatmul.mubr.bf16.gmra.mrb[0].mxu0 %v4780
  %v5397 = vpop.f32.mrb[0].mxu0
  %v5398 = vadd.f32 %v3717, %v5397
  %v5399 = vpop.f32.mrb[0].mxu0
  %v5400 = vpop.f32.mrb[0].mxu0
  %v5401 = vadd.f32 %v3722, %v5400
  %v5402 = vpop.f32.mrb[0].mxu0
  %5403 = vmatprep.mubr.bf16.mxu0 0
  %5404 = vmatmul.mubr.bf16.gmra.mrb[0].mxu0 %v4783
  %v5405 = vpop.f32.mrb[0].mxu0
  %v5406 = vadd.f32 %v3727, %v5405
  %v5407 = vpop.f32.mrb[0].mxu0
  %v5408 = vpop.f32.mrb[0].mxu0
  %v5409 = vadd.f32 %v3732, %v5408
  %v5410 = vpop.f32.mrb[0].mxu0
  %5411 = vmatprep.mubr.bf16.mxu0 0
  %5412 = vmatmul.mubr.bf16.gmra.mrb[0].mxu0 %v4786
  %v5413 = vpop.f32.mrb[0].mxu0
  %v5414 = vadd.f32 %v3737, %v5413
  %v5415 = vpop.f32.mrb[0].mxu0
  %v5416 = vpop.f32.mrb[0].mxu0
  %v5417 = vadd.f32 %v3742, %v5416
  %v5418 = vpop.f32.mrb[0].mxu0
  %5419 = vmatprep.mubr.bf16.mxu0 0
  %5420 = vmatmul.mubr.bf16.gmra.mrb[0].mxu0 %v4789
  %v5421 = vpop.f32.mrb[0].mxu0
  %v5422 = vadd.f32 %v3747, %v5421
  %v5423 = vpop.f32.mrb[0].mxu0
  %v5424 = vpop.f32.mrb[0].mxu0
  %v5425 = vadd.f32 %v3752, %v5424
  %v5426 = vpop.f32.mrb[0].mxu0
  %5427 = vmatprep.mubr.bf16.mxu0 0
  %5428 = vmatmul.mubr.bf16.gmra.mrb[0].mxu0 %v4792
  %v5429 = vpop.f32.mrb[0].mxu0
  %v5430 = vadd.f32 %v3757, %v5429
  %v5431 = vpop.f32.mrb[0].mxu0
  %v5432 = vpop.f32.mrb[0].mxu0
  %v5433 = vadd.f32 %v3762, %v5432
  %v5434 = vpop.f32.mrb[0].mxu0
  %5435 = vmatprep.mubr.bf16.mxu0 0
  %5436 = vmatmul.mubr.bf16.gmra.mrb[0].mxu0 %v4795
  %v5437 = vpop.f32.mrb[0].mxu0
  %v5438 = vadd.f32 %v3767, %v5437
  %v5439 = vpop.f32.mrb[0].mxu0
  %v5440 = vpop.f32.mrb[0].mxu0
  %v5441 = vadd.f32 %v3772, %v5440
  %v5442 = vpop.f32.mrb[0].mxu0
  %5443 = vmatprep.mubr.bf16.mxu0 0
  %5444 = vmatmul.mubr.bf16.gmra.mrb[0].mxu0 %v4798
  %v5445 = vpop.f32.mrb[0].mxu0
  %v5446 = vadd.f32 %v3777, %v5445
  %v5447 = vpop.f32.mrb[0].mxu0
  %v5448 = vpop.f32.mrb[0].mxu0
  %v5449 = vadd.f32 %v3782, %v5448
  %v5450 = vpop.f32.mrb[0].mxu0
  %5451 = vmatprep.mubr.bf16.mxu0 0
  %5452 = vmatmul.mubr.bf16.gmra.mrb[0].mxu0 %v4801
  %v5453 = vpop.f32.mrb[0].mxu0
  %v5454 = vadd.f32 %v3787, %v5453
  %v5455 = vpop.f32.mrb[0].mxu0
  %v5456 = vpop.f32.mrb[0].mxu0
  %v5457 = vadd.f32 %v3792, %v5456
  %v5458 = vpop.f32.mrb[0].mxu0
  %5459 = vmatprep.mubr.bf16.mxu0 0
  %5460 = vmatmul.mubr.bf16.gmra.mrb[0].mxu0 %v4804
  %v5461 = vpop.f32.mrb[0].mxu0
  %v5462 = vadd.f32 %v3797, %v5461
  %v5463 = vpop.f32.mrb[0].mxu0
  %v5464 = vpop.f32.mrb[0].mxu0
  %v5465 = vadd.f32 %v3802, %v5464
  %v5466 = vpop.f32.mrb[0].mxu0
  %5467 = vmatprep.mubr.bf16.mxu0 0
  %5468 = vmatmul.mubr.bf16.gmra.mrb[0].mxu0 %v4807
  %v5469 = vpop.f32.mrb[0].mxu0
  %v5470 = vadd.f32 %v3807, %v5469
  %v5471 = vpop.f32.mrb[0].mxu0
  %v5472 = vpop.f32.mrb[0].mxu0
  %v5473 = vadd.f32 %v3812, %v5472
  %v5474 = vpop.f32.mrb[0].mxu0
  %5475 = vmatprep.mubr.bf16.mxu0 0
  %5476 = vmatmul.mubr.bf16.gmra.mrb[0].mxu0 %v4810
  %v5477 = vpop.f32.mrb[0].mxu0
  %v5478 = vadd.f32 %v3817, %v5477
  %v5479 = vpop.f32.mrb[0].mxu0
  %v5480 = vpop.f32.mrb[0].mxu0
  %v5481 = vadd.f32 %v3822, %v5480
  %v5482 = vpop.f32.mrb[0].mxu0
  %5483 = vmatprep.mubr.bf16.mxu0 0
  %5484 = vmatmul.mubr.bf16.gmra.mrb[0].mxu0 %v4813
  %v5485 = vpop.f32.mrb[0].mxu0
  %v5486 = vadd.f32 %v3827, %v5485
  %v5487 = vpop.f32.mrb[0].mxu0
  %v5488 = vpop.f32.mrb[0].mxu0
  %v5489 = vadd.f32 %v3832, %v5488
  %v5490 = vpop.f32.mrb[0].mxu0
  %5491 = vmatprep.mubr.bf16.mxu0 0
  %5492 = vmatmul.mubr.bf16.gmra.mrb[0].mxu0 %v4816
  %v5493 = vpop.f32.mrb[0].mxu0
  %v5494 = vadd.f32 %v3837, %v5493
  %v5495 = vpop.f32.mrb[0].mxu0
  %v5496 = vpop.f32.mrb[0].mxu0
  %v5497 = vadd.f32 %v3842, %v5496
  %v5498 = vpop.f32.mrb[0].mxu0
  %5499 = vmatprep.mubr.bf16.mxu0 0
  %5500 = vmatmul.mubr.bf16.gmra.mrb[0].mxu0 %v4819
  %v5501 = vpop.f32.mrb[0].mxu0
  %v5502 = vadd.f32 %v3847, %v5501
  %v5503 = vpop.f32.mrb[0].mxu0
  %v5504 = vpop.f32.mrb[0].mxu0
  %v5505 = vadd.f32 %v3852, %v5504
  %v5506 = vpop.f32.mrb[0].mxu0
  %5507 = vmatprep.mubr.bf16.mxu0 0
  %5508 = vmatmul.mubr.bf16.gmra.mrb[0].mxu0 %v4822
  %v5509 = vpop.f32.mrb[0].mxu0
  %v5510 = vadd.f32 %v3857, %v5509
  %v5511 = vpop.f32.mrb[0].mxu0
  %v5512 = vpop.f32.mrb[0].mxu0
  %v5513 = vadd.f32 %v3862, %v5512
  %v5514 = vpop.f32.mrb[0].mxu0
  %5515 = vmatprep.mubr.bf16.mxu0 0
  %5516 = vmatmul.mubr.bf16.gmra.mrb[0].mxu0 %v4825
  %v5517 = vpop.f32.mrb[0].mxu0
  %v5518 = vadd.f32 %v3867, %v5517
  %v5519 = vpop.f32.mrb[0].mxu0
  %v5520 = vpop.f32.mrb[0].mxu0
  %v5521 = vadd.f32 %v3872, %v5520
  %v5522 = vpop.f32.mrb[0].mxu0
  %5523 = vmatprep.mubr.bf16.mxu0 0
  %5524 = vmatmul.mubr.bf16.gmra.mrb[0].mxu0 %v4828
  %v5525 = vpop.f32.mrb[0].mxu0
  %v5526 = vadd.f32 %v3877, %v5525
  %v5527 = vpop.f32.mrb[0].mxu0
  %v5528 = vpop.f32.mrb[0].mxu0
  %v5529 = vadd.f32 %v3882, %v5528
  %v5530 = vpop.f32.mrb[0].mxu0
  %5531 = vmatprep.mubr.bf16.mxu0 0
  %5532 = vmatmul.mubr.bf16.gmra.mrb[0].mxu0 %v4831
  %v5533 = vpop.f32.mrb[0].mxu0
  %v5534 = vadd.f32 %v3887, %v5533
  %v5535 = vpop.f32.mrb[0].mxu0
  %v5536 = vpop.f32.mrb[0].mxu0
  %v5537 = vadd.f32 %v3892, %v5536
  %v5538 = vpop.f32.mrb[0].mxu0
  %5539 = vmatprep.mubr.bf16.mxu0 0
  %5540 = vmatmul.mubr.bf16.gmra.mrb[0].mxu0 %v4834
  %v5541 = vpop.f32.mrb[0].mxu0
  %v5542 = vadd.f32 %v3897, %v5541
  %v5543 = vpop.f32.mrb[0].mxu0
  %v5544 = vpop.f32.mrb[0].mxu0
  %v5545 = vadd.f32 %v3902, %v5544
  %v5546 = vpop.f32.mrb[0].mxu0
  %5547 = vmatprep.mubr.bf16.mxu0 0
  %5548 = vmatmul.mubr.bf16.gmra.mrb[0].mxu0 %v4837
  %v5549 = vpop.f32.mrb[0].mxu0
  %v5550 = vadd.f32 %v3907, %v5549
  %v5551 = vpop.f32.mrb[0].mxu0
  %v5552 = vpop.f32.mrb[0].mxu0
  %v5553 = vadd.f32 %v3912, %v5552
  %v5554 = vpop.f32.mrb[0].mxu0
  %5555 = vmatprep.mubr.bf16.mxu0 0
  %5556 = vmatmul.mubr.bf16.gmra.mrb[0].mxu0 %v4840
  %v5557 = vpop.f32.mrb[0].mxu0
  %v5558 = vadd.f32 %v3917, %v5557
  %v5559 = vpop.f32.mrb[0].mxu0
  %v5560 = vpop.f32.mrb[0].mxu0
  %v5561 = vadd.f32 %v3922, %v5560
  %v5562 = vpop.f32.mrb[0].mxu0
  %5563 = vmatprep.mubr.bf16.mxu0 0
  %5564 = vmatmul.mubr.bf16.gmra.mrb[0].mxu0 %v4843
  %v5565 = vpop.f32.mrb[0].mxu0
  %v5566 = vadd.f32 %v3927, %v5565
  %v5567 = vpop.f32.mrb[0].mxu0
  %v5568 = vpop.f32.mrb[0].mxu0
  %v5569 = vadd.f32 %v3932, %v5568
  %v5570 = vpop.f32.mrb[0].mxu0
  %5571 = vmatprep.mubr.bf16.mxu0 0
  %5572 = vmatmul.mubr.bf16.gmra.mrb[0].mxu0 %v4846
  %v5573 = vpop.f32.mrb[0].mxu0
  %v5574 = vadd.f32 %v3937, %v5573
  %v5575 = vpop.f32.mrb[0].mxu0
  %v5576 = vpop.f32.mrb[0].mxu0
  %v5577 = vadd.f32 %v3942, %v5576
  %v5578 = vpop.f32.mrb[0].mxu0
  %5579 = vmatprep.mubr.bf16.mxu0 0
  %5580 = vmatmul.mubr.bf16.gmra.mrb[0].mxu0 %v4849
  %v5581 = vpop.f32.mrb[0].mxu0
  %v5582 = vadd.f32 %v3947, %v5581
  %v5583 = vpop.f32.mrb[0].mxu0
  %v5584 = vpop.f32.mrb[0].mxu0
  %v5585 = vadd.f32 %v3952, %v5584
  %v5586 = vpop.f32.mrb[0].mxu0
  %5587 = vmatprep.mubr.bf16.mxu0 0
  %5588 = vmatmul.mubr.bf16.gmra.mrb[0].mxu0 %v4852
  %v5589 = vpop.f32.mrb[0].mxu0
  %v5590 = vadd.f32 %v3957, %v5589
  %v5591 = vpop.f32.mrb[0].mxu0
  %v5592 = vpop.f32.mrb[0].mxu0
  %v5593 = vadd.f32 %v3962, %v5592
  %v5594 = vpop.f32.mrb[0].mxu0
  %5595 = vmatprep.mubr.bf16.mxu0 0
  %5596 = vmatmul.mubr.bf16.gmra.mrb[0].mxu0 %v4855
  %v5597 = vpop.f32.mrb[0].mxu0
  %v5598 = vadd.f32 %v3967, %v5597
  %v5599 = vpop.f32.mrb[0].mxu0
  %v5600 = vpop.f32.mrb[0].mxu0
  %v5601 = vadd.f32 %v3972, %v5600
  %v5602 = vpop.f32.mrb[0].mxu0
  %5603 = vmatprep.mubr.bf16.mxu0 0
  %5604 = vmatmul.mubr.bf16.gmra.mrb[0].mxu0 %v4858
  %v5605 = vpop.f32.mrb[0].mxu0
  %v5606 = vadd.f32 %v3977, %v5605
  %v5607 = vpop.f32.mrb[0].mxu0
  %v5608 = vpop.f32.mrb[0].mxu0
  %v5609 = vadd.f32 %v3982, %v5608
  %v5610 = vpop.f32.mrb[0].mxu0
  %5611 = vmatprep.mubr.bf16.mxu0 0
  %5612 = vmatmul.mubr.bf16.gmra.mrb[0].mxu0 %v4861
  %v5613 = vpop.f32.mrb[0].mxu0
  %v5614 = vadd.f32 %v3987, %v5613
  %v5615 = vpop.f32.mrb[0].mxu0
  %v5616 = vpop.f32.mrb[0].mxu0
  %v5617 = vadd.f32 %v3992, %v5616
  %v5618 = vpop.f32.mrb[0].mxu0
  %5619 = vmatprep.mubr.bf16.mxu0 0
  %5620 = vmatmul.mubr.bf16.gmra.mrb[0].mxu0 %v4864
  %v5621 = vpop.f32.mrb[0].mxu0
  %v5622 = vadd.f32 %v3997, %v5621
  %v5623 = vpop.f32.mrb[0].mxu0
  %v5624 = vpop.f32.mrb[0].mxu0
  %v5625 = vadd.f32 %v4002, %v5624
  %v5626 = vpop.f32.mrb[0].mxu0
  %5627 = vmatprep.mubr.bf16.mxu0 0
  %5628 = vmatmul.mubr.bf16.gmra.mrb[0].mxu0 %v4867
  %v5629 = vpop.f32.mrb[0].mxu0
  %v5630 = vadd.f32 %v4007, %v5629
  %v5631 = vpop.f32.mrb[0].mxu0
  %v5632 = vpop.f32.mrb[0].mxu0
  %v5633 = vadd.f32 %v4012, %v5632
  %v5634 = vpop.f32.mrb[0].mxu0
  %5635 = vmatprep.mubr.bf16.mxu0 0
  %5636 = vmatmul.mubr.bf16.gmra.mrb[0].mxu0 %v4870
  %v5637 = vpop.f32.mrb[0].mxu0
  %v5638 = vadd.f32 %v4017, %v5637
  %v5639 = vpop.f32.mrb[0].mxu0
  %v5640 = vpop.f32.mrb[0].mxu0
  %v5641 = vadd.f32 %v4022, %v5640
  %v5642 = vpop.f32.mrb[0].mxu0
  %5643 = vmatprep.mubr.bf16.mxu0 0
  %5644 = vmatmul.mubr.bf16.gmra.mrb[0].mxu0 %v4873
  %v5645 = vpop.f32.mrb[0].mxu0
  %v5646 = vadd.f32 %v4027, %v5645
  %v5647 = vpop.f32.mrb[0].mxu0
  %v5648 = vpop.f32.mrb[0].mxu0
  %v5649 = vadd.f32 %v4032, %v5648
  %v5650 = vpop.f32.mrb[0].mxu0
  %5651 = vmatprep.mubr.bf16.mxu0 0
  %5652 = vmatmul.mubr.bf16.gmra.mrb[0].mxu0 %v4876
  %v5653 = vpop.f32.mrb[0].mxu0
  %v5654 = vadd.f32 %v4037, %v5653
  %v5655 = vpop.f32.mrb[0].mxu0
  %v5656 = vpop.f32.mrb[0].mxu0
  %v5657 = vadd.f32 %v4042, %v5656
  %v5658 = vpop.f32.mrb[0].mxu0
  %5659 = vmatprep.mubr.bf16.mxu0 0
  %5660 = vmatmul.mubr.bf16.gmra.mrb[0].mxu0 %v4879
  %v5661 = vpop.f32.mrb[0].mxu0
  %v5662 = vadd.f32 %v4047, %v5661
  %v5663 = vpop.f32.mrb[0].mxu0
  %v5664 = vpop.f32.mrb[0].mxu0
  %v5665 = vadd.f32 %v4052, %v5664
  %v5666 = vpop.f32.mrb[0].mxu0
  %5667 = vmatprep.mubr.bf16.mxu0 0
  %5668 = vmatmul.mubr.bf16.gmra.mrb[0].mxu0 %v4882
  %v5669 = vpop.f32.mrb[0].mxu0
  %v5670 = vadd.f32 %v4057, %v5669
  %v5671 = vpop.f32.mrb[0].mxu0
  %v5672 = vpop.f32.mrb[0].mxu0
  %v5673 = vadd.f32 %v4062, %v5672
  %v5674 = vpop.f32.mrb[0].mxu0
  %5675 = vmatprep.mubr.bf16.mxu0 0
  %5676 = vmatmul.mubr.bf16.gmra.mrb[0].mxu0 %v4885
  %v5677 = vpop.f32.mrb[0].mxu0
  %v5678 = vadd.f32 %v4067, %v5677
  %v5679 = vpop.f32.mrb[0].mxu0
  %v5680 = vpop.f32.mrb[0].mxu0
  %v5681 = vadd.f32 %v4072, %v5680
  %v5682 = vpop.f32.mrb[0].mxu0
  %5683 = vmatprep.mubr.bf16.mxu0 0
  %5684 = vmatmul.mubr.bf16.gmra.mrb[0].mxu0 %v4888
  %v5685 = vpop.f32.mrb[0].mxu0
  %v5686 = vadd.f32 %v4077, %v5685
  %v5687 = vpop.f32.mrb[0].mxu0
  %v5688 = vpop.f32.mrb[0].mxu0
  %v5689 = vadd.f32 %v4082, %v5688
  %v5690 = vpop.f32.mrb[0].mxu0
  %5691 = vmatprep.mubr.bf16.mxu0 0
  %5692 = vmatmul.mubr.bf16.gmra.mrb[0].mxu0 %v4891
  %v5693 = vpop.f32.mrb[0].mxu0
  %v5694 = vadd.f32 %v4087, %v5693
  %v5695 = vpop.f32.mrb[0].mxu0
  %v5696 = vpop.f32.mrb[0].mxu0
  %v5697 = vadd.f32 %v4092, %v5696
  %v5698 = vpop.f32.mrb[0].mxu0
  %5699 = vmatprep.mubr.bf16.mxu0 0
  %5700 = vmatmul.mubr.bf16.gmra.mrb[0].mxu0 %v4894
  %v5701 = vpop.f32.mrb[0].mxu0
  %v5702 = vadd.f32 %v4097, %v5701
  %v5703 = vpop.f32.mrb[0].mxu0
  %v5704 = vpop.f32.mrb[0].mxu0
  %v5705 = vadd.f32 %v4102, %v5704
  %v5706 = vpop.f32.mrb[0].mxu0
  %5707 = vmatprep.mubr.bf16.mxu0 0
  %5708 = vmatmul.mubr.bf16.gmra.mrb[0].mxu0 %v4897
  %v5709 = vpop.f32.mrb[0].mxu0
  %v5710 = vadd.f32 %v4107, %v5709
  %v5711 = vpop.f32.mrb[0].mxu0
  %v5712 = vpop.f32.mrb[0].mxu0
  %v5713 = vadd.f32 %v4112, %v5712
  %v5714 = vpop.f32.mrb[0].mxu0
  %5715 = vdwg.mxu0
  %v5716 = vmax.f32 %v4934, 0.0
  %v5717 = vmax.f32 %v4937, 0.0
  %v5718 = vmax.f32 %v4942, 0.0
  %v5719 = vmax.f32 %v4945, 0.0
  %v5720 = vmax.f32 %v4950, 0.0
  %v5721 = vmax.f32 %v4953, 0.0
  %v5722 = vmax.f32 %v4958, 0.0
  %v5723 = vmax.f32 %v4961, 0.0
  %v5724 = vmax.f32 %v4966, 0.0
  %v5725 = vmax.f32 %v4969, 0.0
  %v5726 = vmax.f32 %v4974, 0.0
  %v5727 = vmax.f32 %v4977, 0.0
  %v5728 = vmax.f32 %v4982, 0.0
  %v5729 = vmax.f32 %v4985, 0.0
  %v5730 = vmax.f32 %v4990, 0.0
  %v5731 = vmax.f32 %v4993, 0.0
  %v5732 = vmax.f32 %v4998, 0.0
  %v5733 = vmax.f32 %v5001, 0.0
  %v5734 = vmax.f32 %v5006, 0.0
  %v5735 = vmax.f32 %v5009, 0.0
  %v5736 = vmax.f32 %v5014, 0.0
  %v5737 = vmax.f32 %v5017, 0.0
  %v5738 = vmax.f32 %v5022, 0.0
  %v5739 = vmax.f32 %v5025, 0.0
  %v5740 = vmax.f32 %v5030, 0.0
  %v5741 = vmax.f32 %v5033, 0.0
  %v5742 = vmax.f32 %v5038, 0.0
  %v5743 = vmax.f32 %v5041, 0.0
  %v5744 = vmax.f32 %v5046, 0.0
  %v5745 = vmax.f32 %v5049, 0.0
  %v5746 = vmax.f32 %v5054, 0.0
  %v5747 = vmax.f32 %v5057, 0.0
  %v5748 = vmax.f32 %v5062, 0.0
  %v5749 = vmax.f32 %v5065, 0.0
  %v5750 = vmax.f32 %v5070, 0.0
  %v5751 = vmax.f32 %v5073, 0.0
  %v5752 = vmax.f32 %v5078, 0.0
  %v5753 = vmax.f32 %v5081, 0.0
  %v5754 = vmax.f32 %v5086, 0.0
  %v5755 = vmax.f32 %v5089, 0.0
  %v5756 = vmax.f32 %v5094, 0.0
  %v5757 = vmax.f32 %v5097, 0.0
  %v5758 = vmax.f32 %v5102, 0.0
  %v5759 = vmax.f32 %v5105, 0.0
  %v5760 = vmax.f32 %v5110, 0.0
  %v5761 = vmax.f32 %v5113, 0.0
  %v5762 = vmax.f32 %v5118, 0.0
  %v5763 = vmax.f32 %v5121, 0.0
  %v5764 = vmax.f32 %v5126, 0.0
  %v5765 = vmax.f32 %v5129, 0.0
  %v5766 = vmax.f32 %v5134, 0.0
  %v5767 = vmax.f32 %v5137, 0.0
  %v5768 = vmax.f32 %v5142, 0.0
  %v5769 = vmax.f32 %v5145, 0.0
  %v5770 = vmax.f32 %v5150, 0.0
  %v5771 = vmax.f32 %v5153, 0.0
  %v5772 = vmax.f32 %v5158, 0.0
  %v5773 = vmax.f32 %v5161, 0.0
  %v5774 = vmax.f32 %v5166, 0.0
  %v5775 = vmax.f32 %v5169, 0.0
  %v5776 = vmax.f32 %v5174, 0.0
  %v5777 = vmax.f32 %v5177, 0.0
  %v5778 = vmax.f32 %v5182, 0.0
  %v5779 = vmax.f32 %v5185, 0.0
  %v5780 = vmax.f32 %v5190, 0.0
  %v5781 = vmax.f32 %v5193, 0.0
  %v5782 = vmax.f32 %v5198, 0.0
  %v5783 = vmax.f32 %v5201, 0.0
  %v5784 = vmax.f32 %v5206, 0.0
  %v5785 = vmax.f32 %v5209, 0.0
  %v5786 = vmax.f32 %v5214, 0.0
  %v5787 = vmax.f32 %v5217, 0.0
  %v5788 = vmax.f32 %v5222, 0.0
  %v5789 = vmax.f32 %v5225, 0.0
  %v5790 = vmax.f32 %v5230, 0.0
  %v5791 = vmax.f32 %v5233, 0.0
  %v5792 = vmax.f32 %v5238, 0.0
  %v5793 = vmax.f32 %v5241, 0.0
  %v5794 = vmax.f32 %v5246, 0.0
  %v5795 = vmax.f32 %v5249, 0.0
  %v5796 = vmax.f32 %v5254, 0.0
  %v5797 = vmax.f32 %v5257, 0.0
  %v5798 = vmax.f32 %v5262, 0.0
  %v5799 = vmax.f32 %v5265, 0.0
  %v5800 = vmax.f32 %v5270, 0.0
  %v5801 = vmax.f32 %v5273, 0.0
  %v5802 = vmax.f32 %v5278, 0.0
  %v5803 = vmax.f32 %v5281, 0.0
  %v5804 = vmax.f32 %v5286, 0.0
  %v5805 = vmax.f32 %v5289, 0.0
  %v5806 = vmax.f32 %v5294, 0.0
  %v5807 = vmax.f32 %v5297, 0.0
  %v5808 = vmax.f32 %v5302, 0.0
  %v5809 = vmax.f32 %v5305, 0.0
  %v5810 = vmax.f32 %v5310, 0.0
  %v5811 = vmax.f32 %v5313, 0.0
  %v5812 = vmax.f32 %v5318, 0.0
  %v5813 = vmax.f32 %v5321, 0.0
  %v5814 = vmax.f32 %v5326, 0.0
  %v5815 = vmax.f32 %v5329, 0.0
  %v5816 = vmax.f32 %v5334, 0.0
  %v5817 = vmax.f32 %v5337, 0.0
  %v5818 = vmax.f32 %v5342, 0.0
  %v5819 = vmax.f32 %v5345, 0.0
  %v5820 = vmax.f32 %v5350, 0.0
  %v5821 = vmax.f32 %v5353, 0.0
  %v5822 = vmax.f32 %v5358, 0.0
  %v5823 = vmax.f32 %v5361, 0.0
  %v5824 = vmax.f32 %v5366, 0.0
  %v5825 = vmax.f32 %v5369, 0.0
  %v5826 = vmax.f32 %v5374, 0.0
  %v5827 = vmax.f32 %v5377, 0.0
  %v5828 = vmax.f32 %v5382, 0.0
  %v5829 = vmax.f32 %v5385, 0.0
  %v5830 = vmax.f32 %v5390, 0.0
  %v5831 = vmax.f32 %v5393, 0.0
  %v5832 = vmax.f32 %v5398, 0.0
  %v5833 = vmax.f32 %v5401, 0.0
  %v5834 = vmax.f32 %v5406, 0.0
  %v5835 = vmax.f32 %v5409, 0.0
  %v5836 = vmax.f32 %v5414, 0.0
  %v5837 = vmax.f32 %v5417, 0.0
  %v5838 = vmax.f32 %v5422, 0.0
  %v5839 = vmax.f32 %v5425, 0.0
  %v5840 = vmax.f32 %v5430, 0.0
  %v5841 = vmax.f32 %v5433, 0.0
  %v5842 = vmax.f32 %v5438, 0.0
  %v5843 = vmax.f32 %v5441, 0.0
  %v5844 = vmax.f32 %v5446, 0.0
  %v5845 = vmax.f32 %v5449, 0.0
  %v5846 = vmax.f32 %v5454, 0.0
  %v5847 = vmax.f32 %v5457, 0.0
  %v5848 = vmax.f32 %v5462, 0.0
  %v5849 = vmax.f32 %v5465, 0.0
  %v5850 = vmax.f32 %v5470, 0.0
  %v5851 = vmax.f32 %v5473, 0.0
  %v5852 = vmax.f32 %v5478, 0.0
  %v5853 = vmax.f32 %v5481, 0.0
  %v5854 = vmax.f32 %v5486, 0.0
  %v5855 = vmax.f32 %v5489, 0.0
  %v5856 = vmax.f32 %v5494, 0.0
  %v5857 = vmax.f32 %v5497, 0.0
  %v5858 = vmax.f32 %v5502, 0.0
  %v5859 = vmax.f32 %v5505, 0.0
  %v5860 = vmax.f32 %v5510, 0.0
  %v5861 = vmax.f32 %v5513, 0.0
  %v5862 = vmax.f32 %v5518, 0.0
  %v5863 = vmax.f32 %v5521, 0.0
  %v5864 = vmax.f32 %v5526, 0.0
  %v5865 = vmax.f32 %v5529, 0.0
  %v5866 = vmax.f32 %v5534, 0.0
  %v5867 = vmax.f32 %v5537, 0.0
  %v5868 = vmax.f32 %v5542, 0.0
  %v5869 = vmax.f32 %v5545, 0.0
  %v5870 = vmax.f32 %v5550, 0.0
  %v5871 = vmax.f32 %v5553, 0.0
  %v5872 = vmax.f32 %v5558, 0.0
  %v5873 = vmax.f32 %v5561, 0.0
  %v5874 = vmax.f32 %v5566, 0.0
  %v5875 = vmax.f32 %v5569, 0.0
  %v5876 = vmax.f32 %v5574, 0.0
  %v5877 = vmax.f32 %v5577, 0.0
  %v5878 = vmax.f32 %v5582, 0.0
  %v5879 = vmax.f32 %v5585, 0.0
  %v5880 = vmax.f32 %v5590, 0.0
  %v5881 = vmax.f32 %v5593, 0.0
  %v5882 = vmax.f32 %v5598, 0.0
  %v5883 = vmax.f32 %v5601, 0.0
  %v5884 = vmax.f32 %v5606, 0.0
  %v5885 = vmax.f32 %v5609, 0.0
  %v5886 = vmax.f32 %v5614, 0.0
  %v5887 = vmax.f32 %v5617, 0.0
  %v5888 = vmax.f32 %v5622, 0.0
  %v5889 = vmax.f32 %v5625, 0.0
  %v5890 = vmax.f32 %v5630, 0.0
  %v5891 = vmax.f32 %v5633, 0.0
  %v5892 = vmax.f32 %v5638, 0.0
  %v5893 = vmax.f32 %v5641, 0.0
  %v5894 = vmax.f32 %v5646, 0.0
  %v5895 = vmax.f32 %v5649, 0.0
  %v5896 = vmax.f32 %v5654, 0.0
  %v5897 = vmax.f32 %v5657, 0.0
  %v5898 = vmax.f32 %v5662, 0.0
  %v5899 = vmax.f32 %v5665, 0.0
  %v5900 = vmax.f32 %v5670, 0.0
  %v5901 = vmax.f32 %v5673, 0.0
  %v5902 = vmax.f32 %v5678, 0.0
  %v5903 = vmax.f32 %v5681, 0.0
  %v5904 = vmax.f32 %v5686, 0.0
  %v5905 = vmax.f32 %v5689, 0.0
  %v5906 = vmax.f32 %v5694, 0.0
  %v5907 = vmax.f32 %v5697, 0.0
  %v5908 = vmax.f32 %v5702, 0.0
  %v5909 = vmax.f32 %v5705, 0.0
  %v5910 = vmax.f32 %v5710, 0.0
  %v5911 = vmax.f32 %v5713, 0.0
  %v5912 = vpack.c.bf16 %v5717, %v5716
  %v5913 = vpack.c.bf16 %v5719, %v5718
  %v5914 = vpack.c.bf16 %v5721, %v5720
  %v5915 = vpack.c.bf16 %v5723, %v5722
  %v5916 = vpack.c.bf16 %v5725, %v5724
  %v5917 = vpack.c.bf16 %v5727, %v5726
  %v5918 = vpack.c.bf16 %v5729, %v5728
  %v5919 = vpack.c.bf16 %v5731, %v5730
  %v5920 = vpack.c.bf16 %v5733, %v5732
  %v5921 = vpack.c.bf16 %v5735, %v5734
  %v5922 = vpack.c.bf16 %v5737, %v5736
  %v5923 = vpack.c.bf16 %v5739, %v5738
  %v5924 = vpack.c.bf16 %v5741, %v5740
  %v5925 = vpack.c.bf16 %v5743, %v5742
  %v5926 = vpack.c.bf16 %v5745, %v5744
  %v5927 = vpack.c.bf16 %v5747, %v5746
  %v5928 = vpack.c.bf16 %v5749, %v5748
  %v5929 = vpack.c.bf16 %v5751, %v5750
  %v5930 = vpack.c.bf16 %v5753, %v5752
  %v5931 = vpack.c.bf16 %v5755, %v5754
  %v5932 = vpack.c.bf16 %v5757, %v5756
  %v5933 = vpack.c.bf16 %v5759, %v5758
  %v5934 = vpack.c.bf16 %v5761, %v5760
  %v5935 = vpack.c.bf16 %v5763, %v5762
  %v5936 = vpack.c.bf16 %v5765, %v5764
  %v5937 = vpack.c.bf16 %v5767, %v5766
  %v5938 = vpack.c.bf16 %v5769, %v5768
  %v5939 = vpack.c.bf16 %v5771, %v5770
  %v5940 = vpack.c.bf16 %v5773, %v5772
  %v5941 = vpack.c.bf16 %v5775, %v5774
  %v5942 = vpack.c.bf16 %v5777, %v5776
  %v5943 = vpack.c.bf16 %v5779, %v5778
  %v5944 = vpack.c.bf16 %v5781, %v5780
  %v5945 = vpack.c.bf16 %v5783, %v5782
  %v5946 = vpack.c.bf16 %v5785, %v5784
  %v5947 = vpack.c.bf16 %v5787, %v5786
  %v5948 = vpack.c.bf16 %v5789, %v5788
  %v5949 = vpack.c.bf16 %v5791, %v5790
  %v5950 = vpack.c.bf16 %v5793, %v5792
  %v5951 = vpack.c.bf16 %v5795, %v5794
  %v5952 = vpack.c.bf16 %v5797, %v5796
  %v5953 = vpack.c.bf16 %v5799, %v5798
  %v5954 = vpack.c.bf16 %v5801, %v5800
  %v5955 = vpack.c.bf16 %v5803, %v5802
  %v5956 = vpack.c.bf16 %v5805, %v5804
  %v5957 = vpack.c.bf16 %v5807, %v5806
  %v5958 = vpack.c.bf16 %v5809, %v5808
  %v5959 = vpack.c.bf16 %v5811, %v5810
  %v5960 = vpack.c.bf16 %v5813, %v5812
  %v5961 = vpack.c.bf16 %v5815, %v5814
  %v5962 = vpack.c.bf16 %v5817, %v5816
  %v5963 = vpack.c.bf16 %v5819, %v5818
  %v5964 = vpack.c.bf16 %v5821, %v5820
  %v5965 = vpack.c.bf16 %v5823, %v5822
  %v5966 = vpack.c.bf16 %v5825, %v5824
  %v5967 = vpack.c.bf16 %v5827, %v5826
  %v5968 = vpack.c.bf16 %v5829, %v5828
  %v5969 = vpack.c.bf16 %v5831, %v5830
  %v5970 = vpack.c.bf16 %v5833, %v5832
  %v5971 = vpack.c.bf16 %v5835, %v5834
  %v5972 = vpack.c.bf16 %v5837, %v5836
  %v5973 = vpack.c.bf16 %v5839, %v5838
  %v5974 = vpack.c.bf16 %v5841, %v5840
  %v5975 = vpack.c.bf16 %v5843, %v5842
  %v5976 = vpack.c.bf16 %v5845, %v5844
  %v5977 = vpack.c.bf16 %v5847, %v5846
  %v5978 = vpack.c.bf16 %v5849, %v5848
  %v5979 = vpack.c.bf16 %v5851, %v5850
  %v5980 = vpack.c.bf16 %v5853, %v5852
  %v5981 = vpack.c.bf16 %v5855, %v5854
  %v5982 = vpack.c.bf16 %v5857, %v5856
  %v5983 = vpack.c.bf16 %v5859, %v5858
  %v5984 = vpack.c.bf16 %v5861, %v5860
  %v5985 = vpack.c.bf16 %v5863, %v5862
  %v5986 = vpack.c.bf16 %v5865, %v5864
  %v5987 = vpack.c.bf16 %v5867, %v5866
  %v5988 = vpack.c.bf16 %v5869, %v5868
  %v5989 = vpack.c.bf16 %v5871, %v5870
  %v5990 = vpack.c.bf16 %v5873, %v5872
  %v5991 = vpack.c.bf16 %v5875, %v5874
  %v5992 = vpack.c.bf16 %v5877, %v5876
  %v5993 = vpack.c.bf16 %v5879, %v5878
  %v5994 = vpack.c.bf16 %v5881, %v5880
  %v5995 = vpack.c.bf16 %v5883, %v5882
  %v5996 = vpack.c.bf16 %v5885, %v5884
  %v5997 = vpack.c.bf16 %v5887, %v5886
  %v5998 = vpack.c.bf16 %v5889, %v5888
  %v5999 = vpack.c.bf16 %v5891, %v5890
  %v6000 = vpack.c.bf16 %v5893, %v5892
  %v6001 = vpack.c.bf16 %v5895, %v5894
  %v6002 = vpack.c.bf16 %v5897, %v5896
  %v6003 = vpack.c.bf16 %v5899, %v5898
  %v6004 = vpack.c.bf16 %v5901, %v5900
  %v6005 = vpack.c.bf16 %v5903, %v5902
  %v6006 = vpack.c.bf16 %v5905, %v5904
  %v6007 = vpack.c.bf16 %v5907, %v5906
  %v6008 = vpack.c.bf16 %v5909, %v5908
  %v6009 = vpack.c.bf16 %v5911, %v5910
  %6010 = vst.msk [vmem:[#allocation3] sm:$0xff] %vm1419, %v5912
  %6011 = vst.msk [vmem:[#allocation3 + $0x8] sm:$0xff] %vm1419, %v5913
  %6014 = vrot.lane.b32.xlu0 %v5914, 2
  %v6015 = vpop.permute.xlu0 %6014
  %6016 = vrot.lane.b32.xlu0 %v5915, 2
  %v6017 = vpop.permute.xlu0 %6016
  %vm6020 = vcmask 31760
  %6021 = vst.msk [vmem:[#allocation3] sm:$0xff] %vm6020, %v6015
  %6022 = vst.msk [vmem:[#allocation3 + $0x8] sm:$0xff] %vm6020, %v6017
  %6025 = vrot.lane.b32.xlu0 %v5916, 4
  %v6026 = vpop.permute.xlu0 %6025
  %6027 = vrot.lane.b32.xlu0 %v5917, 4
  %v6028 = vpop.permute.xlu0 %6027
  %vm6031 = vcmask 48160
  %6032 = vst.msk [vmem:[#allocation3] sm:$0xff] %vm6031, %v6026
  %6033 = vst.msk [vmem:[#allocation3 + $0x8] sm:$0xff] %vm6031, %v6028
  %6036 = vrot.lane.b32.xlu0 %v5918, 6
  %v6037 = vpop.permute.xlu0 %6036
  %6038 = vrot.lane.b32.xlu0 %v5919, 6
  %v6039 = vpop.permute.xlu0 %6038
  %vm6042 = vcmask 64560
  %6043 = vst.msk [vmem:[#allocation3] sm:$0xff] %vm6042, %v6037
  %6044 = vst.msk [vmem:[#allocation3 + $0x8] sm:$0xff] %vm6042, %v6039
  %6047 = vrot.lane.b32.xlu0 %v5920, 8
  %v6048 = vpop.permute.xlu0 %6047
  %6049 = vrot.lane.b32.xlu0 %v5921, 8
  %v6050 = vpop.permute.xlu0 %6049
  %vm6053 = vcmask 80960
  %6054 = vst.msk [vmem:[#allocation3] sm:$0xff] %vm6053, %v6048
  %6055 = vst.msk [vmem:[#allocation3 + $0x8] sm:$0xff] %vm6053, %v6050
  %6058 = vrot.lane.b32.xlu0 %v5922, 10
  %v6059 = vpop.permute.xlu0 %6058
  %6060 = vrot.lane.b32.xlu0 %v5923, 10
  %v6061 = vpop.permute.xlu0 %6060
  %vm6064 = vcmask 97360
  %6065 = vst.msk [vmem:[#allocation3] sm:$0xff] %vm6064, %v6059
  %6066 = vst.msk [vmem:[#allocation3 + $0x8] sm:$0xff] %vm6064, %v6061
  %6069 = vrot.lane.b32.xlu0 %v5924, 12
  %v6070 = vpop.permute.xlu0 %6069
  %6071 = vrot.lane.b32.xlu0 %v5925, 12
  %v6072 = vpop.permute.xlu0 %6071
  %vm6075 = vcmask 113760
  %6076 = vst.msk [vmem:[#allocation3] sm:$0xff] %vm6075, %v6070
  %6077 = vst.msk [vmem:[#allocation3 + $0x8] sm:$0xff] %vm6075, %v6072
  %6080 = vrot.lane.b32.xlu0 %v5926, 14
  %v6081 = vpop.permute.xlu0 %6080
  %6082 = vrot.lane.b32.xlu0 %v5927, 14
  %v6083 = vpop.permute.xlu0 %6082
  %vm6086 = vcmask 130160
  %6087 = vst.msk [vmem:[#allocation3] sm:$0xff] %vm6086, %v6081
  %6088 = vst.msk [vmem:[#allocation3 + $0x8] sm:$0xff] %vm6086, %v6083
  %6091 = vrot.lane.b32.xlu0 %v5928, 16
  %v6092 = vpop.permute.xlu0 %6091
  %6093 = vrot.lane.b32.xlu0 %v5929, 16
  %v6094 = vpop.permute.xlu0 %6093
  %vm6097 = vcmask 146560
  %6098 = vst.msk [vmem:[#allocation3] sm:$0xff] %vm6097, %v6092
  %6099 = vst.msk [vmem:[#allocation3 + $0x8] sm:$0xff] %vm6097, %v6094
  %6102 = vrot.lane.b32.xlu0 %v5930, 18
  %v6103 = vpop.permute.xlu0 %6102
  %6104 = vrot.lane.b32.xlu0 %v5931, 18
  %v6105 = vpop.permute.xlu0 %6104
  %vm6108 = vcmask 162960
  %6109 = vst.msk [vmem:[#allocation3] sm:$0xff] %vm6108, %v6103
  %6110 = vst.msk [vmem:[#allocation3 + $0x8] sm:$0xff] %vm6108, %v6105
  %6113 = vrot.lane.b32.xlu0 %v5932, 20
  %v6114 = vpop.permute.xlu0 %6113
  %6115 = vrot.lane.b32.xlu0 %v5933, 20
  %v6116 = vpop.permute.xlu0 %6115
  %vm6119 = vcmask 179360
  %6120 = vst.msk [vmem:[#allocation3] sm:$0xff] %vm6119, %v6114
  %6121 = vst.msk [vmem:[#allocation3 + $0x8] sm:$0xff] %vm6119, %v6116
  %6124 = vrot.lane.b32.xlu0 %v5934, 22
  %v6125 = vpop.permute.xlu0 %6124
  %6126 = vrot.lane.b32.xlu0 %v5935, 22
  %v6127 = vpop.permute.xlu0 %6126
  %vm6130 = vcmask 195760
  %6131 = vst.msk [vmem:[#allocation3] sm:$0xff] %vm6130, %v6125
  %6132 = vst.msk [vmem:[#allocation3 + $0x8] sm:$0xff] %vm6130, %v6127
  %6135 = vrot.lane.b32.xlu0 %v5936, 24
  %v6136 = vpop.permute.xlu0 %6135
  %6137 = vrot.lane.b32.xlu0 %v5937, 24
  %v6138 = vpop.permute.xlu0 %6137
  %vm6141 = vcmask 212160
  %6142 = vst.msk [vmem:[#allocation3] sm:$0xff] %vm6141, %v6136
  %6143 = vst.msk [vmem:[#allocation3 + $0x8] sm:$0xff] %vm6141, %v6138
  %6146 = vrot.lane.b32.xlu0 %v5938, 26
  %v6147 = vpop.permute.xlu0 %6146
  %6148 = vrot.lane.b32.xlu0 %v5939, 26
  %v6149 = vpop.permute.xlu0 %6148
  %vm6152 = vcmask 228560
  %6153 = vst.msk [vmem:[#allocation3] sm:$0xff] %vm6152, %v6147
  %6154 = vst.msk [vmem:[#allocation3 + $0x8] sm:$0xff] %vm6152, %v6149
  %6157 = vrot.lane.b32.xlu0 %v5940, 28
  %v6158 = vpop.permute.xlu0 %6157
  %6159 = vrot.lane.b32.xlu0 %v5941, 28
  %v6160 = vpop.permute.xlu0 %6159
  %vm6163 = vcmask 244960
  %6164 = vst.msk [vmem:[#allocation3] sm:$0xff] %vm6163, %v6158
  %6165 = vst.msk [vmem:[#allocation3 + $0x8] sm:$0xff] %vm6163, %v6160
  %6168 = vrot.lane.b32.xlu0 %v5942, 30
  %v6169 = vpop.permute.xlu0 %6168
  %6170 = vrot.lane.b32.xlu0 %v5943, 30
  %v6171 = vpop.permute.xlu0 %6170
  %vm6174 = vcmask 261360
  %6175 = vst.msk [vmem:[#allocation3] sm:$0xff] %vm6174, %v6169
  %6176 = vst.msk [vmem:[#allocation3 + $0x8] sm:$0xff] %vm6174, %v6171
  %6179 = vrot.lane.b32.xlu0 %v5944, 32
  %v6180 = vpop.permute.xlu0 %6179
  %6181 = vrot.lane.b32.xlu0 %v5945, 32
  %v6182 = vpop.permute.xlu0 %6181
  %vm6185 = vcmask 277760
  %6186 = vst.msk [vmem:[#allocation3] sm:$0xff] %vm6185, %v6180
  %6187 = vst.msk [vmem:[#allocation3 + $0x8] sm:$0xff] %vm6185, %v6182
  %6190 = vrot.lane.b32.xlu0 %v5946, 34
  %v6191 = vpop.permute.xlu0 %6190
  %6192 = vrot.lane.b32.xlu0 %v5947, 34
  %v6193 = vpop.permute.xlu0 %6192
  %vm6196 = vcmask 294160
  %6197 = vst.msk [vmem:[#allocation3] sm:$0xff] %vm6196, %v6191
  %6198 = vst.msk [vmem:[#allocation3 + $0x8] sm:$0xff] %vm6196, %v6193
  %6201 = vrot.lane.b32.xlu0 %v5948, 36
  %v6202 = vpop.permute.xlu0 %6201
  %6203 = vrot.lane.b32.xlu0 %v5949, 36
  %v6204 = vpop.permute.xlu0 %6203
  %vm6207 = vcmask 310560
  %6208 = vst.msk [vmem:[#allocation3] sm:$0xff] %vm6207, %v6202
  %6209 = vst.msk [vmem:[#allocation3 + $0x8] sm:$0xff] %vm6207, %v6204
  %6212 = vrot.lane.b32.xlu0 %v5950, 38
  %v6213 = vpop.permute.xlu0 %6212
  %6214 = vrot.lane.b32.xlu0 %v5951, 38
  %v6215 = vpop.permute.xlu0 %6214
  %vm6218 = vcmask 326960
  %6219 = vst.msk [vmem:[#allocation3] sm:$0xff] %vm6218, %v6213
  %6220 = vst.msk [vmem:[#allocation3 + $0x8] sm:$0xff] %vm6218, %v6215
  %6223 = vrot.lane.b32.xlu0 %v5952, 40
  %v6224 = vpop.permute.xlu0 %6223
  %6225 = vrot.lane.b32.xlu0 %v5953, 40
  %v6226 = vpop.permute.xlu0 %6225
  %vm6229 = vcmask 343360
  %6230 = vst.msk [vmem:[#allocation3] sm:$0xff] %vm6229, %v6224
  %6231 = vst.msk [vmem:[#allocation3 + $0x8] sm:$0xff] %vm6229, %v6226
  %6234 = vrot.lane.b32.xlu0 %v5954, 42
  %v6235 = vpop.permute.xlu0 %6234
  %6236 = vrot.lane.b32.xlu0 %v5955, 42
  %v6237 = vpop.permute.xlu0 %6236
  %vm6240 = vcmask 359760
  %6241 = vst.msk [vmem:[#allocation3] sm:$0xff] %vm6240, %v6235
  %6242 = vst.msk [vmem:[#allocation3 + $0x8] sm:$0xff] %vm6240, %v6237
  %6245 = vrot.lane.b32.xlu0 %v5956, 44
  %v6246 = vpop.permute.xlu0 %6245
  %6247 = vrot.lane.b32.xlu0 %v5957, 44
  %v6248 = vpop.permute.xlu0 %6247
  %vm6251 = vcmask 376160
  %6252 = vst.msk [vmem:[#allocation3] sm:$0xff] %vm6251, %v6246
  %6253 = vst.msk [vmem:[#allocation3 + $0x8] sm:$0xff] %vm6251, %v6248
  %6256 = vrot.lane.b32.xlu0 %v5958, 46
  %v6257 = vpop.permute.xlu0 %6256
  %6258 = vrot.lane.b32.xlu0 %v5959, 46
  %v6259 = vpop.permute.xlu0 %6258
  %vm6262 = vcmask 392560
  %6263 = vst.msk [vmem:[#allocation3] sm:$0xff] %vm6262, %v6257
  %6264 = vst.msk [vmem:[#allocation3 + $0x8] sm:$0xff] %vm6262, %v6259
  %6267 = vrot.lane.b32.xlu0 %v5960, 48
  %v6268 = vpop.permute.xlu0 %6267
  %6269 = vrot.lane.b32.xlu0 %v5961, 48
  %v6270 = vpop.permute.xlu0 %6269
  %vm6273 = vcmask 408960
  %6274 = vst.msk [vmem:[#allocation3] sm:$0xff] %vm6273, %v6268
  %6275 = vst.msk [vmem:[#allocation3 + $0x8] sm:$0xff] %vm6273, %v6270
  %6278 = vrot.lane.b32.xlu0 %v5962, 50
  %v6279 = vpop.permute.xlu0 %6278
  %6280 = vrot.lane.b32.xlu0 %v5963, 50
  %v6281 = vpop.permute.xlu0 %6280
  %vm6284 = vcmask 425360
  %6285 = vst.msk [vmem:[#allocation3] sm:$0xff] %vm6284, %v6279
  %6286 = vst.msk [vmem:[#allocation3 + $0x8] sm:$0xff] %vm6284, %v6281
  %6289 = vrot.lane.b32.xlu0 %v5964, 52
  %v6290 = vpop.permute.xlu0 %6289
  %6291 = vrot.lane.b32.xlu0 %v5965, 52
  %v6292 = vpop.permute.xlu0 %6291
  %vm6295 = vcmask 441760
  %6296 = vst.msk [vmem:[#allocation3] sm:$0xff] %vm6295, %v6290
  %6297 = vst.msk [vmem:[#allocation3 + $0x8] sm:$0xff] %vm6295, %v6292
  %6300 = vrot.lane.b32.xlu0 %v5966, 54
  %v6301 = vpop.permute.xlu0 %6300
  %6302 = vrot.lane.b32.xlu0 %v5967, 54
  %v6303 = vpop.permute.xlu0 %6302
  %vm6306 = vcmask 458160
  %6307 = vst.msk [vmem:[#allocation3] sm:$0xff] %vm6306, %v6301
  %6308 = vst.msk [vmem:[#allocation3 + $0x8] sm:$0xff] %vm6306, %v6303
  %6311 = vrot.lane.b32.xlu0 %v5968, 56
  %v6312 = vpop.permute.xlu0 %6311
  %6313 = vrot.lane.b32.xlu0 %v5969, 56
  %v6314 = vpop.permute.xlu0 %6313
  %vm6317 = vcmask 474560
  %6318 = vst.msk [vmem:[#allocation3] sm:$0xff] %vm6317, %v6312
  %6319 = vst.msk [vmem:[#allocation3 + $0x8] sm:$0xff] %vm6317, %v6314
  %6322 = vrot.lane.b32.xlu0 %v5970, 58
  %v6323 = vpop.permute.xlu0 %6322
  %6324 = vrot.lane.b32.xlu0 %v5971, 58
  %v6325 = vpop.permute.xlu0 %6324
  %vm6328 = vcmask 490960
  %6329 = vst.msk [vmem:[#allocation3] sm:$0xff] %vm6328, %v6323
  %6330 = vst.msk [vmem:[#allocation3 + $0x8] sm:$0xff] %vm6328, %v6325
  %6333 = vrot.lane.b32.xlu0 %v5972, 60
  %v6334 = vpop.permute.xlu0 %6333
  %6335 = vrot.lane.b32.xlu0 %v5973, 60
  %v6336 = vpop.permute.xlu0 %6335
  %vm6339 = vcmask 507360
  %6340 = vst.msk [vmem:[#allocation3] sm:$0xff] %vm6339, %v6334
  %6341 = vst.msk [vmem:[#allocation3 + $0x8] sm:$0xff] %vm6339, %v6336
  %6344 = vrot.lane.b32.xlu0 %v5974, 62
  %v6345 = vpop.permute.xlu0 %6344
  %6346 = vrot.lane.b32.xlu0 %v5975, 62
  %v6347 = vpop.permute.xlu0 %6346
  %vm6350 = vcmask 523760
  %6351 = vst.msk [vmem:[#allocation3] sm:$0xff] %vm6350, %v6345
  %6352 = vst.msk [vmem:[#allocation3 + $0x8] sm:$0xff] %vm6350, %v6347
  %6355 = vrot.lane.b32.xlu0 %v5976, 64
  %v6356 = vpop.permute.xlu0 %6355
  %6357 = vrot.lane.b32.xlu0 %v5977, 64
  %v6358 = vpop.permute.xlu0 %6357
  %vm6361 = vcmask 540160
  %6362 = vst.msk [vmem:[#allocation3] sm:$0xff] %vm6361, %v6356
  %6363 = vst.msk [vmem:[#allocation3 + $0x8] sm:$0xff] %vm6361, %v6358
  %6366 = vrot.lane.b32.xlu0 %v5978, 66
  %v6367 = vpop.permute.xlu0 %6366
  %6368 = vrot.lane.b32.xlu0 %v5979, 66
  %v6369 = vpop.permute.xlu0 %6368
  %vm6372 = vcmask 556560
  %6373 = vst.msk [vmem:[#allocation3] sm:$0xff] %vm6372, %v6367
  %6374 = vst.msk [vmem:[#allocation3 + $0x8] sm:$0xff] %vm6372, %v6369
  %6377 = vrot.lane.b32.xlu0 %v5980, 68
  %v6378 = vpop.permute.xlu0 %6377
  %6379 = vrot.lane.b32.xlu0 %v5981, 68
  %v6380 = vpop.permute.xlu0 %6379
  %vm6383 = vcmask 572960
  %6384 = vst.msk [vmem:[#allocation3] sm:$0xff] %vm6383, %v6378
  %6385 = vst.msk [vmem:[#allocation3 + $0x8] sm:$0xff] %vm6383, %v6380
  %6388 = vrot.lane.b32.xlu0 %v5982, 70
  %v6389 = vpop.permute.xlu0 %6388
  %6390 = vrot.lane.b32.xlu0 %v5983, 70
  %v6391 = vpop.permute.xlu0 %6390
  %vm6394 = vcmask 589360
  %6395 = vst.msk [vmem:[#allocation3] sm:$0xff] %vm6394, %v6389
  %6396 = vst.msk [vmem:[#allocation3 + $0x8] sm:$0xff] %vm6394, %v6391
  %6399 = vrot.lane.b32.xlu0 %v5984, 72
  %v6400 = vpop.permute.xlu0 %6399
  %6401 = vrot.lane.b32.xlu0 %v5985, 72
  %v6402 = vpop.permute.xlu0 %6401
  %vm6405 = vcmask 605760
  %6406 = vst.msk [vmem:[#allocation3] sm:$0xff] %vm6405, %v6400
  %6407 = vst.msk [vmem:[#allocation3 + $0x8] sm:$0xff] %vm6405, %v6402
  %6410 = vrot.lane.b32.xlu0 %v5986, 74
  %v6411 = vpop.permute.xlu0 %6410
  %6412 = vrot.lane.b32.xlu0 %v5987, 74
  %v6413 = vpop.permute.xlu0 %6412
  %vm6416 = vcmask 622160
  %6417 = vst.msk [vmem:[#allocation3] sm:$0xff] %vm6416, %v6411
  %6418 = vst.msk [vmem:[#allocation3 + $0x8] sm:$0xff] %vm6416, %v6413
  %6421 = vrot.lane.b32.xlu0 %v5988, 76
  %v6422 = vpop.permute.xlu0 %6421
  %6423 = vrot.lane.b32.xlu0 %v5989, 76
  %v6424 = vpop.permute.xlu0 %6423
  %vm6427 = vcmask 638560
  %6428 = vst.msk [vmem:[#allocation3] sm:$0xff] %vm6427, %v6422
  %6429 = vst.msk [vmem:[#allocation3 + $0x8] sm:$0xff] %vm6427, %v6424
  %6432 = vrot.lane.b32.xlu0 %v5990, 78
  %v6433 = vpop.permute.xlu0 %6432
  %6434 = vrot.lane.b32.xlu0 %v5991, 78
  %v6435 = vpop.permute.xlu0 %6434
  %vm6438 = vcmask 654960
  %6439 = vst.msk [vmem:[#allocation3] sm:$0xff] %vm6438, %v6433
  %6440 = vst.msk [vmem:[#allocation3 + $0x8] sm:$0xff] %vm6438, %v6435
  %6443 = vrot.lane.b32.xlu0 %v5992, 80
  %v6444 = vpop.permute.xlu0 %6443
  %6445 = vrot.lane.b32.xlu0 %v5993, 80
  %v6446 = vpop.permute.xlu0 %6445
  %vm6449 = vcmask 671360
  %6450 = vst.msk [vmem:[#allocation3] sm:$0xff] %vm6449, %v6444
  %6451 = vst.msk [vmem:[#allocation3 + $0x8] sm:$0xff] %vm6449, %v6446
  %6454 = vrot.lane.b32.xlu0 %v5994, 82
  %v6455 = vpop.permute.xlu0 %6454
  %6456 = vrot.lane.b32.xlu0 %v5995, 82
  %v6457 = vpop.permute.xlu0 %6456
  %vm6460 = vcmask 687760
  %6461 = vst.msk [vmem:[#allocation3] sm:$0xff] %vm6460, %v6455
  %6462 = vst.msk [vmem:[#allocation3 + $0x8] sm:$0xff] %vm6460, %v6457
  %6465 = vrot.lane.b32.xlu0 %v5996, 84
  %v6466 = vpop.permute.xlu0 %6465
  %6467 = vrot.lane.b32.xlu0 %v5997, 84
  %v6468 = vpop.permute.xlu0 %6467
  %vm6471 = vcmask 704160
  %6472 = vst.msk [vmem:[#allocation3] sm:$0xff] %vm6471, %v6466
  %6473 = vst.msk [vmem:[#allocation3 + $0x8] sm:$0xff] %vm6471, %v6468
  %6476 = vrot.lane.b32.xlu0 %v5998, 86
  %v6477 = vpop.permute.xlu0 %6476
  %6478 = vrot.lane.b32.xlu0 %v5999, 86
  %v6479 = vpop.permute.xlu0 %6478
  %vm6482 = vcmask 720560
  %6483 = vst.msk [vmem:[#allocation3] sm:$0xff] %vm6482, %v6477
  %6484 = vst.msk [vmem:[#allocation3 + $0x8] sm:$0xff] %vm6482, %v6479
  %6487 = vrot.lane.b32.xlu0 %v6000, 88
  %v6488 = vpop.permute.xlu0 %6487
  %6489 = vrot.lane.b32.xlu0 %v6001, 88
  %v6490 = vpop.permute.xlu0 %6489
  %vm6493 = vcmask 736960
  %6494 = vst.msk [vmem:[#allocation3] sm:$0xff] %vm6493, %v6488
  %6495 = vst.msk [vmem:[#allocation3 + $0x8] sm:$0xff] %vm6493, %v6490
  %6498 = vrot.lane.b32.xlu0 %v6002, 90
  %v6499 = vpop.permute.xlu0 %6498
  %6500 = vrot.lane.b32.xlu0 %v6003, 90
  %v6501 = vpop.permute.xlu0 %6500
  %vm6504 = vcmask 753360
  %6505 = vst.msk [vmem:[#allocation3] sm:$0xff] %vm6504, %v6499
  %6506 = vst.msk [vmem:[#allocation3 + $0x8] sm:$0xff] %vm6504, %v6501
  %6509 = vrot.lane.b32.xlu0 %v6004, 92
  %v6510 = vpop.permute.xlu0 %6509
  %6511 = vrot.lane.b32.xlu0 %v6005, 92
  %v6512 = vpop.permute.xlu0 %6511
  %vm6515 = vcmask 769760
  %6516 = vst.msk [vmem:[#allocation3] sm:$0xff] %vm6515, %v6510
  %6517 = vst.msk [vmem:[#allocation3 + $0x8] sm:$0xff] %vm6515, %v6512
  %6520 = vrot.lane.b32.xlu0 %v6006, 94
  %v6521 = vpop.permute.xlu0 %6520
  %6522 = vrot.lane.b32.xlu0 %v6007, 94
  %v6523 = vpop.permute.xlu0 %6522
  %vm6526 = vcmask 786160
  %6527 = vst.msk [vmem:[#allocation3] sm:$0xff] %vm6526, %v6521
  %6528 = vst.msk [vmem:[#allocation3 + $0x8] sm:$0xff] %vm6526, %v6523
  %6531 = vrot.lane.b32.xlu0 %v6008, 96
  %v6532 = vpop.permute.xlu0 %6531
  %6533 = vrot.lane.b32.xlu0 %v6009, 96
  %v6534 = vpop.permute.xlu0 %6533
  %vm6537 = vcmask 802560
  %6538 = vst.msk [vmem:[#allocation3] sm:$0xff] %vm6537, %v6532
  %6539 = vst.msk [vmem:[#allocation3 + $0x8] sm:$0xff] %vm6537, %v6534
  %v6540 = vld [vmem:[#allocation3] sm:$0xff]
  %v6541 = vld [vmem:[#allocation3 + $0x8] sm:$0xff]
  %v6542 = vld [vmem:[%s16] sm:$0xf]
  %v6543 = vld [vmem:[%s16 + $0x4] sm:$0xf]
  %v6544 = vld [vmem:[%s16 + $0x8] sm:$0xf]
  %v6545 = vld [vmem:[%s16 + $0xc] sm:$0xf]
  %v6546 = vld [vmem:[%s16 + $0x10] sm:$0xf]
  %v6547 = vld [vmem:[%s16 + $0x14] sm:$0xf]
  %v6548 = vld [vmem:[%s16 + $0x18] sm:$0xf]
  %v6549 = vld [vmem:[%s16 + $0x1c] sm:$0xf]
  %v6550 = vld [vmem:[%s16 + $0x20] sm:$0xf]
  %v6551 = vld [vmem:[%s16 + $0x24] sm:$0xf]
  %v6552 = vld [vmem:[%s16 + $0x28] sm:$0xf]
  %v6553 = vld [vmem:[%s16 + $0x2c] sm:$0xf]
  %v6554 = vld [vmem:[%s16 + $0x30] sm:$0x1]
  %v6555 = vld [vmem:[%s17] sm:$0xf]
  %v6556 = vld [vmem:[%s17 + $0x4] sm:$0xf]
  %v6557 = vld [vmem:[%s17 + $0x8] sm:$0xf]
  %v6558 = vld [vmem:[%s17 + $0xc] sm:$0xf]
  %v6559 = vld [vmem:[%s17 + $0x10] sm:$0xf]
  %v6560 = vld [vmem:[%s17 + $0x14] sm:$0xf]
  %v6561 = vld [vmem:[%s17 + $0x18] sm:$0xf]
  %v6562 = vld [vmem:[%s17 + $0x1c] sm:$0xf]
  %v6563 = vld [vmem:[%s17 + $0x20] sm:$0xf]
  %v6564 = vld [vmem:[%s17 + $0x24] sm:$0xf]
  %v6565 = vld [vmem:[%s17 + $0x28] sm:$0xf]
  %v6566 = vld [vmem:[%s17 + $0x2c] sm:$0xf]
  %v6567 = vld [vmem:[%s17 + $0x30] sm:$0x1]
  %v6568 = vld [vmem:[%s18] sm:$0xf]
  %v6569 = vld [vmem:[%s18 + $0x4] sm:$0xf]
  %v6570 = vld [vmem:[%s18 + $0x8] sm:$0xf]
  %v6571 = vld [vmem:[%s18 + $0xc] sm:$0xf]
  %v6572 = vld [vmem:[%s18 + $0x10] sm:$0xf]
  %v6573 = vld [vmem:[%s18 + $0x14] sm:$0xf]
  %v6574 = vld [vmem:[%s18 + $0x18] sm:$0xf]
  %v6575 = vld [vmem:[%s18 + $0x1c] sm:$0xf]
  %v6576 = vld [vmem:[%s18 + $0x20] sm:$0xf]
  %v6577 = vld [vmem:[%s18 + $0x24] sm:$0xf]
  %v6578 = vld [vmem:[%s18 + $0x28] sm:$0xf]
  %v6579 = vld [vmem:[%s18 + $0x2c] sm:$0xf]
  %v6580 = vld [vmem:[%s18 + $0x30] sm:$0x1]
  %v6594 = vunpack.c.l.b16 %v6542
  %v6595 = vunpack.c.l.b16 %v6543
  %v6596 = vunpack.c.l.b16 %v6544
  %v6597 = vunpack.c.l.b16 %v6545
  %v6598 = vunpack.c.l.b16 %v6546
  %v6599 = vunpack.c.l.b16 %v6547
  %v6600 = vunpack.c.l.b16 %v6548
  %v6601 = vunpack.c.l.b16 %v6549
  %v6602 = vunpack.c.l.b16 %v6550
  %v6603 = vunpack.c.l.b16 %v6551
  %v6604 = vunpack.c.l.b16 %v6552
  %v6605 = vunpack.c.l.b16 %v6553
  %v6606 = vunpack.c.l.b16 %v6554
  %v6607 = vpack.c.b16 %v6595, %v6594
  %v6608 = vpack.c.b16 %v6597, %v6596
  %v6609 = vpack.c.b16 %v6599, %v6598
  %v6610 = vpack.c.b16 %v6601, %v6600
  %v6611 = vpack.c.b16 %v6603, %v6602
  %v6612 = vpack.c.b16 %v6605, %v6604
  %v6613 = vpack.c.b16 %v6606, %v6606
  %v6621 = vsel %vm419, %v6540, 0
  %v6624 = vsel %vm419, %v6541, 0
  %v6627 = vsel %vm423, %v6613, 0
  %6629 = vmatprep.subr.bf16.mxu0 0
  %6630 = vmatpush1.bf16.msra.mxu0 %v6607
  %6631 = vmatprep.subr.bf16.mxu0 0
  %6632 = vmatpush1.bf16.msra.mxu0 %v6608
  %6633 = vmatprep.subr.bf16.mxu0 0
  %6634 = vmatpush1.bf16.msra.mxu0 %v6609
  %6635 = vmatprep.subr.bf16.mxu0 0
  %6636 = vmatpush1.bf16.msra.mxu0 %v6610
  %6637 = vmatprep.subr.bf16.mxu0 0
  %6638 = vmatpush1.bf16.msra.mxu0 %v6611
  %6639 = vmatprep.subr.bf16.mxu0 0
  %6640 = vmatpush1.bf16.msra.mxu0 %v6612
  %6641 = vmatprep.subr.bf16.mxu0 0
  %6642 = vmatpush1.bf16.msra.mxu0 %v6627
  %6643 = vmatprep.subr.bf16.mxu0 0
  %6644 = vmatpush1.bf16.msra.mxu0 0
  %6645 = vmatprep.subr.bf16.mxu0 0
  %6646 = vmatpush1.bf16.msra.mxu0 0
  %6647 = vmatprep.subr.bf16.mxu0 0
  %6648 = vmatpush1.bf16.msra.mxu0 0
  %6649 = vmatprep.subr.bf16.mxu0 0
  %6650 = vmatpush1.bf16.msra.mxu0 0
  %6651 = vmatprep.subr.bf16.mxu0 0
  %6652 = vmatpush1.bf16.msra.mxu0 0
  %6653 = vmatprep.subr.bf16.mxu0 0
  %6654 = vmatpush1.bf16.msra.mxu0 0
  %6655 = vmatprep.subr.bf16.mxu0 0
  %6656 = vmatpush1.bf16.msra.mxu0 0
  %6657 = vmatprep.subr.bf16.mxu0 0
  %6658 = vmatpush1.bf16.msra.mxu0 0
  %6659 = vmatprep.subr.bf16.mxu0 0
  %6660 = vmatpush1.bf16.msra.mxu0 0
  %6661 = vmatprep.mubr.bf16.mxu0 0
  %6662 = vmatmul.mubr.bf16.gmra.mrb[0].mxu0 %v6621
  %v6663 = vpop.f32.mrb[0].mxu0
  %v6664 = vadd.f32 0.0, %v6663
  %v6665 = vpop.f32.mrb[0].mxu0
  %v6666 = vpop.f32.mrb[0].mxu0
  %v6667 = vadd.f32 0.0, %v6666
  %v6668 = vpop.f32.mrb[0].mxu0
  %6669 = vmatprep.mubr.bf16.mxu0 0
  %6670 = vmatmul.mubr.bf16.gmra.mrb[0].mxu0 %v6624
  %v6671 = vpop.f32.mrb[0].mxu0
  %v6672 = vadd.f32 0.0, %v6671
  %v6673 = vpop.f32.mrb[0].mxu0
  %v6674 = vpop.f32.mrb[0].mxu0
  %v6675 = vadd.f32 0.0, %v6674
  %v6676 = vpop.f32.mrb[0].mxu0
  %6677 = vdwg.mxu0
  %v6678 = vpack.c.bf16 %v6667, %v6664
  %v6679 = vpack.c.bf16 %v6675, %v6672
  %v6693 = vunpack.c.l.b16 %v6555
  %v6694 = vunpack.c.l.b16 %v6556
  %v6695 = vunpack.c.l.b16 %v6557
  %v6696 = vunpack.c.l.b16 %v6558
  %v6697 = vunpack.c.l.b16 %v6559
  %v6698 = vunpack.c.l.b16 %v6560
  %v6699 = vunpack.c.l.b16 %v6561
  %v6700 = vunpack.c.l.b16 %v6562
  %v6701 = vunpack.c.l.b16 %v6563
  %v6702 = vunpack.c.l.b16 %v6564
  %v6703 = vunpack.c.l.b16 %v6565
  %v6704 = vunpack.c.l.b16 %v6566
  %v6705 = vunpack.c.l.b16 %v6567
  %v6706 = vpack.c.b16 %v6694, %v6693
  %v6707 = vpack.c.b16 %v6696, %v6695
  %v6708 = vpack.c.b16 %v6698, %v6697
  %v6709 = vpack.c.b16 %v6700, %v6699
  %v6710 = vpack.c.b16 %v6702, %v6701
  %v6711 = vpack.c.b16 %v6704, %v6703
  %v6712 = vpack.c.b16 %v6705, %v6705
  %v6720 = vsel %vm423, %v6712, 0
  %6722 = vmatprep.subr.bf16.mxu0 0
  %6723 = vmatpush1.bf16.msra.mxu0 %v6706
  %6724 = vmatprep.subr.bf16.mxu0 0
  %6725 = vmatpush1.bf16.msra.mxu0 %v6707
  %6726 = vmatprep.subr.bf16.mxu0 0
  %6727 = vmatpush1.bf16.msra.mxu0 %v6708
  %6728 = vmatprep.subr.bf16.mxu0 0
  %6729 = vmatpush1.bf16.msra.mxu0 %v6709
  %6730 = vmatprep.subr.bf16.mxu0 0
  %6731 = vmatpush1.bf16.msra.mxu0 %v6710
  %6732 = vmatprep.subr.bf16.mxu0 0
  %6733 = vmatpush1.bf16.msra.mxu0 %v6711
  %6734 = vmatprep.subr.bf16.mxu0 0
  %6735 = vmatpush1.bf16.msra.mxu0 %v6720
  %6736 = vmatprep.subr.bf16.mxu0 0
  %6737 = vmatpush1.bf16.msra.mxu0 0
  %6738 = vmatprep.subr.bf16.mxu0 0
  %6739 = vmatpush1.bf16.msra.mxu0 0
  %6740 = vmatprep.subr.bf16.mxu0 0
  %6741 = vmatpush1.bf16.msra.mxu0 0
  %6742 = vmatprep.subr.bf16.mxu0 0
  %6743 = vmatpush1.bf16.msra.mxu0 0
  %6744 = vmatprep.subr.bf16.mxu0 0
  %6745 = vmatpush1.bf16.msra.mxu0 0
  %6746 = vmatprep.subr.bf16.mxu0 0
  %6747 = vmatpush1.bf16.msra.mxu0 0
  %6748 = vmatprep.subr.bf16.mxu0 0
  %6749 = vmatpush1.bf16.msra.mxu0 0
  %6750 = vmatprep.subr.bf16.mxu0 0
  %6751 = vmatpush1.bf16.msra.mxu0 0
  %6752 = vmatprep.subr.bf16.mxu0 0
  %6753 = vmatpush1.bf16.msra.mxu0 0
  %6754 = vmatprep.mubr.bf16.mxu0 0
  %6755 = vmatmul.mubr.bf16.gmra.mrb[0].mxu0 %v6621
  %v6756 = vpop.f32.mrb[0].mxu0
  %v6757 = vadd.f32 0.0, %v6756
  %v6758 = vpop.f32.mrb[0].mxu0
  %v6759 = vpop.f32.mrb[0].mxu0
  %v6760 = vadd.f32 0.0, %v6759
  %v6761 = vpop.f32.mrb[0].mxu0
  %6762 = vmatprep.mubr.bf16.mxu0 0
  %6763 = vmatmul.mubr.bf16.gmra.mrb[0].mxu0 %v6624
  %v6764 = vpop.f32.mrb[0].mxu0
  %v6765 = vadd.f32 0.0, %v6764
  %v6766 = vpop.f32.mrb[0].mxu0
  %v6767 = vpop.f32.mrb[0].mxu0
  %v6768 = vadd.f32 0.0, %v6767
  %v6769 = vpop.f32.mrb[0].mxu0
  %6770 = vdwg.mxu0
  %v6771 = vpack.c.bf16 %v6760, %v6757
  %v6772 = vpack.c.bf16 %v6768, %v6765
  %v6786 = vunpack.c.l.b16 %v6568
  %v6787 = vunpack.c.l.b16 %v6569
  %v6788 = vunpack.c.l.b16 %v6570
  %v6789 = vunpack.c.l.b16 %v6571
  %v6790 = vunpack.c.l.b16 %v6572
  %v6791 = vunpack.c.l.b16 %v6573
  %v6792 = vunpack.c.l.b16 %v6574
  %v6793 = vunpack.c.l.b16 %v6575
  %v6794 = vunpack.c.l.b16 %v6576
  %v6795 = vunpack.c.l.b16 %v6577
  %v6796 = vunpack.c.l.b16 %v6578
  %v6797 = vunpack.c.l.b16 %v6579
  %v6798 = vunpack.c.l.b16 %v6580
  %v6799 = vpack.c.b16 %v6787, %v6786
  %v6800 = vpack.c.b16 %v6789, %v6788
  %v6801 = vpack.c.b16 %v6791, %v6790
  %v6802 = vpack.c.b16 %v6793, %v6792
  %v6803 = vpack.c.b16 %v6795, %v6794
  %v6804 = vpack.c.b16 %v6797, %v6796
  %v6805 = vpack.c.b16 %v6798, %v6798
  %v6813 = vsel %vm423, %v6805, 0
  %6815 = vmatprep.subr.bf16.mxu0 0
  %6816 = vmatpush1.bf16.msra.mxu0 %v6799
  %6817 = vmatprep.subr.bf16.mxu0 0
  %6818 = vmatpush1.bf16.msra.mxu0 %v6800
  %6819 = vmatprep.subr.bf16.mxu0 0
  %6820 = vmatpush1.bf16.msra.mxu0 %v6801
  %6821 = vmatprep.subr.bf16.mxu0 0
  %6822 = vmatpush1.bf16.msra.mxu0 %v6802
  %6823 = vmatprep.subr.bf16.mxu0 0
  %6824 = vmatpush1.bf16.msra.mxu0 %v6803
  %6825 = vmatprep.subr.bf16.mxu0 0
  %6826 = vmatpush1.bf16.msra.mxu0 %v6804
  %6827 = vmatprep.subr.bf16.mxu0 0
  %6828 = vmatpush1.bf16.msra.mxu0 %v6813
  %6829 = vmatprep.subr.bf16.mxu0 0
  %6830 = vmatpush1.bf16.msra.mxu0 0
  %6831 = vmatprep.subr.bf16.mxu0 0
  %6832 = vmatpush1.bf16.msra.mxu0 0
  %6833 = vmatprep.subr.bf16.mxu0 0
  %6834 = vmatpush1.bf16.msra.mxu0 0
  %6835 = vmatprep.subr.bf16.mxu0 0
  %6836 = vmatpush1.bf16.msra.mxu0 0
  %6837 = vmatprep.subr.bf16.mxu0 0
  %6838 = vmatpush1.bf16.msra.mxu0 0
  %6839 = vmatprep.subr.bf16.mxu0 0
  %6840 = vmatpush1.bf16.msra.mxu0 0
  %6841 = vmatprep.subr.bf16.mxu0 0
  %6842 = vmatpush1.bf16.msra.mxu0 0
  %6843 = vmatprep.subr.bf16.mxu0 0
  %6844 = vmatpush1.bf16.msra.mxu0 0
  %6845 = vmatprep.subr.bf16.mxu0 0
  %6846 = vmatpush1.bf16.msra.mxu0 0
  %6847 = vmatprep.mubr.bf16.mxu0 0
  %6848 = vmatmul.mubr.bf16.gmra.mrb[0].mxu0 %v6621
  %v6849 = vpop.f32.mrb[0].mxu0
  %v6850 = vadd.f32 0.0, %v6849
  %v6851 = vpop.f32.mrb[0].mxu0
  %v6852 = vpop.f32.mrb[0].mxu0
  %v6853 = vadd.f32 0.0, %v6852
  %v6854 = vpop.f32.mrb[0].mxu0
  %6855 = vmatprep.mubr.bf16.mxu0 0
  %6856 = vmatmul.mubr.bf16.gmra.mrb[0].mxu0 %v6624
  %v6857 = vpop.f32.mrb[0].mxu0
  %v6858 = vadd.f32 0.0, %v6857
  %v6859 = vpop.f32.mrb[0].mxu0
  %v6860 = vpop.f32.mrb[0].mxu0
  %v6861 = vadd.f32 0.0, %v6860
  %v6862 = vpop.f32.mrb[0].mxu0
  %6863 = vdwg.mxu0
  %v6864 = vpack.c.bf16 %v6853, %v6850
  %v6865 = vpack.c.bf16 %v6861, %v6858
  %v6866 = vld [vmem:[%s10] sm:$0xff]
  %v6867 = vld [vmem:[%s10 + $0x8] sm:$0xff]
  %s6868 = scalar_lea.vmem %s9, 32
  %v6869 = vld [vmem:[%s6868] sm:$0xf]
  %v6870 = vld [vmem:[%s6868 + $0x4] sm:$0xf]
  %6872 = vset.pattern.permute.xlu0 0
  %6873 = vperm.xlu0 %6872, %v6866
  %v6874 = vpop.permute.xlu0 %6873
  %6877 = vset.pattern.permute.xlu0 0
  %6878 = vperm.xlu0 %6877, %v6867
  %v6879 = vpop.permute.xlu0 %6878
  %v6883 = vunpack.c.l.b16 %v6869
  %v6884 = vunpack.c.l.b16 %v6870
  %v6885 = vpack.c.b16 %v6884, %v6883
  %v6887 = vsel %vm2270, %v6885, 0
  %6889 = vmatprep.subr.bf16.mxu0 0
  %6890 = vmatpush1.bf16.msra.mxu0 %v6540
  %6891 = vmatprep.subr.bf16.mxu0 0
  %6892 = vmatpush1.bf16.msra.mxu0 %v6541
  %6893 = vmatprep.subr.bf16.mxu0 0
  %6894 = vmatpush1.bf16.msra.mxu0 0
  %6895 = vmatprep.subr.bf16.mxu0 0
  %6896 = vmatpush1.bf16.msra.mxu0 0
  %6897 = vmatprep.subr.bf16.mxu0 0
  %6898 = vmatpush1.bf16.msra.mxu0 0
  %6899 = vmatprep.subr.bf16.mxu0 0
  %6900 = vmatpush1.bf16.msra.mxu0 0
  %6901 = vmatprep.subr.bf16.mxu0 0
  %6902 = vmatpush1.bf16.msra.mxu0 0
  %6903 = vmatprep.subr.bf16.mxu0 0
  %6904 = vmatpush1.bf16.msra.mxu0 0
  %6905 = vmatprep.subr.bf16.mxu0 0
  %6906 = vmatpush1.bf16.msra.mxu0 0
  %6907 = vmatprep.subr.bf16.mxu0 0
  %6908 = vmatpush1.bf16.msra.mxu0 0
  %6909 = vmatprep.subr.bf16.mxu0 0
  %6910 = vmatpush1.bf16.msra.mxu0 0
  %6911 = vmatprep.subr.bf16.mxu0 0
  %6912 = vmatpush1.bf16.msra.mxu0 0
  %6913 = vmatprep.subr.bf16.mxu0 0
  %6914 = vmatpush1.bf16.msra.mxu0 0
  %6915 = vmatprep.subr.bf16.mxu0 0
  %6916 = vmatpush1.bf16.msra.mxu0 0
  %6917 = vmatprep.subr.bf16.mxu0 0
  %6918 = vmatpush1.bf16.msra.mxu0 0
  %6919 = vmatprep.subr.bf16.mxu0 0
  %6920 = vmatpush1.bf16.msra.mxu0 0
  %6921 = vmatprep.mubr.bf16.mxu0 0
  %6922 = vmatmul.mubr.bf16.gmra.mrb[0].mxu0 %v6887
  %v6923 = vpop.f32.mrb[0].mxu0
  %v6924 = vadd.f32 %v6874, %v6923
  %v6925 = vpop.f32.mrb[0].mxu0
  %v6926 = vpop.f32.mrb[0].mxu0
  %v6927 = vadd.f32 %v6879, %v6926
  %v6928 = vpop.f32.mrb[0].mxu0
  %6929 = vdwg.mxu0
  %v6930 = vmax.f32 %v6924, 0.0
  %v6931 = vmax.f32 %v6927, 0.0
  %v6932 = vpack.c.bf16 %v6931, %v6930
  %s6933 = scalar_lea.vmem %s9, 24
  %v6934 = vld [vmem:[%s6933] sm:$0xf]
  %v6935 = vld [vmem:[%s6933 + $0x4] sm:$0xf]
  %s6936 = scalar_lea.vmem %s9, 40
  %v6937 = vld [vmem:[%s6936] sm:$0xf]
  %v6938 = vld [vmem:[%s6936 + $0x4] sm:$0xf]
  %v6941 = vunpack.c.l.b16 %v6937
  %v6942 = vunpack.c.l.b16 %v6938
  %v6943 = vpack.c.b16 %v6942, %v6941
  %v6945 = vsel %vm2270, %v6943, 0
  %6947 = vmatprep.subr.bf16.mxu0 0
  %6948 = vmatpush1.bf16.msra.mxu0 %v6540
  %6949 = vmatprep.subr.bf16.mxu0 0
  %6950 = vmatpush1.bf16.msra.mxu0 %v6541
  %6951 = vmatprep.subr.bf16.mxu0 0
  %6952 = vmatpush1.bf16.msra.mxu0 0
  %6953 = vmatprep.subr.bf16.mxu0 0
  %6954 = vmatpush1.bf16.msra.mxu0 0
  %6955 = vmatprep.subr.bf16.mxu0 0
  %6956 = vmatpush1.bf16.msra.mxu0 0
  %6957 = vmatprep.subr.bf16.mxu0 0
  %6958 = vmatpush1.bf16.msra.mxu0 0
  %6959 = vmatprep.subr.bf16.mxu0 0
  %6960 = vmatpush1.bf16.msra.mxu0 0
  %6961 = vmatprep.subr.bf16.mxu0 0
  %6962 = vmatpush1.bf16.msra.mxu0 0
  %6963 = vmatprep.subr.bf16.mxu0 0
  %6964 = vmatpush1.bf16.msra.mxu0 0
  %6965 = vmatprep.subr.bf16.mxu0 0
  %6966 = vmatpush1.bf16.msra.mxu0 0
  %6967 = vmatprep.subr.bf16.mxu0 0
  %6968 = vmatpush1.bf16.msra.mxu0 0
  %6969 = vmatprep.subr.bf16.mxu0 0
  %6970 = vmatpush1.bf16.msra.mxu0 0
  %6971 = vmatprep.subr.bf16.mxu0 0
  %6972 = vmatpush1.bf16.msra.mxu0 0
  %6973 = vmatprep.subr.bf16.mxu0 0
  %6974 = vmatpush1.bf16.msra.mxu0 0
  %6975 = vmatprep.subr.bf16.mxu0 0
  %6976 = vmatpush1.bf16.msra.mxu0 0
  %6977 = vmatprep.subr.bf16.mxu0 0
  %6978 = vmatpush1.bf16.msra.mxu0 0
  %6979 = vmatprep.mubr.bf16.mxu0 0
  %6980 = vmatmul.mubr.bf16.gmra.mrb[0].mxu0 %v6945
  %v6981 = vpop.f32.mrb[0].mxu0
  %v6982 = vadd.f32 0.0, %v6981
  %v6983 = vpop.f32.mrb[0].mxu0
  %v6984 = vpop.f32.mrb[0].mxu0
  %v6985 = vadd.f32 0.0, %v6984
  %v6986 = vpop.f32.mrb[0].mxu0
  %6987 = vdwg.mxu0
  %v6990 = vunpack.c.l.b16 %v6934
  %v6991 = vunpack.c.l.b16 %v6935
  %v6992 = vpack.c.b16 %v6991, %v6990
  %v6994 = vsel %vm2270, %v6992, 0
  %6996 = vmatprep.subr.bf16.mxu0 0
  %6997 = vmatpush1.bf16.msra.mxu0 %v6678
  %6998 = vmatprep.subr.bf16.mxu0 0
  %6999 = vmatpush1.bf16.msra.mxu0 %v6679
  %7000 = vmatprep.subr.bf16.mxu0 0
  %7001 = vmatpush1.bf16.msra.mxu0 0
  %7002 = vmatprep.subr.bf16.mxu0 0
  %7003 = vmatpush1.bf16.msra.mxu0 0
  %7004 = vmatprep.subr.bf16.mxu0 0
  %7005 = vmatpush1.bf16.msra.mxu0 0
  %7006 = vmatprep.subr.bf16.mxu0 0
  %7007 = vmatpush1.bf16.msra.mxu0 0
  %7008 = vmatprep.subr.bf16.mxu0 0
  %7009 = vmatpush1.bf16.msra.mxu0 0
  %7010 = vmatprep.subr.bf16.mxu0 0
  %7011 = vmatpush1.bf16.msra.mxu0 0
  %7012 = vmatprep.subr.bf16.mxu0 0
  %7013 = vmatpush1.bf16.msra.mxu0 0
  %7014 = vmatprep.subr.bf16.mxu0 0
  %7015 = vmatpush1.bf16.msra.mxu0 0
  %7016 = vmatprep.subr.bf16.mxu0 0
  %7017 = vmatpush1.bf16.msra.mxu0 0
  %7018 = vmatprep.subr.bf16.mxu0 0
  %7019 = vmatpush1.bf16.msra.mxu0 0
  %7020 = vmatprep.subr.bf16.mxu0 0
  %7021 = vmatpush1.bf16.msra.mxu0 0
  %7022 = vmatprep.subr.bf16.mxu0 0
  %7023 = vmatpush1.bf16.msra.mxu0 0
  %7024 = vmatprep.subr.bf16.mxu0 0
  %7025 = vmatpush1.bf16.msra.mxu0 0
  %7026 = vmatprep.subr.bf16.mxu0 0
  %7027 = vmatpush1.bf16.msra.mxu0 0
  %7028 = vmatprep.mubr.bf16.mxu0 0
  %7029 = vmatmul.mubr.bf16.gmra.mrb[0].mxu0 %v6994
  %v7030 = vpop.f32.mrb[0].mxu0
  %v7031 = vadd.f32 %v6982, %v7030
  %v7032 = vpop.f32.mrb[0].mxu0
  %v7033 = vpop.f32.mrb[0].mxu0
  %v7034 = vadd.f32 %v6985, %v7033
  %v7035 = vpop.f32.mrb[0].mxu0
  %7036 = vdwg.mxu0
  %v7037 = vadd.f32 %v7031, %v6874
  %v7038 = vadd.f32 %v7034, %v6879
  %v7039 = vmax.f32 %v7037, 0.0
  %v7040 = vmax.f32 %v7038, 0.0
  %v7041 = vpack.c.bf16 %v7040, %v7039
  %s7042 = scalar_lea.vmem %s9, 8
  %v7043 = vld [vmem:[%s7042] sm:$0xf]
  %v7044 = vld [vmem:[%s7042 + $0x4] sm:$0xf]
  %s7045 = scalar_lea.vmem %s9, 56
  %v7046 = vld [vmem:[%s7045] sm:$0xf]
  %v7047 = vld [vmem:[%s7045 + $0x4] sm:$0xf]
  %v7050 = vunpack.c.l.b16 %v7046
  %v7051 = vunpack.c.l.b16 %v7047
  %v7052 = vpack.c.b16 %v7051, %v7050
  %v7054 = vsel %vm2270, %v7052, 0
  %7056 = vmatprep.subr.bf16.mxu0 0
  %7057 = vmatpush1.bf16.msra.mxu0 %v6540
  %7058 = vmatprep.subr.bf16.mxu0 0
  %7059 = vmatpush1.bf16.msra.mxu0 %v6541
  %7060 = vmatprep.subr.bf16.mxu0 0
  %7061 = vmatpush1.bf16.msra.mxu0 0
  %7062 = vmatprep.subr.bf16.mxu0 0
  %7063 = vmatpush1.bf16.msra.mxu0 0
  %7064 = vmatprep.subr.bf16.mxu0 0
  %7065 = vmatpush1.bf16.msra.mxu0 0
  %7066 = vmatprep.subr.bf16.mxu0 0
  %7067 = vmatpush1.bf16.msra.mxu0 0
  %7068 = vmatprep.subr.bf16.mxu0 0
  %7069 = vmatpush1.bf16.msra.mxu0 0
  %7070 = vmatprep.subr.bf16.mxu0 0
  %7071 = vmatpush1.bf16.msra.mxu0 0
  %7072 = vmatprep.subr.bf16.mxu0 0
  %7073 = vmatpush1.bf16.msra.mxu0 0
  %7074 = vmatprep.subr.bf16.mxu0 0
  %7075 = vmatpush1.bf16.msra.mxu0 0
  %7076 = vmatprep.subr.bf16.mxu0 0
  %7077 = vmatpush1.bf16.msra.mxu0 0
  %7078 = vmatprep.subr.bf16.mxu0 0
  %7079 = vmatpush1.bf16.msra.mxu0 0
  %7080 = vmatprep.subr.bf16.mxu0 0
  %7081 = vmatpush1.bf16.msra.mxu0 0
  %7082 = vmatprep.subr.bf16.mxu0 0
  %7083 = vmatpush1.bf16.msra.mxu0 0
  %7084 = vmatprep.subr.bf16.mxu0 0
  %7085 = vmatpush1.bf16.msra.mxu0 0
  %7086 = vmatprep.subr.bf16.mxu0 0
  %7087 = vmatpush1.bf16.msra.mxu0 0
  %7088 = vmatprep.mubr.bf16.mxu0 0
  %7089 = vmatmul.mubr.bf16.gmra.mrb[0].mxu0 %v7054
  %v7090 = vpop.f32.mrb[0].mxu0
  %v7091 = vadd.f32 0.0, %v7090
  %v7092 = vpop.f32.mrb[0].mxu0
  %v7093 = vpop.f32.mrb[0].mxu0
  %v7094 = vadd.f32 0.0, %v7093
  %v7095 = vpop.f32.mrb[0].mxu0
  %7096 = vdwg.mxu0
  %v7099 = vunpack.c.l.b16 %v7043
  %v7100 = vunpack.c.l.b16 %v7044
  %v7101 = vpack.c.b16 %v7100, %v7099
  %v7103 = vsel %vm2270, %v7101, 0
  %7105 = vmatprep.subr.bf16.mxu0 0
  %7106 = vmatpush1.bf16.msra.mxu0 %v6771
  %7107 = vmatprep.subr.bf16.mxu0 0
  %7108 = vmatpush1.bf16.msra.mxu0 %v6772
  %7109 = vmatprep.subr.bf16.mxu0 0
  %7110 = vmatpush1.bf16.msra.mxu0 0
  %7111 = vmatprep.subr.bf16.mxu0 0
  %7112 = vmatpush1.bf16.msra.mxu0 0
  %7113 = vmatprep.subr.bf16.mxu0 0
  %7114 = vmatpush1.bf16.msra.mxu0 0
  %7115 = vmatprep.subr.bf16.mxu0 0
  %7116 = vmatpush1.bf16.msra.mxu0 0
  %7117 = vmatprep.subr.bf16.mxu0 0
  %7118 = vmatpush1.bf16.msra.mxu0 0
  %7119 = vmatprep.subr.bf16.mxu0 0
  %7120 = vmatpush1.bf16.msra.mxu0 0
  %7121 = vmatprep.subr.bf16.mxu0 0
  %7122 = vmatpush1.bf16.msra.mxu0 0
  %7123 = vmatprep.subr.bf16.mxu0 0
  %7124 = vmatpush1.bf16.msra.mxu0 0
  %7125 = vmatprep.subr.bf16.mxu0 0
  %7126 = vmatpush1.bf16.msra.mxu0 0
  %7127 = vmatprep.subr.bf16.mxu0 0
  %7128 = vmatpush1.bf16.msra.mxu0 0
  %7129 = vmatprep.subr.bf16.mxu0 0
  %7130 = vmatpush1.bf16.msra.mxu0 0
  %7131 = vmatprep.subr.bf16.mxu0 0
  %7132 = vmatpush1.bf16.msra.mxu0 0
  %7133 = vmatprep.subr.bf16.mxu0 0
  %7134 = vmatpush1.bf16.msra.mxu0 0
  %7135 = vmatprep.subr.bf16.mxu0 0
  %7136 = vmatpush1.bf16.msra.mxu0 0
  %7137 = vmatprep.mubr.bf16.mxu0 0
  %7138 = vmatmul.mubr.bf16.gmra.mrb[0].mxu0 %v7103
  %v7139 = vpop.f32.mrb[0].mxu0
  %v7140 = vadd.f32 %v7091, %v7139
  %v7141 = vpop.f32.mrb[0].mxu0
  %v7142 = vpop.f32.mrb[0].mxu0
  %v7143 = vadd.f32 %v7094, %v7142
  %v7144 = vpop.f32.mrb[0].mxu0
  %7145 = vdwg.mxu0
  %v7146 = vadd.f32 %v7140, %v6874
  %v7147 = vadd.f32 %v7143, %v6879
  %v7148 = vmax.f32 %v7146, 0.0
  %v7149 = vmax.f32 %v7147, 0.0
  %v7150 = vpack.c.bf16 %v7149, %v7148
  %v7151 = vld [vmem:[%s9] sm:$0xf]
  %v7152 = vld [vmem:[%s9 + $0x4] sm:$0xf]
  %s7153 = scalar_lea.vmem %s9, 16
  %v7154 = vld [vmem:[%s7153] sm:$0xf]
  %v7155 = vld [vmem:[%s7153 + $0x4] sm:$0xf]
  %v7158 = vunpack.c.l.b16 %v7154
  %v7159 = vunpack.c.l.b16 %v7155
  %v7160 = vpack.c.b16 %v7159, %v7158
  %v7162 = vsel %vm2270, %v7160, 0
  %7164 = vmatprep.subr.bf16.mxu0 0
  %7165 = vmatpush1.bf16.msra.mxu0 %v6771
  %7166 = vmatprep.subr.bf16.mxu0 0
  %7167 = vmatpush1.bf16.msra.mxu0 %v6772
  %7168 = vmatprep.subr.bf16.mxu0 0
  %7169 = vmatpush1.bf16.msra.mxu0 0
  %7170 = vmatprep.subr.bf16.mxu0 0
  %7171 = vmatpush1.bf16.msra.mxu0 0
  %7172 = vmatprep.subr.bf16.mxu0 0
  %7173 = vmatpush1.bf16.msra.mxu0 0
  %7174 = vmatprep.subr.bf16.mxu0 0
  %7175 = vmatpush1.bf16.msra.mxu0 0
  %7176 = vmatprep.subr.bf16.mxu0 0
  %7177 = vmatpush1.bf16.msra.mxu0 0
  %7178 = vmatprep.subr.bf16.mxu0 0
  %7179 = vmatpush1.bf16.msra.mxu0 0
  %7180 = vmatprep.subr.bf16.mxu0 0
  %7181 = vmatpush1.bf16.msra.mxu0 0
  %7182 = vmatprep.subr.bf16.mxu0 0
  %7183 = vmatpush1.bf16.msra.mxu0 0
  %7184 = vmatprep.subr.bf16.mxu0 0
  %7185 = vmatpush1.bf16.msra.mxu0 0
  %7186 = vmatprep.subr.bf16.mxu0 0
  %7187 = vmatpush1.bf16.msra.mxu0 0
  %7188 = vmatprep.subr.bf16.mxu0 0
  %7189 = vmatpush1.bf16.msra.mxu0 0
  %7190 = vmatprep.subr.bf16.mxu0 0
  %7191 = vmatpush1.bf16.msra.mxu0 0
  %7192 = vmatprep.subr.bf16.mxu0 0
  %7193 = vmatpush1.bf16.msra.mxu0 0
  %7194 = vmatprep.subr.bf16.mxu0 0
  %7195 = vmatpush1.bf16.msra.mxu0 0
  %7196 = vmatprep.mubr.bf16.mxu0 0
  %7197 = vmatmul.mubr.bf16.gmra.mrb[0].mxu0 %v7162
  %v7198 = vpop.f32.mrb[0].mxu0
  %v7199 = vadd.f32 0.0, %v7198
  %v7200 = vpop.f32.mrb[0].mxu0
  %v7201 = vpop.f32.mrb[0].mxu0
  %v7202 = vadd.f32 0.0, %v7201
  %v7203 = vpop.f32.mrb[0].mxu0
  %7204 = vdwg.mxu0
  %v7207 = vunpack.c.l.b16 %v7151
  %v7208 = vunpack.c.l.b16 %v7152
  %v7209 = vpack.c.b16 %v7208, %v7207
  %v7211 = vsel %vm2270, %v7209, 0
  %7213 = vmatprep.subr.bf16.mxu0 0
  %7214 = vmatpush1.bf16.msra.mxu0 %v6864
  %7215 = vmatprep.subr.bf16.mxu0 0
  %7216 = vmatpush1.bf16.msra.mxu0 %v6865
  %7217 = vmatprep.subr.bf16.mxu0 0
  %7218 = vmatpush1.bf16.msra.mxu0 0
  %7219 = vmatprep.subr.bf16.mxu0 0
  %7220 = vmatpush1.bf16.msra.mxu0 0
  %7221 = vmatprep.subr.bf16.mxu0 0
  %7222 = vmatpush1.bf16.msra.mxu0 0
  %7223 = vmatprep.subr.bf16.mxu0 0
  %7224 = vmatpush1.bf16.msra.mxu0 0
  %7225 = vmatprep.subr.bf16.mxu0 0
  %7226 = vmatpush1.bf16.msra.mxu0 0
  %7227 = vmatprep.subr.bf16.mxu0 0
  %7228 = vmatpush1.bf16.msra.mxu0 0
  %7229 = vmatprep.subr.bf16.mxu0 0
  %7230 = vmatpush1.bf16.msra.mxu0 0
  %7231 = vmatprep.subr.bf16.mxu0 0
  %7232 = vmatpush1.bf16.msra.mxu0 0
  %7233 = vmatprep.subr.bf16.mxu0 0
  %7234 = vmatpush1.bf16.msra.mxu0 0
  %7235 = vmatprep.subr.bf16.mxu0 0
  %7236 = vmatpush1.bf16.msra.mxu0 0
  %7237 = vmatprep.subr.bf16.mxu0 0
  %7238 = vmatpush1.bf16.msra.mxu0 0
  %7239 = vmatprep.subr.bf16.mxu0 0
  %7240 = vmatpush1.bf16.msra.mxu0 0
  %7241 = vmatprep.subr.bf16.mxu0 0
  %7242 = vmatpush1.bf16.msra.mxu0 0
  %7243 = vmatprep.subr.bf16.mxu0 0
  %7244 = vmatpush1.bf16.msra.mxu0 0
  %7245 = vmatprep.mubr.bf16.mxu0 0
  %7246 = vmatmul.mubr.bf16.gmra.mrb[0].mxu0 %v7211
  %v7247 = vpop.f32.mrb[0].mxu0
  %v7248 = vadd.f32 %v7199, %v7247
  %v7249 = vpop.f32.mrb[0].mxu0
  %v7250 = vpop.f32.mrb[0].mxu0
  %v7251 = vadd.f32 %v7202, %v7250
  %v7252 = vpop.f32.mrb[0].mxu0
  %7253 = vdwg.mxu0
  %s7254 = scalar_lea.vmem %s9, 48
  %v7255 = vld [vmem:[%s7254] sm:$0xf]
  %v7256 = vld [vmem:[%s7254 + $0x4] sm:$0xf]
  %v7259 = vunpack.c.l.b16 %v7255
  %v7260 = vunpack.c.l.b16 %v7256
  %v7261 = vpack.c.b16 %v7260, %v7259
  %v7263 = vsel %vm2270, %v7261, 0
  %7265 = vmatprep.subr.bf16.mxu0 0
  %7266 = vmatpush1.bf16.msra.mxu0 %v6678
  %7267 = vmatprep.subr.bf16.mxu0 0
  %7268 = vmatpush1.bf16.msra.mxu0 %v6679
  %7269 = vmatprep.subr.bf16.mxu0 0
  %7270 = vmatpush1.bf16.msra.mxu0 0
  %7271 = vmatprep.subr.bf16.mxu0 0
  %7272 = vmatpush1.bf16.msra.mxu0 0
  %7273 = vmatprep.subr.bf16.mxu0 0
  %7274 = vmatpush1.bf16.msra.mxu0 0
  %7275 = vmatprep.subr.bf16.mxu0 0
  %7276 = vmatpush1.bf16.msra.mxu0 0
  %7277 = vmatprep.subr.bf16.mxu0 0
  %7278 = vmatpush1.bf16.msra.mxu0 0
  %7279 = vmatprep.subr.bf16.mxu0 0
  %7280 = vmatpush1.bf16.msra.mxu0 0
  %7281 = vmatprep.subr.bf16.mxu0 0
  %7282 = vmatpush1.bf16.msra.mxu0 0
  %7283 = vmatprep.subr.bf16.mxu0 0
  %7284 = vmatpush1.bf16.msra.mxu0 0
  %7285 = vmatprep.subr.bf16.mxu0 0
  %7286 = vmatpush1.bf16.msra.mxu0 0
  %7287 = vmatprep.subr.bf16.mxu0 0
  %7288 = vmatpush1.bf16.msra.mxu0 0
  %7289 = vmatprep.subr.bf16.mxu0 0
  %7290 = vmatpush1.bf16.msra.mxu0 0
  %7291 = vmatprep.subr.bf16.mxu0 0
  %7292 = vmatpush1.bf16.msra.mxu0 0
  %7293 = vmatprep.subr.bf16.mxu0 0
  %7294 = vmatpush1.bf16.msra.mxu0 0
  %7295 = vmatprep.subr.bf16.mxu0 0
  %7296 = vmatpush1.bf16.msra.mxu0 0
  %7297 = vmatprep.mubr.bf16.mxu0 0
  %7298 = vmatmul.mubr.bf16.gmra.mrb[0].mxu0 %v7263
  %v7299 = vpop.f32.mrb[0].mxu0
  %v7300 = vadd.f32 0.0, %v7299
  %v7301 = vpop.f32.mrb[0].mxu0
  %v7302 = vpop.f32.mrb[0].mxu0
  %v7303 = vadd.f32 0.0, %v7302
  %v7304 = vpop.f32.mrb[0].mxu0
  %7305 = vdwg.mxu0
  %v7306 = vadd.f32 %v7248, %v7300
  %v7307 = vadd.f32 %v7251, %v7303
  %s7308 = scalar_lea.vmem %s9, 64
  %v7309 = vld [vmem:[%s7308] sm:$0xf]
  %v7310 = vld [vmem:[%s7308 + $0x4] sm:$0xf]
  %v7313 = vunpack.c.l.b16 %v7309
  %v7314 = vunpack.c.l.b16 %v7310
  %v7315 = vpack.c.b16 %v7314, %v7313
  %v7317 = vsel %vm2270, %v7315, 0
  %7319 = vmatprep.subr.bf16.mxu0 0
  %7320 = vmatpush1.bf16.msra.mxu0 %v6540
  %7321 = vmatprep.subr.bf16.mxu0 0
  %7322 = vmatpush1.bf16.msra.mxu0 %v6541
  %7323 = vmatprep.subr.bf16.mxu0 0
  %7324 = vmatpush1.bf16.msra.mxu0 0
  %7325 = vmatprep.subr.bf16.mxu0 0
  %7326 = vmatpush1.bf16.msra.mxu0 0
  %7327 = vmatprep.subr.bf16.mxu0 0
  %7328 = vmatpush1.bf16.msra.mxu0 0
  %7329 = vmatprep.subr.bf16.mxu0 0
  %7330 = vmatpush1.bf16.msra.mxu0 0
  %7331 = vmatprep.subr.bf16.mxu0 0
  %7332 = vmatpush1.bf16.msra.mxu0 0
  %7333 = vmatprep.subr.bf16.mxu0 0
  %7334 = vmatpush1.bf16.msra.mxu0 0
  %7335 = vmatprep.subr.bf16.mxu0 0
  %7336 = vmatpush1.bf16.msra.mxu0 0
  %7337 = vmatprep.subr.bf16.mxu0 0
  %7338 = vmatpush1.bf16.msra.mxu0 0
  %7339 = vmatprep.subr.bf16.mxu0 0
  %7340 = vmatpush1.bf16.msra.mxu0 0
  %7341 = vmatprep.subr.bf16.mxu0 0
  %7342 = vmatpush1.bf16.msra.mxu0 0
  %7343 = vmatprep.subr.bf16.mxu0 0
  %7344 = vmatpush1.bf16.msra.mxu0 0
  %7345 = vmatprep.subr.bf16.mxu0 0
  %7346 = vmatpush1.bf16.msra.mxu0 0
  %7347 = vmatprep.subr.bf16.mxu0 0
  %7348 = vmatpush1.bf16.msra.mxu0 0
  %7349 = vmatprep.subr.bf16.mxu0 0
  %7350 = vmatpush1.bf16.msra.mxu0 0
  %7351 = vmatprep.mubr.bf16.mxu0 0
  %7352 = vmatmul.mubr.bf16.gmra.mrb[0].mxu0 %v7317
  %v7353 = vpop.f32.mrb[0].mxu0
  %v7354 = vadd.f32 0.0, %v7353
  %v7355 = vpop.f32.mrb[0].mxu0
  %v7356 = vpop.f32.mrb[0].mxu0
  %v7357 = vadd.f32 0.0, %v7356
  %v7358 = vpop.f32.mrb[0].mxu0
  %7359 = vdwg.mxu0
  %v7360 = vadd.f32 %v7306, %v7354
  %v7361 = vadd.f32 %v7307, %v7357
  %v7362 = vadd.f32 %v7360, %v6874
  %v7363 = vadd.f32 %v7361, %v6879
  %v7364 = vmax.f32 %v7362, 0.0
  %v7365 = vmax.f32 %v7363, 0.0
  %v7366 = vpack.c.bf16 %v7365, %v7364
  %v7368 = vsel %vm419, %v6932, 0
  %7370 = vmatprep.subr.bf16.mxu0 0
  %7371 = vmatpush1.bf16.msra.mxu0 %v6607
  %7372 = vmatprep.subr.bf16.mxu0 0
  %7373 = vmatpush1.bf16.msra.mxu0 %v6608
  %7374 = vmatprep.subr.bf16.mxu0 0
  %7375 = vmatpush1.bf16.msra.mxu0 %v6609
  %7376 = vmatprep.subr.bf16.mxu0 0
  %7377 = vmatpush1.bf16.msra.mxu0 %v6610
  %7378 = vmatprep.subr.bf16.mxu0 0
  %7379 = vmatpush1.bf16.msra.mxu0 %v6611
  %7380 = vmatprep.subr.bf16.mxu0 0
  %7381 = vmatpush1.bf16.msra.mxu0 %v6612
  %7382 = vmatprep.subr.bf16.mxu0 0
  %7383 = vmatpush1.bf16.msra.mxu0 %v6627
  %7384 = vmatprep.subr.bf16.mxu0 0
  %7385 = vmatpush1.bf16.msra.mxu0 0
  %7386 = vmatprep.subr.bf16.mxu0 0
  %7387 = vmatpush1.bf16.msra.mxu0 0
  %7388 = vmatprep.subr.bf16.mxu0 0
  %7389 = vmatpush1.bf16.msra.mxu0 0
  %7390 = vmatprep.subr.bf16.mxu0 0
  %7391 = vmatpush1.bf16.msra.mxu0 0
  %7392 = vmatprep.subr.bf16.mxu0 0
  %7393 = vmatpush1.bf16.msra.mxu0 0
  %7394 = vmatprep.subr.bf16.mxu0 0
  %7395 = vmatpush1.bf16.msra.mxu0 0
  %7396 = vmatprep.subr.bf16.mxu0 0
  %7397 = vmatpush1.bf16.msra.mxu0 0
  %7398 = vmatprep.subr.bf16.mxu0 0
  %7399 = vmatpush1.bf16.msra.mxu0 0
  %7400 = vmatprep.subr.bf16.mxu0 0
  %7401 = vmatpush1.bf16.msra.mxu0 0
  %7402 = vmatprep.mubr.bf16.mxu0 0
  %7403 = vmatmul.mubr.bf16.gmra.mrb[0].mxu0 %v7368
  %v7404 = vpop.f32.mrb[0].mxu0
  %v7405 = vadd.f32 0.0, %v7404
  %v7406 = vpop.f32.mrb[0].mxu0
  %v7407 = vpop.f32.mrb[0].mxu0
  %v7408 = vadd.f32 0.0, %v7407
  %v7409 = vpop.f32.mrb[0].mxu0
  %7410 = vdwg.mxu0
  %v7411 = vpack.c.bf16 %v7408, %v7405
  %v7413 = vsel %vm419, %v7150, 0
  %7415 = vmatprep.subr.bf16.mxu0 0
  %7416 = vmatpush1.bf16.msra.mxu0 %v6607
  %7417 = vmatprep.subr.bf16.mxu0 0
  %7418 = vmatpush1.bf16.msra.mxu0 %v6608
  %7419 = vmatprep.subr.bf16.mxu0 0
  %7420 = vmatpush1.bf16.msra.mxu0 %v6609
  %7421 = vmatprep.subr.bf16.mxu0 0
  %7422 = vmatpush1.bf16.msra.mxu0 %v6610
  %7423 = vmatprep.subr.bf16.mxu0 0
  %7424 = vmatpush1.bf16.msra.mxu0 %v6611
  %7425 = vmatprep.subr.bf16.mxu0 0
  %7426 = vmatpush1.bf16.msra.mxu0 %v6612
  %7427 = vmatprep.subr.bf16.mxu0 0
  %7428 = vmatpush1.bf16.msra.mxu0 %v6627
  %7429 = vmatprep.subr.bf16.mxu0 0
  %7430 = vmatpush1.bf16.msra.mxu0 0
  %7431 = vmatprep.subr.bf16.mxu0 0
  %7432 = vmatpush1.bf16.msra.mxu0 0
  %7433 = vmatprep.subr.bf16.mxu0 0
  %7434 = vmatpush1.bf16.msra.mxu0 0
  %7435 = vmatprep.subr.bf16.mxu0 0
  %7436 = vmatpush1.bf16.msra.mxu0 0
  %7437 = vmatprep.subr.bf16.mxu0 0
  %7438 = vmatpush1.bf16.msra.mxu0 0
  %7439 = vmatprep.subr.bf16.mxu0 0
  %7440 = vmatpush1.bf16.msra.mxu0 0
  %7441 = vmatprep.subr.bf16.mxu0 0
  %7442 = vmatpush1.bf16.msra.mxu0 0
  %7443 = vmatprep.subr.bf16.mxu0 0
  %7444 = vmatpush1.bf16.msra.mxu0 0
  %7445 = vmatprep.subr.bf16.mxu0 0
  %7446 = vmatpush1.bf16.msra.mxu0 0
  %7447 = vmatprep.mubr.bf16.mxu0 0
  %7448 = vmatmul.mubr.bf16.gmra.mrb[0].mxu0 %v7413
  %v7449 = vpop.f32.mrb[0].mxu0
  %v7450 = vadd.f32 0.0, %v7449
  %v7451 = vpop.f32.mrb[0].mxu0
  %v7452 = vpop.f32.mrb[0].mxu0
  %v7453 = vadd.f32 0.0, %v7452
  %v7454 = vpop.f32.mrb[0].mxu0
  %7455 = vdwg.mxu0
  %v7456 = vpack.c.bf16 %v7453, %v7450
  %7457 = vmatprep.subr.bf16.mxu0 0
  %7458 = vmatpush1.bf16.msra.mxu0 %v6706
  %7459 = vmatprep.subr.bf16.mxu0 0
  %7460 = vmatpush1.bf16.msra.mxu0 %v6707
  %7461 = vmatprep.subr.bf16.mxu0 0
  %7462 = vmatpush1.bf16.msra.mxu0 %v6708
  %7463 = vmatprep.subr.bf16.mxu0 0
  %7464 = vmatpush1.bf16.msra.mxu0 %v6709
  %7465 = vmatprep.subr.bf16.mxu0 0
  %7466 = vmatpush1.bf16.msra.mxu0 %v6710
  %7467 = vmatprep.subr.bf16.mxu0 0
  %7468 = vmatpush1.bf16.msra.mxu0 %v6711
  %7469 = vmatprep.subr.bf16.mxu0 0
  %7470 = vmatpush1.bf16.msra.mxu0 %v6720
  %7471 = vmatprep.subr.bf16.mxu0 0
  %7472 = vmatpush1.bf16.msra.mxu0 0
  %7473 = vmatprep.subr.bf16.mxu0 0
  %7474 = vmatpush1.bf16.msra.mxu0 0
  %7475 = vmatprep.subr.bf16.mxu0 0
  %7476 = vmatpush1.bf16.msra.mxu0 0
  %7477 = vmatprep.subr.bf16.mxu0 0
  %7478 = vmatpush1.bf16.msra.mxu0 0
  %7479 = vmatprep.subr.bf16.mxu0 0
  %7480 = vmatpush1.bf16.msra.mxu0 0
  %7481 = vmatprep.subr.bf16.mxu0 0
  %7482 = vmatpush1.bf16.msra.mxu0 0
  %7483 = vmatprep.subr.bf16.mxu0 0
  %7484 = vmatpush1.bf16.msra.mxu0 0
  %7485 = vmatprep.subr.bf16.mxu0 0
  %7486 = vmatpush1.bf16.msra.mxu0 0
  %7487 = vmatprep.subr.bf16.mxu0 0
  %7488 = vmatpush1.bf16.msra.mxu0 0
  %7489 = vmatprep.mubr.bf16.mxu0 0
  %7490 = vmatmul.mubr.bf16.gmra.mrb[0].mxu0 %v7368
  %v7491 = vpop.f32.mrb[0].mxu0
  %v7492 = vadd.f32 0.0, %v7491
  %v7493 = vpop.f32.mrb[0].mxu0
  %v7494 = vpop.f32.mrb[0].mxu0
  %v7495 = vadd.f32 0.0, %v7494
  %v7496 = vpop.f32.mrb[0].mxu0
  %7497 = vdwg.mxu0
  %v7498 = vpack.c.bf16 %v7495, %v7492
  %v7500 = vsel %vm419, %v7041, 0
  %7502 = vmatprep.subr.bf16.mxu0 0
  %7503 = vmatpush1.bf16.msra.mxu0 %v6706
  %7504 = vmatprep.subr.bf16.mxu0 0
  %7505 = vmatpush1.bf16.msra.mxu0 %v6707
  %7506 = vmatprep.subr.bf16.mxu0 0
  %7507 = vmatpush1.bf16.msra.mxu0 %v6708
  %7508 = vmatprep.subr.bf16.mxu0 0
  %7509 = vmatpush1.bf16.msra.mxu0 %v6709
  %7510 = vmatprep.subr.bf16.mxu0 0
  %7511 = vmatpush1.bf16.msra.mxu0 %v6710
  %7512 = vmatprep.subr.bf16.mxu0 0
  %7513 = vmatpush1.bf16.msra.mxu0 %v6711
  %7514 = vmatprep.subr.bf16.mxu0 0
  %7515 = vmatpush1.bf16.msra.mxu0 %v6720
  %7516 = vmatprep.subr.bf16.mxu0 0
  %7517 = vmatpush1.bf16.msra.mxu0 0
  %7518 = vmatprep.subr.bf16.mxu0 0
  %7519 = vmatpush1.bf16.msra.mxu0 0
  %7520 = vmatprep.subr.bf16.mxu0 0
  %7521 = vmatpush1.bf16.msra.mxu0 0
  %7522 = vmatprep.subr.bf16.mxu0 0
  %7523 = vmatpush1.bf16.msra.mxu0 0
  %7524 = vmatprep.subr.bf16.mxu0 0
  %7525 = vmatpush1.bf16.msra.mxu0 0
  %7526 = vmatprep.subr.bf16.mxu0 0
  %7527 = vmatpush1.bf16.msra.mxu0 0
  %7528 = vmatprep.subr.bf16.mxu0 0
  %7529 = vmatpush1.bf16.msra.mxu0 0
  %7530 = vmatprep.subr.bf16.mxu0 0
  %7531 = vmatpush1.bf16.msra.mxu0 0
  %7532 = vmatprep.subr.bf16.mxu0 0
  %7533 = vmatpush1.bf16.msra.mxu0 0
  %7534 = vmatprep.mubr.bf16.mxu0 0
  %7535 = vmatmul.mubr.bf16.gmra.mrb[0].mxu0 %v7500
  %v7536 = vpop.f32.mrb[0].mxu0
  %v7537 = vadd.f32 0.0, %v7536
  %v7538 = vpop.f32.mrb[0].mxu0
  %v7539 = vpop.f32.mrb[0].mxu0
  %v7540 = vadd.f32 0.0, %v7539
  %v7541 = vpop.f32.mrb[0].mxu0
  %7542 = vdwg.mxu0
  %v7543 = vpack.c.bf16 %v7540, %v7537
  %7544 = vmatprep.subr.bf16.mxu0 0
  %7545 = vmatpush1.bf16.msra.mxu0 %v6799
  %7546 = vmatprep.subr.bf16.mxu0 0
  %7547 = vmatpush1.bf16.msra.mxu0 %v6800
  %7548 = vmatprep.subr.bf16.mxu0 0
  %7549 = vmatpush1.bf16.msra.mxu0 %v6801
  %7550 = vmatprep.subr.bf16.mxu0 0
  %7551 = vmatpush1.bf16.msra.mxu0 %v6802
  %7552 = vmatprep.subr.bf16.mxu0 0
  %7553 = vmatpush1.bf16.msra.mxu0 %v6803
  %7554 = vmatprep.subr.bf16.mxu0 0
  %7555 = vmatpush1.bf16.msra.mxu0 %v6804
  %7556 = vmatprep.subr.bf16.mxu0 0
  %7557 = vmatpush1.bf16.msra.mxu0 %v6813
  %7558 = vmatprep.subr.bf16.mxu0 0
  %7559 = vmatpush1.bf16.msra.mxu0 0
  %7560 = vmatprep.subr.bf16.mxu0 0
  %7561 = vmatpush1.bf16.msra.mxu0 0
  %7562 = vmatprep.subr.bf16.mxu0 0
  %7563 = vmatpush1.bf16.msra.mxu0 0
  %7564 = vmatprep.subr.bf16.mxu0 0
  %7565 = vmatpush1.bf16.msra.mxu0 0
  %7566 = vmatprep.subr.bf16.mxu0 0
  %7567 = vmatpush1.bf16.msra.mxu0 0
  %7568 = vmatprep.subr.bf16.mxu0 0
  %7569 = vmatpush1.bf16.msra.mxu0 0
  %7570 = vmatprep.subr.bf16.mxu0 0
  %7571 = vmatpush1.bf16.msra.mxu0 0
  %7572 = vmatprep.subr.bf16.mxu0 0
  %7573 = vmatpush1.bf16.msra.mxu0 0
  %7574 = vmatprep.subr.bf16.mxu0 0
  %7575 = vmatpush1.bf16.msra.mxu0 0
  %7576 = vmatprep.mubr.bf16.mxu0 0
  %7577 = vmatmul.mubr.bf16.gmra.mrb[0].mxu0 %v7368
  %v7578 = vpop.f32.mrb[0].mxu0
  %v7579 = vadd.f32 0.0, %v7578
  %v7580 = vpop.f32.mrb[0].mxu0
  %v7581 = vpop.f32.mrb[0].mxu0
  %v7582 = vadd.f32 0.0, %v7581
  %v7583 = vpop.f32.mrb[0].mxu0
  %7584 = vdwg.mxu0
  %v7585 = vpack.c.bf16 %v7582, %v7579
  %7586 = vst.msk [vmem:[#allocation4] sm:$0xff] %vm419, %v6932
  %7588 = vrot.lane.b32.xlu0 %v7041, 98
  %v7589 = vpop.permute.xlu0 %7588
  %vm7591 = vcmask 1048336
  %7592 = vst.msk [vmem:[#allocation4] sm:$0xff] %vm7591, %v7589
  %vm7593 = vcmask 556032
  %7594 = vst.msk [vmem:[#allocation4 + $0x8] sm:$0xff] %vm7593, %v7589
  %7596 = vrot.lane.b32.xlu0 %v7150, 68
  %v7597 = vpop.permute.xlu0 %7596
  %vm7599 = vcmask 1048096
  %7600 = vst.msk [vmem:[#allocation4 + $0x8] sm:$0xff] %vm7599, %v7597
  %vm7601 = vcmask 310272
  %7602 = vst.msk [vmem:[#allocation4 + $0x10] sm:$0xff] %vm7601, %v7597
  %7604 = vrot.lane.b32.xlu0 %v7366, 38
  %v7605 = vpop.permute.xlu0 %7604
  %vm7607 = vcmask 1047856
  %7608 = vst.msk [vmem:[#allocation4 + $0x10] sm:$0xff] %vm7607, %v7605
  %vm7609 = vcmask 64512
  %7610 = vst.msk [vmem:[#allocation4 + $0x18] sm:$0xff] %vm7609, %v7605
  %7611 = vst.msk [vmem:[#allocation5] sm:$0xff] %vm419, %v7041
  %7613 = vrot.lane.b32.xlu0 %v7411, 98
  %v7614 = vpop.permute.xlu0 %7613
  %7616 = vst.msk [vmem:[#allocation5] sm:$0xff] %vm7591, %v7614
  %7617 = vst.msk [vmem:[#allocation5 + $0x8] sm:$0xff] %vm7593, %v7614
  %7618 = vrot.lane.b32.xlu0 %v7366, 68
  %v7619 = vpop.permute.xlu0 %7618
  %7621 = vst.msk [vmem:[#allocation5 + $0x8] sm:$0xff] %vm7599, %v7619
  %7622 = vst.msk [vmem:[#allocation5 + $0x10] sm:$0xff] %vm7601, %v7619
  %7624 = vrot.lane.b32.xlu0 %v7456, 38
  %v7625 = vpop.permute.xlu0 %7624
  %7627 = vst.msk [vmem:[#allocation5 + $0x10] sm:$0xff] %vm7607, %v7625
  %7628 = vst.msk [vmem:[#allocation5 + $0x18] sm:$0xff] %vm7609, %v7625
  %7629 = vst.msk [vmem:[#allocation6] sm:$0xff] %vm419, %v7150
  %7630 = vrot.lane.b32.xlu0 %v7366, 98
  %v7631 = vpop.permute.xlu0 %7630
  %7633 = vst.msk [vmem:[#allocation6] sm:$0xff] %vm7591, %v7631
  %7634 = vst.msk [vmem:[#allocation6 + $0x8] sm:$0xff] %vm7593, %v7631
  %7636 = vrot.lane.b32.xlu0 %v7498, 68
  %v7637 = vpop.permute.xlu0 %7636
  %7639 = vst.msk [vmem:[#allocation6 + $0x8] sm:$0xff] %vm7599, %v7637
  %7640 = vst.msk [vmem:[#allocation6 + $0x10] sm:$0xff] %vm7601, %v7637
  %7642 = vrot.lane.b32.xlu0 %v7543, 38
  %v7643 = vpop.permute.xlu0 %7642
  %7645 = vst.msk [vmem:[#allocation6 + $0x10] sm:$0xff] %vm7607, %v7643
  %7646 = vst.msk [vmem:[#allocation6 + $0x18] sm:$0xff] %vm7609, %v7643
  %7647 = vst.msk [vmem:[#allocation7] sm:$0xff] %vm419, %v7366
  %7648 = vrot.lane.b32.xlu0 %v7456, 98
  %v7649 = vpop.permute.xlu0 %7648
  %7651 = vst.msk [vmem:[#allocation7] sm:$0xff] %vm7591, %v7649
  %7652 = vst.msk [vmem:[#allocation7 + $0x8] sm:$0xff] %vm7593, %v7649
  %7653 = vrot.lane.b32.xlu0 %v7543, 68
  %v7654 = vpop.permute.xlu0 %7653
  %7656 = vst.msk [vmem:[#allocation7 + $0x8] sm:$0xff] %vm7599, %v7654
  %7657 = vst.msk [vmem:[#allocation7 + $0x10] sm:$0xff] %vm7601, %v7654
  %7659 = vrot.lane.b32.xlu0 %v7585, 38
  %v7660 = vpop.permute.xlu0 %7659
  %7662 = vst.msk [vmem:[#allocation7 + $0x10] sm:$0xff] %vm7607, %v7660
  %7663 = vst.msk [vmem:[#allocation7 + $0x18] sm:$0xff] %vm7609, %v7660
  %v7664 = vld [vmem:[#allocation4] sm:$0xff]
  %v7665 = vld [vmem:[#allocation4 + $0x8] sm:$0xff]
  %v7666 = vld [vmem:[#allocation4 + $0x10] sm:$0xff]
  %v7667 = vld [vmem:[#allocation4 + $0x18] sm:$0xff]
  %v7668 = vld [vmem:[#allocation5] sm:$0xff]
  %v7669 = vld [vmem:[#allocation5 + $0x8] sm:$0xff]
  %v7670 = vld [vmem:[#allocation5 + $0x10] sm:$0xff]
  %v7671 = vld [vmem:[#allocation5 + $0x18] sm:$0xff]
  %v7672 = vld [vmem:[#allocation6] sm:$0xff]
  %v7673 = vld [vmem:[#allocation6 + $0x8] sm:$0xff]
  %v7674 = vld [vmem:[#allocation6 + $0x10] sm:$0xff]
  %v7675 = vld [vmem:[#allocation6 + $0x18] sm:$0xff]
  %v7676 = vld [vmem:[#allocation7] sm:$0xff]
  %v7677 = vld [vmem:[#allocation7 + $0x8] sm:$0xff]
  %v7678 = vld [vmem:[#allocation7 + $0x10] sm:$0xff]
  %v7679 = vld [vmem:[#allocation7 + $0x18] sm:$0xff]
  %v7680 = vld [vmem:[%s12] sm:$0x7]
  %s7681 = scalar_lea.vmem %s11, 8
  %v7682 = vld [vmem:[%s7681] sm:$0x3]
  %7684 = vset.pattern.permute.xlu0 0
  %7685 = vperm.xlu0 %7684, %v7680
  %v7686 = vpop.permute.xlu0 %7685
  %v7689 = vsel %vm747, %v7682, 0
  %7691 = vmatprep.subr.bf16.mxu0 %v7665
  %7692 = vmatpush1.bf16.msra.mxu0 %v7664
  %7693 = vmatprep.subr.bf16.mxu0 0
  %7694 = vmatpush1.bf16.msra.mxu0 0
  %7695 = vmatprep.subr.bf16.mxu0 0
  %7696 = vmatpush1.bf16.msra.mxu0 0
  %7697 = vmatprep.subr.bf16.mxu0 0
  %7698 = vmatpush1.bf16.msra.mxu0 0
  %7699 = vmatprep.subr.bf16.mxu0 0
  %7700 = vmatpush1.bf16.msra.mxu0 0
  %7701 = vmatprep.subr.bf16.mxu0 0
  %7702 = vmatpush1.bf16.msra.mxu0 0
  %7703 = vmatprep.subr.bf16.mxu0 0
  %7704 = vmatpush1.bf16.msra.mxu0 0
  %7705 = vmatprep.subr.bf16.mxu0 0
  %7706 = vmatpush1.bf16.msra.mxu0 0
  %7707 = vmatprep.subr.bf16.mxu0 0
  %7708 = vmatpush1.bf16.msra.mxu0 0
  %7709 = vmatprep.subr.bf16.mxu0 0
  %7710 = vmatpush1.bf16.msra.mxu0 0
  %7711 = vmatprep.subr.bf16.mxu0 0
  %7712 = vmatpush1.bf16.msra.mxu0 0
  %7713 = vmatprep.subr.bf16.mxu0 0
  %7714 = vmatpush1.bf16.msra.mxu0 0
  %7715 = vmatprep.subr.bf16.mxu0 0
  %7716 = vmatpush1.bf16.msra.mxu0 0
  %7717 = vmatprep.subr.bf16.mxu0 0
  %7718 = vmatpush1.bf16.msra.mxu0 0
  %7719 = vmatprep.subr.bf16.mxu0 0
  %7720 = vmatpush1.bf16.msra.mxu0 0
  %7721 = vmatprep.subr.bf16.mxu0 0
  %7722 = vmatpush1.bf16.msra.mxu0 0
  %7723 = vmatprep.mubr.bf16.mxu0 0
  %7724 = vmatmul.mubr.bf16.gmra.mrb[0].mxu0 %v7689
  %v7725 = vpop.f32.mrb[0].mxu0
  %v7726 = vadd.f32 %v7686, %v7725
  %v7727 = vpop.f32.mrb[0].mxu0
  %v7728 = vadd.f32 %v7686, %v7727
  %v7729 = vpop.f32.mrb[0].mxu0
  %v7730 = vpop.f32.mrb[0].mxu0
  %7731 = vdwg.mxu0
  %7732 = vmatprep.subr.bf16.mxu0 %v7667
  %7733 = vmatpush1.bf16.msra.mxu0 %v7666
  %7734 = vmatprep.subr.bf16.mxu0 0
  %7735 = vmatpush1.bf16.msra.mxu0 0
  %7736 = vmatprep.subr.bf16.mxu0 0
  %7737 = vmatpush1.bf16.msra.mxu0 0
  %7738 = vmatprep.subr.bf16.mxu0 0
  %7739 = vmatpush1.bf16.msra.mxu0 0
  %7740 = vmatprep.subr.bf16.mxu0 0
  %7741 = vmatpush1.bf16.msra.mxu0 0
  %7742 = vmatprep.subr.bf16.mxu0 0
  %7743 = vmatpush1.bf16.msra.mxu0 0
  %7744 = vmatprep.subr.bf16.mxu0 0
  %7745 = vmatpush1.bf16.msra.mxu0 0
  %7746 = vmatprep.subr.bf16.mxu0 0
  %7747 = vmatpush1.bf16.msra.mxu0 0
  %7748 = vmatprep.subr.bf16.mxu0 0
  %7749 = vmatpush1.bf16.msra.mxu0 0
  %7750 = vmatprep.subr.bf16.mxu0 0
  %7751 = vmatpush1.bf16.msra.mxu0 0
  %7752 = vmatprep.subr.bf16.mxu0 0
  %7753 = vmatpush1.bf16.msra.mxu0 0
  %7754 = vmatprep.subr.bf16.mxu0 0
  %7755 = vmatpush1.bf16.msra.mxu0 0
  %7756 = vmatprep.subr.bf16.mxu0 0
  %7757 = vmatpush1.bf16.msra.mxu0 0
  %7758 = vmatprep.subr.bf16.mxu0 0
  %7759 = vmatpush1.bf16.msra.mxu0 0
  %7760 = vmatprep.subr.bf16.mxu0 0
  %7761 = vmatpush1.bf16.msra.mxu0 0
  %7762 = vmatprep.subr.bf16.mxu0 0
  %7763 = vmatpush1.bf16.msra.mxu0 0
  %7764 = vmatprep.mubr.bf16.mxu0 0
  %7765 = vmatmul.mubr.bf16.gmra.mrb[0].mxu0 %v7689
  %v7766 = vpop.f32.mrb[0].mxu0
  %v7767 = vadd.f32 %v7686, %v7766
  %v7768 = vpop.f32.mrb[0].mxu0
  %v7769 = vadd.f32 %v7686, %v7768
  %v7770 = vpop.f32.mrb[0].mxu0
  %v7771 = vpop.f32.mrb[0].mxu0
  %7772 = vdwg.mxu0
  %v7773 = vsub.f32 0.0, %v7726
  %v7774 = vsub.f32 0.0, %v7728
  %v7775 = vsub.f32 0.0, %v7767
  %v7776 = vsub.f32 0.0, %v7769
  %v7777 = vmul.f32 %v7773, 1.442695
  %v7778 = vpow.pop %v7777
  %v7779 = vmul.f32 %v7774, 1.442695
  %v7780 = vpow.pop %v7779
  %v7781 = vmul.f32 %v7775, 1.442695
  %v7782 = vpow.pop %v7781
  %v7783 = vmul.f32 %v7776, 1.442695
  %v7784 = vpow.pop %v7783
  %v7785 = vadd.f32 %v7778, 1.0
  %v7786 = vadd.f32 %v7780, 1.0
  %v7787 = vadd.f32 %v7782, 1.0
  %v7788 = vadd.f32 %v7784, 1.0
  %v7789 = vrcp.pop %v7785
  %v7790 = vrcp.pop %v7786
  %v7791 = vrcp.pop %v7787
  %v7792 = vrcp.pop %v7788
  %v7793 = vmax.f32 %v7789, 0.0
  %v7794 = vmax.f32 %v7790, 0.0
  %v7795 = vmax.f32 %v7791, 0.0
  %v7796 = vmax.f32 %v7792, 0.0
  %v7797 = vmin.f32 %v7793, 1.0
  %v7798 = vmin.f32 %v7794, 1.0
  %v7799 = vmin.f32 %v7795, 1.0
  %v7800 = vmin.f32 %v7796, 1.0
  %s7801 = scalar_lea.vmem %s11, 6
  %v7802 = vld [vmem:[%s7801] sm:$0x3]
  %s7803 = scalar_lea.vmem %s11, 10
  %v7804 = vld [vmem:[%s7803] sm:$0x3]
  %v7806 = vsel %vm747, %v7804, 0
  %7808 = vmatprep.subr.bf16.mxu0 %v7665
  %7809 = vmatpush1.bf16.msra.mxu0 %v7664
  %7810 = vmatprep.subr.bf16.mxu0 0
  %7811 = vmatpush1.bf16.msra.mxu0 0
  %7812 = vmatprep.subr.bf16.mxu0 0
  %7813 = vmatpush1.bf16.msra.mxu0 0
  %7814 = vmatprep.subr.bf16.mxu0 0
  %7815 = vmatpush1.bf16.msra.mxu0 0
  %7816 = vmatprep.subr.bf16.mxu0 0
  %7817 = vmatpush1.bf16.msra.mxu0 0
  %7818 = vmatprep.subr.bf16.mxu0 0
  %7819 = vmatpush1.bf16.msra.mxu0 0
  %7820 = vmatprep.subr.bf16.mxu0 0
  %7821 = vmatpush1.bf16.msra.mxu0 0
  %7822 = vmatprep.subr.bf16.mxu0 0
  %7823 = vmatpush1.bf16.msra.mxu0 0
  %7824 = vmatprep.subr.bf16.mxu0 0
  %7825 = vmatpush1.bf16.msra.mxu0 0
  %7826 = vmatprep.subr.bf16.mxu0 0
  %7827 = vmatpush1.bf16.msra.mxu0 0
  %7828 = vmatprep.subr.bf16.mxu0 0
  %7829 = vmatpush1.bf16.msra.mxu0 0
  %7830 = vmatprep.subr.bf16.mxu0 0
  %7831 = vmatpush1.bf16.msra.mxu0 0
  %7832 = vmatprep.subr.bf16.mxu0 0
  %7833 = vmatpush1.bf16.msra.mxu0 0
  %7834 = vmatprep.subr.bf16.mxu0 0
  %7835 = vmatpush1.bf16.msra.mxu0 0
  %7836 = vmatprep.subr.bf16.mxu0 0
  %7837 = vmatpush1.bf16.msra.mxu0 0
  %7838 = vmatprep.subr.bf16.mxu0 0
  %7839 = vmatpush1.bf16.msra.mxu0 0
  %7840 = vmatprep.mubr.bf16.mxu0 0
  %7841 = vmatmul.mubr.bf16.gmra.mrb[0].mxu0 %v7806
  %v7842 = vpop.f32.mrb[0].mxu0
  %v7843 = vadd.f32 0.0, %v7842
  %v7844 = vpop.f32.mrb[0].mxu0
  %v7845 = vadd.f32 0.0, %v7844
  %v7846 = vpop.f32.mrb[0].mxu0
  %v7847 = vpop.f32.mrb[0].mxu0
  %7848 = vdwg.mxu0
  %7849 = vmatprep.subr.bf16.mxu0 %v7667
  %7850 = vmatpush1.bf16.msra.mxu0 %v7666
  %7851 = vmatprep.subr.bf16.mxu0 0
  %7852 = vmatpush1.bf16.msra.mxu0 0
  %7853 = vmatprep.subr.bf16.mxu0 0
  %7854 = vmatpush1.bf16.msra.mxu0 0
  %7855 = vmatprep.subr.bf16.mxu0 0
  %7856 = vmatpush1.bf16.msra.mxu0 0
  %7857 = vmatprep.subr.bf16.mxu0 0
  %7858 = vmatpush1.bf16.msra.mxu0 0
  %7859 = vmatprep.subr.bf16.mxu0 0
  %7860 = vmatpush1.bf16.msra.mxu0 0
  %7861 = vmatprep.subr.bf16.mxu0 0
  %7862 = vmatpush1.bf16.msra.mxu0 0
  %7863 = vmatprep.subr.bf16.mxu0 0
  %7864 = vmatpush1.bf16.msra.mxu0 0
  %7865 = vmatprep.subr.bf16.mxu0 0
  %7866 = vmatpush1.bf16.msra.mxu0 0
  %7867 = vmatprep.subr.bf16.mxu0 0
  %7868 = vmatpush1.bf16.msra.mxu0 0
  %7869 = vmatprep.subr.bf16.mxu0 0
  %7870 = vmatpush1.bf16.msra.mxu0 0
  %7871 = vmatprep.subr.bf16.mxu0 0
  %7872 = vmatpush1.bf16.msra.mxu0 0
  %7873 = vmatprep.subr.bf16.mxu0 0
  %7874 = vmatpush1.bf16.msra.mxu0 0
  %7875 = vmatprep.subr.bf16.mxu0 0
  %7876 = vmatpush1.bf16.msra.mxu0 0
  %7877 = vmatprep.subr.bf16.mxu0 0
  %7878 = vmatpush1.bf16.msra.mxu0 0
  %7879 = vmatprep.subr.bf16.mxu0 0
  %7880 = vmatpush1.bf16.msra.mxu0 0
  %7881 = vmatprep.mubr.bf16.mxu0 0
  %7882 = vmatmul.mubr.bf16.gmra.mrb[0].mxu0 %v7806
  %v7883 = vpop.f32.mrb[0].mxu0
  %v7884 = vadd.f32 0.0, %v7883
  %v7885 = vpop.f32.mrb[0].mxu0
  %v7886 = vadd.f32 0.0, %v7885
  %v7887 = vpop.f32.mrb[0].mxu0
  %v7888 = vpop.f32.mrb[0].mxu0
  %7889 = vdwg.mxu0
  %v7891 = vsel %vm747, %v7802, 0
  %7893 = vmatprep.subr.bf16.mxu0 %v7669
  %7894 = vmatpush1.bf16.msra.mxu0 %v7668
  %7895 = vmatprep.subr.bf16.mxu0 0
  %7896 = vmatpush1.bf16.msra.mxu0 0
  %7897 = vmatprep.subr.bf16.mxu0 0
  %7898 = vmatpush1.bf16.msra.mxu0 0
  %7899 = vmatprep.subr.bf16.mxu0 0
  %7900 = vmatpush1.bf16.msra.mxu0 0
  %7901 = vmatprep.subr.bf16.mxu0 0
  %7902 = vmatpush1.bf16.msra.mxu0 0
  %7903 = vmatprep.subr.bf16.mxu0 0
  %7904 = vmatpush1.bf16.msra.mxu0 0
  %7905 = vmatprep.subr.bf16.mxu0 0
  %7906 = vmatpush1.bf16.msra.mxu0 0
  %7907 = vmatprep.subr.bf16.mxu0 0
  %7908 = vmatpush1.bf16.msra.mxu0 0
  %7909 = vmatprep.subr.bf16.mxu0 0
  %7910 = vmatpush1.bf16.msra.mxu0 0
  %7911 = vmatprep.subr.bf16.mxu0 0
  %7912 = vmatpush1.bf16.msra.mxu0 0
  %7913 = vmatprep.subr.bf16.mxu0 0
  %7914 = vmatpush1.bf16.msra.mxu0 0
  %7915 = vmatprep.subr.bf16.mxu0 0
  %7916 = vmatpush1.bf16.msra.mxu0 0
  %7917 = vmatprep.subr.bf16.mxu0 0
  %7918 = vmatpush1.bf16.msra.mxu0 0
  %7919 = vmatprep.subr.bf16.mxu0 0
  %7920 = vmatpush1.bf16.msra.mxu0 0
  %7921 = vmatprep.subr.bf16.mxu0 0
  %7922 = vmatpush1.bf16.msra.mxu0 0
  %7923 = vmatprep.subr.bf16.mxu0 0
  %7924 = vmatpush1.bf16.msra.mxu0 0
  %7925 = vmatprep.mubr.bf16.mxu0 0
  %7926 = vmatmul.mubr.bf16.gmra.mrb[0].mxu0 %v7891
  %v7927 = vpop.f32.mrb[0].mxu0
  %v7928 = vadd.f32 %v7843, %v7927
  %v7929 = vpop.f32.mrb[0].mxu0
  %v7930 = vadd.f32 %v7845, %v7929
  %v7931 = vpop.f32.mrb[0].mxu0
  %v7932 = vpop.f32.mrb[0].mxu0
  %7933 = vdwg.mxu0
  %7934 = vmatprep.subr.bf16.mxu0 %v7671
  %7935 = vmatpush1.bf16.msra.mxu0 %v7670
  %7936 = vmatprep.subr.bf16.mxu0 0
  %7937 = vmatpush1.bf16.msra.mxu0 0
  %7938 = vmatprep.subr.bf16.mxu0 0
  %7939 = vmatpush1.bf16.msra.mxu0 0
  %7940 = vmatprep.subr.bf16.mxu0 0
  %7941 = vmatpush1.bf16.msra.mxu0 0
  %7942 = vmatprep.subr.bf16.mxu0 0
  %7943 = vmatpush1.bf16.msra.mxu0 0
  %7944 = vmatprep.subr.bf16.mxu0 0
  %7945 = vmatpush1.bf16.msra.mxu0 0
  %7946 = vmatprep.subr.bf16.mxu0 0
  %7947 = vmatpush1.bf16.msra.mxu0 0
  %7948 = vmatprep.subr.bf16.mxu0 0
  %7949 = vmatpush1.bf16.msra.mxu0 0
  %7950 = vmatprep.subr.bf16.mxu0 0
  %7951 = vmatpush1.bf16.msra.mxu0 0
  %7952 = vmatprep.subr.bf16.mxu0 0
  %7953 = vmatpush1.bf16.msra.mxu0 0
  %7954 = vmatprep.subr.bf16.mxu0 0
  %7955 = vmatpush1.bf16.msra.mxu0 0
  %7956 = vmatprep.subr.bf16.mxu0 0
  %7957 = vmatpush1.bf16.msra.mxu0 0
  %7958 = vmatprep.subr.bf16.mxu0 0
  %7959 = vmatpush1.bf16.msra.mxu0 0
  %7960 = vmatprep.subr.bf16.mxu0 0
  %7961 = vmatpush1.bf16.msra.mxu0 0
  %7962 = vmatprep.subr.bf16.mxu0 0
  %7963 = vmatpush1.bf16.msra.mxu0 0
  %7964 = vmatprep.subr.bf16.mxu0 0
  %7965 = vmatpush1.bf16.msra.mxu0 0
  %7966 = vmatprep.mubr.bf16.mxu0 0
  %7967 = vmatmul.mubr.bf16.gmra.mrb[0].mxu0 %v7891
  %v7968 = vpop.f32.mrb[0].mxu0
  %v7969 = vadd.f32 %v7884, %v7968
  %v7970 = vpop.f32.mrb[0].mxu0
  %v7971 = vadd.f32 %v7886, %v7970
  %v7972 = vpop.f32.mrb[0].mxu0
  %v7973 = vpop.f32.mrb[0].mxu0
  %7974 = vdwg.mxu0
  %v7975 = vadd.f32 %v7928, %v7686
  %v7976 = vadd.f32 %v7930, %v7686
  %v7977 = vadd.f32 %v7969, %v7686
  %v7978 = vadd.f32 %v7971, %v7686
  %v7979 = vsub.f32 0.0, %v7975
  %v7980 = vsub.f32 0.0, %v7976
  %v7981 = vsub.f32 0.0, %v7977
  %v7982 = vsub.f32 0.0, %v7978
  %v7983 = vmul.f32 %v7979, 1.442695
  %v7984 = vpow.pop %v7983
  %v7985 = vmul.f32 %v7980, 1.442695
  %v7986 = vpow.pop %v7985
  %v7987 = vmul.f32 %v7981, 1.442695
  %v7988 = vpow.pop %v7987
  %v7989 = vmul.f32 %v7982, 1.442695
  %v7990 = vpow.pop %v7989
  %v7991 = vadd.f32 %v7984, 1.0
  %v7992 = vadd.f32 %v7986, 1.0
  %v7993 = vadd.f32 %v7988, 1.0
  %v7994 = vadd.f32 %v7990, 1.0
  %v7995 = vrcp.pop %v7991
  %v7996 = vrcp.pop %v7992
  %v7997 = vrcp.pop %v7993
  %v7998 = vrcp.pop %v7994
  %v7999 = vmax.f32 %v7995, 0.0
  %v8000 = vmax.f32 %v7996, 0.0
  %v8001 = vmax.f32 %v7997, 0.0
  %v8002 = vmax.f32 %v7998, 0.0
  %v8003 = vmin.f32 %v7999, 1.0
  %v8004 = vmin.f32 %v8000, 1.0
  %v8005 = vmin.f32 %v8001, 1.0
  %v8006 = vmin.f32 %v8002, 1.0
  %s8007 = scalar_lea.vmem %s11, 2
  %v8008 = vld [vmem:[%s8007] sm:$0x3]
  %s8009 = scalar_lea.vmem %s11, 14
  %v8010 = vld [vmem:[%s8009] sm:$0x3]
  %v8012 = vsel %vm747, %v8010, 0
  %8014 = vmatprep.subr.bf16.mxu0 %v7665
  %8015 = vmatpush1.bf16.msra.mxu0 %v7664
  %8016 = vmatprep.subr.bf16.mxu0 0
  %8017 = vmatpush1.bf16.msra.mxu0 0
  %8018 = vmatprep.subr.bf16.mxu0 0
  %8019 = vmatpush1.bf16.msra.mxu0 0
  %8020 = vmatprep.subr.bf16.mxu0 0
  %8021 = vmatpush1.bf16.msra.mxu0 0
  %8022 = vmatprep.subr.bf16.mxu0 0
  %8023 = vmatpush1.bf16.msra.mxu0 0
  %8024 = vmatprep.subr.bf16.mxu0 0
  %8025 = vmatpush1.bf16.msra.mxu0 0
  %8026 = vmatprep.subr.bf16.mxu0 0
  %8027 = vmatpush1.bf16.msra.mxu0 0
  %8028 = vmatprep.subr.bf16.mxu0 0
  %8029 = vmatpush1.bf16.msra.mxu0 0
  %8030 = vmatprep.subr.bf16.mxu0 0
  %8031 = vmatpush1.bf16.msra.mxu0 0
  %8032 = vmatprep.subr.bf16.mxu0 0
  %8033 = vmatpush1.bf16.msra.mxu0 0
  %8034 = vmatprep.subr.bf16.mxu0 0
  %8035 = vmatpush1.bf16.msra.mxu0 0
  %8036 = vmatprep.subr.bf16.mxu0 0
  %8037 = vmatpush1.bf16.msra.mxu0 0
  %8038 = vmatprep.subr.bf16.mxu0 0
  %8039 = vmatpush1.bf16.msra.mxu0 0
  %8040 = vmatprep.subr.bf16.mxu0 0
  %8041 = vmatpush1.bf16.msra.mxu0 0
  %8042 = vmatprep.subr.bf16.mxu0 0
  %8043 = vmatpush1.bf16.msra.mxu0 0
  %8044 = vmatprep.subr.bf16.mxu0 0
  %8045 = vmatpush1.bf16.msra.mxu0 0
  %8046 = vmatprep.mubr.bf16.mxu0 0
  %8047 = vmatmul.mubr.bf16.gmra.mrb[0].mxu0 %v8012
  %v8048 = vpop.f32.mrb[0].mxu0
  %v8049 = vadd.f32 0.0, %v8048
  %v8050 = vpop.f32.mrb[0].mxu0
  %v8051 = vadd.f32 0.0, %v8050
  %v8052 = vpop.f32.mrb[0].mxu0
  %v8053 = vpop.f32.mrb[0].mxu0
  %8054 = vdwg.mxu0
  %8055 = vmatprep.subr.bf16.mxu0 %v7667
  %8056 = vmatpush1.bf16.msra.mxu0 %v7666
  %8057 = vmatprep.subr.bf16.mxu0 0
  %8058 = vmatpush1.bf16.msra.mxu0 0
  %8059 = vmatprep.subr.bf16.mxu0 0
  %8060 = vmatpush1.bf16.msra.mxu0 0
  %8061 = vmatprep.subr.bf16.mxu0 0
  %8062 = vmatpush1.bf16.msra.mxu0 0
  %8063 = vmatprep.subr.bf16.mxu0 0
  %8064 = vmatpush1.bf16.msra.mxu0 0
  %8065 = vmatprep.subr.bf16.mxu0 0
  %8066 = vmatpush1.bf16.msra.mxu0 0
  %8067 = vmatprep.subr.bf16.mxu0 0
  %8068 = vmatpush1.bf16.msra.mxu0 0
  %8069 = vmatprep.subr.bf16.mxu0 0
  %8070 = vmatpush1.bf16.msra.mxu0 0
  %8071 = vmatprep.subr.bf16.mxu0 0
  %8072 = vmatpush1.bf16.msra.mxu0 0
  %8073 = vmatprep.subr.bf16.mxu0 0
  %8074 = vmatpush1.bf16.msra.mxu0 0
  %8075 = vmatprep.subr.bf16.mxu0 0
  %8076 = vmatpush1.bf16.msra.mxu0 0
  %8077 = vmatprep.subr.bf16.mxu0 0
  %8078 = vmatpush1.bf16.msra.mxu0 0
  %8079 = vmatprep.subr.bf16.mxu0 0
  %8080 = vmatpush1.bf16.msra.mxu0 0
  %8081 = vmatprep.subr.bf16.mxu0 0
  %8082 = vmatpush1.bf16.msra.mxu0 0
  %8083 = vmatprep.subr.bf16.mxu0 0
  %8084 = vmatpush1.bf16.msra.mxu0 0
  %8085 = vmatprep.subr.bf16.mxu0 0
  %8086 = vmatpush1.bf16.msra.mxu0 0
  %8087 = vmatprep.mubr.bf16.mxu0 0
  %8088 = vmatmul.mubr.bf16.gmra.mrb[0].mxu0 %v8012
  %v8089 = vpop.f32.mrb[0].mxu0
  %v8090 = vadd.f32 0.0, %v8089
  %v8091 = vpop.f32.mrb[0].mxu0
  %v8092 = vadd.f32 0.0, %v8091
  %v8093 = vpop.f32.mrb[0].mxu0
  %v8094 = vpop.f32.mrb[0].mxu0
  %8095 = vdwg.mxu0
  %v8097 = vsel %vm747, %v8008, 0
  %8099 = vmatprep.subr.bf16.mxu0 %v7673
  %8100 = vmatpush1.bf16.msra.mxu0 %v7672
  %8101 = vmatprep.subr.bf16.mxu0 0
  %8102 = vmatpush1.bf16.msra.mxu0 0
  %8103 = vmatprep.subr.bf16.mxu0 0
  %8104 = vmatpush1.bf16.msra.mxu0 0
  %8105 = vmatprep.subr.bf16.mxu0 0
  %8106 = vmatpush1.bf16.msra.mxu0 0
  %8107 = vmatprep.subr.bf16.mxu0 0
  %8108 = vmatpush1.bf16.msra.mxu0 0
  %8109 = vmatprep.subr.bf16.mxu0 0
  %8110 = vmatpush1.bf16.msra.mxu0 0
  %8111 = vmatprep.subr.bf16.mxu0 0
  %8112 = vmatpush1.bf16.msra.mxu0 0
  %8113 = vmatprep.subr.bf16.mxu0 0
  %8114 = vmatpush1.bf16.msra.mxu0 0
  %8115 = vmatprep.subr.bf16.mxu0 0
  %8116 = vmatpush1.bf16.msra.mxu0 0
  %8117 = vmatprep.subr.bf16.mxu0 0
  %8118 = vmatpush1.bf16.msra.mxu0 0
  %8119 = vmatprep.subr.bf16.mxu0 0
  %8120 = vmatpush1.bf16.msra.mxu0 0
  %8121 = vmatprep.subr.bf16.mxu0 0
  %8122 = vmatpush1.bf16.msra.mxu0 0
  %8123 = vmatprep.subr.bf16.mxu0 0
  %8124 = vmatpush1.bf16.msra.mxu0 0
  %8125 = vmatprep.subr.bf16.mxu0 0
  %8126 = vmatpush1.bf16.msra.mxu0 0
  %8127 = vmatprep.subr.bf16.mxu0 0
  %8128 = vmatpush1.bf16.msra.mxu0 0
  %8129 = vmatprep.subr.bf16.mxu0 0
  %8130 = vmatpush1.bf16.msra.mxu0 0
  %8131 = vmatprep.mubr.bf16.mxu0 0
  %8132 = vmatmul.mubr.bf16.gmra.mrb[0].mxu0 %v8097
  %v8133 = vpop.f32.mrb[0].mxu0
  %v8134 = vadd.f32 %v8049, %v8133
  %v8135 = vpop.f32.mrb[0].mxu0
  %v8136 = vadd.f32 %v8051, %v8135
  %v8137 = vpop.f32.mrb[0].mxu0
  %v8138 = vpop.f32.mrb[0].mxu0
  %8139 = vdwg.mxu0
  %8140 = vmatprep.subr.bf16.mxu0 %v7675
  %8141 = vmatpush1.bf16.msra.mxu0 %v7674
  %8142 = vmatprep.subr.bf16.mxu0 0
  %8143 = vmatpush1.bf16.msra.mxu0 0
  %8144 = vmatprep.subr.bf16.mxu0 0
  %8145 = vmatpush1.bf16.msra.mxu0 0
  %8146 = vmatprep.subr.bf16.mxu0 0
  %8147 = vmatpush1.bf16.msra.mxu0 0
  %8148 = vmatprep.subr.bf16.mxu0 0
  %8149 = vmatpush1.bf16.msra.mxu0 0
  %8150 = vmatprep.subr.bf16.mxu0 0
  %8151 = vmatpush1.bf16.msra.mxu0 0
  %8152 = vmatprep.subr.bf16.mxu0 0
  %8153 = vmatpush1.bf16.msra.mxu0 0
  %8154 = vmatprep.subr.bf16.mxu0 0
  %8155 = vmatpush1.bf16.msra.mxu0 0
  %8156 = vmatprep.subr.bf16.mxu0 0
  %8157 = vmatpush1.bf16.msra.mxu0 0
  %8158 = vmatprep.subr.bf16.mxu0 0
  %8159 = vmatpush1.bf16.msra.mxu0 0
  %8160 = vmatprep.subr.bf16.mxu0 0
  %8161 = vmatpush1.bf16.msra.mxu0 0
  %8162 = vmatprep.subr.bf16.mxu0 0
  %8163 = vmatpush1.bf16.msra.mxu0 0
  %8164 = vmatprep.subr.bf16.mxu0 0
  %8165 = vmatpush1.bf16.msra.mxu0 0
  %8166 = vmatprep.subr.bf16.mxu0 0
  %8167 = vmatpush1.bf16.msra.mxu0 0
  %8168 = vmatprep.subr.bf16.mxu0 0
  %8169 = vmatpush1.bf16.msra.mxu0 0
  %8170 = vmatprep.subr.bf16.mxu0 0
  %8171 = vmatpush1.bf16.msra.mxu0 0
  %8172 = vmatprep.mubr.bf16.mxu0 0
  %8173 = vmatmul.mubr.bf16.gmra.mrb[0].mxu0 %v8097
  %v8174 = vpop.f32.mrb[0].mxu0
  %v8175 = vadd.f32 %v8090, %v8174
  %v8176 = vpop.f32.mrb[0].mxu0
  %v8177 = vadd.f32 %v8092, %v8176
  %v8178 = vpop.f32.mrb[0].mxu0
  %v8179 = vpop.f32.mrb[0].mxu0
  %8180 = vdwg.mxu0
  %v8181 = vadd.f32 %v8134, %v7686
  %v8182 = vadd.f32 %v8136, %v7686
  %v8183 = vadd.f32 %v8175, %v7686
  %v8184 = vadd.f32 %v8177, %v7686
  %v8185 = vsub.f32 0.0, %v8181
  %v8186 = vsub.f32 0.0, %v8182
  %v8187 = vsub.f32 0.0, %v8183
  %v8188 = vsub.f32 0.0, %v8184
  %v8189 = vmul.f32 %v8185, 1.442695
  %v8190 = vpow.pop %v8189
  %v8191 = vmul.f32 %v8186, 1.442695
  %v8192 = vpow.pop %v8191
  %v8193 = vmul.f32 %v8187, 1.442695
  %v8194 = vpow.pop %v8193
  %v8195 = vmul.f32 %v8188, 1.442695
  %v8196 = vpow.pop %v8195
  %v8197 = vadd.f32 %v8190, 1.0
  %v8198 = vadd.f32 %v8192, 1.0
  %v8199 = vadd.f32 %v8194, 1.0
  %v8200 = vadd.f32 %v8196, 1.0
  %v8201 = vrcp.pop %v8197
  %v8202 = vrcp.pop %v8198
  %v8203 = vrcp.pop %v8199
  %v8204 = vrcp.pop %v8200
  %v8205 = vmax.f32 %v8201, 0.0
  %v8206 = vmax.f32 %v8202, 0.0
  %v8207 = vmax.f32 %v8203, 0.0
  %v8208 = vmax.f32 %v8204, 0.0
  %v8209 = vmin.f32 %v8205, 1.0
  %v8210 = vmin.f32 %v8206, 1.0
  %v8211 = vmin.f32 %v8207, 1.0
  %v8212 = vmin.f32 %v8208, 1.0
  %v8213 = vld [vmem:[%s11] sm:$0x3]
  %s8214 = scalar_lea.vmem %s11, 4
  %v8215 = vld [vmem:[%s8214] sm:$0x3]
  %v8217 = vsel %vm747, %v8215, 0
  %8219 = vmatprep.subr.bf16.mxu0 %v7673
  %8220 = vmatpush1.bf16.msra.mxu0 %v7672
  %8221 = vmatprep.subr.bf16.mxu0 0
  %8222 = vmatpush1.bf16.msra.mxu0 0
  %8223 = vmatprep.subr.bf16.mxu0 0
  %8224 = vmatpush1.bf16.msra.mxu0 0
  %8225 = vmatprep.subr.bf16.mxu0 0
  %8226 = vmatpush1.bf16.msra.mxu0 0
  %8227 = vmatprep.subr.bf16.mxu0 0
  %8228 = vmatpush1.bf16.msra.mxu0 0
  %8229 = vmatprep.subr.bf16.mxu0 0
  %8230 = vmatpush1.bf16.msra.mxu0 0
  %8231 = vmatprep.subr.bf16.mxu0 0
  %8232 = vmatpush1.bf16.msra.mxu0 0
  %8233 = vmatprep.subr.bf16.mxu0 0
  %8234 = vmatpush1.bf16.msra.mxu0 0
  %8235 = vmatprep.subr.bf16.mxu0 0
  %8236 = vmatpush1.bf16.msra.mxu0 0
  %8237 = vmatprep.subr.bf16.mxu0 0
  %8238 = vmatpush1.bf16.msra.mxu0 0
  %8239 = vmatprep.subr.bf16.mxu0 0
  %8240 = vmatpush1.bf16.msra.mxu0 0
  %8241 = vmatprep.subr.bf16.mxu0 0
  %8242 = vmatpush1.bf16.msra.mxu0 0
  %8243 = vmatprep.subr.bf16.mxu0 0
  %8244 = vmatpush1.bf16.msra.mxu0 0
  %8245 = vmatprep.subr.bf16.mxu0 0
  %8246 = vmatpush1.bf16.msra.mxu0 0
  %8247 = vmatprep.subr.bf16.mxu0 0
  %8248 = vmatpush1.bf16.msra.mxu0 0
  %8249 = vmatprep.subr.bf16.mxu0 0
  %8250 = vmatpush1.bf16.msra.mxu0 0
  %8251 = vmatprep.mubr.bf16.mxu0 0
  %8252 = vmatmul.mubr.bf16.gmra.mrb[0].mxu0 %v8217
  %v8253 = vpop.f32.mrb[0].mxu0
  %v8254 = vadd.f32 0.0, %v8253
  %v8255 = vpop.f32.mrb[0].mxu0
  %v8256 = vadd.f32 0.0, %v8255
  %v8257 = vpop.f32.mrb[0].mxu0
  %v8258 = vpop.f32.mrb[0].mxu0
  %8259 = vdwg.mxu0
  %8260 = vmatprep.subr.bf16.mxu0 %v7675
  %8261 = vmatpush1.bf16.msra.mxu0 %v7674
  %8262 = vmatprep.subr.bf16.mxu0 0
  %8263 = vmatpush1.bf16.msra.mxu0 0
  %8264 = vmatprep.subr.bf16.mxu0 0
  %8265 = vmatpush1.bf16.msra.mxu0 0
  %8266 = vmatprep.subr.bf16.mxu0 0
  %8267 = vmatpush1.bf16.msra.mxu0 0
  %8268 = vmatprep.subr.bf16.mxu0 0
  %8269 = vmatpush1.bf16.msra.mxu0 0
  %8270 = vmatprep.subr.bf16.mxu0 0
  %8271 = vmatpush1.bf16.msra.mxu0 0
  %8272 = vmatprep.subr.bf16.mxu0 0
  %8273 = vmatpush1.bf16.msra.mxu0 0
  %8274 = vmatprep.subr.bf16.mxu0 0
  %8275 = vmatpush1.bf16.msra.mxu0 0
  %8276 = vmatprep.subr.bf16.mxu0 0
  %8277 = vmatpush1.bf16.msra.mxu0 0
  %8278 = vmatprep.subr.bf16.mxu0 0
  %8279 = vmatpush1.bf16.msra.mxu0 0
  %8280 = vmatprep.subr.bf16.mxu0 0
  %8281 = vmatpush1.bf16.msra.mxu0 0
  %8282 = vmatprep.subr.bf16.mxu0 0
  %8283 = vmatpush1.bf16.msra.mxu0 0
  %8284 = vmatprep.subr.bf16.mxu0 0
  %8285 = vmatpush1.bf16.msra.mxu0 0
  %8286 = vmatprep.subr.bf16.mxu0 0
  %8287 = vmatpush1.bf16.msra.mxu0 0
  %8288 = vmatprep.subr.bf16.mxu0 0
  %8289 = vmatpush1.bf16.msra.mxu0 0
  %8290 = vmatprep.subr.bf16.mxu0 0
  %8291 = vmatpush1.bf16.msra.mxu0 0
  %8292 = vmatprep.mubr.bf16.mxu0 0
  %8293 = vmatmul.mubr.bf16.gmra.mrb[0].mxu0 %v8217
  %v8294 = vpop.f32.mrb[0].mxu0
  %v8295 = vadd.f32 0.0, %v8294
  %v8296 = vpop.f32.mrb[0].mxu0
  %v8297 = vadd.f32 0.0, %v8296
  %v8298 = vpop.f32.mrb[0].mxu0
  %v8299 = vpop.f32.mrb[0].mxu0
  %8300 = vdwg.mxu0
  %v8302 = vsel %vm747, %v8213, 0
  %8304 = vmatprep.subr.bf16.mxu0 %v7677
  %8305 = vmatpush1.bf16.msra.mxu0 %v7676
  %8306 = vmatprep.subr.bf16.mxu0 0
  %8307 = vmatpush1.bf16.msra.mxu0 0
  %8308 = vmatprep.subr.bf16.mxu0 0
  %8309 = vmatpush1.bf16.msra.mxu0 0
  %8310 = vmatprep.subr.bf16.mxu0 0
  %8311 = vmatpush1.bf16.msra.mxu0 0
  %8312 = vmatprep.subr.bf16.mxu0 0
  %8313 = vmatpush1.bf16.msra.mxu0 0
  %8314 = vmatprep.subr.bf16.mxu0 0
  %8315 = vmatpush1.bf16.msra.mxu0 0
  %8316 = vmatprep.subr.bf16.mxu0 0
  %8317 = vmatpush1.bf16.msra.mxu0 0
  %8318 = vmatprep.subr.bf16.mxu0 0
  %8319 = vmatpush1.bf16.msra.mxu0 0
  %8320 = vmatprep.subr.bf16.mxu0 0
  %8321 = vmatpush1.bf16.msra.mxu0 0
  %8322 = vmatprep.subr.bf16.mxu0 0
  %8323 = vmatpush1.bf16.msra.mxu0 0
  %8324 = vmatprep.subr.bf16.mxu0 0
  %8325 = vmatpush1.bf16.msra.mxu0 0
  %8326 = vmatprep.subr.bf16.mxu0 0
  %8327 = vmatpush1.bf16.msra.mxu0 0
  %8328 = vmatprep.subr.bf16.mxu0 0
  %8329 = vmatpush1.bf16.msra.mxu0 0
  %8330 = vmatprep.subr.bf16.mxu0 0
  %8331 = vmatpush1.bf16.msra.mxu0 0
  %8332 = vmatprep.subr.bf16.mxu0 0
  %8333 = vmatpush1.bf16.msra.mxu0 0
  %8334 = vmatprep.subr.bf16.mxu0 0
  %8335 = vmatpush1.bf16.msra.mxu0 0
  %8336 = vmatprep.mubr.bf16.mxu0 0
  %8337 = vmatmul.mubr.bf16.gmra.mrb[0].mxu0 %v8302
  %v8338 = vpop.f32.mrb[0].mxu0
  %v8339 = vadd.f32 %v8254, %v8338
  %v8340 = vpop.f32.mrb[0].mxu0
  %v8341 = vadd.f32 %v8256, %v8340
  %v8342 = vpop.f32.mrb[0].mxu0
  %v8343 = vpop.f32.mrb[0].mxu0
  %8344 = vdwg.mxu0
  %8345 = vmatprep.subr.bf16.mxu0 %v7679
  %8346 = vmatpush1.bf16.msra.mxu0 %v7678
  %8347 = vmatprep.subr.bf16.mxu0 0
  %8348 = vmatpush1.bf16.msra.mxu0 0
  %8349 = vmatprep.subr.bf16.mxu0 0
  %8350 = vmatpush1.bf16.msra.mxu0 0
  %8351 = vmatprep.subr.bf16.mxu0 0
  %8352 = vmatpush1.bf16.msra.mxu0 0
  %8353 = vmatprep.subr.bf16.mxu0 0
  %8354 = vmatpush1.bf16.msra.mxu0 0
  %8355 = vmatprep.subr.bf16.mxu0 0
  %8356 = vmatpush1.bf16.msra.mxu0 0
  %8357 = vmatprep.subr.bf16.mxu0 0
  %8358 = vmatpush1.bf16.msra.mxu0 0
  %8359 = vmatprep.subr.bf16.mxu0 0
  %8360 = vmatpush1.bf16.msra.mxu0 0
  %8361 = vmatprep.subr.bf16.mxu0 0
  %8362 = vmatpush1.bf16.msra.mxu0 0
  %8363 = vmatprep.subr.bf16.mxu0 0
  %8364 = vmatpush1.bf16.msra.mxu0 0
  %8365 = vmatprep.subr.bf16.mxu0 0
  %8366 = vmatpush1.bf16.msra.mxu0 0
  %8367 = vmatprep.subr.bf16.mxu0 0
  %8368 = vmatpush1.bf16.msra.mxu0 0
  %8369 = vmatprep.subr.bf16.mxu0 0
  %8370 = vmatpush1.bf16.msra.mxu0 0
  %8371 = vmatprep.subr.bf16.mxu0 0
  %8372 = vmatpush1.bf16.msra.mxu0 0
  %8373 = vmatprep.subr.bf16.mxu0 0
  %8374 = vmatpush1.bf16.msra.mxu0 0
  %8375 = vmatprep.subr.bf16.mxu0 0
  %8376 = vmatpush1.bf16.msra.mxu0 0
  %8377 = vmatprep.mubr.bf16.mxu0 0
  %8378 = vmatmul.mubr.bf16.gmra.mrb[0].mxu0 %v8302
  %v8379 = vpop.f32.mrb[0].mxu0
  %v8380 = vadd.f32 %v8295, %v8379
  %v8381 = vpop.f32.mrb[0].mxu0
  %v8382 = vadd.f32 %v8297, %v8381
  %v8383 = vpop.f32.mrb[0].mxu0
  %v8384 = vpop.f32.mrb[0].mxu0
  %8385 = vdwg.mxu0
  %s8386 = scalar_lea.vmem %s11, 12
  %v8387 = vld [vmem:[%s8386] sm:$0x3]
  %v8389 = vsel %vm747, %v8387, 0
  %8391 = vmatprep.subr.bf16.mxu0 %v7669
  %8392 = vmatpush1.bf16.msra.mxu0 %v7668
  %8393 = vmatprep.subr.bf16.mxu0 0
  %8394 = vmatpush1.bf16.msra.mxu0 0
  %8395 = vmatprep.subr.bf16.mxu0 0
  %8396 = vmatpush1.bf16.msra.mxu0 0
  %8397 = vmatprep.subr.bf16.mxu0 0
  %8398 = vmatpush1.bf16.msra.mxu0 0
  %8399 = vmatprep.subr.bf16.mxu0 0
  %8400 = vmatpush1.bf16.msra.mxu0 0
  %8401 = vmatprep.subr.bf16.mxu0 0
  %8402 = vmatpush1.bf16.msra.mxu0 0
  %8403 = vmatprep.subr.bf16.mxu0 0
  %8404 = vmatpush1.bf16.msra.mxu0 0
  %8405 = vmatprep.subr.bf16.mxu0 0
  %8406 = vmatpush1.bf16.msra.mxu0 0
  %8407 = vmatprep.subr.bf16.mxu0 0
  %8408 = vmatpush1.bf16.msra.mxu0 0
  %8409 = vmatprep.subr.bf16.mxu0 0
  %8410 = vmatpush1.bf16.msra.mxu0 0
  %8411 = vmatprep.subr.bf16.mxu0 0
  %8412 = vmatpush1.bf16.msra.mxu0 0
  %8413 = vmatprep.subr.bf16.mxu0 0
  %8414 = vmatpush1.bf16.msra.mxu0 0
  %8415 = vmatprep.subr.bf16.mxu0 0
  %8416 = vmatpush1.bf16.msra.mxu0 0
  %8417 = vmatprep.subr.bf16.mxu0 0
  %8418 = vmatpush1.bf16.msra.mxu0 0
  %8419 = vmatprep.subr.bf16.mxu0 0
  %8420 = vmatpush1.bf16.msra.mxu0 0
  %8421 = vmatprep.subr.bf16.mxu0 0
  %8422 = vmatpush1.bf16.msra.mxu0 0
  %8423 = vmatprep.mubr.bf16.mxu0 0
  %8424 = vmatmul.mubr.bf16.gmra.mrb[0].mxu0 %v8389
  %v8425 = vpop.f32.mrb[0].mxu0
  %v8426 = vadd.f32 0.0, %v8425
  %v8427 = vpop.f32.mrb[0].mxu0
  %v8428 = vadd.f32 0.0, %v8427
  %v8429 = vpop.f32.mrb[0].mxu0
  %v8430 = vpop.f32.mrb[0].mxu0
  %8431 = vdwg.mxu0
  %8432 = vmatprep.subr.bf16.mxu0 %v7671
  %8433 = vmatpush1.bf16.msra.mxu0 %v7670
  %8434 = vmatprep.subr.bf16.mxu0 0
  %8435 = vmatpush1.bf16.msra.mxu0 0
  %8436 = vmatprep.subr.bf16.mxu0 0
  %8437 = vmatpush1.bf16.msra.mxu0 0
  %8438 = vmatprep.subr.bf16.mxu0 0
  %8439 = vmatpush1.bf16.msra.mxu0 0
  %8440 = vmatprep.subr.bf16.mxu0 0
  %8441 = vmatpush1.bf16.msra.mxu0 0
  %8442 = vmatprep.subr.bf16.mxu0 0
  %8443 = vmatpush1.bf16.msra.mxu0 0
  %8444 = vmatprep.subr.bf16.mxu0 0
  %8445 = vmatpush1.bf16.msra.mxu0 0
  %8446 = vmatprep.subr.bf16.mxu0 0
  %8447 = vmatpush1.bf16.msra.mxu0 0
  %8448 = vmatprep.subr.bf16.mxu0 0
  %8449 = vmatpush1.bf16.msra.mxu0 0
  %8450 = vmatprep.subr.bf16.mxu0 0
  %8451 = vmatpush1.bf16.msra.mxu0 0
  %8452 = vmatprep.subr.bf16.mxu0 0
  %8453 = vmatpush1.bf16.msra.mxu0 0
  %8454 = vmatprep.subr.bf16.mxu0 0
  %8455 = vmatpush1.bf16.msra.mxu0 0
  %8456 = vmatprep.subr.bf16.mxu0 0
  %8457 = vmatpush1.bf16.msra.mxu0 0
  %8458 = vmatprep.subr.bf16.mxu0 0
  %8459 = vmatpush1.bf16.msra.mxu0 0
  %8460 = vmatprep.subr.bf16.mxu0 0
  %8461 = vmatpush1.bf16.msra.mxu0 0
  %8462 = vmatprep.subr.bf16.mxu0 0
  %8463 = vmatpush1.bf16.msra.mxu0 0
  %8464 = vmatprep.mubr.bf16.mxu0 0
  %8465 = vmatmul.mubr.bf16.gmra.mrb[0].mxu0 %v8389
  %v8466 = vpop.f32.mrb[0].mxu0
  %v8467 = vadd.f32 0.0, %v8466
  %v8468 = vpop.f32.mrb[0].mxu0
  %v8469 = vadd.f32 0.0, %v8468
  %v8470 = vpop.f32.mrb[0].mxu0
  %v8471 = vpop.f32.mrb[0].mxu0
  %8472 = vdwg.mxu0
  %v8473 = vadd.f32 %v8339, %v8426
  %v8474 = vadd.f32 %v8341, %v8428
  %v8475 = vadd.f32 %v8380, %v8467
  %v8476 = vadd.f32 %v8382, %v8469
  %s8477 = scalar_lea.vmem %s11, 16
  %v8478 = vld [vmem:[%s8477] sm:$0x3]
  %v8480 = vsel %vm747, %v8478, 0
  %8482 = vmatprep.subr.bf16.mxu0 %v7665
  %8483 = vmatpush1.bf16.msra.mxu0 %v7664
  %8484 = vmatprep.subr.bf16.mxu0 0
  %8485 = vmatpush1.bf16.msra.mxu0 0
  %8486 = vmatprep.subr.bf16.mxu0 0
  %8487 = vmatpush1.bf16.msra.mxu0 0
  %8488 = vmatprep.subr.bf16.mxu0 0
  %8489 = vmatpush1.bf16.msra.mxu0 0
  %8490 = vmatprep.subr.bf16.mxu0 0
  %8491 = vmatpush1.bf16.msra.mxu0 0
  %8492 = vmatprep.subr.bf16.mxu0 0
  %8493 = vmatpush1.bf16.msra.mxu0 0
  %8494 = vmatprep.subr.bf16.mxu0 0
  %8495 = vmatpush1.bf16.msra.mxu0 0
  %8496 = vmatprep.subr.bf16.mxu0 0
  %8497 = vmatpush1.bf16.msra.mxu0 0
  %8498 = vmatprep.subr.bf16.mxu0 0
  %8499 = vmatpush1.bf16.msra.mxu0 0
  %8500 = vmatprep.subr.bf16.mxu0 0
  %8501 = vmatpush1.bf16.msra.mxu0 0
  %8502 = vmatprep.subr.bf16.mxu0 0
  %8503 = vmatpush1.bf16.msra.mxu0 0
  %8504 = vmatprep.subr.bf16.mxu0 0
  %8505 = vmatpush1.bf16.msra.mxu0 0
  %8506 = vmatprep.subr.bf16.mxu0 0
  %8507 = vmatpush1.bf16.msra.mxu0 0
  %8508 = vmatprep.subr.bf16.mxu0 0
  %8509 = vmatpush1.bf16.msra.mxu0 0
  %8510 = vmatprep.subr.bf16.mxu0 0
  %8511 = vmatpush1.bf16.msra.mxu0 0
  %8512 = vmatprep.subr.bf16.mxu0 0
  %8513 = vmatpush1.bf16.msra.mxu0 0
  %8514 = vmatprep.mubr.bf16.mxu0 0
  %8515 = vmatmul.mubr.bf16.gmra.mrb[0].mxu0 %v8480
  %v8516 = vpop.f32.mrb[0].mxu0
  %v8517 = vadd.f32 0.0, %v8516
  %v8518 = vpop.f32.mrb[0].mxu0
  %v8519 = vadd.f32 0.0, %v8518
  %v8520 = vpop.f32.mrb[0].mxu0
  %v8521 = vpop.f32.mrb[0].mxu0
  %8522 = vdwg.mxu0
  %8523 = vmatprep.subr.bf16.mxu0 %v7667
  %8524 = vmatpush1.bf16.msra.mxu0 %v7666
  %8525 = vmatprep.subr.bf16.mxu0 0
  %8526 = vmatpush1.bf16.msra.mxu0 0
  %8527 = vmatprep.subr.bf16.mxu0 0
  %8528 = vmatpush1.bf16.msra.mxu0 0
  %8529 = vmatprep.subr.bf16.mxu0 0
  %8530 = vmatpush1.bf16.msra.mxu0 0
  %8531 = vmatprep.subr.bf16.mxu0 0
  %8532 = vmatpush1.bf16.msra.mxu0 0
  %8533 = vmatprep.subr.bf16.mxu0 0
  %8534 = vmatpush1.bf16.msra.mxu0 0
  %8535 = vmatprep.subr.bf16.mxu0 0
  %8536 = vmatpush1.bf16.msra.mxu0 0
  %8537 = vmatprep.subr.bf16.mxu0 0
  %8538 = vmatpush1.bf16.msra.mxu0 0
  %8539 = vmatprep.subr.bf16.mxu0 0
  %8540 = vmatpush1.bf16.msra.mxu0 0
  %8541 = vmatprep.subr.bf16.mxu0 0
  %8542 = vmatpush1.bf16.msra.mxu0 0
  %8543 = vmatprep.subr.bf16.mxu0 0
  %8544 = vmatpush1.bf16.msra.mxu0 0
  %8545 = vmatprep.subr.bf16.mxu0 0
  %8546 = vmatpush1.bf16.msra.mxu0 0
  %8547 = vmatprep.subr.bf16.mxu0 0
  %8548 = vmatpush1.bf16.msra.mxu0 0
  %8549 = vmatprep.subr.bf16.mxu0 0
  %8550 = vmatpush1.bf16.msra.mxu0 0
  %8551 = vmatprep.subr.bf16.mxu0 0
  %8552 = vmatpush1.bf16.msra.mxu0 0
  %8553 = vmatprep.subr.bf16.mxu0 0
  %8554 = vmatpush1.bf16.msra.mxu0 0
  %8555 = vmatprep.mubr.bf16.mxu0 0
  %8556 = vmatmul.mubr.bf16.gmra.mrb[0].mxu0 %v8480
  %v8557 = vpop.f32.mrb[0].mxu0
  %v8558 = vadd.f32 0.0, %v8557
  %v8559 = vpop.f32.mrb[0].mxu0
  %v8560 = vadd.f32 0.0, %v8559
  %v8561 = vpop.f32.mrb[0].mxu0
  %v8562 = vpop.f32.mrb[0].mxu0
  %8563 = vdwg.mxu0
  %v8564 = vadd.f32 %v8473, %v8517
  %v8565 = vadd.f32 %v8474, %v8519
  %v8566 = vadd.f32 %v8475, %v8558
  %v8567 = vadd.f32 %v8476, %v8560
  %v8568 = vadd.f32 %v8564, %v7686
  %v8569 = vadd.f32 %v8565, %v7686
  %v8570 = vadd.f32 %v8566, %v7686
  %v8571 = vadd.f32 %v8567, %v7686
  %v8572 = vsub.f32 0.0, %v8568
  %v8573 = vsub.f32 0.0, %v8569
  %v8574 = vsub.f32 0.0, %v8570
  %v8575 = vsub.f32 0.0, %v8571
  %v8576 = vmul.f32 %v8572, 1.442695
  %v8577 = vpow.pop %v8576
  %v8578 = vmul.f32 %v8573, 1.442695
  %v8579 = vpow.pop %v8578
  %v8580 = vmul.f32 %v8574, 1.442695
  %v8581 = vpow.pop %v8580
  %v8582 = vmul.f32 %v8575, 1.442695
  %v8583 = vpow.pop %v8582
  %v8584 = vadd.f32 %v8577, 1.0
  %v8585 = vadd.f32 %v8579, 1.0
  %v8586 = vadd.f32 %v8581, 1.0
  %v8587 = vadd.f32 %v8583, 1.0
  %v8588 = vrcp.pop %v8584
  %v8589 = vrcp.pop %v8585
  %v8590 = vrcp.pop %v8586
  %v8591 = vrcp.pop %v8587
  %v8592 = vmax.f32 %v8588, 0.0
  %v8593 = vmax.f32 %v8589, 0.0
  %v8594 = vmax.f32 %v8590, 0.0
  %v8595 = vmax.f32 %v8591, 0.0
  %v8596 = vmin.f32 %v8592, 1.0
  %v8597 = vmin.f32 %v8593, 1.0
  %v8598 = vmin.f32 %v8594, 1.0
  %v8599 = vmin.f32 %v8595, 1.0
  %v8604 = vcombine.low %v7797, %v7798
  %v8605 = vcombine.low %v7799, %v7800
  %8608 = vst [vmem:[%s19] sm:$0x77] %v8604
  %vm8609 = vcmask 1042432
  %vm8610 = vcmask 63492
  %vm8611 = vmor %vm8610, %vm8609
  %8612 = vst.msk [vmem:[%s19 + $0x8] sm:$0x77] %vm8611, %v8605
  %v8617 = vcombine.low %v8003, %v8004
  %v8618 = vcombine.low %v8005, %v8006
  %s8621 = scalar_lea.vmem %s19, 16
  %8622 = vst [vmem:[%s8621] sm:$0x77] %v8617
  %8623 = vst.msk [vmem:[%s8621 + $0x8] sm:$0x77] %vm8611, %v8618
  %v8628 = vcombine.low %v8209, %v8210
  %v8629 = vcombine.low %v8211, %v8212
  %s8632 = scalar_lea.vmem %s19, 32
  %8633 = vst [vmem:[%s8632] sm:$0x77] %v8628
  %8634 = vst.msk [vmem:[%s8632 + $0x8] sm:$0x77] %vm8611, %v8629
  %v8639 = vcombine.low %v8596, %v8597
  %v8640 = vcombine.low %v8598, %v8599
  %s8643 = scalar_lea.vmem %s19, 48
  %8644 = vst [vmem:[%s8643] sm:$0x77] %v8639
  %8645 = vst.msk [vmem:[%s8643 + $0x8] sm:$0x77] %vm8611, %v8640
  // Predicated region
  $region78: #{autoencoder_forward.1} parent=0 // pred_check
    _
  $region79: #{autoencoder_forward.1} parent=0 // pred_check_branch
    %8647 = sbr.rel (0) target = $region81
  $region80: #{autoencoder_forward.1} parent=0 // pred_region
    _
  $region81: #{autoencoder_forward.1} parent=0 // pred_fallthru
    _
  // Predicated region
  $region82: #{autoencoder_forward.1} parent=0 // pred_check
    _
  $region83: #{autoencoder_forward.1} parent=0 // pred_check_branch
    %8649 = sbr.rel (0) target = $region85
  $region84: #{autoencoder_forward.1} parent=0 // pred_region
    _
  $region85: #{autoencoder_forward.1} parent=0 // pred_fallthru
    _

</llo_original>
